<compile_context>
chip_gen: v7x
topology: tpu7x:2x2x1
jax: 0.10.0
libtpu: 0.0.40
codegen_flags: <defaults>
</compile_context>

<pallas_src>
import jax
import jax.numpy as jnp
from jax import lax
from jax.experimental import pallas as pl
from jax.experimental.pallas import tpu as pltpu


# ---------------------------------------------------------------------------
# Fused VideoSubNet kernel
# ---------------------------------------------------------------------------

def _gate_mask(batch, hidden):
    """Lane mask that is True on the 'g' (cell-candidate) gate columns."""
    lane = lax.broadcasted_iota(jnp.int32, (batch, 4 * hidden), 1)
    return (lane >= 2 * hidden) & (lane < 3 * hidden)


def _lstm_cell(gates, c, hidden, g_mask):
    """PyTorch gate order: input, forget, cell(g), output.

    Activations are applied to the full (B, 4H) slab (sigmoid + tanh on the
    EUP) and merged with one select, instead of four narrow lane extracts.
    """
    act = jnp.where(g_mask, jnp.tanh(gates), jax.nn.sigmoid(gates))
    i = act[:, 0 * hidden:1 * hidden]
    f = act[:, 1 * hidden:2 * hidden]
    g = act[:, 2 * hidden:3 * hidden]
    o = act[:, 3 * hidden:4 * hidden]
    c_new = f * c + i * g
    h_new = o * jnp.tanh(c_new)
    return h_new, c_new


def _videosubnet_kernel(len_ref, x_ref,
                        wi1_ref, wh1_ref, bl1_ref,           # LSTM-1
                        wa1_ref, ba1_ref, wa2_ref, ba2_ref,  # linear1/linear2
                        wi2_ref, wh2_ref, bl2_ref,           # LSTM-2
                        wo_ref, bo_ref,                      # linear3
                        out_ref,
                        g1_scr, g2_scr):                     # (L*B, 4*H) VMEM
    B = len_ref.shape[0]
    LB = x_ref.shape[0]
    L = LB // B
    H1 = wh1_ref.shape[0]
    H2 = wh2_ref.shape[0]

    lengths = len_ref[...]                       # (B, 1) int32
    last1 = lengths - 1                          # hoisted: LSTM-1 final index
    last2 = lengths                              # hoisted: LSTM-2 final index

    x = x_ref[...]                               # (L*B, In) bf16, time-major

    # ---- hoisted batched matmuls (MXU M = L*B instead of B per step) -------
    # LSTM-1 input gate pre-activations for every timestep.
    g1_scr[...] = (jnp.dot(x, wi1_ref[...], preferred_element_type=jnp.float32)
                   + bl1_ref[...])

    # Attention branch (dropout1 is identity in eval mode).
    x1 = (jnp.dot(x, wa1_ref[...], preferred_element_type=jnp.float32)
          + ba1_ref[...])                                        # linear1
    a = (jnp.dot(jnp.maximum(x1, 0.0).astype(jnp.bfloat16), wa2_ref[...],
                 preferred_element_type=jnp.float32) + ba2_ref[...])  # linear2
    # softmax over the FEATURE axis (dim=-1), as in the PyTorch reference
    a = a - jnp.max(a, axis=-1, keepdims=True)
    p = jnp.exp(a)
    p = p * pl.reciprocal(jnp.sum(p, axis=-1, keepdims=True), approx=True)
    attended = p * x1              # gate the PRE-ReLU linear1 output (as in torch)

    # LSTM-2 input gate pre-activations for the `attended` part of its input.
    g2_scr[...] = (jnp.dot(attended.astype(jnp.bfloat16), wi2_ref[...],
                           preferred_element_type=jnp.float32)
                   + bl2_ref[...])

    # ---- hoisted loop invariants -------------------------------------------
    mask1 = _gate_mask(B, H1)
    mask2 = mask1 if H2 == H1 else _gate_mask(B, H2)
    wh1 = wh1_ref[...]                           # bf16 recurrent weights
    wh2 = wh2_ref[...]

    # ---- LSTM-1 recurrence (only the recurrent dot + gate math per step) ---
    z1 = jnp.zeros((B, H1), jnp.float32)

    def step1(t, carry):
        h, c, h_last = carry
        gates = (g1_scr[pl.ds(t * B, B)]
                 + jnp.dot(h.astype(jnp.bfloat16), wh1,
                           preferred_element_type=jnp.float32))
        h, c = _lstm_cell(gates, c, H1, mask1)
        # pack_padded_sequence: keep hidden state at the last valid step
        h_last = jnp.where(t == last1, h, h_last)
        return h, c, h_last

    _, _, h0 = lax.fori_loop(0, L, step1, (z1, z1, z1), unroll=True)

    # ---- LSTM-2 over [h0 ; attended_0 .. attended_{L-1}], lengths + 1 ------
    z2 = jnp.zeros((B, H2), jnp.float32)

    # peel step 0 (input token is h0, initial h = c = 0)
    gates0 = (jnp.dot(h0.astype(jnp.bfloat16), wi2_ref[...],
                      preferred_element_type=jnp.float32) + bl2_ref[...])
    h2s, c2s = _lstm_cell(gates0, z2, H2, mask2)
    hl2 = jnp.where(0 == last2, h2s, z2)

    def step2(t, carry):
        h, c, h_last = carry
        gates = (g2_scr[pl.ds((t - 1) * B, B)]
                 + jnp.dot(h.astype(jnp.bfloat16), wh2,
                           preferred_element_type=jnp.float32))
        h, c = _lstm_cell(gates, c, H2, mask2)
        h_last = jnp.where(t == last2, h, h_last)   # (lengths + 1) - 1
        return h, c, h_last

    _, _, h3 = lax.fori_loop(1, L + 1, step2, (h2s, c2s, hl2), unroll=True)

    # ---- h5 = h3 + h0 ; y = linear3(h5) ------------------------------------
    h5 = h3 + h0
    out_ref[...] = (jnp.dot(h5.astype(jnp.bfloat16), wo_ref[...],
                            preferred_element_type=jnp.float32) + bo_ref[...])


def _full_spec(shape):
    nd = len(shape)
    return pl.BlockSpec(shape, lambda i, _nd=nd: (0,) * _nd)


def video_subnet_forward(params, x, lengths):
    """x: (B, L, in_size) float32, lengths: (B,) int32 -> (B, out_size) f32."""
    B, L, in_size = x.shape
    H1 = params["wh1"].shape[0]
    H2 = params["wh2"].shape[0]
    out_size = params["wo"].shape[1]
    bf = jnp.bfloat16

    # Time-major (L*B, In) layout so every per-step slice of the precomputed
    # gate slabs is a contiguous row block; fused with the bf16 cast (one
    # tiny XLA op over x, negligible at these shapes).
    x_tb = jnp.transpose(x, (1, 0, 2)).reshape(L * B, in_size).astype(bf)
    len2 = lengths.reshape(B, 1).astype(jnp.int32)

    inputs = (
        len2,
        x_tb,
        params["wi1"].astype(bf),                          # (In, 4*H1)
        params["wh1"].astype(bf),                          # (H1, 4*H1)
        params["bl1"].reshape(1, 4 * H1).astype(jnp.float32),
        params["wa1"].astype(bf),                          # (In, 64)
        params["ba1"].reshape(1, -1).astype(jnp.float32),
        params["wa2"].astype(bf),                          # (64, 64)
        params["ba2"].reshape(1, -1).astype(jnp.float32),
        params["wi2"].astype(bf),                          # (64, 4*H2)
        params["wh2"].astype(bf),                          # (H2, 4*H2)
        params["bl2"].reshape(1, 4 * H2).astype(jnp.float32),
        params["wo"].astype(bf),                           # (H1, out)
        params["bo"].reshape(1, out_size).astype(jnp.float32),
    )
    in_specs = [_full_spec(a.shape) for a in inputs]

    return pl.pallas_call(
        _videosubnet_kernel,
        out_shape=jax.ShapeDtypeStruct((B, out_size), jnp.float32),
        grid=(1,),
        in_specs=in_specs,
        out_specs=_full_spec((B, out_size)),
        scratch_shapes=[pltpu.VMEM((L * B, 4 * H1), jnp.float32),
                        pltpu.VMEM((L * B, 4 * H2), jnp.float32)],
        compiler_params=pltpu.CompilerParams(
            dimension_semantics=("arbitrary",),
            vmem_limit_bytes=32 * 1024 * 1024),
    )(*inputs)


# ---------------------------------------------------------------------------
# Deterministic parameter init (weights stored pre-transposed to (in, out);
# a PyTorch checkpoint would be loaded with weight.T and b_ih + b_hh summed).
# ---------------------------------------------------------------------------

def init_params(key, in_size=2048, hidden_size=64, out_size=32):
    ks = jax.random.split(key, 12)

    def w(k, shape, scale=0.02):
        return jax.random.normal(k, shape, jnp.float32) * scale

    H = hidden_size
    return {
        # rnn1: LSTM(in_size, H)
        "wi1": w(ks[0], (in_size, 4 * H)),
        "wh1": w(ks[1], (H, 4 * H)),
        "bl1": w(ks[2], (4 * H,)),
        # linear1: 2048 -> 64, linear2: 64 -> 64
        "wa1": w(ks[3], (in_size, 64)),
        "ba1": w(ks[4], (64,)),
        "wa2": w(ks[5], (64, 64)),
        "ba2": w(ks[6], (64,)),
        # rnn2: LSTM(64, 64)
        "wi2": w(ks[7], (64, 4 * 64)),
        "wh2": w(ks[8], (64, 4 * 64)),
        "bl2": w(ks[9], (4 * 64,)),
        # linear3: hidden_size -> out_size
        "wo": w(ks[10], (H, out_size)),
        "bo": w(ks[11], (out_size,)),
    }


if __name__ == "__main__":
    B, L, IN_SIZE, HIDDEN, OUT = 2, 16, 2048, 64, 32

    key = jax.random.PRNGKey(0)
    kx, kp = jax.random.split(key)
    x = jax.random.normal(kx, (B, L, IN_SIZE), jnp.float32)
    lengths = jnp.array([L, L - 5], jnp.int32)      # ragged batch, like pack_padded

    params = init_params(kp, IN_SIZE, HIDDEN, OUT)

    fwd = jax.jit(video_subnet_forward)
    y = fwd(params, x, lengths)
    jax.block_until_ready(y)
    assert y.shape == (B, OUT) and bool(jnp.all(jnp.isfinite(y)))
    print("KERNEL_OK")
</pallas_src>

<mosaic_0001>
module attributes {stable_mosaic.version = 11 : i64} {
  func.func @_videosubnet_kernel(%arg0: i32, %arg1: memref<2x1xi32, #tpu.memory_space<vmem>>, %arg2: memref<32x2048xbf16, #tpu.memory_space<vmem>>, %arg3: memref<2048x256xbf16, #tpu.memory_space<vmem>>, %arg4: memref<64x256xbf16, #tpu.memory_space<vmem>>, %arg5: memref<1x256xf32, #tpu.memory_space<vmem>>, %arg6: memref<2048x64xbf16, #tpu.memory_space<vmem>>, %arg7: memref<1x64xf32, #tpu.memory_space<vmem>>, %arg8: memref<64x64xbf16, #tpu.memory_space<vmem>>, %arg9: memref<1x64xf32, #tpu.memory_space<vmem>>, %arg10: memref<64x256xbf16, #tpu.memory_space<vmem>>, %arg11: memref<64x256xbf16, #tpu.memory_space<vmem>>, %arg12: memref<1x256xf32, #tpu.memory_space<vmem>>, %arg13: memref<64x32xbf16, #tpu.memory_space<vmem>>, %arg14: memref<1x32xf32, #tpu.memory_space<vmem>>, %arg15: memref<2x32xf32, #tpu.memory_space<vmem>>, %arg16: memref<32x256xf32, #tpu.memory_space<vmem>>, %arg17: memref<32x256xf32, #tpu.memory_space<vmem>>) attributes {dimension_semantics = [#tpu.dimension_semantics<arbitrary>], iteration_bounds = array<i64: 1>, scalar_prefetch = 0 : i64, scratch_operands = 2 : i64, tpu.core_type = #tpu.core_type<tc>, window_params = [{pipeline_mode = #tpu.pipeline_mode<synchronous>, transform_indices = @transform_0, window_bounds = array<i64: 2, 1>}, {pipeline_mode = #tpu.pipeline_mode<synchronous>, transform_indices = @transform_1, window_bounds = array<i64: 32, 2048>}, {pipeline_mode = #tpu.pipeline_mode<synchronous>, transform_indices = @transform_2, window_bounds = array<i64: 2048, 256>}, {pipeline_mode = #tpu.pipeline_mode<synchronous>, transform_indices = @transform_3, window_bounds = array<i64: 64, 256>}, {pipeline_mode = #tpu.pipeline_mode<synchronous>, transform_indices = @transform_4, window_bounds = array<i64: 1, 256>}, {pipeline_mode = #tpu.pipeline_mode<synchronous>, transform_indices = @transform_5, window_bounds = array<i64: 2048, 64>}, {pipeline_mode = #tpu.pipeline_mode<synchronous>, transform_indices = @transform_6, window_bounds = array<i64: 1, 64>}, {pipeline_mode = #tpu.pipeline_mode<synchronous>, transform_indices = @transform_7, window_bounds = array<i64: 64, 64>}, {pipeline_mode = #tpu.pipeline_mode<synchronous>, transform_indices = @transform_8, window_bounds = array<i64: 1, 64>}, {pipeline_mode = #tpu.pipeline_mode<synchronous>, transform_indices = @transform_9, window_bounds = array<i64: 64, 256>}, {pipeline_mode = #tpu.pipeline_mode<synchronous>, transform_indices = @transform_10, window_bounds = array<i64: 64, 256>}, {pipeline_mode = #tpu.pipeline_mode<synchronous>, transform_indices = @transform_11, window_bounds = array<i64: 1, 256>}, {pipeline_mode = #tpu.pipeline_mode<synchronous>, transform_indices = @transform_12, window_bounds = array<i64: 64, 32>}, {pipeline_mode = #tpu.pipeline_mode<synchronous>, transform_indices = @transform_13, window_bounds = array<i64: 1, 32>}, {pipeline_mode = #tpu.pipeline_mode<synchronous>, transform_indices = @transform_14, window_bounds = array<i64: 2, 32>}]} {
    %c0 = arith.constant 0 : index
    %c0_0 = arith.constant 0 : index
    %0 = vector.load %arg1[%c0, %c0_0] : memref<2x1xi32, #tpu.memory_space<vmem>>, vector<2x1xi32>
    %c1_i32 = arith.constant 1 : i32
    %1 = vector.broadcast %c1_i32 : i32 to vector<2x1xi32>
    %2 = arith.subi %0, %1 : vector<2x1xi32>
    %c0_1 = arith.constant 0 : index
    %c0_2 = arith.constant 0 : index
    %3 = vector.load %arg2[%c0_1, %c0_2] : memref<32x2048xbf16, #tpu.memory_space<vmem>>, vector<32x2048xbf16>
    %c0_3 = arith.constant 0 : index
    %c0_4 = arith.constant 0 : index
    %4 = vector.load %arg3[%c0_3, %c0_4] : memref<2048x256xbf16, #tpu.memory_space<vmem>>, vector<2048x256xbf16>
    %cst = arith.constant dense<0.000000e+00> : vector<32x256xf32>
    %5 = tpu.matmul %3, %4, %cst {dimension_numbers = #tpu.dot_dimension_numbers<[1], [0], [0], [1], [0, 0, 1, 1], [], []>} : vector<32x2048xbf16>, vector<2048x256xbf16>, vector<32x256xf32> -> vector<32x256xf32>
    %c0_5 = arith.constant 0 : index
    %c0_6 = arith.constant 0 : index
    %6 = vector.load %arg5[%c0_5, %c0_6] : memref<1x256xf32, #tpu.memory_space<vmem>>, vector<1x256xf32>
    %7 = vector.broadcast %6 : vector<1x256xf32> to vector<32x256xf32>
    %8 = arith.addf %5, %7 : vector<32x256xf32>
    %c0_7 = arith.constant 0 : index
    %c0_8 = arith.constant 0 : index
    %9 = vector.load %arg16[%c0_7, %c0_8] : memref<32x256xf32, #tpu.memory_space<vmem>>, vector<32x256xf32>
    tpu.vector_store %arg16[%c0_7, %c0_8], %8 {strides = array<i32>} : memref<32x256xf32, #tpu.memory_space<vmem>>, vector<32x256xf32>,
    %c0_9 = arith.constant 0 : index
    %c0_10 = arith.constant 0 : index
    %10 = vector.load %arg6[%c0_9, %c0_10] : memref<2048x64xbf16, #tpu.memory_space<vmem>>, vector<2048x64xbf16>
    %cst_11 = arith.constant dense<0.000000e+00> : vector<32x64xf32>
    %11 = tpu.matmul %3, %10, %cst_11 {dimension_numbers = #tpu.dot_dimension_numbers<[1], [0], [0], [1], [0, 0, 1, 1], [], []>} : vector<32x2048xbf16>, vector<2048x64xbf16>, vector<32x64xf32> -> vector<32x64xf32>
    %c0_12 = arith.constant 0 : index
    %c0_13 = arith.constant 0 : index
    %12 = vector.load %arg7[%c0_12, %c0_13] : memref<1x64xf32, #tpu.memory_space<vmem>>, vector<1x64xf32>
    %13 = vector.broadcast %12 : vector<1x64xf32> to vector<32x64xf32>
    %14 = arith.addf %11, %13 : vector<32x64xf32>
    %cst_14 = arith.constant 0.000000e+00 : f32
    %15 = vector.broadcast %cst_14 : f32 to vector<32x64xf32>
    %16 = arith.maximumf %14, %15 : vector<32x64xf32>
    %17 = arith.truncf %16 : vector<32x64xf32> to vector<32x64xbf16>
    %c0_15 = arith.constant 0 : index
    %c0_16 = arith.constant 0 : index
    %18 = vector.load %arg8[%c0_15, %c0_16] : memref<64x64xbf16, #tpu.memory_space<vmem>>, vector<64x64xbf16>
    %cst_17 = arith.constant dense<0.000000e+00> : vector<32x64xf32>
    %19 = tpu.matmul %17, %18, %cst_17 {dimension_numbers = #tpu.dot_dimension_numbers<[1], [0], [0], [1], [0, 0, 1, 1], [], []>} : vector<32x64xbf16>, vector<64x64xbf16>, vector<32x64xf32> -> vector<32x64xf32>
    %c0_18 = arith.constant 0 : index
    %c0_19 = arith.constant 0 : index
    %20 = vector.load %arg9[%c0_18, %c0_19] : memref<1x64xf32, #tpu.memory_space<vmem>>, vector<1x64xf32>
    %21 = vector.broadcast %20 : vector<1x64xf32> to vector<32x64xf32>
    %22 = arith.addf %19, %21 : vector<32x64xf32>
    %cst_20 = arith.constant dense<0xFF800000> : vector<32xf32>
    %23 = vector.multi_reduction <maximumf>, %22, %cst_20 [1] : vector<32x64xf32> to vector<32xf32>
    %24 = vector.shape_cast %23 : vector<32xf32> to vector<32x1xf32>
    %25 = vector.broadcast %24 : vector<32x1xf32> to vector<32x64xf32>
    %26 = arith.subf %22, %25 : vector<32x64xf32>
    %27 = math.exp %26 : vector<32x64xf32>
    %cst_21 = arith.constant dense<0.000000e+00> : vector<32xf32>
    %28 = vector.multi_reduction <add>, %27, %cst_21 [1] : vector<32x64xf32> to vector<32xf32>
    %29 = vector.shape_cast %28 : vector<32xf32> to vector<32x1xf32>
    %30 = tpu.reciprocal %29 {approx = true} : vector<32x1xf32> -> vector<32x1xf32>
    %31 = vector.broadcast %30 : vector<32x1xf32> to vector<32x64xf32>
    %32 = arith.mulf %27, %31 : vector<32x64xf32>
    %33 = arith.mulf %32, %14 : vector<32x64xf32>
    %34 = arith.truncf %33 : vector<32x64xf32> to vector<32x64xbf16>
    %c0_22 = arith.constant 0 : index
    %c0_23 = arith.constant 0 : index
    %35 = vector.load %arg10[%c0_22, %c0_23] : memref<64x256xbf16, #tpu.memory_space<vmem>>, vector<64x256xbf16>
    %cst_24 = arith.constant dense<0.000000e+00> : vector<32x256xf32>
    %36 = tpu.matmul %34, %35, %cst_24 {dimension_numbers = #tpu.dot_dimension_numbers<[1], [0], [0], [1], [0, 0, 1, 1], [], []>} : vector<32x64xbf16>, vector<64x256xbf16>, vector<32x256xf32> -> vector<32x256xf32>
    %c0_25 = arith.constant 0 : index
    %c0_26 = arith.constant 0 : index
    %37 = vector.load %arg12[%c0_25, %c0_26] : memref<1x256xf32, #tpu.memory_space<vmem>>, vector<1x256xf32>
    %38 = vector.broadcast %37 : vector<1x256xf32> to vector<32x256xf32>
    %39 = arith.addf %36, %38 : vector<32x256xf32>
    %c0_27 = arith.constant 0 : index
    %c0_28 = arith.constant 0 : index
    %40 = vector.load %arg17[%c0_27, %c0_28] : memref<32x256xf32, #tpu.memory_space<vmem>>, vector<32x256xf32>
    tpu.vector_store %arg17[%c0_27, %c0_28], %39 {strides = array<i32>} : memref<32x256xf32, #tpu.memory_space<vmem>>, vector<32x256xf32>,
    %41 = tpu.iota {dimensions = array<i32: 1>} : vector<2x256xi32>
    %c128_i32 = arith.constant 128 : i32
    %42 = vector.broadcast %c128_i32 : i32 to vector<2x256xi32>
    %43 = arith.cmpi sge, %41, %42 : vector<2x256xi32>
    %c192_i32 = arith.constant 192 : i32
    %44 = vector.broadcast %c192_i32 : i32 to vector<2x256xi32>
    %45 = arith.cmpi slt, %41, %44 : vector<2x256xi32>
    %46 = arith.andi %43, %45 : vector<2x256xi1>
    %c0_29 = arith.constant 0 : index
    %c0_30 = arith.constant 0 : index
    %47 = vector.load %arg4[%c0_29, %c0_30] : memref<64x256xbf16, #tpu.memory_space<vmem>>, vector<64x256xbf16>
    %c0_31 = arith.constant 0 : index
    %c0_32 = arith.constant 0 : index
    %48 = vector.load %arg11[%c0_31, %c0_32] : memref<64x256xbf16, #tpu.memory_space<vmem>>, vector<64x256xbf16>
    %cst_33 = arith.constant 0.000000e+00 : f32
    %49 = vector.broadcast %cst_33 : f32 to vector<2x64xf32>
    %c0_i32 = arith.constant 0 : i32
    %c2_i32 = arith.constant 2 : i32
    %50 = arith.muli %c0_i32, %c2_i32 : i32
    %51 = arith.index_cast %50 : i32 to index
    %c0_34 = arith.constant 0 : index
    %52 = vector.load %arg16[%51, %c0_34] : memref<32x256xf32, #tpu.memory_space<vmem>>, vector<2x256xf32>
    %53 = arith.truncf %49 : vector<2x64xf32> to vector<2x64xbf16>
    %cst_35 = arith.constant dense<0.000000e+00> : vector<2x256xf32>
    %54 = tpu.matmul %53, %47, %cst_35 {dimension_numbers = #tpu.dot_dimension_numbers<[1], [0], [0], [1], [0, 0, 1, 1], [], []>} : vector<2x64xbf16>, vector<64x256xbf16>, vector<2x256xf32> -> vector<2x256xf32>
    %55 = arith.addf %52, %54 : vector<2x256xf32>
    %56 = math.tanh %55 : vector<2x256xf32>
    %57 = arith.negf %55 : vector<2x256xf32>
    %58 = math.exp %57 : vector<2x256xf32>
    %cst_36 = arith.constant 1.000000e+00 : f32
    %59 = vector.broadcast %cst_36 : f32 to vector<2x256xf32>
    %60 = arith.addf %59, %58 : vector<2x256xf32>
    %61 = arith.divf %59, %60 : vector<2x256xf32>
    %62 = arith.select %46, %56, %61 : vector<2x256xi1>, vector<2x256xf32>
    %63 = vector.extract_strided_slice %62 {offsets = [0, 0], sizes = [2, 64], strides = [1, 1]} : vector<2x256xf32> to vector<2x64xf32>
    %64 = vector.extract_strided_slice %62 {offsets = [0, 64], sizes = [2, 64], strides = [1, 1]} : vector<2x256xf32> to vector<2x64xf32>
    %65 = vector.extract_strided_slice %62 {offsets = [0, 128], sizes = [2, 64], strides = [1, 1]} : vector<2x256xf32> to vector<2x64xf32>
    %66 = vector.extract_strided_slice %62 {offsets = [0, 192], sizes = [2, 64], strides = [1, 1]} : vector<2x256xf32> to vector<2x64xf32>
    %67 = arith.mulf %64, %49 : vector<2x64xf32>
    %68 = arith.mulf %63, %65 : vector<2x64xf32>
    %69 = arith.addf %67, %68 : vector<2x64xf32>
    %70 = math.tanh %69 : vector<2x64xf32>
    %71 = arith.mulf %66, %70 : vector<2x64xf32>
    %72 = vector.broadcast %c0_i32 : i32 to vector<2x1xi32>
    %73 = arith.cmpi eq, %72, %2 : vector<2x1xi32>
    %74 = vector.shape_cast %73 : vector<2x1xi1> to vector<2x1xi1>
    %75 = vector.broadcast %74 : vector<2x1xi1> to vector<2x64xi1>
    %76 = arith.select %75, %71, %49 : vector<2x64xi1>, vector<2x64xf32>
    %c1_i32_37 = arith.constant 1 : i32
    %c2_i32_38 = arith.constant 2 : i32
    %77 = arith.muli %c1_i32_37, %c2_i32_38 : i32
    %78 = arith.index_cast %77 : i32 to index
    %c0_39 = arith.constant 0 : index
    %79 = vector.load %arg16[%78, %c0_39] : memref<32x256xf32, #tpu.memory_space<vmem>>, vector<2x256xf32>
    %80 = arith.truncf %71 : vector<2x64xf32> to vector<2x64xbf16>
    %cst_40 = arith.constant dense<0.000000e+00> : vector<2x256xf32>
    %81 = tpu.matmul %80, %47, %cst_40 {dimension_numbers = #tpu.dot_dimension_numbers<[1], [0], [0], [1], [0, 0, 1, 1], [], []>} : vector<2x64xbf16>, vector<64x256xbf16>, vector<2x256xf32> -> vector<2x256xf32>
    %82 = arith.addf %79, %81 : vector<2x256xf32>
    %83 = math.tanh %82 : vector<2x256xf32>
    %84 = arith.negf %82 : vector<2x256xf32>
    %85 = math.exp %84 : vector<2x256xf32>
    %cst_41 = arith.constant 1.000000e+00 : f32
    %86 = vector.broadcast %cst_41 : f32 to vector<2x256xf32>
    %87 = arith.addf %86, %85 : vector<2x256xf32>
    %88 = arith.divf %86, %87 : vector<2x256xf32>
    %89 = arith.select %46, %83, %88 : vector<2x256xi1>, vector<2x256xf32>
    %90 = vector.extract_strided_slice %89 {offsets = [0, 0], sizes = [2, 64], strides = [1, 1]} : vector<2x256xf32> to vector<2x64xf32>
    %91 = vector.extract_strided_slice %89 {offsets = [0, 64], sizes = [2, 64], strides = [1, 1]} : vector<2x256xf32> to vector<2x64xf32>
    %92 = vector.extract_strided_slice %89 {offsets = [0, 128], sizes = [2, 64], strides = [1, 1]} : vector<2x256xf32> to vector<2x64xf32>
    %93 = vector.extract_strided_slice %89 {offsets = [0, 192], sizes = [2, 64], strides = [1, 1]} : vector<2x256xf32> to vector<2x64xf32>
    %94 = arith.mulf %91, %69 : vector<2x64xf32>
    %95 = arith.mulf %90, %92 : vector<2x64xf32>
    %96 = arith.addf %94, %95 : vector<2x64xf32>
    %97 = math.tanh %96 : vector<2x64xf32>
    %98 = arith.mulf %93, %97 : vector<2x64xf32>
    %99 = vector.broadcast %c1_i32_37 : i32 to vector<2x1xi32>
    %100 = arith.cmpi eq, %99, %2 : vector<2x1xi32>
    %101 = vector.shape_cast %100 : vector<2x1xi1> to vector<2x1xi1>
    %102 = vector.broadcast %101 : vector<2x1xi1> to vector<2x64xi1>
    %103 = arith.select %102, %98, %76 : vector<2x64xi1>, vector<2x64xf32>
    %c2_i32_42 = arith.constant 2 : i32
    %c2_i32_43 = arith.constant 2 : i32
    %104 = arith.muli %c2_i32_42, %c2_i32_43 : i32
    %105 = arith.index_cast %104 : i32 to index
    %c0_44 = arith.constant 0 : index
    %106 = vector.load %arg16[%105, %c0_44] : memref<32x256xf32, #tpu.memory_space<vmem>>, vector<2x256xf32>
    %107 = arith.truncf %98 : vector<2x64xf32> to vector<2x64xbf16>
    %cst_45 = arith.constant dense<0.000000e+00> : vector<2x256xf32>
    %108 = tpu.matmul %107, %47, %cst_45 {dimension_numbers = #tpu.dot_dimension_numbers<[1], [0], [0], [1], [0, 0, 1, 1], [], []>} : vector<2x64xbf16>, vector<64x256xbf16>, vector<2x256xf32> -> vector<2x256xf32>
    %109 = arith.addf %106, %108 : vector<2x256xf32>
    %110 = math.tanh %109 : vector<2x256xf32>
    %111 = arith.negf %109 : vector<2x256xf32>
    %112 = math.exp %111 : vector<2x256xf32>
    %cst_46 = arith.constant 1.000000e+00 : f32
    %113 = vector.broadcast %cst_46 : f32 to vector<2x256xf32>
    %114 = arith.addf %113, %112 : vector<2x256xf32>
    %115 = arith.divf %113, %114 : vector<2x256xf32>
    %116 = arith.select %46, %110, %115 : vector<2x256xi1>, vector<2x256xf32>
    %117 = vector.extract_strided_slice %116 {offsets = [0, 0], sizes = [2, 64], strides = [1, 1]} : vector<2x256xf32> to vector<2x64xf32>
    %118 = vector.extract_strided_slice %116 {offsets = [0, 64], sizes = [2, 64], strides = [1, 1]} : vector<2x256xf32> to vector<2x64xf32>
    %119 = vector.extract_strided_slice %116 {offsets = [0, 128], sizes = [2, 64], strides = [1, 1]} : vector<2x256xf32> to vector<2x64xf32>
    %120 = vector.extract_strided_slice %116 {offsets = [0, 192], sizes = [2, 64], strides = [1, 1]} : vector<2x256xf32> to vector<2x64xf32>
    %121 = arith.mulf %118, %96 : vector<2x64xf32>
    %122 = arith.mulf %117, %119 : vector<2x64xf32>
    %123 = arith.addf %121, %122 : vector<2x64xf32>
    %124 = math.tanh %123 : vector<2x64xf32>
    %125 = arith.mulf %120, %124 : vector<2x64xf32>
    %126 = vector.broadcast %c2_i32_42 : i32 to vector<2x1xi32>
    %127 = arith.cmpi eq, %126, %2 : vector<2x1xi32>
    %128 = vector.shape_cast %127 : vector<2x1xi1> to vector<2x1xi1>
    %129 = vector.broadcast %128 : vector<2x1xi1> to vector<2x64xi1>
    %130 = arith.select %129, %125, %103 : vector<2x64xi1>, vector<2x64xf32>
    %c3_i32 = arith.constant 3 : i32
    %c2_i32_47 = arith.constant 2 : i32
    %131 = arith.muli %c3_i32, %c2_i32_47 : i32
    %132 = arith.index_cast %131 : i32 to index
    %c0_48 = arith.constant 0 : index
    %133 = vector.load %arg16[%132, %c0_48] : memref<32x256xf32, #tpu.memory_space<vmem>>, vector<2x256xf32>
    %134 = arith.truncf %125 : vector<2x64xf32> to vector<2x64xbf16>
    %cst_49 = arith.constant dense<0.000000e+00> : vector<2x256xf32>
    %135 = tpu.matmul %134, %47, %cst_49 {dimension_numbers = #tpu.dot_dimension_numbers<[1], [0], [0], [1], [0, 0, 1, 1], [], []>} : vector<2x64xbf16>, vector<64x256xbf16>, vector<2x256xf32> -> vector<2x256xf32>
    %136 = arith.addf %133, %135 : vector<2x256xf32>
    %137 = math.tanh %136 : vector<2x256xf32>
    %138 = arith.negf %136 : vector<2x256xf32>
    %139 = math.exp %138 : vector<2x256xf32>
    %cst_50 = arith.constant 1.000000e+00 : f32
    %140 = vector.broadcast %cst_50 : f32 to vector<2x256xf32>
    %141 = arith.addf %140, %139 : vector<2x256xf32>
    %142 = arith.divf %140, %141 : vector<2x256xf32>
    %143 = arith.select %46, %137, %142 : vector<2x256xi1>, vector<2x256xf32>
    %144 = vector.extract_strided_slice %143 {offsets = [0, 0], sizes = [2, 64], strides = [1, 1]} : vector<2x256xf32> to vector<2x64xf32>
    %145 = vector.extract_strided_slice %143 {offsets = [0, 64], sizes = [2, 64], strides = [1, 1]} : vector<2x256xf32> to vector<2x64xf32>
    %146 = vector.extract_strided_slice %143 {offsets = [0, 128], sizes = [2, 64], strides = [1, 1]} : vector<2x256xf32> to vector<2x64xf32>
    %147 = vector.extract_strided_slice %143 {offsets = [0, 192], sizes = [2, 64], strides = [1, 1]} : vector<2x256xf32> to vector<2x64xf32>
    %148 = arith.mulf %145, %123 : vector<2x64xf32>
    %149 = arith.mulf %144, %146 : vector<2x64xf32>
    %150 = arith.addf %148, %149 : vector<2x64xf32>
    %151 = math.tanh %150 : vector<2x64xf32>
    %152 = arith.mulf %147, %151 : vector<2x64xf32>
    %153 = vector.broadcast %c3_i32 : i32 to vector<2x1xi32>
    %154 = arith.cmpi eq, %153, %2 : vector<2x1xi32>
    %155 = vector.shape_cast %154 : vector<2x1xi1> to vector<2x1xi1>
    %156 = vector.broadcast %155 : vector<2x1xi1> to vector<2x64xi1>
    %157 = arith.select %156, %152, %130 : vector<2x64xi1>, vector<2x64xf32>
    %c4_i32 = arith.constant 4 : i32
    %c2_i32_51 = arith.constant 2 : i32
    %158 = arith.muli %c4_i32, %c2_i32_51 : i32
    %159 = arith.index_cast %158 : i32 to index
    %c0_52 = arith.constant 0 : index
    %160 = vector.load %arg16[%159, %c0_52] : memref<32x256xf32, #tpu.memory_space<vmem>>, vector<2x256xf32>
    %161 = arith.truncf %152 : vector<2x64xf32> to vector<2x64xbf16>
    %cst_53 = arith.constant dense<0.000000e+00> : vector<2x256xf32>
    %162 = tpu.matmul %161, %47, %cst_53 {dimension_numbers = #tpu.dot_dimension_numbers<[1], [0], [0], [1], [0, 0, 1, 1], [], []>} : vector<2x64xbf16>, vector<64x256xbf16>, vector<2x256xf32> -> vector<2x256xf32>
    %163 = arith.addf %160, %162 : vector<2x256xf32>
    %164 = math.tanh %163 : vector<2x256xf32>
    %165 = arith.negf %163 : vector<2x256xf32>
    %166 = math.exp %165 : vector<2x256xf32>
    %cst_54 = arith.constant 1.000000e+00 : f32
    %167 = vector.broadcast %cst_54 : f32 to vector<2x256xf32>
    %168 = arith.addf %167, %166 : vector<2x256xf32>
    %169 = arith.divf %167, %168 : vector<2x256xf32>
    %170 = arith.select %46, %164, %169 : vector<2x256xi1>, vector<2x256xf32>
    %171 = vector.extract_strided_slice %170 {offsets = [0, 0], sizes = [2, 64], strides = [1, 1]} : vector<2x256xf32> to vector<2x64xf32>
    %172 = vector.extract_strided_slice %170 {offsets = [0, 64], sizes = [2, 64], strides = [1, 1]} : vector<2x256xf32> to vector<2x64xf32>
    %173 = vector.extract_strided_slice %170 {offsets = [0, 128], sizes = [2, 64], strides = [1, 1]} : vector<2x256xf32> to vector<2x64xf32>
    %174 = vector.extract_strided_slice %170 {offsets = [0, 192], sizes = [2, 64], strides = [1, 1]} : vector<2x256xf32> to vector<2x64xf32>
    %175 = arith.mulf %172, %150 : vector<2x64xf32>
    %176 = arith.mulf %171, %173 : vector<2x64xf32>
    %177 = arith.addf %175, %176 : vector<2x64xf32>
    %178 = math.tanh %177 : vector<2x64xf32>
    %179 = arith.mulf %174, %178 : vector<2x64xf32>
    %180 = vector.broadcast %c4_i32 : i32 to vector<2x1xi32>
    %181 = arith.cmpi eq, %180, %2 : vector<2x1xi32>
    %182 = vector.shape_cast %181 : vector<2x1xi1> to vector<2x1xi1>
    %183 = vector.broadcast %182 : vector<2x1xi1> to vector<2x64xi1>
    %184 = arith.select %183, %179, %157 : vector<2x64xi1>, vector<2x64xf32>
    %c5_i32 = arith.constant 5 : i32
    %c2_i32_55 = arith.constant 2 : i32
    %185 = arith.muli %c5_i32, %c2_i32_55 : i32
    %186 = arith.index_cast %185 : i32 to index
    %c0_56 = arith.constant 0 : index
    %187 = vector.load %arg16[%186, %c0_56] : memref<32x256xf32, #tpu.memory_space<vmem>>, vector<2x256xf32>
    %188 = arith.truncf %179 : vector<2x64xf32> to vector<2x64xbf16>
    %cst_57 = arith.constant dense<0.000000e+00> : vector<2x256xf32>
    %189 = tpu.matmul %188, %47, %cst_57 {dimension_numbers = #tpu.dot_dimension_numbers<[1], [0], [0], [1], [0, 0, 1, 1], [], []>} : vector<2x64xbf16>, vector<64x256xbf16>, vector<2x256xf32> -> vector<2x256xf32>
    %190 = arith.addf %187, %189 : vector<2x256xf32>
    %191 = math.tanh %190 : vector<2x256xf32>
    %192 = arith.negf %190 : vector<2x256xf32>
    %193 = math.exp %192 : vector<2x256xf32>
    %cst_58 = arith.constant 1.000000e+00 : f32
    %194 = vector.broadcast %cst_58 : f32 to vector<2x256xf32>
    %195 = arith.addf %194, %193 : vector<2x256xf32>
    %196 = arith.divf %194, %195 : vector<2x256xf32>
    %197 = arith.select %46, %191, %196 : vector<2x256xi1>, vector<2x256xf32>
    %198 = vector.extract_strided_slice %197 {offsets = [0, 0], sizes = [2, 64], strides = [1, 1]} : vector<2x256xf32> to vector<2x64xf32>
    %199 = vector.extract_strided_slice %197 {offsets = [0, 64], sizes = [2, 64], strides = [1, 1]} : vector<2x256xf32> to vector<2x64xf32>
    %200 = vector.extract_strided_slice %197 {offsets = [0, 128], sizes = [2, 64], strides = [1, 1]} : vector<2x256xf32> to vector<2x64xf32>
    %201 = vector.extract_strided_slice %197 {offsets = [0, 192], sizes = [2, 64], strides = [1, 1]} : vector<2x256xf32> to vector<2x64xf32>
    %202 = arith.mulf %199, %177 : vector<2x64xf32>
    %203 = arith.mulf %198, %200 : vector<2x64xf32>
    %204 = arith.addf %202, %203 : vector<2x64xf32>
    %205 = math.tanh %204 : vector<2x64xf32>
    %206 = arith.mulf %201, %205 : vector<2x64xf32>
    %207 = vector.broadcast %c5_i32 : i32 to vector<2x1xi32>
    %208 = arith.cmpi eq, %207, %2 : vector<2x1xi32>
    %209 = vector.shape_cast %208 : vector<2x1xi1> to vector<2x1xi1>
    %210 = vector.broadcast %209 : vector<2x1xi1> to vector<2x64xi1>
    %211 = arith.select %210, %206, %184 : vector<2x64xi1>, vector<2x64xf32>
    %c6_i32 = arith.constant 6 : i32
    %c2_i32_59 = arith.constant 2 : i32
    %212 = arith.muli %c6_i32, %c2_i32_59 : i32
    %213 = arith.index_cast %212 : i32 to index
    %c0_60 = arith.constant 0 : index
    %214 = vector.load %arg16[%213, %c0_60] : memref<32x256xf32, #tpu.memory_space<vmem>>, vector<2x256xf32>
    %215 = arith.truncf %206 : vector<2x64xf32> to vector<2x64xbf16>
    %cst_61 = arith.constant dense<0.000000e+00> : vector<2x256xf32>
    %216 = tpu.matmul %215, %47, %cst_61 {dimension_numbers = #tpu.dot_dimension_numbers<[1], [0], [0], [1], [0, 0, 1, 1], [], []>} : vector<2x64xbf16>, vector<64x256xbf16>, vector<2x256xf32> -> vector<2x256xf32>
    %217 = arith.addf %214, %216 : vector<2x256xf32>
    %218 = math.tanh %217 : vector<2x256xf32>
    %219 = arith.negf %217 : vector<2x256xf32>
    %220 = math.exp %219 : vector<2x256xf32>
    %cst_62 = arith.constant 1.000000e+00 : f32
    %221 = vector.broadcast %cst_62 : f32 to vector<2x256xf32>
    %222 = arith.addf %221, %220 : vector<2x256xf32>
    %223 = arith.divf %221, %222 : vector<2x256xf32>
    %224 = arith.select %46, %218, %223 : vector<2x256xi1>, vector<2x256xf32>
    %225 = vector.extract_strided_slice %224 {offsets = [0, 0], sizes = [2, 64], strides = [1, 1]} : vector<2x256xf32> to vector<2x64xf32>
    %226 = vector.extract_strided_slice %224 {offsets = [0, 64], sizes = [2, 64], strides = [1, 1]} : vector<2x256xf32> to vector<2x64xf32>
    %227 = vector.extract_strided_slice %224 {offsets = [0, 128], sizes = [2, 64], strides = [1, 1]} : vector<2x256xf32> to vector<2x64xf32>
    %228 = vector.extract_strided_slice %224 {offsets = [0, 192], sizes = [2, 64], strides = [1, 1]} : vector<2x256xf32> to vector<2x64xf32>
    %229 = arith.mulf %226, %204 : vector<2x64xf32>
    %230 = arith.mulf %225, %227 : vector<2x64xf32>
    %231 = arith.addf %229, %230 : vector<2x64xf32>
    %232 = math.tanh %231 : vector<2x64xf32>
    %233 = arith.mulf %228, %232 : vector<2x64xf32>
    %234 = vector.broadcast %c6_i32 : i32 to vector<2x1xi32>
    %235 = arith.cmpi eq, %234, %2 : vector<2x1xi32>
    %236 = vector.shape_cast %235 : vector<2x1xi1> to vector<2x1xi1>
    %237 = vector.broadcast %236 : vector<2x1xi1> to vector<2x64xi1>
    %238 = arith.select %237, %233, %211 : vector<2x64xi1>, vector<2x64xf32>
    %c7_i32 = arith.constant 7 : i32
    %c2_i32_63 = arith.constant 2 : i32
    %239 = arith.muli %c7_i32, %c2_i32_63 : i32
    %240 = arith.index_cast %239 : i32 to index
    %c0_64 = arith.constant 0 : index
    %241 = vector.load %arg16[%240, %c0_64] : memref<32x256xf32, #tpu.memory_space<vmem>>, vector<2x256xf32>
    %242 = arith.truncf %233 : vector<2x64xf32> to vector<2x64xbf16>
    %cst_65 = arith.constant dense<0.000000e+00> : vector<2x256xf32>
    %243 = tpu.matmul %242, %47, %cst_65 {dimension_numbers = #tpu.dot_dimension_numbers<[1], [0], [0], [1], [0, 0, 1, 1], [], []>} : vector<2x64xbf16>, vector<64x256xbf16>, vector<2x256xf32> -> vector<2x256xf32>
    %244 = arith.addf %241, %243 : vector<2x256xf32>
    %245 = math.tanh %244 : vector<2x256xf32>
    %246 = arith.negf %244 : vector<2x256xf32>
    %247 = math.exp %246 : vector<2x256xf32>
    %cst_66 = arith.constant 1.000000e+00 : f32
    %248 = vector.broadcast %cst_66 : f32 to vector<2x256xf32>
    %249 = arith.addf %248, %247 : vector<2x256xf32>
    %250 = arith.divf %248, %249 : vector<2x256xf32>
    %251 = arith.select %46, %245, %250 : vector<2x256xi1>, vector<2x256xf32>
    %252 = vector.extract_strided_slice %251 {offsets = [0, 0], sizes = [2, 64], strides = [1, 1]} : vector<2x256xf32> to vector<2x64xf32>
    %253 = vector.extract_strided_slice %251 {offsets = [0, 64], sizes = [2, 64], strides = [1, 1]} : vector<2x256xf32> to vector<2x64xf32>
    %254 = vector.extract_strided_slice %251 {offsets = [0, 128], sizes = [2, 64], strides = [1, 1]} : vector<2x256xf32> to vector<2x64xf32>
    %255 = vector.extract_strided_slice %251 {offsets = [0, 192], sizes = [2, 64], strides = [1, 1]} : vector<2x256xf32> to vector<2x64xf32>
    %256 = arith.mulf %253, %231 : vector<2x64xf32>
    %257 = arith.mulf %252, %254 : vector<2x64xf32>
    %258 = arith.addf %256, %257 : vector<2x64xf32>
    %259 = math.tanh %258 : vector<2x64xf32>
    %260 = arith.mulf %255, %259 : vector<2x64xf32>
    %261 = vector.broadcast %c7_i32 : i32 to vector<2x1xi32>
    %262 = arith.cmpi eq, %261, %2 : vector<2x1xi32>
    %263 = vector.shape_cast %262 : vector<2x1xi1> to vector<2x1xi1>
    %264 = vector.broadcast %263 : vector<2x1xi1> to vector<2x64xi1>
    %265 = arith.select %264, %260, %238 : vector<2x64xi1>, vector<2x64xf32>
    %c8_i32 = arith.constant 8 : i32
    %c2_i32_67 = arith.constant 2 : i32
    %266 = arith.muli %c8_i32, %c2_i32_67 : i32
    %267 = arith.index_cast %266 : i32 to index
    %c0_68 = arith.constant 0 : index
    %268 = vector.load %arg16[%267, %c0_68] : memref<32x256xf32, #tpu.memory_space<vmem>>, vector<2x256xf32>
    %269 = arith.truncf %260 : vector<2x64xf32> to vector<2x64xbf16>
    %cst_69 = arith.constant dense<0.000000e+00> : vector<2x256xf32>
    %270 = tpu.matmul %269, %47, %cst_69 {dimension_numbers = #tpu.dot_dimension_numbers<[1], [0], [0], [1], [0, 0, 1, 1], [], []>} : vector<2x64xbf16>, vector<64x256xbf16>, vector<2x256xf32> -> vector<2x256xf32>
    %271 = arith.addf %268, %270 : vector<2x256xf32>
    %272 = math.tanh %271 : vector<2x256xf32>
    %273 = arith.negf %271 : vector<2x256xf32>
    %274 = math.exp %273 : vector<2x256xf32>
    %cst_70 = arith.constant 1.000000e+00 : f32
    %275 = vector.broadcast %cst_70 : f32 to vector<2x256xf32>
    %276 = arith.addf %275, %274 : vector<2x256xf32>
    %277 = arith.divf %275, %276 : vector<2x256xf32>
    %278 = arith.select %46, %272, %277 : vector<2x256xi1>, vector<2x256xf32>
    %279 = vector.extract_strided_slice %278 {offsets = [0, 0], sizes = [2, 64], strides = [1, 1]} : vector<2x256xf32> to vector<2x64xf32>
    %280 = vector.extract_strided_slice %278 {offsets = [0, 64], sizes = [2, 64], strides = [1, 1]} : vector<2x256xf32> to vector<2x64xf32>
    %281 = vector.extract_strided_slice %278 {offsets = [0, 128], sizes = [2, 64], strides = [1, 1]} : vector<2x256xf32> to vector<2x64xf32>
    %282 = vector.extract_strided_slice %278 {offsets = [0, 192], sizes = [2, 64], strides = [1, 1]} : vector<2x256xf32> to vector<2x64xf32>
    %283 = arith.mulf %280, %258 : vector<2x64xf32>
    %284 = arith.mulf %279, %281 : vector<2x64xf32>
    %285 = arith.addf %283, %284 : vector<2x64xf32>
    %286 = math.tanh %285 : vector<2x64xf32>
    %287 = arith.mulf %282, %286 : vector<2x64xf32>
    %288 = vector.broadcast %c8_i32 : i32 to vector<2x1xi32>
    %289 = arith.cmpi eq, %288, %2 : vector<2x1xi32>
    %290 = vector.shape_cast %289 : vector<2x1xi1> to vector<2x1xi1>
    %291 = vector.broadcast %290 : vector<2x1xi1> to vector<2x64xi1>
    %292 = arith.select %291, %287, %265 : vector<2x64xi1>, vector<2x64xf32>
    %c9_i32 = arith.constant 9 : i32
    %c2_i32_71 = arith.constant 2 : i32
    %293 = arith.muli %c9_i32, %c2_i32_71 : i32
    %294 = arith.index_cast %293 : i32 to index
    %c0_72 = arith.constant 0 : index
    %295 = vector.load %arg16[%294, %c0_72] : memref<32x256xf32, #tpu.memory_space<vmem>>, vector<2x256xf32>
    %296 = arith.truncf %287 : vector<2x64xf32> to vector<2x64xbf16>
    %cst_73 = arith.constant dense<0.000000e+00> : vector<2x256xf32>
    %297 = tpu.matmul %296, %47, %cst_73 {dimension_numbers = #tpu.dot_dimension_numbers<[1], [0], [0], [1], [0, 0, 1, 1], [], []>} : vector<2x64xbf16>, vector<64x256xbf16>, vector<2x256xf32> -> vector<2x256xf32>
    %298 = arith.addf %295, %297 : vector<2x256xf32>
    %299 = math.tanh %298 : vector<2x256xf32>
    %300 = arith.negf %298 : vector<2x256xf32>
    %301 = math.exp %300 : vector<2x256xf32>
    %cst_74 = arith.constant 1.000000e+00 : f32
    %302 = vector.broadcast %cst_74 : f32 to vector<2x256xf32>
    %303 = arith.addf %302, %301 : vector<2x256xf32>
    %304 = arith.divf %302, %303 : vector<2x256xf32>
    %305 = arith.select %46, %299, %304 : vector<2x256xi1>, vector<2x256xf32>
    %306 = vector.extract_strided_slice %305 {offsets = [0, 0], sizes = [2, 64], strides = [1, 1]} : vector<2x256xf32> to vector<2x64xf32>
    %307 = vector.extract_strided_slice %305 {offsets = [0, 64], sizes = [2, 64], strides = [1, 1]} : vector<2x256xf32> to vector<2x64xf32>
    %308 = vector.extract_strided_slice %305 {offsets = [0, 128], sizes = [2, 64], strides = [1, 1]} : vector<2x256xf32> to vector<2x64xf32>
    %309 = vector.extract_strided_slice %305 {offsets = [0, 192], sizes = [2, 64], strides = [1, 1]} : vector<2x256xf32> to vector<2x64xf32>
    %310 = arith.mulf %307, %285 : vector<2x64xf32>
    %311 = arith.mulf %306, %308 : vector<2x64xf32>
    %312 = arith.addf %310, %311 : vector<2x64xf32>
    %313 = math.tanh %312 : vector<2x64xf32>
    %314 = arith.mulf %309, %313 : vector<2x64xf32>
    %315 = vector.broadcast %c9_i32 : i32 to vector<2x1xi32>
    %316 = arith.cmpi eq, %315, %2 : vector<2x1xi32>
    %317 = vector.shape_cast %316 : vector<2x1xi1> to vector<2x1xi1>
    %318 = vector.broadcast %317 : vector<2x1xi1> to vector<2x64xi1>
    %319 = arith.select %318, %314, %292 : vector<2x64xi1>, vector<2x64xf32>
    %c10_i32 = arith.constant 10 : i32
    %c2_i32_75 = arith.constant 2 : i32
    %320 = arith.muli %c10_i32, %c2_i32_75 : i32
    %321 = arith.index_cast %320 : i32 to index
    %c0_76 = arith.constant 0 : index
    %322 = vector.load %arg16[%321, %c0_76] : memref<32x256xf32, #tpu.memory_space<vmem>>, vector<2x256xf32>
    %323 = arith.truncf %314 : vector<2x64xf32> to vector<2x64xbf16>
    %cst_77 = arith.constant dense<0.000000e+00> : vector<2x256xf32>
    %324 = tpu.matmul %323, %47, %cst_77 {dimension_numbers = #tpu.dot_dimension_numbers<[1], [0], [0], [1], [0, 0, 1, 1], [], []>} : vector<2x64xbf16>, vector<64x256xbf16>, vector<2x256xf32> -> vector<2x256xf32>
    %325 = arith.addf %322, %324 : vector<2x256xf32>
    %326 = math.tanh %325 : vector<2x256xf32>
    %327 = arith.negf %325 : vector<2x256xf32>
    %328 = math.exp %327 : vector<2x256xf32>
    %cst_78 = arith.constant 1.000000e+00 : f32
    %329 = vector.broadcast %cst_78 : f32 to vector<2x256xf32>
    %330 = arith.addf %329, %328 : vector<2x256xf32>
    %331 = arith.divf %329, %330 : vector<2x256xf32>
    %332 = arith.select %46, %326, %331 : vector<2x256xi1>, vector<2x256xf32>
    %333 = vector.extract_strided_slice %332 {offsets = [0, 0], sizes = [2, 64], strides = [1, 1]} : vector<2x256xf32> to vector<2x64xf32>
    %334 = vector.extract_strided_slice %332 {offsets = [0, 64], sizes = [2, 64], strides = [1, 1]} : vector<2x256xf32> to vector<2x64xf32>
    %335 = vector.extract_strided_slice %332 {offsets = [0, 128], sizes = [2, 64], strides = [1, 1]} : vector<2x256xf32> to vector<2x64xf32>
    %336 = vector.extract_strided_slice %332 {offsets = [0, 192], sizes = [2, 64], strides = [1, 1]} : vector<2x256xf32> to vector<2x64xf32>
    %337 = arith.mulf %334, %312 : vector<2x64xf32>
    %338 = arith.mulf %333, %335 : vector<2x64xf32>
    %339 = arith.addf %337, %338 : vector<2x64xf32>
    %340 = math.tanh %339 : vector<2x64xf32>
    %341 = arith.mulf %336, %340 : vector<2x64xf32>
    %342 = vector.broadcast %c10_i32 : i32 to vector<2x1xi32>
    %343 = arith.cmpi eq, %342, %2 : vector<2x1xi32>
    %344 = vector.shape_cast %343 : vector<2x1xi1> to vector<2x1xi1>
    %345 = vector.broadcast %344 : vector<2x1xi1> to vector<2x64xi1>
    %346 = arith.select %345, %341, %319 : vector<2x64xi1>, vector<2x64xf32>
    %c11_i32 = arith.constant 11 : i32
    %c2_i32_79 = arith.constant 2 : i32
    %347 = arith.muli %c11_i32, %c2_i32_79 : i32
    %348 = arith.index_cast %347 : i32 to index
    %c0_80 = arith.constant 0 : index
    %349 = vector.load %arg16[%348, %c0_80] : memref<32x256xf32, #tpu.memory_space<vmem>>, vector<2x256xf32>
    %350 = arith.truncf %341 : vector<2x64xf32> to vector<2x64xbf16>
    %cst_81 = arith.constant dense<0.000000e+00> : vector<2x256xf32>
    %351 = tpu.matmul %350, %47, %cst_81 {dimension_numbers = #tpu.dot_dimension_numbers<[1], [0], [0], [1], [0, 0, 1, 1], [], []>} : vector<2x64xbf16>, vector<64x256xbf16>, vector<2x256xf32> -> vector<2x256xf32>
    %352 = arith.addf %349, %351 : vector<2x256xf32>
    %353 = math.tanh %352 : vector<2x256xf32>
    %354 = arith.negf %352 : vector<2x256xf32>
    %355 = math.exp %354 : vector<2x256xf32>
    %cst_82 = arith.constant 1.000000e+00 : f32
    %356 = vector.broadcast %cst_82 : f32 to vector<2x256xf32>
    %357 = arith.addf %356, %355 : vector<2x256xf32>
    %358 = arith.divf %356, %357 : vector<2x256xf32>
    %359 = arith.select %46, %353, %358 : vector<2x256xi1>, vector<2x256xf32>
    %360 = vector.extract_strided_slice %359 {offsets = [0, 0], sizes = [2, 64], strides = [1, 1]} : vector<2x256xf32> to vector<2x64xf32>
    %361 = vector.extract_strided_slice %359 {offsets = [0, 64], sizes = [2, 64], strides = [1, 1]} : vector<2x256xf32> to vector<2x64xf32>
    %362 = vector.extract_strided_slice %359 {offsets = [0, 128], sizes = [2, 64], strides = [1, 1]} : vector<2x256xf32> to vector<2x64xf32>
    %363 = vector.extract_strided_slice %359 {offsets = [0, 192], sizes = [2, 64], strides = [1, 1]} : vector<2x256xf32> to vector<2x64xf32>
    %364 = arith.mulf %361, %339 : vector<2x64xf32>
    %365 = arith.mulf %360, %362 : vector<2x64xf32>
    %366 = arith.addf %364, %365 : vector<2x64xf32>
    %367 = math.tanh %366 : vector<2x64xf32>
    %368 = arith.mulf %363, %367 : vector<2x64xf32>
    %369 = vector.broadcast %c11_i32 : i32 to vector<2x1xi32>
    %370 = arith.cmpi eq, %369, %2 : vector<2x1xi32>
    %371 = vector.shape_cast %370 : vector<2x1xi1> to vector<2x1xi1>
    %372 = vector.broadcast %371 : vector<2x1xi1> to vector<2x64xi1>
    %373 = arith.select %372, %368, %346 : vector<2x64xi1>, vector<2x64xf32>
    %c12_i32 = arith.constant 12 : i32
    %c2_i32_83 = arith.constant 2 : i32
    %374 = arith.muli %c12_i32, %c2_i32_83 : i32
    %375 = arith.index_cast %374 : i32 to index
    %c0_84 = arith.constant 0 : index
    %376 = vector.load %arg16[%375, %c0_84] : memref<32x256xf32, #tpu.memory_space<vmem>>, vector<2x256xf32>
    %377 = arith.truncf %368 : vector<2x64xf32> to vector<2x64xbf16>
    %cst_85 = arith.constant dense<0.000000e+00> : vector<2x256xf32>
    %378 = tpu.matmul %377, %47, %cst_85 {dimension_numbers = #tpu.dot_dimension_numbers<[1], [0], [0], [1], [0, 0, 1, 1], [], []>} : vector<2x64xbf16>, vector<64x256xbf16>, vector<2x256xf32> -> vector<2x256xf32>
    %379 = arith.addf %376, %378 : vector<2x256xf32>
    %380 = math.tanh %379 : vector<2x256xf32>
    %381 = arith.negf %379 : vector<2x256xf32>
    %382 = math.exp %381 : vector<2x256xf32>
    %cst_86 = arith.constant 1.000000e+00 : f32
    %383 = vector.broadcast %cst_86 : f32 to vector<2x256xf32>
    %384 = arith.addf %383, %382 : vector<2x256xf32>
    %385 = arith.divf %383, %384 : vector<2x256xf32>
    %386 = arith.select %46, %380, %385 : vector<2x256xi1>, vector<2x256xf32>
    %387 = vector.extract_strided_slice %386 {offsets = [0, 0], sizes = [2, 64], strides = [1, 1]} : vector<2x256xf32> to vector<2x64xf32>
    %388 = vector.extract_strided_slice %386 {offsets = [0, 64], sizes = [2, 64], strides = [1, 1]} : vector<2x256xf32> to vector<2x64xf32>
    %389 = vector.extract_strided_slice %386 {offsets = [0, 128], sizes = [2, 64], strides = [1, 1]} : vector<2x256xf32> to vector<2x64xf32>
    %390 = vector.extract_strided_slice %386 {offsets = [0, 192], sizes = [2, 64], strides = [1, 1]} : vector<2x256xf32> to vector<2x64xf32>
    %391 = arith.mulf %388, %366 : vector<2x64xf32>
    %392 = arith.mulf %387, %389 : vector<2x64xf32>
    %393 = arith.addf %391, %392 : vector<2x64xf32>
    %394 = math.tanh %393 : vector<2x64xf32>
    %395 = arith.mulf %390, %394 : vector<2x64xf32>
    %396 = vector.broadcast %c12_i32 : i32 to vector<2x1xi32>
    %397 = arith.cmpi eq, %396, %2 : vector<2x1xi32>
    %398 = vector.shape_cast %397 : vector<2x1xi1> to vector<2x1xi1>
    %399 = vector.broadcast %398 : vector<2x1xi1> to vector<2x64xi1>
    %400 = arith.select %399, %395, %373 : vector<2x64xi1>, vector<2x64xf32>
    %c13_i32 = arith.constant 13 : i32
    %c2_i32_87 = arith.constant 2 : i32
    %401 = arith.muli %c13_i32, %c2_i32_87 : i32
    %402 = arith.index_cast %401 : i32 to index
    %c0_88 = arith.constant 0 : index
    %403 = vector.load %arg16[%402, %c0_88] : memref<32x256xf32, #tpu.memory_space<vmem>>, vector<2x256xf32>
    %404 = arith.truncf %395 : vector<2x64xf32> to vector<2x64xbf16>
    %cst_89 = arith.constant dense<0.000000e+00> : vector<2x256xf32>
    %405 = tpu.matmul %404, %47, %cst_89 {dimension_numbers = #tpu.dot_dimension_numbers<[1], [0], [0], [1], [0, 0, 1, 1], [], []>} : vector<2x64xbf16>, vector<64x256xbf16>, vector<2x256xf32> -> vector<2x256xf32>
    %406 = arith.addf %403, %405 : vector<2x256xf32>
    %407 = math.tanh %406 : vector<2x256xf32>
    %408 = arith.negf %406 : vector<2x256xf32>
    %409 = math.exp %408 : vector<2x256xf32>
    %cst_90 = arith.constant 1.000000e+00 : f32
    %410 = vector.broadcast %cst_90 : f32 to vector<2x256xf32>
    %411 = arith.addf %410, %409 : vector<2x256xf32>
    %412 = arith.divf %410, %411 : vector<2x256xf32>
    %413 = arith.select %46, %407, %412 : vector<2x256xi1>, vector<2x256xf32>
    %414 = vector.extract_strided_slice %413 {offsets = [0, 0], sizes = [2, 64], strides = [1, 1]} : vector<2x256xf32> to vector<2x64xf32>
    %415 = vector.extract_strided_slice %413 {offsets = [0, 64], sizes = [2, 64], strides = [1, 1]} : vector<2x256xf32> to vector<2x64xf32>
    %416 = vector.extract_strided_slice %413 {offsets = [0, 128], sizes = [2, 64], strides = [1, 1]} : vector<2x256xf32> to vector<2x64xf32>
    %417 = vector.extract_strided_slice %413 {offsets = [0, 192], sizes = [2, 64], strides = [1, 1]} : vector<2x256xf32> to vector<2x64xf32>
    %418 = arith.mulf %415, %393 : vector<2x64xf32>
    %419 = arith.mulf %414, %416 : vector<2x64xf32>
    %420 = arith.addf %418, %419 : vector<2x64xf32>
    %421 = math.tanh %420 : vector<2x64xf32>
    %422 = arith.mulf %417, %421 : vector<2x64xf32>
    %423 = vector.broadcast %c13_i32 : i32 to vector<2x1xi32>
    %424 = arith.cmpi eq, %423, %2 : vector<2x1xi32>
    %425 = vector.shape_cast %424 : vector<2x1xi1> to vector<2x1xi1>
    %426 = vector.broadcast %425 : vector<2x1xi1> to vector<2x64xi1>
    %427 = arith.select %426, %422, %400 : vector<2x64xi1>, vector<2x64xf32>
    %c14_i32 = arith.constant 14 : i32
    %c2_i32_91 = arith.constant 2 : i32
    %428 = arith.muli %c14_i32, %c2_i32_91 : i32
    %429 = arith.index_cast %428 : i32 to index
    %c0_92 = arith.constant 0 : index
    %430 = vector.load %arg16[%429, %c0_92] : memref<32x256xf32, #tpu.memory_space<vmem>>, vector<2x256xf32>
    %431 = arith.truncf %422 : vector<2x64xf32> to vector<2x64xbf16>
    %cst_93 = arith.constant dense<0.000000e+00> : vector<2x256xf32>
    %432 = tpu.matmul %431, %47, %cst_93 {dimension_numbers = #tpu.dot_dimension_numbers<[1], [0], [0], [1], [0, 0, 1, 1], [], []>} : vector<2x64xbf16>, vector<64x256xbf16>, vector<2x256xf32> -> vector<2x256xf32>
    %433 = arith.addf %430, %432 : vector<2x256xf32>
    %434 = math.tanh %433 : vector<2x256xf32>
    %435 = arith.negf %433 : vector<2x256xf32>
    %436 = math.exp %435 : vector<2x256xf32>
    %cst_94 = arith.constant 1.000000e+00 : f32
    %437 = vector.broadcast %cst_94 : f32 to vector<2x256xf32>
    %438 = arith.addf %437, %436 : vector<2x256xf32>
    %439 = arith.divf %437, %438 : vector<2x256xf32>
    %440 = arith.select %46, %434, %439 : vector<2x256xi1>, vector<2x256xf32>
    %441 = vector.extract_strided_slice %440 {offsets = [0, 0], sizes = [2, 64], strides = [1, 1]} : vector<2x256xf32> to vector<2x64xf32>
    %442 = vector.extract_strided_slice %440 {offsets = [0, 64], sizes = [2, 64], strides = [1, 1]} : vector<2x256xf32> to vector<2x64xf32>
    %443 = vector.extract_strided_slice %440 {offsets = [0, 128], sizes = [2, 64], strides = [1, 1]} : vector<2x256xf32> to vector<2x64xf32>
    %444 = vector.extract_strided_slice %440 {offsets = [0, 192], sizes = [2, 64], strides = [1, 1]} : vector<2x256xf32> to vector<2x64xf32>
    %445 = arith.mulf %442, %420 : vector<2x64xf32>
    %446 = arith.mulf %441, %443 : vector<2x64xf32>
    %447 = arith.addf %445, %446 : vector<2x64xf32>
    %448 = math.tanh %447 : vector<2x64xf32>
    %449 = arith.mulf %444, %448 : vector<2x64xf32>
    %450 = vector.broadcast %c14_i32 : i32 to vector<2x1xi32>
    %451 = arith.cmpi eq, %450, %2 : vector<2x1xi32>
    %452 = vector.shape_cast %451 : vector<2x1xi1> to vector<2x1xi1>
    %453 = vector.broadcast %452 : vector<2x1xi1> to vector<2x64xi1>
    %454 = arith.select %453, %449, %427 : vector<2x64xi1>, vector<2x64xf32>
    %c15_i32 = arith.constant 15 : i32
    %c2_i32_95 = arith.constant 2 : i32
    %455 = arith.muli %c15_i32, %c2_i32_95 : i32
    %456 = arith.index_cast %455 : i32 to index
    %c0_96 = arith.constant 0 : index
    %457 = vector.load %arg16[%456, %c0_96] : memref<32x256xf32, #tpu.memory_space<vmem>>, vector<2x256xf32>
    %458 = arith.truncf %449 : vector<2x64xf32> to vector<2x64xbf16>
    %cst_97 = arith.constant dense<0.000000e+00> : vector<2x256xf32>
    %459 = tpu.matmul %458, %47, %cst_97 {dimension_numbers = #tpu.dot_dimension_numbers<[1], [0], [0], [1], [0, 0, 1, 1], [], []>} : vector<2x64xbf16>, vector<64x256xbf16>, vector<2x256xf32> -> vector<2x256xf32>
    %460 = arith.addf %457, %459 : vector<2x256xf32>
    %461 = math.tanh %460 : vector<2x256xf32>
    %462 = arith.negf %460 : vector<2x256xf32>
    %463 = math.exp %462 : vector<2x256xf32>
    %cst_98 = arith.constant 1.000000e+00 : f32
    %464 = vector.broadcast %cst_98 : f32 to vector<2x256xf32>
    %465 = arith.addf %464, %463 : vector<2x256xf32>
    %466 = arith.divf %464, %465 : vector<2x256xf32>
    %467 = arith.select %46, %461, %466 : vector<2x256xi1>, vector<2x256xf32>
    %468 = vector.extract_strided_slice %467 {offsets = [0, 0], sizes = [2, 64], strides = [1, 1]} : vector<2x256xf32> to vector<2x64xf32>
    %469 = vector.extract_strided_slice %467 {offsets = [0, 64], sizes = [2, 64], strides = [1, 1]} : vector<2x256xf32> to vector<2x64xf32>
    %470 = vector.extract_strided_slice %467 {offsets = [0, 128], sizes = [2, 64], strides = [1, 1]} : vector<2x256xf32> to vector<2x64xf32>
    %471 = vector.extract_strided_slice %467 {offsets = [0, 192], sizes = [2, 64], strides = [1, 1]} : vector<2x256xf32> to vector<2x64xf32>
    %472 = arith.mulf %469, %447 : vector<2x64xf32>
    %473 = arith.mulf %468, %470 : vector<2x64xf32>
    %474 = arith.addf %472, %473 : vector<2x64xf32>
    %475 = math.tanh %474 : vector<2x64xf32>
    %476 = arith.mulf %471, %475 : vector<2x64xf32>
    %477 = vector.broadcast %c15_i32 : i32 to vector<2x1xi32>
    %478 = arith.cmpi eq, %477, %2 : vector<2x1xi32>
    %479 = vector.shape_cast %478 : vector<2x1xi1> to vector<2x1xi1>
    %480 = vector.broadcast %479 : vector<2x1xi1> to vector<2x64xi1>
    %481 = arith.select %480, %476, %454 : vector<2x64xi1>, vector<2x64xf32>
    %c16_i32 = arith.constant 16 : i32
    %cst_99 = arith.constant 0.000000e+00 : f32
    %482 = vector.broadcast %cst_99 : f32 to vector<2x64xf32>
    %483 = arith.truncf %481 : vector<2x64xf32> to vector<2x64xbf16>
    %c0_100 = arith.constant 0 : index
    %c0_101 = arith.constant 0 : index
    %484 = vector.load %arg10[%c0_100, %c0_101] : memref<64x256xbf16, #tpu.memory_space<vmem>>, vector<64x256xbf16>
    %cst_102 = arith.constant dense<0.000000e+00> : vector<2x256xf32>
    %485 = tpu.matmul %483, %484, %cst_102 {dimension_numbers = #tpu.dot_dimension_numbers<[1], [0], [0], [1], [0, 0, 1, 1], [], []>} : vector<2x64xbf16>, vector<64x256xbf16>, vector<2x256xf32> -> vector<2x256xf32>
    %c0_103 = arith.constant 0 : index
    %c0_104 = arith.constant 0 : index
    %486 = vector.load %arg12[%c0_103, %c0_104] : memref<1x256xf32, #tpu.memory_space<vmem>>, vector<1x256xf32>
    %487 = vector.broadcast %486 : vector<1x256xf32> to vector<2x256xf32>
    %488 = arith.addf %485, %487 : vector<2x256xf32>
    %489 = math.tanh %488 : vector<2x256xf32>
    %490 = arith.negf %488 : vector<2x256xf32>
    %491 = math.exp %490 : vector<2x256xf32>
    %cst_105 = arith.constant 1.000000e+00 : f32
    %492 = vector.broadcast %cst_105 : f32 to vector<2x256xf32>
    %493 = arith.addf %492, %491 : vector<2x256xf32>
    %494 = arith.divf %492, %493 : vector<2x256xf32>
    %495 = arith.select %46, %489, %494 : vector<2x256xi1>, vector<2x256xf32>
    %496 = vector.extract_strided_slice %495 {offsets = [0, 0], sizes = [2, 64], strides = [1, 1]} : vector<2x256xf32> to vector<2x64xf32>
    %497 = vector.extract_strided_slice %495 {offsets = [0, 64], sizes = [2, 64], strides = [1, 1]} : vector<2x256xf32> to vector<2x64xf32>
    %498 = vector.extract_strided_slice %495 {offsets = [0, 128], sizes = [2, 64], strides = [1, 1]} : vector<2x256xf32> to vector<2x64xf32>
    %499 = vector.extract_strided_slice %495 {offsets = [0, 192], sizes = [2, 64], strides = [1, 1]} : vector<2x256xf32> to vector<2x64xf32>
    %500 = arith.mulf %497, %482 : vector<2x64xf32>
    %501 = arith.mulf %496, %498 : vector<2x64xf32>
    %502 = arith.addf %500, %501 : vector<2x64xf32>
    %503 = math.tanh %502 : vector<2x64xf32>
    %504 = arith.mulf %499, %503 : vector<2x64xf32>
    %c0_i32_106 = arith.constant 0 : i32
    %505 = vector.broadcast %c0_i32_106 : i32 to vector<2x1xi32>
    %506 = arith.cmpi eq, %0, %505 : vector<2x1xi32>
    %507 = vector.shape_cast %506 : vector<2x1xi1> to vector<2x1xi1>
    %508 = vector.broadcast %507 : vector<2x1xi1> to vector<2x64xi1>
    %509 = arith.select %508, %504, %482 : vector<2x64xi1>, vector<2x64xf32>
    %c1_i32_107 = arith.constant 1 : i32
    %c1_i32_108 = arith.constant 1 : i32
    %510 = arith.subi %c1_i32_107, %c1_i32_108 : i32
    %c2_i32_109 = arith.constant 2 : i32
    %511 = arith.muli %510, %c2_i32_109 : i32
    %512 = arith.index_cast %511 : i32 to index
    %c0_110 = arith.constant 0 : index
    %513 = vector.load %arg17[%512, %c0_110] : memref<32x256xf32, #tpu.memory_space<vmem>>, vector<2x256xf32>
    %514 = arith.truncf %504 : vector<2x64xf32> to vector<2x64xbf16>
    %cst_111 = arith.constant dense<0.000000e+00> : vector<2x256xf32>
    %515 = tpu.matmul %514, %48, %cst_111 {dimension_numbers = #tpu.dot_dimension_numbers<[1], [0], [0], [1], [0, 0, 1, 1], [], []>} : vector<2x64xbf16>, vector<64x256xbf16>, vector<2x256xf32> -> vector<2x256xf32>
    %516 = arith.addf %513, %515 : vector<2x256xf32>
    %517 = math.tanh %516 : vector<2x256xf32>
    %518 = arith.negf %516 : vector<2x256xf32>
    %519 = math.exp %518 : vector<2x256xf32>
    %cst_112 = arith.constant 1.000000e+00 : f32
    %520 = vector.broadcast %cst_112 : f32 to vector<2x256xf32>
    %521 = arith.addf %520, %519 : vector<2x256xf32>
    %522 = arith.divf %520, %521 : vector<2x256xf32>
    %523 = arith.select %46, %517, %522 : vector<2x256xi1>, vector<2x256xf32>
    %524 = vector.extract_strided_slice %523 {offsets = [0, 0], sizes = [2, 64], strides = [1, 1]} : vector<2x256xf32> to vector<2x64xf32>
    %525 = vector.extract_strided_slice %523 {offsets = [0, 64], sizes = [2, 64], strides = [1, 1]} : vector<2x256xf32> to vector<2x64xf32>
    %526 = vector.extract_strided_slice %523 {offsets = [0, 128], sizes = [2, 64], strides = [1, 1]} : vector<2x256xf32> to vector<2x64xf32>
    %527 = vector.extract_strided_slice %523 {offsets = [0, 192], sizes = [2, 64], strides = [1, 1]} : vector<2x256xf32> to vector<2x64xf32>
    %528 = arith.mulf %525, %502 : vector<2x64xf32>
    %529 = arith.mulf %524, %526 : vector<2x64xf32>
    %530 = arith.addf %528, %529 : vector<2x64xf32>
    %531 = math.tanh %530 : vector<2x64xf32>
    %532 = arith.mulf %527, %531 : vector<2x64xf32>
    %533 = vector.broadcast %c1_i32_107 : i32 to vector<2x1xi32>
    %534 = arith.cmpi eq, %533, %0 : vector<2x1xi32>
    %535 = vector.shape_cast %534 : vector<2x1xi1> to vector<2x1xi1>
    %536 = vector.broadcast %535 : vector<2x1xi1> to vector<2x64xi1>
    %537 = arith.select %536, %532, %509 : vector<2x64xi1>, vector<2x64xf32>
    %c2_i32_113 = arith.constant 2 : i32
    %c1_i32_114 = arith.constant 1 : i32
    %538 = arith.subi %c2_i32_113, %c1_i32_114 : i32
    %c2_i32_115 = arith.constant 2 : i32
    %539 = arith.muli %538, %c2_i32_115 : i32
    %540 = arith.index_cast %539 : i32 to index
    %c0_116 = arith.constant 0 : index
    %541 = vector.load %arg17[%540, %c0_116] : memref<32x256xf32, #tpu.memory_space<vmem>>, vector<2x256xf32>
    %542 = arith.truncf %532 : vector<2x64xf32> to vector<2x64xbf16>
    %cst_117 = arith.constant dense<0.000000e+00> : vector<2x256xf32>
    %543 = tpu.matmul %542, %48, %cst_117 {dimension_numbers = #tpu.dot_dimension_numbers<[1], [0], [0], [1], [0, 0, 1, 1], [], []>} : vector<2x64xbf16>, vector<64x256xbf16>, vector<2x256xf32> -> vector<2x256xf32>
    %544 = arith.addf %541, %543 : vector<2x256xf32>
    %545 = math.tanh %544 : vector<2x256xf32>
    %546 = arith.negf %544 : vector<2x256xf32>
    %547 = math.exp %546 : vector<2x256xf32>
    %cst_118 = arith.constant 1.000000e+00 : f32
    %548 = vector.broadcast %cst_118 : f32 to vector<2x256xf32>
    %549 = arith.addf %548, %547 : vector<2x256xf32>
    %550 = arith.divf %548, %549 : vector<2x256xf32>
    %551 = arith.select %46, %545, %550 : vector<2x256xi1>, vector<2x256xf32>
    %552 = vector.extract_strided_slice %551 {offsets = [0, 0], sizes = [2, 64], strides = [1, 1]} : vector<2x256xf32> to vector<2x64xf32>
    %553 = vector.extract_strided_slice %551 {offsets = [0, 64], sizes = [2, 64], strides = [1, 1]} : vector<2x256xf32> to vector<2x64xf32>
    %554 = vector.extract_strided_slice %551 {offsets = [0, 128], sizes = [2, 64], strides = [1, 1]} : vector<2x256xf32> to vector<2x64xf32>
    %555 = vector.extract_strided_slice %551 {offsets = [0, 192], sizes = [2, 64], strides = [1, 1]} : vector<2x256xf32> to vector<2x64xf32>
    %556 = arith.mulf %553, %530 : vector<2x64xf32>
    %557 = arith.mulf %552, %554 : vector<2x64xf32>
    %558 = arith.addf %556, %557 : vector<2x64xf32>
    %559 = math.tanh %558 : vector<2x64xf32>
    %560 = arith.mulf %555, %559 : vector<2x64xf32>
    %561 = vector.broadcast %c2_i32_113 : i32 to vector<2x1xi32>
    %562 = arith.cmpi eq, %561, %0 : vector<2x1xi32>
    %563 = vector.shape_cast %562 : vector<2x1xi1> to vector<2x1xi1>
    %564 = vector.broadcast %563 : vector<2x1xi1> to vector<2x64xi1>
    %565 = arith.select %564, %560, %537 : vector<2x64xi1>, vector<2x64xf32>
    %c3_i32_119 = arith.constant 3 : i32
    %c1_i32_120 = arith.constant 1 : i32
    %566 = arith.subi %c3_i32_119, %c1_i32_120 : i32
    %c2_i32_121 = arith.constant 2 : i32
    %567 = arith.muli %566, %c2_i32_121 : i32
    %568 = arith.index_cast %567 : i32 to index
    %c0_122 = arith.constant 0 : index
    %569 = vector.load %arg17[%568, %c0_122] : memref<32x256xf32, #tpu.memory_space<vmem>>, vector<2x256xf32>
    %570 = arith.truncf %560 : vector<2x64xf32> to vector<2x64xbf16>
    %cst_123 = arith.constant dense<0.000000e+00> : vector<2x256xf32>
    %571 = tpu.matmul %570, %48, %cst_123 {dimension_numbers = #tpu.dot_dimension_numbers<[1], [0], [0], [1], [0, 0, 1, 1], [], []>} : vector<2x64xbf16>, vector<64x256xbf16>, vector<2x256xf32> -> vector<2x256xf32>
    %572 = arith.addf %569, %571 : vector<2x256xf32>
    %573 = math.tanh %572 : vector<2x256xf32>
    %574 = arith.negf %572 : vector<2x256xf32>
    %575 = math.exp %574 : vector<2x256xf32>
    %cst_124 = arith.constant 1.000000e+00 : f32
    %576 = vector.broadcast %cst_124 : f32 to vector<2x256xf32>
    %577 = arith.addf %576, %575 : vector<2x256xf32>
    %578 = arith.divf %576, %577 : vector<2x256xf32>
    %579 = arith.select %46, %573, %578 : vector<2x256xi1>, vector<2x256xf32>
    %580 = vector.extract_strided_slice %579 {offsets = [0, 0], sizes = [2, 64], strides = [1, 1]} : vector<2x256xf32> to vector<2x64xf32>
    %581 = vector.extract_strided_slice %579 {offsets = [0, 64], sizes = [2, 64], strides = [1, 1]} : vector<2x256xf32> to vector<2x64xf32>
    %582 = vector.extract_strided_slice %579 {offsets = [0, 128], sizes = [2, 64], strides = [1, 1]} : vector<2x256xf32> to vector<2x64xf32>
    %583 = vector.extract_strided_slice %579 {offsets = [0, 192], sizes = [2, 64], strides = [1, 1]} : vector<2x256xf32> to vector<2x64xf32>
    %584 = arith.mulf %581, %558 : vector<2x64xf32>
    %585 = arith.mulf %580, %582 : vector<2x64xf32>
    %586 = arith.addf %584, %585 : vector<2x64xf32>
    %587 = math.tanh %586 : vector<2x64xf32>
    %588 = arith.mulf %583, %587 : vector<2x64xf32>
    %589 = vector.broadcast %c3_i32_119 : i32 to vector<2x1xi32>
    %590 = arith.cmpi eq, %589, %0 : vector<2x1xi32>
    %591 = vector.shape_cast %590 : vector<2x1xi1> to vector<2x1xi1>
    %592 = vector.broadcast %591 : vector<2x1xi1> to vector<2x64xi1>
    %593 = arith.select %592, %588, %565 : vector<2x64xi1>, vector<2x64xf32>
    %c4_i32_125 = arith.constant 4 : i32
    %c1_i32_126 = arith.constant 1 : i32
    %594 = arith.subi %c4_i32_125, %c1_i32_126 : i32
    %c2_i32_127 = arith.constant 2 : i32
    %595 = arith.muli %594, %c2_i32_127 : i32
    %596 = arith.index_cast %595 : i32 to index
    %c0_128 = arith.constant 0 : index
    %597 = vector.load %arg17[%596, %c0_128] : memref<32x256xf32, #tpu.memory_space<vmem>>, vector<2x256xf32>
    %598 = arith.truncf %588 : vector<2x64xf32> to vector<2x64xbf16>
    %cst_129 = arith.constant dense<0.000000e+00> : vector<2x256xf32>
    %599 = tpu.matmul %598, %48, %cst_129 {dimension_numbers = #tpu.dot_dimension_numbers<[1], [0], [0], [1], [0, 0, 1, 1], [], []>} : vector<2x64xbf16>, vector<64x256xbf16>, vector<2x256xf32> -> vector<2x256xf32>
    %600 = arith.addf %597, %599 : vector<2x256xf32>
    %601 = math.tanh %600 : vector<2x256xf32>
    %602 = arith.negf %600 : vector<2x256xf32>
    %603 = math.exp %602 : vector<2x256xf32>
    %cst_130 = arith.constant 1.000000e+00 : f32
    %604 = vector.broadcast %cst_130 : f32 to vector<2x256xf32>
    %605 = arith.addf %604, %603 : vector<2x256xf32>
    %606 = arith.divf %604, %605 : vector<2x256xf32>
    %607 = arith.select %46, %601, %606 : vector<2x256xi1>, vector<2x256xf32>
    %608 = vector.extract_strided_slice %607 {offsets = [0, 0], sizes = [2, 64], strides = [1, 1]} : vector<2x256xf32> to vector<2x64xf32>
    %609 = vector.extract_strided_slice %607 {offsets = [0, 64], sizes = [2, 64], strides = [1, 1]} : vector<2x256xf32> to vector<2x64xf32>
    %610 = vector.extract_strided_slice %607 {offsets = [0, 128], sizes = [2, 64], strides = [1, 1]} : vector<2x256xf32> to vector<2x64xf32>
    %611 = vector.extract_strided_slice %607 {offsets = [0, 192], sizes = [2, 64], strides = [1, 1]} : vector<2x256xf32> to vector<2x64xf32>
    %612 = arith.mulf %609, %586 : vector<2x64xf32>
    %613 = arith.mulf %608, %610 : vector<2x64xf32>
    %614 = arith.addf %612, %613 : vector<2x64xf32>
    %615 = math.tanh %614 : vector<2x64xf32>
    %616 = arith.mulf %611, %615 : vector<2x64xf32>
    %617 = vector.broadcast %c4_i32_125 : i32 to vector<2x1xi32>
    %618 = arith.cmpi eq, %617, %0 : vector<2x1xi32>
    %619 = vector.shape_cast %618 : vector<2x1xi1> to vector<2x1xi1>
    %620 = vector.broadcast %619 : vector<2x1xi1> to vector<2x64xi1>
    %621 = arith.select %620, %616, %593 : vector<2x64xi1>, vector<2x64xf32>
    %c5_i32_131 = arith.constant 5 : i32
    %c1_i32_132 = arith.constant 1 : i32
    %622 = arith.subi %c5_i32_131, %c1_i32_132 : i32
    %c2_i32_133 = arith.constant 2 : i32
    %623 = arith.muli %622, %c2_i32_133 : i32
    %624 = arith.index_cast %623 : i32 to index
    %c0_134 = arith.constant 0 : index
    %625 = vector.load %arg17[%624, %c0_134] : memref<32x256xf32, #tpu.memory_space<vmem>>, vector<2x256xf32>
    %626 = arith.truncf %616 : vector<2x64xf32> to vector<2x64xbf16>
    %cst_135 = arith.constant dense<0.000000e+00> : vector<2x256xf32>
    %627 = tpu.matmul %626, %48, %cst_135 {dimension_numbers = #tpu.dot_dimension_numbers<[1], [0], [0], [1], [0, 0, 1, 1], [], []>} : vector<2x64xbf16>, vector<64x256xbf16>, vector<2x256xf32> -> vector<2x256xf32>
    %628 = arith.addf %625, %627 : vector<2x256xf32>
    %629 = math.tanh %628 : vector<2x256xf32>
    %630 = arith.negf %628 : vector<2x256xf32>
    %631 = math.exp %630 : vector<2x256xf32>
    %cst_136 = arith.constant 1.000000e+00 : f32
    %632 = vector.broadcast %cst_136 : f32 to vector<2x256xf32>
    %633 = arith.addf %632, %631 : vector<2x256xf32>
    %634 = arith.divf %632, %633 : vector<2x256xf32>
    %635 = arith.select %46, %629, %634 : vector<2x256xi1>, vector<2x256xf32>
    %636 = vector.extract_strided_slice %635 {offsets = [0, 0], sizes = [2, 64], strides = [1, 1]} : vector<2x256xf32> to vector<2x64xf32>
    %637 = vector.extract_strided_slice %635 {offsets = [0, 64], sizes = [2, 64], strides = [1, 1]} : vector<2x256xf32> to vector<2x64xf32>
    %638 = vector.extract_strided_slice %635 {offsets = [0, 128], sizes = [2, 64], strides = [1, 1]} : vector<2x256xf32> to vector<2x64xf32>
    %639 = vector.extract_strided_slice %635 {offsets = [0, 192], sizes = [2, 64], strides = [1, 1]} : vector<2x256xf32> to vector<2x64xf32>
    %640 = arith.mulf %637, %614 : vector<2x64xf32>
    %641 = arith.mulf %636, %638 : vector<2x64xf32>
    %642 = arith.addf %640, %641 : vector<2x64xf32>
    %643 = math.tanh %642 : vector<2x64xf32>
    %644 = arith.mulf %639, %643 : vector<2x64xf32>
    %645 = vector.broadcast %c5_i32_131 : i32 to vector<2x1xi32>
    %646 = arith.cmpi eq, %645, %0 : vector<2x1xi32>
    %647 = vector.shape_cast %646 : vector<2x1xi1> to vector<2x1xi1>
    %648 = vector.broadcast %647 : vector<2x1xi1> to vector<2x64xi1>
    %649 = arith.select %648, %644, %621 : vector<2x64xi1>, vector<2x64xf32>
    %c6_i32_137 = arith.constant 6 : i32
    %c1_i32_138 = arith.constant 1 : i32
    %650 = arith.subi %c6_i32_137, %c1_i32_138 : i32
    %c2_i32_139 = arith.constant 2 : i32
    %651 = arith.muli %650, %c2_i32_139 : i32
    %652 = arith.index_cast %651 : i32 to index
    %c0_140 = arith.constant 0 : index
    %653 = vector.load %arg17[%652, %c0_140] : memref<32x256xf32, #tpu.memory_space<vmem>>, vector<2x256xf32>
    %654 = arith.truncf %644 : vector<2x64xf32> to vector<2x64xbf16>
    %cst_141 = arith.constant dense<0.000000e+00> : vector<2x256xf32>
    %655 = tpu.matmul %654, %48, %cst_141 {dimension_numbers = #tpu.dot_dimension_numbers<[1], [0], [0], [1], [0, 0, 1, 1], [], []>} : vector<2x64xbf16>, vector<64x256xbf16>, vector<2x256xf32> -> vector<2x256xf32>
    %656 = arith.addf %653, %655 : vector<2x256xf32>
    %657 = math.tanh %656 : vector<2x256xf32>
    %658 = arith.negf %656 : vector<2x256xf32>
    %659 = math.exp %658 : vector<2x256xf32>
    %cst_142 = arith.constant 1.000000e+00 : f32
    %660 = vector.broadcast %cst_142 : f32 to vector<2x256xf32>
    %661 = arith.addf %660, %659 : vector<2x256xf32>
    %662 = arith.divf %660, %661 : vector<2x256xf32>
    %663 = arith.select %46, %657, %662 : vector<2x256xi1>, vector<2x256xf32>
    %664 = vector.extract_strided_slice %663 {offsets = [0, 0], sizes = [2, 64], strides = [1, 1]} : vector<2x256xf32> to vector<2x64xf32>
    %665 = vector.extract_strided_slice %663 {offsets = [0, 64], sizes = [2, 64], strides = [1, 1]} : vector<2x256xf32> to vector<2x64xf32>
    %666 = vector.extract_strided_slice %663 {offsets = [0, 128], sizes = [2, 64], strides = [1, 1]} : vector<2x256xf32> to vector<2x64xf32>
    %667 = vector.extract_strided_slice %663 {offsets = [0, 192], sizes = [2, 64], strides = [1, 1]} : vector<2x256xf32> to vector<2x64xf32>
    %668 = arith.mulf %665, %642 : vector<2x64xf32>
    %669 = arith.mulf %664, %666 : vector<2x64xf32>
    %670 = arith.addf %668, %669 : vector<2x64xf32>
    %671 = math.tanh %670 : vector<2x64xf32>
    %672 = arith.mulf %667, %671 : vector<2x64xf32>
    %673 = vector.broadcast %c6_i32_137 : i32 to vector<2x1xi32>
    %674 = arith.cmpi eq, %673, %0 : vector<2x1xi32>
    %675 = vector.shape_cast %674 : vector<2x1xi1> to vector<2x1xi1>
    %676 = vector.broadcast %675 : vector<2x1xi1> to vector<2x64xi1>
    %677 = arith.select %676, %672, %649 : vector<2x64xi1>, vector<2x64xf32>
    %c7_i32_143 = arith.constant 7 : i32
    %c1_i32_144 = arith.constant 1 : i32
    %678 = arith.subi %c7_i32_143, %c1_i32_144 : i32
    %c2_i32_145 = arith.constant 2 : i32
    %679 = arith.muli %678, %c2_i32_145 : i32
    %680 = arith.index_cast %679 : i32 to index
    %c0_146 = arith.constant 0 : index
    %681 = vector.load %arg17[%680, %c0_146] : memref<32x256xf32, #tpu.memory_space<vmem>>, vector<2x256xf32>
    %682 = arith.truncf %672 : vector<2x64xf32> to vector<2x64xbf16>
    %cst_147 = arith.constant dense<0.000000e+00> : vector<2x256xf32>
    %683 = tpu.matmul %682, %48, %cst_147 {dimension_numbers = #tpu.dot_dimension_numbers<[1], [0], [0], [1], [0, 0, 1, 1], [], []>} : vector<2x64xbf16>, vector<64x256xbf16>, vector<2x256xf32> -> vector<2x256xf32>
    %684 = arith.addf %681, %683 : vector<2x256xf32>
    %685 = math.tanh %684 : vector<2x256xf32>
    %686 = arith.negf %684 : vector<2x256xf32>
    %687 = math.exp %686 : vector<2x256xf32>
    %cst_148 = arith.constant 1.000000e+00 : f32
    %688 = vector.broadcast %cst_148 : f32 to vector<2x256xf32>
    %689 = arith.addf %688, %687 : vector<2x256xf32>
    %690 = arith.divf %688, %689 : vector<2x256xf32>
    %691 = arith.select %46, %685, %690 : vector<2x256xi1>, vector<2x256xf32>
    %692 = vector.extract_strided_slice %691 {offsets = [0, 0], sizes = [2, 64], strides = [1, 1]} : vector<2x256xf32> to vector<2x64xf32>
    %693 = vector.extract_strided_slice %691 {offsets = [0, 64], sizes = [2, 64], strides = [1, 1]} : vector<2x256xf32> to vector<2x64xf32>
    %694 = vector.extract_strided_slice %691 {offsets = [0, 128], sizes = [2, 64], strides = [1, 1]} : vector<2x256xf32> to vector<2x64xf32>
    %695 = vector.extract_strided_slice %691 {offsets = [0, 192], sizes = [2, 64], strides = [1, 1]} : vector<2x256xf32> to vector<2x64xf32>
    %696 = arith.mulf %693, %670 : vector<2x64xf32>
    %697 = arith.mulf %692, %694 : vector<2x64xf32>
    %698 = arith.addf %696, %697 : vector<2x64xf32>
    %699 = math.tanh %698 : vector<2x64xf32>
    %700 = arith.mulf %695, %699 : vector<2x64xf32>
    %701 = vector.broadcast %c7_i32_143 : i32 to vector<2x1xi32>
    %702 = arith.cmpi eq, %701, %0 : vector<2x1xi32>
    %703 = vector.shape_cast %702 : vector<2x1xi1> to vector<2x1xi1>
    %704 = vector.broadcast %703 : vector<2x1xi1> to vector<2x64xi1>
    %705 = arith.select %704, %700, %677 : vector<2x64xi1>, vector<2x64xf32>
    %c8_i32_149 = arith.constant 8 : i32
    %c1_i32_150 = arith.constant 1 : i32
    %706 = arith.subi %c8_i32_149, %c1_i32_150 : i32
    %c2_i32_151 = arith.constant 2 : i32
    %707 = arith.muli %706, %c2_i32_151 : i32
    %708 = arith.index_cast %707 : i32 to index
    %c0_152 = arith.constant 0 : index
    %709 = vector.load %arg17[%708, %c0_152] : memref<32x256xf32, #tpu.memory_space<vmem>>, vector<2x256xf32>
    %710 = arith.truncf %700 : vector<2x64xf32> to vector<2x64xbf16>
    %cst_153 = arith.constant dense<0.000000e+00> : vector<2x256xf32>
    %711 = tpu.matmul %710, %48, %cst_153 {dimension_numbers = #tpu.dot_dimension_numbers<[1], [0], [0], [1], [0, 0, 1, 1], [], []>} : vector<2x64xbf16>, vector<64x256xbf16>, vector<2x256xf32> -> vector<2x256xf32>
    %712 = arith.addf %709, %711 : vector<2x256xf32>
    %713 = math.tanh %712 : vector<2x256xf32>
    %714 = arith.negf %712 : vector<2x256xf32>
    %715 = math.exp %714 : vector<2x256xf32>
    %cst_154 = arith.constant 1.000000e+00 : f32
    %716 = vector.broadcast %cst_154 : f32 to vector<2x256xf32>
    %717 = arith.addf %716, %715 : vector<2x256xf32>
    %718 = arith.divf %716, %717 : vector<2x256xf32>
    %719 = arith.select %46, %713, %718 : vector<2x256xi1>, vector<2x256xf32>
    %720 = vector.extract_strided_slice %719 {offsets = [0, 0], sizes = [2, 64], strides = [1, 1]} : vector<2x256xf32> to vector<2x64xf32>
    %721 = vector.extract_strided_slice %719 {offsets = [0, 64], sizes = [2, 64], strides = [1, 1]} : vector<2x256xf32> to vector<2x64xf32>
    %722 = vector.extract_strided_slice %719 {offsets = [0, 128], sizes = [2, 64], strides = [1, 1]} : vector<2x256xf32> to vector<2x64xf32>
    %723 = vector.extract_strided_slice %719 {offsets = [0, 192], sizes = [2, 64], strides = [1, 1]} : vector<2x256xf32> to vector<2x64xf32>
    %724 = arith.mulf %721, %698 : vector<2x64xf32>
    %725 = arith.mulf %720, %722 : vector<2x64xf32>
    %726 = arith.addf %724, %725 : vector<2x64xf32>
    %727 = math.tanh %726 : vector<2x64xf32>
    %728 = arith.mulf %723, %727 : vector<2x64xf32>
    %729 = vector.broadcast %c8_i32_149 : i32 to vector<2x1xi32>
    %730 = arith.cmpi eq, %729, %0 : vector<2x1xi32>
    %731 = vector.shape_cast %730 : vector<2x1xi1> to vector<2x1xi1>
    %732 = vector.broadcast %731 : vector<2x1xi1> to vector<2x64xi1>
    %733 = arith.select %732, %728, %705 : vector<2x64xi1>, vector<2x64xf32>
    %c9_i32_155 = arith.constant 9 : i32
    %c1_i32_156 = arith.constant 1 : i32
    %734 = arith.subi %c9_i32_155, %c1_i32_156 : i32
    %c2_i32_157 = arith.constant 2 : i32
    %735 = arith.muli %734, %c2_i32_157 : i32
    %736 = arith.index_cast %735 : i32 to index
    %c0_158 = arith.constant 0 : index
    %737 = vector.load %arg17[%736, %c0_158] : memref<32x256xf32, #tpu.memory_space<vmem>>, vector<2x256xf32>
    %738 = arith.truncf %728 : vector<2x64xf32> to vector<2x64xbf16>
    %cst_159 = arith.constant dense<0.000000e+00> : vector<2x256xf32>
    %739 = tpu.matmul %738, %48, %cst_159 {dimension_numbers = #tpu.dot_dimension_numbers<[1], [0], [0], [1], [0, 0, 1, 1], [], []>} : vector<2x64xbf16>, vector<64x256xbf16>, vector<2x256xf32> -> vector<2x256xf32>
    %740 = arith.addf %737, %739 : vector<2x256xf32>
    %741 = math.tanh %740 : vector<2x256xf32>
    %742 = arith.negf %740 : vector<2x256xf32>
    %743 = math.exp %742 : vector<2x256xf32>
    %cst_160 = arith.constant 1.000000e+00 : f32
    %744 = vector.broadcast %cst_160 : f32 to vector<2x256xf32>
    %745 = arith.addf %744, %743 : vector<2x256xf32>
    %746 = arith.divf %744, %745 : vector<2x256xf32>
    %747 = arith.select %46, %741, %746 : vector<2x256xi1>, vector<2x256xf32>
    %748 = vector.extract_strided_slice %747 {offsets = [0, 0], sizes = [2, 64], strides = [1, 1]} : vector<2x256xf32> to vector<2x64xf32>
    %749 = vector.extract_strided_slice %747 {offsets = [0, 64], sizes = [2, 64], strides = [1, 1]} : vector<2x256xf32> to vector<2x64xf32>
    %750 = vector.extract_strided_slice %747 {offsets = [0, 128], sizes = [2, 64], strides = [1, 1]} : vector<2x256xf32> to vector<2x64xf32>
    %751 = vector.extract_strided_slice %747 {offsets = [0, 192], sizes = [2, 64], strides = [1, 1]} : vector<2x256xf32> to vector<2x64xf32>
    %752 = arith.mulf %749, %726 : vector<2x64xf32>
    %753 = arith.mulf %748, %750 : vector<2x64xf32>
    %754 = arith.addf %752, %753 : vector<2x64xf32>
    %755 = math.tanh %754 : vector<2x64xf32>
    %756 = arith.mulf %751, %755 : vector<2x64xf32>
    %757 = vector.broadcast %c9_i32_155 : i32 to vector<2x1xi32>
    %758 = arith.cmpi eq, %757, %0 : vector<2x1xi32>
    %759 = vector.shape_cast %758 : vector<2x1xi1> to vector<2x1xi1>
    %760 = vector.broadcast %759 : vector<2x1xi1> to vector<2x64xi1>
    %761 = arith.select %760, %756, %733 : vector<2x64xi1>, vector<2x64xf32>
    %c10_i32_161 = arith.constant 10 : i32
    %c1_i32_162 = arith.constant 1 : i32
    %762 = arith.subi %c10_i32_161, %c1_i32_162 : i32
    %c2_i32_163 = arith.constant 2 : i32
    %763 = arith.muli %762, %c2_i32_163 : i32
    %764 = arith.index_cast %763 : i32 to index
    %c0_164 = arith.constant 0 : index
    %765 = vector.load %arg17[%764, %c0_164] : memref<32x256xf32, #tpu.memory_space<vmem>>, vector<2x256xf32>
    %766 = arith.truncf %756 : vector<2x64xf32> to vector<2x64xbf16>
    %cst_165 = arith.constant dense<0.000000e+00> : vector<2x256xf32>
    %767 = tpu.matmul %766, %48, %cst_165 {dimension_numbers = #tpu.dot_dimension_numbers<[1], [0], [0], [1], [0, 0, 1, 1], [], []>} : vector<2x64xbf16>, vector<64x256xbf16>, vector<2x256xf32> -> vector<2x256xf32>
    %768 = arith.addf %765, %767 : vector<2x256xf32>
    %769 = math.tanh %768 : vector<2x256xf32>
    %770 = arith.negf %768 : vector<2x256xf32>
    %771 = math.exp %770 : vector<2x256xf32>
    %cst_166 = arith.constant 1.000000e+00 : f32
    %772 = vector.broadcast %cst_166 : f32 to vector<2x256xf32>
    %773 = arith.addf %772, %771 : vector<2x256xf32>
    %774 = arith.divf %772, %773 : vector<2x256xf32>
    %775 = arith.select %46, %769, %774 : vector<2x256xi1>, vector<2x256xf32>
    %776 = vector.extract_strided_slice %775 {offsets = [0, 0], sizes = [2, 64], strides = [1, 1]} : vector<2x256xf32> to vector<2x64xf32>
    %777 = vector.extract_strided_slice %775 {offsets = [0, 64], sizes = [2, 64], strides = [1, 1]} : vector<2x256xf32> to vector<2x64xf32>
    %778 = vector.extract_strided_slice %775 {offsets = [0, 128], sizes = [2, 64], strides = [1, 1]} : vector<2x256xf32> to vector<2x64xf32>
    %779 = vector.extract_strided_slice %775 {offsets = [0, 192], sizes = [2, 64], strides = [1, 1]} : vector<2x256xf32> to vector<2x64xf32>
    %780 = arith.mulf %777, %754 : vector<2x64xf32>
    %781 = arith.mulf %776, %778 : vector<2x64xf32>
    %782 = arith.addf %780, %781 : vector<2x64xf32>
    %783 = math.tanh %782 : vector<2x64xf32>
    %784 = arith.mulf %779, %783 : vector<2x64xf32>
    %785 = vector.broadcast %c10_i32_161 : i32 to vector<2x1xi32>
    %786 = arith.cmpi eq, %785, %0 : vector<2x1xi32>
    %787 = vector.shape_cast %786 : vector<2x1xi1> to vector<2x1xi1>
    %788 = vector.broadcast %787 : vector<2x1xi1> to vector<2x64xi1>
    %789 = arith.select %788, %784, %761 : vector<2x64xi1>, vector<2x64xf32>
    %c11_i32_167 = arith.constant 11 : i32
    %c1_i32_168 = arith.constant 1 : i32
    %790 = arith.subi %c11_i32_167, %c1_i32_168 : i32
    %c2_i32_169 = arith.constant 2 : i32
    %791 = arith.muli %790, %c2_i32_169 : i32
    %792 = arith.index_cast %791 : i32 to index
    %c0_170 = arith.constant 0 : index
    %793 = vector.load %arg17[%792, %c0_170] : memref<32x256xf32, #tpu.memory_space<vmem>>, vector<2x256xf32>
    %794 = arith.truncf %784 : vector<2x64xf32> to vector<2x64xbf16>
    %cst_171 = arith.constant dense<0.000000e+00> : vector<2x256xf32>
    %795 = tpu.matmul %794, %48, %cst_171 {dimension_numbers = #tpu.dot_dimension_numbers<[1], [0], [0], [1], [0, 0, 1, 1], [], []>} : vector<2x64xbf16>, vector<64x256xbf16>, vector<2x256xf32> -> vector<2x256xf32>
    %796 = arith.addf %793, %795 : vector<2x256xf32>
    %797 = math.tanh %796 : vector<2x256xf32>
    %798 = arith.negf %796 : vector<2x256xf32>
    %799 = math.exp %798 : vector<2x256xf32>
    %cst_172 = arith.constant 1.000000e+00 : f32
    %800 = vector.broadcast %cst_172 : f32 to vector<2x256xf32>
    %801 = arith.addf %800, %799 : vector<2x256xf32>
    %802 = arith.divf %800, %801 : vector<2x256xf32>
    %803 = arith.select %46, %797, %802 : vector<2x256xi1>, vector<2x256xf32>
    %804 = vector.extract_strided_slice %803 {offsets = [0, 0], sizes = [2, 64], strides = [1, 1]} : vector<2x256xf32> to vector<2x64xf32>
    %805 = vector.extract_strided_slice %803 {offsets = [0, 64], sizes = [2, 64], strides = [1, 1]} : vector<2x256xf32> to vector<2x64xf32>
    %806 = vector.extract_strided_slice %803 {offsets = [0, 128], sizes = [2, 64], strides = [1, 1]} : vector<2x256xf32> to vector<2x64xf32>
    %807 = vector.extract_strided_slice %803 {offsets = [0, 192], sizes = [2, 64], strides = [1, 1]} : vector<2x256xf32> to vector<2x64xf32>
    %808 = arith.mulf %805, %782 : vector<2x64xf32>
    %809 = arith.mulf %804, %806 : vector<2x64xf32>
    %810 = arith.addf %808, %809 : vector<2x64xf32>
    %811 = math.tanh %810 : vector<2x64xf32>
    %812 = arith.mulf %807, %811 : vector<2x64xf32>
    %813 = vector.broadcast %c11_i32_167 : i32 to vector<2x1xi32>
    %814 = arith.cmpi eq, %813, %0 : vector<2x1xi32>
    %815 = vector.shape_cast %814 : vector<2x1xi1> to vector<2x1xi1>
    %816 = vector.broadcast %815 : vector<2x1xi1> to vector<2x64xi1>
    %817 = arith.select %816, %812, %789 : vector<2x64xi1>, vector<2x64xf32>
    %c12_i32_173 = arith.constant 12 : i32
    %c1_i32_174 = arith.constant 1 : i32
    %818 = arith.subi %c12_i32_173, %c1_i32_174 : i32
    %c2_i32_175 = arith.constant 2 : i32
    %819 = arith.muli %818, %c2_i32_175 : i32
    %820 = arith.index_cast %819 : i32 to index
    %c0_176 = arith.constant 0 : index
    %821 = vector.load %arg17[%820, %c0_176] : memref<32x256xf32, #tpu.memory_space<vmem>>, vector<2x256xf32>
    %822 = arith.truncf %812 : vector<2x64xf32> to vector<2x64xbf16>
    %cst_177 = arith.constant dense<0.000000e+00> : vector<2x256xf32>
    %823 = tpu.matmul %822, %48, %cst_177 {dimension_numbers = #tpu.dot_dimension_numbers<[1], [0], [0], [1], [0, 0, 1, 1], [], []>} : vector<2x64xbf16>, vector<64x256xbf16>, vector<2x256xf32> -> vector<2x256xf32>
    %824 = arith.addf %821, %823 : vector<2x256xf32>
    %825 = math.tanh %824 : vector<2x256xf32>
    %826 = arith.negf %824 : vector<2x256xf32>
    %827 = math.exp %826 : vector<2x256xf32>
    %cst_178 = arith.constant 1.000000e+00 : f32
    %828 = vector.broadcast %cst_178 : f32 to vector<2x256xf32>
    %829 = arith.addf %828, %827 : vector<2x256xf32>
    %830 = arith.divf %828, %829 : vector<2x256xf32>
    %831 = arith.select %46, %825, %830 : vector<2x256xi1>, vector<2x256xf32>
    %832 = vector.extract_strided_slice %831 {offsets = [0, 0], sizes = [2, 64], strides = [1, 1]} : vector<2x256xf32> to vector<2x64xf32>
    %833 = vector.extract_strided_slice %831 {offsets = [0, 64], sizes = [2, 64], strides = [1, 1]} : vector<2x256xf32> to vector<2x64xf32>
    %834 = vector.extract_strided_slice %831 {offsets = [0, 128], sizes = [2, 64], strides = [1, 1]} : vector<2x256xf32> to vector<2x64xf32>
    %835 = vector.extract_strided_slice %831 {offsets = [0, 192], sizes = [2, 64], strides = [1, 1]} : vector<2x256xf32> to vector<2x64xf32>
    %836 = arith.mulf %833, %810 : vector<2x64xf32>
    %837 = arith.mulf %832, %834 : vector<2x64xf32>
    %838 = arith.addf %836, %837 : vector<2x64xf32>
    %839 = math.tanh %838 : vector<2x64xf32>
    %840 = arith.mulf %835, %839 : vector<2x64xf32>
    %841 = vector.broadcast %c12_i32_173 : i32 to vector<2x1xi32>
    %842 = arith.cmpi eq, %841, %0 : vector<2x1xi32>
    %843 = vector.shape_cast %842 : vector<2x1xi1> to vector<2x1xi1>
    %844 = vector.broadcast %843 : vector<2x1xi1> to vector<2x64xi1>
    %845 = arith.select %844, %840, %817 : vector<2x64xi1>, vector<2x64xf32>
    %c13_i32_179 = arith.constant 13 : i32
    %c1_i32_180 = arith.constant 1 : i32
    %846 = arith.subi %c13_i32_179, %c1_i32_180 : i32
    %c2_i32_181 = arith.constant 2 : i32
    %847 = arith.muli %846, %c2_i32_181 : i32
    %848 = arith.index_cast %847 : i32 to index
    %c0_182 = arith.constant 0 : index
    %849 = vector.load %arg17[%848, %c0_182] : memref<32x256xf32, #tpu.memory_space<vmem>>, vector<2x256xf32>
    %850 = arith.truncf %840 : vector<2x64xf32> to vector<2x64xbf16>
    %cst_183 = arith.constant dense<0.000000e+00> : vector<2x256xf32>
    %851 = tpu.matmul %850, %48, %cst_183 {dimension_numbers = #tpu.dot_dimension_numbers<[1], [0], [0], [1], [0, 0, 1, 1], [], []>} : vector<2x64xbf16>, vector<64x256xbf16>, vector<2x256xf32> -> vector<2x256xf32>
    %852 = arith.addf %849, %851 : vector<2x256xf32>
    %853 = math.tanh %852 : vector<2x256xf32>
    %854 = arith.negf %852 : vector<2x256xf32>
    %855 = math.exp %854 : vector<2x256xf32>
    %cst_184 = arith.constant 1.000000e+00 : f32
    %856 = vector.broadcast %cst_184 : f32 to vector<2x256xf32>
    %857 = arith.addf %856, %855 : vector<2x256xf32>
    %858 = arith.divf %856, %857 : vector<2x256xf32>
    %859 = arith.select %46, %853, %858 : vector<2x256xi1>, vector<2x256xf32>
    %860 = vector.extract_strided_slice %859 {offsets = [0, 0], sizes = [2, 64], strides = [1, 1]} : vector<2x256xf32> to vector<2x64xf32>
    %861 = vector.extract_strided_slice %859 {offsets = [0, 64], sizes = [2, 64], strides = [1, 1]} : vector<2x256xf32> to vector<2x64xf32>
    %862 = vector.extract_strided_slice %859 {offsets = [0, 128], sizes = [2, 64], strides = [1, 1]} : vector<2x256xf32> to vector<2x64xf32>
    %863 = vector.extract_strided_slice %859 {offsets = [0, 192], sizes = [2, 64], strides = [1, 1]} : vector<2x256xf32> to vector<2x64xf32>
    %864 = arith.mulf %861, %838 : vector<2x64xf32>
    %865 = arith.mulf %860, %862 : vector<2x64xf32>
    %866 = arith.addf %864, %865 : vector<2x64xf32>
    %867 = math.tanh %866 : vector<2x64xf32>
    %868 = arith.mulf %863, %867 : vector<2x64xf32>
    %869 = vector.broadcast %c13_i32_179 : i32 to vector<2x1xi32>
    %870 = arith.cmpi eq, %869, %0 : vector<2x1xi32>
    %871 = vector.shape_cast %870 : vector<2x1xi1> to vector<2x1xi1>
    %872 = vector.broadcast %871 : vector<2x1xi1> to vector<2x64xi1>
    %873 = arith.select %872, %868, %845 : vector<2x64xi1>, vector<2x64xf32>
    %c14_i32_185 = arith.constant 14 : i32
    %c1_i32_186 = arith.constant 1 : i32
    %874 = arith.subi %c14_i32_185, %c1_i32_186 : i32
    %c2_i32_187 = arith.constant 2 : i32
    %875 = arith.muli %874, %c2_i32_187 : i32
    %876 = arith.index_cast %875 : i32 to index
    %c0_188 = arith.constant 0 : index
    %877 = vector.load %arg17[%876, %c0_188] : memref<32x256xf32, #tpu.memory_space<vmem>>, vector<2x256xf32>
    %878 = arith.truncf %868 : vector<2x64xf32> to vector<2x64xbf16>
    %cst_189 = arith.constant dense<0.000000e+00> : vector<2x256xf32>
    %879 = tpu.matmul %878, %48, %cst_189 {dimension_numbers = #tpu.dot_dimension_numbers<[1], [0], [0], [1], [0, 0, 1, 1], [], []>} : vector<2x64xbf16>, vector<64x256xbf16>, vector<2x256xf32> -> vector<2x256xf32>
    %880 = arith.addf %877, %879 : vector<2x256xf32>
    %881 = math.tanh %880 : vector<2x256xf32>
    %882 = arith.negf %880 : vector<2x256xf32>
    %883 = math.exp %882 : vector<2x256xf32>
    %cst_190 = arith.constant 1.000000e+00 : f32
    %884 = vector.broadcast %cst_190 : f32 to vector<2x256xf32>
    %885 = arith.addf %884, %883 : vector<2x256xf32>
    %886 = arith.divf %884, %885 : vector<2x256xf32>
    %887 = arith.select %46, %881, %886 : vector<2x256xi1>, vector<2x256xf32>
    %888 = vector.extract_strided_slice %887 {offsets = [0, 0], sizes = [2, 64], strides = [1, 1]} : vector<2x256xf32> to vector<2x64xf32>
    %889 = vector.extract_strided_slice %887 {offsets = [0, 64], sizes = [2, 64], strides = [1, 1]} : vector<2x256xf32> to vector<2x64xf32>
    %890 = vector.extract_strided_slice %887 {offsets = [0, 128], sizes = [2, 64], strides = [1, 1]} : vector<2x256xf32> to vector<2x64xf32>
    %891 = vector.extract_strided_slice %887 {offsets = [0, 192], sizes = [2, 64], strides = [1, 1]} : vector<2x256xf32> to vector<2x64xf32>
    %892 = arith.mulf %889, %866 : vector<2x64xf32>
    %893 = arith.mulf %888, %890 : vector<2x64xf32>
    %894 = arith.addf %892, %893 : vector<2x64xf32>
    %895 = math.tanh %894 : vector<2x64xf32>
    %896 = arith.mulf %891, %895 : vector<2x64xf32>
    %897 = vector.broadcast %c14_i32_185 : i32 to vector<2x1xi32>
    %898 = arith.cmpi eq, %897, %0 : vector<2x1xi32>
    %899 = vector.shape_cast %898 : vector<2x1xi1> to vector<2x1xi1>
    %900 = vector.broadcast %899 : vector<2x1xi1> to vector<2x64xi1>
    %901 = arith.select %900, %896, %873 : vector<2x64xi1>, vector<2x64xf32>
    %c15_i32_191 = arith.constant 15 : i32
    %c1_i32_192 = arith.constant 1 : i32
    %902 = arith.subi %c15_i32_191, %c1_i32_192 : i32
    %c2_i32_193 = arith.constant 2 : i32
    %903 = arith.muli %902, %c2_i32_193 : i32
    %904 = arith.index_cast %903 : i32 to index
    %c0_194 = arith.constant 0 : index
    %905 = vector.load %arg17[%904, %c0_194] : memref<32x256xf32, #tpu.memory_space<vmem>>, vector<2x256xf32>
    %906 = arith.truncf %896 : vector<2x64xf32> to vector<2x64xbf16>
    %cst_195 = arith.constant dense<0.000000e+00> : vector<2x256xf32>
    %907 = tpu.matmul %906, %48, %cst_195 {dimension_numbers = #tpu.dot_dimension_numbers<[1], [0], [0], [1], [0, 0, 1, 1], [], []>} : vector<2x64xbf16>, vector<64x256xbf16>, vector<2x256xf32> -> vector<2x256xf32>
    %908 = arith.addf %905, %907 : vector<2x256xf32>
    %909 = math.tanh %908 : vector<2x256xf32>
    %910 = arith.negf %908 : vector<2x256xf32>
    %911 = math.exp %910 : vector<2x256xf32>
    %cst_196 = arith.constant 1.000000e+00 : f32
    %912 = vector.broadcast %cst_196 : f32 to vector<2x256xf32>
    %913 = arith.addf %912, %911 : vector<2x256xf32>
    %914 = arith.divf %912, %913 : vector<2x256xf32>
    %915 = arith.select %46, %909, %914 : vector<2x256xi1>, vector<2x256xf32>
    %916 = vector.extract_strided_slice %915 {offsets = [0, 0], sizes = [2, 64], strides = [1, 1]} : vector<2x256xf32> to vector<2x64xf32>
    %917 = vector.extract_strided_slice %915 {offsets = [0, 64], sizes = [2, 64], strides = [1, 1]} : vector<2x256xf32> to vector<2x64xf32>
    %918 = vector.extract_strided_slice %915 {offsets = [0, 128], sizes = [2, 64], strides = [1, 1]} : vector<2x256xf32> to vector<2x64xf32>
    %919 = vector.extract_strided_slice %915 {offsets = [0, 192], sizes = [2, 64], strides = [1, 1]} : vector<2x256xf32> to vector<2x64xf32>
    %920 = arith.mulf %917, %894 : vector<2x64xf32>
    %921 = arith.mulf %916, %918 : vector<2x64xf32>
    %922 = arith.addf %920, %921 : vector<2x64xf32>
    %923 = math.tanh %922 : vector<2x64xf32>
    %924 = arith.mulf %919, %923 : vector<2x64xf32>
    %925 = vector.broadcast %c15_i32_191 : i32 to vector<2x1xi32>
    %926 = arith.cmpi eq, %925, %0 : vector<2x1xi32>
    %927 = vector.shape_cast %926 : vector<2x1xi1> to vector<2x1xi1>
    %928 = vector.broadcast %927 : vector<2x1xi1> to vector<2x64xi1>
    %929 = arith.select %928, %924, %901 : vector<2x64xi1>, vector<2x64xf32>
    %c16_i32_197 = arith.constant 16 : i32
    %c1_i32_198 = arith.constant 1 : i32
    %930 = arith.subi %c16_i32_197, %c1_i32_198 : i32
    %c2_i32_199 = arith.constant 2 : i32
    %931 = arith.muli %930, %c2_i32_199 : i32
    %932 = arith.index_cast %931 : i32 to index
    %c0_200 = arith.constant 0 : index
    %933 = vector.load %arg17[%932, %c0_200] : memref<32x256xf32, #tpu.memory_space<vmem>>, vector<2x256xf32>
    %934 = arith.truncf %924 : vector<2x64xf32> to vector<2x64xbf16>
    %cst_201 = arith.constant dense<0.000000e+00> : vector<2x256xf32>
    %935 = tpu.matmul %934, %48, %cst_201 {dimension_numbers = #tpu.dot_dimension_numbers<[1], [0], [0], [1], [0, 0, 1, 1], [], []>} : vector<2x64xbf16>, vector<64x256xbf16>, vector<2x256xf32> -> vector<2x256xf32>
    %936 = arith.addf %933, %935 : vector<2x256xf32>
    %937 = math.tanh %936 : vector<2x256xf32>
    %938 = arith.negf %936 : vector<2x256xf32>
    %939 = math.exp %938 : vector<2x256xf32>
    %cst_202 = arith.constant 1.000000e+00 : f32
    %940 = vector.broadcast %cst_202 : f32 to vector<2x256xf32>
    %941 = arith.addf %940, %939 : vector<2x256xf32>
    %942 = arith.divf %940, %941 : vector<2x256xf32>
    %943 = arith.select %46, %937, %942 : vector<2x256xi1>, vector<2x256xf32>
    %944 = vector.extract_strided_slice %943 {offsets = [0, 0], sizes = [2, 64], strides = [1, 1]} : vector<2x256xf32> to vector<2x64xf32>
    %945 = vector.extract_strided_slice %943 {offsets = [0, 64], sizes = [2, 64], strides = [1, 1]} : vector<2x256xf32> to vector<2x64xf32>
    %946 = vector.extract_strided_slice %943 {offsets = [0, 128], sizes = [2, 64], strides = [1, 1]} : vector<2x256xf32> to vector<2x64xf32>
    %947 = vector.extract_strided_slice %943 {offsets = [0, 192], sizes = [2, 64], strides = [1, 1]} : vector<2x256xf32> to vector<2x64xf32>
    %948 = arith.mulf %945, %922 : vector<2x64xf32>
    %949 = arith.mulf %944, %946 : vector<2x64xf32>
    %950 = arith.addf %948, %949 : vector<2x64xf32>
    %951 = math.tanh %950 : vector<2x64xf32>
    %952 = arith.mulf %947, %951 : vector<2x64xf32>
    %953 = vector.broadcast %c16_i32_197 : i32 to vector<2x1xi32>
    %954 = arith.cmpi eq, %953, %0 : vector<2x1xi32>
    %955 = vector.shape_cast %954 : vector<2x1xi1> to vector<2x1xi1>
    %956 = vector.broadcast %955 : vector<2x1xi1> to vector<2x64xi1>
    %957 = arith.select %956, %952, %929 : vector<2x64xi1>, vector<2x64xf32>
    %c16_i32_203 = arith.constant 16 : i32
    %958 = arith.addf %957, %481 : vector<2x64xf32>
    %959 = arith.truncf %958 : vector<2x64xf32> to vector<2x64xbf16>
    %c0_204 = arith.constant 0 : index
    %c0_205 = arith.constant 0 : index
    %960 = vector.load %arg13[%c0_204, %c0_205] : memref<64x32xbf16, #tpu.memory_space<vmem>>, vector<64x32xbf16>
    %cst_206 = arith.constant dense<0.000000e+00> : vector<2x32xf32>
    %961 = tpu.matmul %959, %960, %cst_206 {dimension_numbers = #tpu.dot_dimension_numbers<[1], [0], [0], [1], [0, 0, 1, 1], [], []>} : vector<2x64xbf16>, vector<64x32xbf16>, vector<2x32xf32> -> vector<2x32xf32>
    %c0_207 = arith.constant 0 : index
    %c0_208 = arith.constant 0 : index
    %962 = vector.load %arg14[%c0_207, %c0_208] : memref<1x32xf32, #tpu.memory_space<vmem>>, vector<1x32xf32>
    %963 = vector.broadcast %962 : vector<1x32xf32> to vector<2x32xf32>
    %964 = arith.addf %961, %963 : vector<2x32xf32>
    %c0_209 = arith.constant 0 : index
    %c0_210 = arith.constant 0 : index
    %965 = vector.load %arg15[%c0_209, %c0_210] : memref<2x32xf32, #tpu.memory_space<vmem>>, vector<2x32xf32>
    tpu.vector_store %arg15[%c0_209, %c0_210], %964 {strides = array<i32>} : memref<2x32xf32, #tpu.memory_space<vmem>>, vector<2x32xf32>,
    return
  }
  func.func @transform_0(%arg0: i32) -> (i32, i32) {
    %c0_i32 = arith.constant 0 : i32
    %c0_i32_0 = arith.constant 0 : i32
    %c0_i32_1 = arith.constant 0 : i32
    return %c0_i32, %c0_i32_0 : i32, i32
  }
  func.func @transform_1(%arg0: i32) -> (i32, i32) {
    %c0_i32 = arith.constant 0 : i32
    %c0_i32_0 = arith.constant 0 : i32
    %c0_i32_1 = arith.constant 0 : i32
    return %c0_i32, %c0_i32_0 : i32, i32
  }
  func.func @transform_2(%arg0: i32) -> (i32, i32) {
    %c0_i32 = arith.constant 0 : i32
    %c0_i32_0 = arith.constant 0 : i32
    %c0_i32_1 = arith.constant 0 : i32
    return %c0_i32, %c0_i32_0 : i32, i32
  }
  func.func @transform_3(%arg0: i32) -> (i32, i32) {
    %c0_i32 = arith.constant 0 : i32
    %c0_i32_0 = arith.constant 0 : i32
    %c0_i32_1 = arith.constant 0 : i32
    return %c0_i32, %c0_i32_0 : i32, i32
  }
  func.func @transform_4(%arg0: i32) -> (i32, i32) {
    %c0_i32 = arith.constant 0 : i32
    %c0_i32_0 = arith.constant 0 : i32
    %c0_i32_1 = arith.constant 0 : i32
    return %c0_i32, %c0_i32_0 : i32, i32
  }
  func.func @transform_5(%arg0: i32) -> (i32, i32) {
    %c0_i32 = arith.constant 0 : i32
    %c0_i32_0 = arith.constant 0 : i32
    %c0_i32_1 = arith.constant 0 : i32
    return %c0_i32, %c0_i32_0 : i32, i32
  }
  func.func @transform_6(%arg0: i32) -> (i32, i32) {
    %c0_i32 = arith.constant 0 : i32
    %c0_i32_0 = arith.constant 0 : i32
    %c0_i32_1 = arith.constant 0 : i32
    return %c0_i32, %c0_i32_0 : i32, i32
  }
  func.func @transform_7(%arg0: i32) -> (i32, i32) {
    %c0_i32 = arith.constant 0 : i32
    %c0_i32_0 = arith.constant 0 : i32
    %c0_i32_1 = arith.constant 0 : i32
    return %c0_i32, %c0_i32_0 : i32, i32
  }
  func.func @transform_8(%arg0: i32) -> (i32, i32) {
    %c0_i32 = arith.constant 0 : i32
    %c0_i32_0 = arith.constant 0 : i32
    %c0_i32_1 = arith.constant 0 : i32
    return %c0_i32, %c0_i32_0 : i32, i32
  }
  func.func @transform_9(%arg0: i32) -> (i32, i32) {
    %c0_i32 = arith.constant 0 : i32
    %c0_i32_0 = arith.constant 0 : i32
    %c0_i32_1 = arith.constant 0 : i32
    return %c0_i32, %c0_i32_0 : i32, i32
  }
  func.func @transform_10(%arg0: i32) -> (i32, i32) {
    %c0_i32 = arith.constant 0 : i32
    %c0_i32_0 = arith.constant 0 : i32
    %c0_i32_1 = arith.constant 0 : i32
    return %c0_i32, %c0_i32_0 : i32, i32
  }
  func.func @transform_11(%arg0: i32) -> (i32, i32) {
    %c0_i32 = arith.constant 0 : i32
    %c0_i32_0 = arith.constant 0 : i32
    %c0_i32_1 = arith.constant 0 : i32
    return %c0_i32, %c0_i32_0 : i32, i32
  }
  func.func @transform_12(%arg0: i32) -> (i32, i32) {
    %c0_i32 = arith.constant 0 : i32
    %c0_i32_0 = arith.constant 0 : i32
    %c0_i32_1 = arith.constant 0 : i32
    return %c0_i32, %c0_i32_0 : i32, i32
  }
  func.func @transform_13(%arg0: i32) -> (i32, i32) {
    %c0_i32 = arith.constant 0 : i32
    %c0_i32_0 = arith.constant 0 : i32
    %c0_i32_1 = arith.constant 0 : i32
    return %c0_i32, %c0_i32_0 : i32, i32
  }
  func.func @transform_14(%arg0: i32) -> (i32, i32) {
    %c0_i32 = arith.constant 0 : i32
    %c0_i32_0 = arith.constant 0 : i32
    %c0_i32_1 = arith.constant 0 : i32
    return %c0_i32, %c0_i32_0 : i32, i32
  }
}

</mosaic_0001>

<llo_original>
// kernel: video_subnet_forward.1
$region0: #{video_subnet_forward.1}
  #allocation0 [shape = 'u32[]', space=smem, size = 0x4, offset = 0x4, fixed_abs, tag = 'smem constant byte address 0x4 - core index']
  #allocation1 [shape = 'u32[144,128]{1,0:T(1,128)}', space=vmem, size = 0x12000, scoped, tag = 'internal scratch']
  #allocation2 [shape = 'f32[32,256]{1,0:T(8,128)}', space=vmem, size = 0x8000, scoped, tag = 'scratch operand']
  #allocation3 [shape = 'f32[32,256]{1,0:T(8,128)}', space=vmem, size = 0x8000, scoped, tag = 'scratch operand']
  %s0 = inlined_call_operand.vmem [shape: s32[2,1], index: 0, kind: input, shape index: {}]
  %s1 = inlined_call_operand.vmem [shape: bf16[32,2048], index: 1, kind: input, shape index: {}]
  %s2 = inlined_call_operand.vmem [shape: bf16[2048,256], index: 2, kind: input, shape index: {}]
  %s3 = inlined_call_operand.vmem [shape: bf16[64,256], index: 3, kind: input, shape index: {}]
  %s4 = inlined_call_operand.vmem [shape: f32[1,256], index: 4, kind: input, shape index: {}]
  %s5 = inlined_call_operand.vmem [shape: bf16[2048,64], index: 5, kind: input, shape index: {}]
  %s6 = inlined_call_operand.vmem [shape: f32[1,64], index: 6, kind: input, shape index: {}]
  %s7 = inlined_call_operand.vmem [shape: bf16[64,64], index: 7, kind: input, shape index: {}]
  %s8 = inlined_call_operand.vmem [shape: f32[1,64], index: 8, kind: input, shape index: {}]
  %s9 = inlined_call_operand.vmem [shape: bf16[64,256], index: 9, kind: input, shape index: {}]
  %s10 = inlined_call_operand.vmem [shape: bf16[64,256], index: 10, kind: input, shape index: {}]
  %s11 = inlined_call_operand.vmem [shape: f32[1,256], index: 11, kind: input, shape index: {}]
  %s12 = inlined_call_operand.vmem [shape: bf16[64,32], index: 12, kind: input, shape index: {}]
  %s13 = inlined_call_operand.vmem [shape: f32[1,32], index: 13, kind: input, shape index: {}]
  %s14 = inlined_call_operand.hbm [shape: f32[2,32], index: 14, kind: output, shape index: {}]
  %s15 = sld [smem:[#allocation0]]
  $region66: #{video_subnet_forward.1} parent=0
    _
  %s17 = ssub.s32 1, %s15
  %s18 = scalar_select 0, %s17, %s15
  $region1: #{video_subnet_forward.1} parent=0
    #allocation4 [shape = 'u8[1024]{0}', space=vmem, size = 0x400, scoped, tag = 'output window, operand 0, single buffered']
    #allocation5 [shape = 's32[1]{0}', space=sflag, size = 0x4, scoped, tag = 'scoped memory for video_subnet_forward.1']
    %19 = vsyncpa [#allocation5], 0
    // Predicated region
    $region2: #{video_subnet_forward.1} parent=1 // pred_check
      _
    $region3: #{video_subnet_forward.1} parent=1 // pred_check_branch
      %21 = sbr.rel (0) target = $region5
    $region4: #{video_subnet_forward.1} parent=1 // pred_region
      _
    $region5: #{video_subnet_forward.1} parent=1 // pred_fallthru
      _
    // Predicated region
    $region6: #{video_subnet_forward.1} parent=1 // pred_check
      _
    $region7: #{video_subnet_forward.1} parent=1 // pred_check_branch
      %23 = sbr.rel (0) target = $region9
    $region8: #{video_subnet_forward.1} parent=1 // pred_region
      _
    $region9: #{video_subnet_forward.1} parent=1 // pred_fallthru
      _
    // Predicated region
    $region10: #{video_subnet_forward.1} parent=1 // pred_check
      _
    $region11: #{video_subnet_forward.1} parent=1 // pred_check_branch
      %25 = sbr.rel (0) target = $region13
    $region12: #{video_subnet_forward.1} parent=1 // pred_region
      _
    $region13: #{video_subnet_forward.1} parent=1 // pred_fallthru
      _
    // Predicated region
    $region14: #{video_subnet_forward.1} parent=1 // pred_check
      _
    $region15: #{video_subnet_forward.1} parent=1 // pred_check_branch
      %27 = sbr.rel (0) target = $region17
    $region16: #{video_subnet_forward.1} parent=1 // pred_region
      _
    $region17: #{video_subnet_forward.1} parent=1 // pred_fallthru
      _
    // Predicated region
    $region18: #{video_subnet_forward.1} parent=1 // pred_check
      _
    $region19: #{video_subnet_forward.1} parent=1 // pred_check_branch
      %29 = sbr.rel (0) target = $region21
    $region20: #{video_subnet_forward.1} parent=1 // pred_region
      _
    $region21: #{video_subnet_forward.1} parent=1 // pred_fallthru
      _
    // Predicated region
    $region22: #{video_subnet_forward.1} parent=1 // pred_check
      _
    $region23: #{video_subnet_forward.1} parent=1 // pred_check_branch
      %31 = sbr.rel (0) target = $region25
    $region24: #{video_subnet_forward.1} parent=1 // pred_region
      _
    $region25: #{video_subnet_forward.1} parent=1 // pred_fallthru
      _
    // Predicated region
    $region26: #{video_subnet_forward.1} parent=1 // pred_check
      _
    $region27: #{video_subnet_forward.1} parent=1 // pred_check_branch
      %33 = sbr.rel (0) target = $region29
    $region28: #{video_subnet_forward.1} parent=1 // pred_region
      _
    $region29: #{video_subnet_forward.1} parent=1 // pred_fallthru
      _
    // Predicated region
    $region30: #{video_subnet_forward.1} parent=1 // pred_check
      _
    $region31: #{video_subnet_forward.1} parent=1 // pred_check_branch
      %35 = sbr.rel (0) target = $region33
    $region32: #{video_subnet_forward.1} parent=1 // pred_region
      _
    $region33: #{video_subnet_forward.1} parent=1 // pred_fallthru
      _
    // Predicated region
    $region34: #{video_subnet_forward.1} parent=1 // pred_check
      _
    $region35: #{video_subnet_forward.1} parent=1 // pred_check_branch
      %37 = sbr.rel (0) target = $region37
    $region36: #{video_subnet_forward.1} parent=1 // pred_region
      _
    $region37: #{video_subnet_forward.1} parent=1 // pred_fallthru
      _
    // Predicated region
    $region38: #{video_subnet_forward.1} parent=1 // pred_check
      _
    $region39: #{video_subnet_forward.1} parent=1 // pred_check_branch
      %39 = sbr.rel (0) target = $region41
    $region40: #{video_subnet_forward.1} parent=1 // pred_region
      _
    $region41: #{video_subnet_forward.1} parent=1 // pred_fallthru
      _
    // Predicated region
    $region42: #{video_subnet_forward.1} parent=1 // pred_check
      _
    $region43: #{video_subnet_forward.1} parent=1 // pred_check_branch
      %41 = sbr.rel (0) target = $region45
    $region44: #{video_subnet_forward.1} parent=1 // pred_region
      _
    $region45: #{video_subnet_forward.1} parent=1 // pred_fallthru
      _
    // Predicated region
    $region46: #{video_subnet_forward.1} parent=1 // pred_check
      _
    $region47: #{video_subnet_forward.1} parent=1 // pred_check_branch
      %43 = sbr.rel (0) target = $region49
    $region48: #{video_subnet_forward.1} parent=1 // pred_region
      _
    $region49: #{video_subnet_forward.1} parent=1 // pred_fallthru
      _
    // Predicated region
    $region50: #{video_subnet_forward.1} parent=1 // pred_check
      _
    $region51: #{video_subnet_forward.1} parent=1 // pred_check_branch
      %45 = sbr.rel (0) target = $region53
    $region52: #{video_subnet_forward.1} parent=1 // pred_region
      _
    $region53: #{video_subnet_forward.1} parent=1 // pred_fallthru
      _
    // Predicated region
    $region54: #{video_subnet_forward.1} parent=1 // pred_check
      _
    $region55: #{video_subnet_forward.1} parent=1 // pred_check_branch
      %47 = sbr.rel (0) target = $region57
    $region56: #{video_subnet_forward.1} parent=1 // pred_region
      _
    $region57: #{video_subnet_forward.1} parent=1 // pred_fallthru
      _
    %v49 = vld [vmem:[%s0] sm:$0x3]
    %v50 = vsub.s32 %v49, 1
    %v51 = vld [vmem:[%s1] sm:$0xff]
    %v52 = vld [vmem:[%s1 + $0x8] sm:$0xff]
    %v53 = vld [vmem:[%s1 + $0x10] sm:$0xff]
    %v54 = vld [vmem:[%s1 + $0x18] sm:$0xff]
    %v55 = vld [vmem:[%s1 + $0x20] sm:$0xff]
    %v56 = vld [vmem:[%s1 + $0x28] sm:$0xff]
    %v57 = vld [vmem:[%s1 + $0x30] sm:$0xff]
    %v58 = vld [vmem:[%s1 + $0x38] sm:$0xff]
    %v59 = vld [vmem:[%s1 + $0x40] sm:$0xff]
    %v60 = vld [vmem:[%s1 + $0x48] sm:$0xff]
    %v61 = vld [vmem:[%s1 + $0x50] sm:$0xff]
    %v62 = vld [vmem:[%s1 + $0x58] sm:$0xff]
    %v63 = vld [vmem:[%s1 + $0x60] sm:$0xff]
    %v64 = vld [vmem:[%s1 + $0x68] sm:$0xff]
    %v65 = vld [vmem:[%s1 + $0x70] sm:$0xff]
    %v66 = vld [vmem:[%s1 + $0x78] sm:$0xff]
    %v67 = vld [vmem:[%s1 + $0x80] sm:$0xff]
    %v68 = vld [vmem:[%s1 + $0x88] sm:$0xff]
    %v69 = vld [vmem:[%s1 + $0x90] sm:$0xff]
    %v70 = vld [vmem:[%s1 + $0x98] sm:$0xff]
    %v71 = vld [vmem:[%s1 + $0xa0] sm:$0xff]
    %v72 = vld [vmem:[%s1 + $0xa8] sm:$0xff]
    %v73 = vld [vmem:[%s1 + $0xb0] sm:$0xff]
    %v74 = vld [vmem:[%s1 + $0xb8] sm:$0xff]
    %v75 = vld [vmem:[%s1 + $0xc0] sm:$0xff]
    %v76 = vld [vmem:[%s1 + $0xc8] sm:$0xff]
    %v77 = vld [vmem:[%s1 + $0xd0] sm:$0xff]
    %v78 = vld [vmem:[%s1 + $0xd8] sm:$0xff]
    %v79 = vld [vmem:[%s1 + $0xe0] sm:$0xff]
    %v80 = vld [vmem:[%s1 + $0xe8] sm:$0xff]
    %v81 = vld [vmem:[%s1 + $0xf0] sm:$0xff]
    %v82 = vld [vmem:[%s1 + $0xf8] sm:$0xff]
    %v83 = vld [vmem:[%s2] sm:$0xff]
    %v84 = vld [vmem:[%s2 + $0x8] sm:$0xff]
    %v85 = vld [vmem:[%s2 + $0x10] sm:$0xff]
    %v86 = vld [vmem:[%s2 + $0x18] sm:$0xff]
    %v87 = vld [vmem:[%s2 + $0x20] sm:$0xff]
    %v88 = vld [vmem:[%s2 + $0x28] sm:$0xff]
    %v89 = vld [vmem:[%s2 + $0x30] sm:$0xff]
    %v90 = vld [vmem:[%s2 + $0x38] sm:$0xff]
    %v91 = vld [vmem:[%s2 + $0x40] sm:$0xff]
    %v92 = vld [vmem:[%s2 + $0x48] sm:$0xff]
    %v93 = vld [vmem:[%s2 + $0x50] sm:$0xff]
    %v94 = vld [vmem:[%s2 + $0x58] sm:$0xff]
    %v95 = vld [vmem:[%s2 + $0x60] sm:$0xff]
    %v96 = vld [vmem:[%s2 + $0x68] sm:$0xff]
    %v97 = vld [vmem:[%s2 + $0x70] sm:$0xff]
    %v98 = vld [vmem:[%s2 + $0x78] sm:$0xff]
    %v99 = vld [vmem:[%s2 + $0x80] sm:$0xff]
    %v100 = vld [vmem:[%s2 + $0x88] sm:$0xff]
    %v101 = vld [vmem:[%s2 + $0x90] sm:$0xff]
    %v102 = vld [vmem:[%s2 + $0x98] sm:$0xff]
    %v103 = vld [vmem:[%s2 + $0xa0] sm:$0xff]
    %v104 = vld [vmem:[%s2 + $0xa8] sm:$0xff]
    %v105 = vld [vmem:[%s2 + $0xb0] sm:$0xff]
    %v106 = vld [vmem:[%s2 + $0xb8] sm:$0xff]
    %v107 = vld [vmem:[%s2 + $0xc0] sm:$0xff]
    %v108 = vld [vmem:[%s2 + $0xc8] sm:$0xff]
    %v109 = vld [vmem:[%s2 + $0xd0] sm:$0xff]
    %v110 = vld [vmem:[%s2 + $0xd8] sm:$0xff]
    %v111 = vld [vmem:[%s2 + $0xe0] sm:$0xff]
    %v112 = vld [vmem:[%s2 + $0xe8] sm:$0xff]
    %v113 = vld [vmem:[%s2 + $0xf0] sm:$0xff]
    %v114 = vld [vmem:[%s2 + $0xf8] sm:$0xff]
    %v115 = vld [vmem:[%s2 + $0x100] sm:$0xff]
    %v116 = vld [vmem:[%s2 + $0x108] sm:$0xff]
    %v117 = vld [vmem:[%s2 + $0x110] sm:$0xff]
    %v118 = vld [vmem:[%s2 + $0x118] sm:$0xff]
    %v119 = vld [vmem:[%s2 + $0x120] sm:$0xff]
    %v120 = vld [vmem:[%s2 + $0x128] sm:$0xff]
    %v121 = vld [vmem:[%s2 + $0x130] sm:$0xff]
    %v122 = vld [vmem:[%s2 + $0x138] sm:$0xff]
    %v123 = vld [vmem:[%s2 + $0x140] sm:$0xff]
    %v124 = vld [vmem:[%s2 + $0x148] sm:$0xff]
    %v125 = vld [vmem:[%s2 + $0x150] sm:$0xff]
    %v126 = vld [vmem:[%s2 + $0x158] sm:$0xff]
    %v127 = vld [vmem:[%s2 + $0x160] sm:$0xff]
    %v128 = vld [vmem:[%s2 + $0x168] sm:$0xff]
    %v129 = vld [vmem:[%s2 + $0x170] sm:$0xff]
    %v130 = vld [vmem:[%s2 + $0x178] sm:$0xff]
    %v131 = vld [vmem:[%s2 + $0x180] sm:$0xff]
    %v132 = vld [vmem:[%s2 + $0x188] sm:$0xff]
    %v133 = vld [vmem:[%s2 + $0x190] sm:$0xff]
    %v134 = vld [vmem:[%s2 + $0x198] sm:$0xff]
    %v135 = vld [vmem:[%s2 + $0x1a0] sm:$0xff]
    %v136 = vld [vmem:[%s2 + $0x1a8] sm:$0xff]
    %v137 = vld [vmem:[%s2 + $0x1b0] sm:$0xff]
    %v138 = vld [vmem:[%s2 + $0x1b8] sm:$0xff]
    %v139 = vld [vmem:[%s2 + $0x1c0] sm:$0xff]
    %v140 = vld [vmem:[%s2 + $0x1c8] sm:$0xff]
    %v141 = vld [vmem:[%s2 + $0x1d0] sm:$0xff]
    %v142 = vld [vmem:[%s2 + $0x1d8] sm:$0xff]
    %v143 = vld [vmem:[%s2 + $0x1e0] sm:$0xff]
    %v144 = vld [vmem:[%s2 + $0x1e8] sm:$0xff]
    %v145 = vld [vmem:[%s2 + $0x1f0] sm:$0xff]
    %v146 = vld [vmem:[%s2 + $0x1f8] sm:$0xff]
    %v147 = vld [vmem:[%s2 + $0x200] sm:$0xff]
    %v148 = vld [vmem:[%s2 + $0x208] sm:$0xff]
    %v149 = vld [vmem:[%s2 + $0x210] sm:$0xff]
    %v150 = vld [vmem:[%s2 + $0x218] sm:$0xff]
    %v151 = vld [vmem:[%s2 + $0x220] sm:$0xff]
    %v152 = vld [vmem:[%s2 + $0x228] sm:$0xff]
    %v153 = vld [vmem:[%s2 + $0x230] sm:$0xff]
    %v154 = vld [vmem:[%s2 + $0x238] sm:$0xff]
    %v155 = vld [vmem:[%s2 + $0x240] sm:$0xff]
    %v156 = vld [vmem:[%s2 + $0x248] sm:$0xff]
    %v157 = vld [vmem:[%s2 + $0x250] sm:$0xff]
    %v158 = vld [vmem:[%s2 + $0x258] sm:$0xff]
    %v159 = vld [vmem:[%s2 + $0x260] sm:$0xff]
    %v160 = vld [vmem:[%s2 + $0x268] sm:$0xff]
    %v161 = vld [vmem:[%s2 + $0x270] sm:$0xff]
    %v162 = vld [vmem:[%s2 + $0x278] sm:$0xff]
    %v163 = vld [vmem:[%s2 + $0x280] sm:$0xff]
    %v164 = vld [vmem:[%s2 + $0x288] sm:$0xff]
    %v165 = vld [vmem:[%s2 + $0x290] sm:$0xff]
    %v166 = vld [vmem:[%s2 + $0x298] sm:$0xff]
    %v167 = vld [vmem:[%s2 + $0x2a0] sm:$0xff]
    %v168 = vld [vmem:[%s2 + $0x2a8] sm:$0xff]
    %v169 = vld [vmem:[%s2 + $0x2b0] sm:$0xff]
    %v170 = vld [vmem:[%s2 + $0x2b8] sm:$0xff]
    %v171 = vld [vmem:[%s2 + $0x2c0] sm:$0xff]
    %v172 = vld [vmem:[%s2 + $0x2c8] sm:$0xff]
    %v173 = vld [vmem:[%s2 + $0x2d0] sm:$0xff]
    %v174 = vld [vmem:[%s2 + $0x2d8] sm:$0xff]
    %v175 = vld [vmem:[%s2 + $0x2e0] sm:$0xff]
    %v176 = vld [vmem:[%s2 + $0x2e8] sm:$0xff]
    %v177 = vld [vmem:[%s2 + $0x2f0] sm:$0xff]
    %v178 = vld [vmem:[%s2 + $0x2f8] sm:$0xff]
    %v179 = vld [vmem:[%s2 + $0x300] sm:$0xff]
    %v180 = vld [vmem:[%s2 + $0x308] sm:$0xff]
    %v181 = vld [vmem:[%s2 + $0x310] sm:$0xff]
    %v182 = vld [vmem:[%s2 + $0x318] sm:$0xff]
    %v183 = vld [vmem:[%s2 + $0x320] sm:$0xff]
    %v184 = vld [vmem:[%s2 + $0x328] sm:$0xff]
    %v185 = vld [vmem:[%s2 + $0x330] sm:$0xff]
    %v186 = vld [vmem:[%s2 + $0x338] sm:$0xff]
    %v187 = vld [vmem:[%s2 + $0x340] sm:$0xff]
    %v188 = vld [vmem:[%s2 + $0x348] sm:$0xff]
    %v189 = vld [vmem:[%s2 + $0x350] sm:$0xff]
    %v190 = vld [vmem:[%s2 + $0x358] sm:$0xff]
    %v191 = vld [vmem:[%s2 + $0x360] sm:$0xff]
    %v192 = vld [vmem:[%s2 + $0x368] sm:$0xff]
    %v193 = vld [vmem:[%s2 + $0x370] sm:$0xff]
    %v194 = vld [vmem:[%s2 + $0x378] sm:$0xff]
    %v195 = vld [vmem:[%s2 + $0x380] sm:$0xff]
    %v196 = vld [vmem:[%s2 + $0x388] sm:$0xff]
    %v197 = vld [vmem:[%s2 + $0x390] sm:$0xff]
    %v198 = vld [vmem:[%s2 + $0x398] sm:$0xff]
    %v199 = vld [vmem:[%s2 + $0x3a0] sm:$0xff]
    %v200 = vld [vmem:[%s2 + $0x3a8] sm:$0xff]
    %v201 = vld [vmem:[%s2 + $0x3b0] sm:$0xff]
    %v202 = vld [vmem:[%s2 + $0x3b8] sm:$0xff]
    %v203 = vld [vmem:[%s2 + $0x3c0] sm:$0xff]
    %v204 = vld [vmem:[%s2 + $0x3c8] sm:$0xff]
    %v205 = vld [vmem:[%s2 + $0x3d0] sm:$0xff]
    %v206 = vld [vmem:[%s2 + $0x3d8] sm:$0xff]
    %v207 = vld [vmem:[%s2 + $0x3e0] sm:$0xff]
    %v208 = vld [vmem:[%s2 + $0x3e8] sm:$0xff]
    %v209 = vld [vmem:[%s2 + $0x3f0] sm:$0xff]
    %v210 = vld [vmem:[%s2 + $0x3f8] sm:$0xff]
    %v211 = vld [vmem:[%s2 + $0x400] sm:$0xff]
    %v212 = vld [vmem:[%s2 + $0x408] sm:$0xff]
    %v213 = vld [vmem:[%s2 + $0x410] sm:$0xff]
    %v214 = vld [vmem:[%s2 + $0x418] sm:$0xff]
    %v215 = vld [vmem:[%s2 + $0x420] sm:$0xff]
    %v216 = vld [vmem:[%s2 + $0x428] sm:$0xff]
    %v217 = vld [vmem:[%s2 + $0x430] sm:$0xff]
    %v218 = vld [vmem:[%s2 + $0x438] sm:$0xff]
    %v219 = vld [vmem:[%s2 + $0x440] sm:$0xff]
    %v220 = vld [vmem:[%s2 + $0x448] sm:$0xff]
    %v221 = vld [vmem:[%s2 + $0x450] sm:$0xff]
    %v222 = vld [vmem:[%s2 + $0x458] sm:$0xff]
    %v223 = vld [vmem:[%s2 + $0x460] sm:$0xff]
    %v224 = vld [vmem:[%s2 + $0x468] sm:$0xff]
    %v225 = vld [vmem:[%s2 + $0x470] sm:$0xff]
    %v226 = vld [vmem:[%s2 + $0x478] sm:$0xff]
    %v227 = vld [vmem:[%s2 + $0x480] sm:$0xff]
    %v228 = vld [vmem:[%s2 + $0x488] sm:$0xff]
    %v229 = vld [vmem:[%s2 + $0x490] sm:$0xff]
    %v230 = vld [vmem:[%s2 + $0x498] sm:$0xff]
    %v231 = vld [vmem:[%s2 + $0x4a0] sm:$0xff]
    %v232 = vld [vmem:[%s2 + $0x4a8] sm:$0xff]
    %v233 = vld [vmem:[%s2 + $0x4b0] sm:$0xff]
    %v234 = vld [vmem:[%s2 + $0x4b8] sm:$0xff]
    %v235 = vld [vmem:[%s2 + $0x4c0] sm:$0xff]
    %v236 = vld [vmem:[%s2 + $0x4c8] sm:$0xff]
    %v237 = vld [vmem:[%s2 + $0x4d0] sm:$0xff]
    %v238 = vld [vmem:[%s2 + $0x4d8] sm:$0xff]
    %v239 = vld [vmem:[%s2 + $0x4e0] sm:$0xff]
    %v240 = vld [vmem:[%s2 + $0x4e8] sm:$0xff]
    %v241 = vld [vmem:[%s2 + $0x4f0] sm:$0xff]
    %v242 = vld [vmem:[%s2 + $0x4f8] sm:$0xff]
    %v243 = vld [vmem:[%s2 + $0x500] sm:$0xff]
    %v244 = vld [vmem:[%s2 + $0x508] sm:$0xff]
    %v245 = vld [vmem:[%s2 + $0x510] sm:$0xff]
    %v246 = vld [vmem:[%s2 + $0x518] sm:$0xff]
    %v247 = vld [vmem:[%s2 + $0x520] sm:$0xff]
    %v248 = vld [vmem:[%s2 + $0x528] sm:$0xff]
    %v249 = vld [vmem:[%s2 + $0x530] sm:$0xff]
    %v250 = vld [vmem:[%s2 + $0x538] sm:$0xff]
    %v251 = vld [vmem:[%s2 + $0x540] sm:$0xff]
    %v252 = vld [vmem:[%s2 + $0x548] sm:$0xff]
    %v253 = vld [vmem:[%s2 + $0x550] sm:$0xff]
    %v254 = vld [vmem:[%s2 + $0x558] sm:$0xff]
    %v255 = vld [vmem:[%s2 + $0x560] sm:$0xff]
    %v256 = vld [vmem:[%s2 + $0x568] sm:$0xff]
    %v257 = vld [vmem:[%s2 + $0x570] sm:$0xff]
    %v258 = vld [vmem:[%s2 + $0x578] sm:$0xff]
    %v259 = vld [vmem:[%s2 + $0x580] sm:$0xff]
    %v260 = vld [vmem:[%s2 + $0x588] sm:$0xff]
    %v261 = vld [vmem:[%s2 + $0x590] sm:$0xff]
    %v262 = vld [vmem:[%s2 + $0x598] sm:$0xff]
    %v263 = vld [vmem:[%s2 + $0x5a0] sm:$0xff]
    %v264 = vld [vmem:[%s2 + $0x5a8] sm:$0xff]
    %v265 = vld [vmem:[%s2 + $0x5b0] sm:$0xff]
    %v266 = vld [vmem:[%s2 + $0x5b8] sm:$0xff]
    %v267 = vld [vmem:[%s2 + $0x5c0] sm:$0xff]
    %v268 = vld [vmem:[%s2 + $0x5c8] sm:$0xff]
    %v269 = vld [vmem:[%s2 + $0x5d0] sm:$0xff]
    %v270 = vld [vmem:[%s2 + $0x5d8] sm:$0xff]
    %v271 = vld [vmem:[%s2 + $0x5e0] sm:$0xff]
    %v272 = vld [vmem:[%s2 + $0x5e8] sm:$0xff]
    %v273 = vld [vmem:[%s2 + $0x5f0] sm:$0xff]
    %v274 = vld [vmem:[%s2 + $0x5f8] sm:$0xff]
    %v275 = vld [vmem:[%s2 + $0x600] sm:$0xff]
    %v276 = vld [vmem:[%s2 + $0x608] sm:$0xff]
    %v277 = vld [vmem:[%s2 + $0x610] sm:$0xff]
    %v278 = vld [vmem:[%s2 + $0x618] sm:$0xff]
    %v279 = vld [vmem:[%s2 + $0x620] sm:$0xff]
    %v280 = vld [vmem:[%s2 + $0x628] sm:$0xff]
    %v281 = vld [vmem:[%s2 + $0x630] sm:$0xff]
    %v282 = vld [vmem:[%s2 + $0x638] sm:$0xff]
    %v283 = vld [vmem:[%s2 + $0x640] sm:$0xff]
    %v284 = vld [vmem:[%s2 + $0x648] sm:$0xff]
    %v285 = vld [vmem:[%s2 + $0x650] sm:$0xff]
    %v286 = vld [vmem:[%s2 + $0x658] sm:$0xff]
    %v287 = vld [vmem:[%s2 + $0x660] sm:$0xff]
    %v288 = vld [vmem:[%s2 + $0x668] sm:$0xff]
    %v289 = vld [vmem:[%s2 + $0x670] sm:$0xff]
    %v290 = vld [vmem:[%s2 + $0x678] sm:$0xff]
    %v291 = vld [vmem:[%s2 + $0x680] sm:$0xff]
    %v292 = vld [vmem:[%s2 + $0x688] sm:$0xff]
    %v293 = vld [vmem:[%s2 + $0x690] sm:$0xff]
    %v294 = vld [vmem:[%s2 + $0x698] sm:$0xff]
    %v295 = vld [vmem:[%s2 + $0x6a0] sm:$0xff]
    %v296 = vld [vmem:[%s2 + $0x6a8] sm:$0xff]
    %v297 = vld [vmem:[%s2 + $0x6b0] sm:$0xff]
    %v298 = vld [vmem:[%s2 + $0x6b8] sm:$0xff]
    %v299 = vld [vmem:[%s2 + $0x6c0] sm:$0xff]
    %v300 = vld [vmem:[%s2 + $0x6c8] sm:$0xff]
    %v301 = vld [vmem:[%s2 + $0x6d0] sm:$0xff]
    %v302 = vld [vmem:[%s2 + $0x6d8] sm:$0xff]
    %v303 = vld [vmem:[%s2 + $0x6e0] sm:$0xff]
    %v304 = vld [vmem:[%s2 + $0x6e8] sm:$0xff]
    %v305 = vld [vmem:[%s2 + $0x6f0] sm:$0xff]
    %v306 = vld [vmem:[%s2 + $0x6f8] sm:$0xff]
    %v307 = vld [vmem:[%s2 + $0x700] sm:$0xff]
    %v308 = vld [vmem:[%s2 + $0x708] sm:$0xff]
    %v309 = vld [vmem:[%s2 + $0x710] sm:$0xff]
    %v310 = vld [vmem:[%s2 + $0x718] sm:$0xff]
    %v311 = vld [vmem:[%s2 + $0x720] sm:$0xff]
    %v312 = vld [vmem:[%s2 + $0x728] sm:$0xff]
    %v313 = vld [vmem:[%s2 + $0x730] sm:$0xff]
    %v314 = vld [vmem:[%s2 + $0x738] sm:$0xff]
    %v315 = vld [vmem:[%s2 + $0x740] sm:$0xff]
    %v316 = vld [vmem:[%s2 + $0x748] sm:$0xff]
    %v317 = vld [vmem:[%s2 + $0x750] sm:$0xff]
    %v318 = vld [vmem:[%s2 + $0x758] sm:$0xff]
    %v319 = vld [vmem:[%s2 + $0x760] sm:$0xff]
    %v320 = vld [vmem:[%s2 + $0x768] sm:$0xff]
    %v321 = vld [vmem:[%s2 + $0x770] sm:$0xff]
    %v322 = vld [vmem:[%s2 + $0x778] sm:$0xff]
    %v323 = vld [vmem:[%s2 + $0x780] sm:$0xff]
    %v324 = vld [vmem:[%s2 + $0x788] sm:$0xff]
    %v325 = vld [vmem:[%s2 + $0x790] sm:$0xff]
    %v326 = vld [vmem:[%s2 + $0x798] sm:$0xff]
    %v327 = vld [vmem:[%s2 + $0x7a0] sm:$0xff]
    %v328 = vld [vmem:[%s2 + $0x7a8] sm:$0xff]
    %v329 = vld [vmem:[%s2 + $0x7b0] sm:$0xff]
    %v330 = vld [vmem:[%s2 + $0x7b8] sm:$0xff]
    %v331 = vld [vmem:[%s2 + $0x7c0] sm:$0xff]
    %v332 = vld [vmem:[%s2 + $0x7c8] sm:$0xff]
    %v333 = vld [vmem:[%s2 + $0x7d0] sm:$0xff]
    %v334 = vld [vmem:[%s2 + $0x7d8] sm:$0xff]
    %v335 = vld [vmem:[%s2 + $0x7e0] sm:$0xff]
    %v336 = vld [vmem:[%s2 + $0x7e8] sm:$0xff]
    %v337 = vld [vmem:[%s2 + $0x7f0] sm:$0xff]
    %v338 = vld [vmem:[%s2 + $0x7f8] sm:$0xff]
    %v339 = vld [vmem:[%s4] sm:$0x3]
    %v341 = vlaneseq
    %v342 = vshrl.u32 %v341, 7
    %v343 = vsub.s32 0, %v342
    %v344 = vrot.slane %v339, %v343
    %v345 = vlaneseq
    %v346 = vshrl.u32 %v345, 7
    %v347 = vsub.s32 1, %v346
    %v348 = vrot.slane %v339, %v347
    %v383 = vunpack.c.l.b16 %v51
    %v384 = vunpack.c.h.b16 %v51
    %v385 = vunpack.c.l.b16 %v52
    %v386 = vunpack.c.h.b16 %v52
    %v387 = vunpack.c.l.b16 %v53
    %v388 = vunpack.c.h.b16 %v53
    %v389 = vunpack.c.l.b16 %v54
    %v390 = vunpack.c.h.b16 %v54
    %v391 = vunpack.c.l.b16 %v55
    %v392 = vunpack.c.h.b16 %v55
    %v393 = vunpack.c.l.b16 %v56
    %v394 = vunpack.c.h.b16 %v56
    %v395 = vunpack.c.l.b16 %v57
    %v396 = vunpack.c.h.b16 %v57
    %v397 = vunpack.c.l.b16 %v58
    %v398 = vunpack.c.h.b16 %v58
    %v399 = vunpack.c.l.b16 %v59
    %v400 = vunpack.c.h.b16 %v59
    %v401 = vunpack.c.l.b16 %v60
    %v402 = vunpack.c.h.b16 %v60
    %v403 = vunpack.c.l.b16 %v61
    %v404 = vunpack.c.h.b16 %v61
    %v405 = vunpack.c.l.b16 %v62
    %v406 = vunpack.c.h.b16 %v62
    %v407 = vunpack.c.l.b16 %v63
    %v408 = vunpack.c.h.b16 %v63
    %v409 = vunpack.c.l.b16 %v64
    %v410 = vunpack.c.h.b16 %v64
    %v411 = vunpack.c.l.b16 %v65
    %v412 = vunpack.c.h.b16 %v65
    %v413 = vunpack.c.l.b16 %v66
    %v414 = vunpack.c.h.b16 %v66
    %v415 = vunpack.c.l.b16 %v67
    %v416 = vunpack.c.h.b16 %v67
    %v417 = vunpack.c.l.b16 %v68
    %v418 = vunpack.c.h.b16 %v68
    %v419 = vunpack.c.l.b16 %v69
    %v420 = vunpack.c.h.b16 %v69
    %v421 = vunpack.c.l.b16 %v70
    %v422 = vunpack.c.h.b16 %v70
    %v423 = vunpack.c.l.b16 %v71
    %v424 = vunpack.c.h.b16 %v71
    %v425 = vunpack.c.l.b16 %v72
    %v426 = vunpack.c.h.b16 %v72
    %v427 = vunpack.c.l.b16 %v73
    %v428 = vunpack.c.h.b16 %v73
    %v429 = vunpack.c.l.b16 %v74
    %v430 = vunpack.c.h.b16 %v74
    %v431 = vunpack.c.l.b16 %v75
    %v432 = vunpack.c.h.b16 %v75
    %v433 = vunpack.c.l.b16 %v76
    %v434 = vunpack.c.h.b16 %v76
    %v435 = vunpack.c.l.b16 %v77
    %v436 = vunpack.c.h.b16 %v77
    %v437 = vunpack.c.l.b16 %v78
    %v438 = vunpack.c.h.b16 %v78
    %v439 = vunpack.c.l.b16 %v79
    %v440 = vunpack.c.h.b16 %v79
    %v441 = vunpack.c.l.b16 %v80
    %v442 = vunpack.c.h.b16 %v80
    %v443 = vunpack.c.l.b16 %v81
    %v444 = vunpack.c.h.b16 %v81
    %v445 = vunpack.c.l.b16 %v82
    %v446 = vunpack.c.h.b16 %v82
    %v447 = vpack.c.b16 %v399, %v383
    %v448 = vpack.c.b16 %v400, %v384
    %v449 = vpack.c.b16 %v401, %v385
    %v450 = vpack.c.b16 %v402, %v386
    %v451 = vpack.c.b16 %v403, %v387
    %v452 = vpack.c.b16 %v404, %v388
    %v453 = vpack.c.b16 %v405, %v389
    %v454 = vpack.c.b16 %v406, %v390
    %v455 = vpack.c.b16 %v407, %v391
    %v456 = vpack.c.b16 %v408, %v392
    %v457 = vpack.c.b16 %v409, %v393
    %v458 = vpack.c.b16 %v410, %v394
    %v459 = vpack.c.b16 %v411, %v395
    %v460 = vpack.c.b16 %v412, %v396
    %v461 = vpack.c.b16 %v413, %v397
    %v462 = vpack.c.b16 %v414, %v398
    %v463 = vpack.c.b16 %v431, %v415
    %v464 = vpack.c.b16 %v432, %v416
    %v465 = vpack.c.b16 %v433, %v417
    %v466 = vpack.c.b16 %v434, %v418
    %v467 = vpack.c.b16 %v435, %v419
    %v468 = vpack.c.b16 %v436, %v420
    %v469 = vpack.c.b16 %v437, %v421
    %v470 = vpack.c.b16 %v438, %v422
    %v471 = vpack.c.b16 %v439, %v423
    %v472 = vpack.c.b16 %v440, %v424
    %v473 = vpack.c.b16 %v441, %v425
    %v474 = vpack.c.b16 %v442, %v426
    %v475 = vpack.c.b16 %v443, %v427
    %v476 = vpack.c.b16 %v444, %v428
    %v477 = vpack.c.b16 %v445, %v429
    %v478 = vpack.c.b16 %v446, %v430
    %v767 = vunpack.c.l.b16 %v83
    %v768 = vunpack.c.h.b16 %v83
    %v769 = vunpack.c.l.b16 %v84
    %v770 = vunpack.c.h.b16 %v84
    %v771 = vunpack.c.l.b16 %v85
    %v772 = vunpack.c.h.b16 %v85
    %v773 = vunpack.c.l.b16 %v86
    %v774 = vunpack.c.h.b16 %v86
    %v775 = vunpack.c.l.b16 %v87
    %v776 = vunpack.c.h.b16 %v87
    %v777 = vunpack.c.l.b16 %v88
    %v778 = vunpack.c.h.b16 %v88
    %v779 = vunpack.c.l.b16 %v89
    %v780 = vunpack.c.h.b16 %v89
    %v781 = vunpack.c.l.b16 %v90
    %v782 = vunpack.c.h.b16 %v90
    %v783 = vunpack.c.l.b16 %v91
    %v784 = vunpack.c.h.b16 %v91
    %v785 = vunpack.c.l.b16 %v92
    %v786 = vunpack.c.h.b16 %v92
    %v787 = vunpack.c.l.b16 %v93
    %v788 = vunpack.c.h.b16 %v93
    %v789 = vunpack.c.l.b16 %v94
    %v790 = vunpack.c.h.b16 %v94
    %v791 = vunpack.c.l.b16 %v95
    %v792 = vunpack.c.h.b16 %v95
    %v793 = vunpack.c.l.b16 %v96
    %v794 = vunpack.c.h.b16 %v96
    %v795 = vunpack.c.l.b16 %v97
    %v796 = vunpack.c.h.b16 %v97
    %v797 = vunpack.c.l.b16 %v98
    %v798 = vunpack.c.h.b16 %v98
    %v799 = vunpack.c.l.b16 %v99
    %v800 = vunpack.c.h.b16 %v99
    %v801 = vunpack.c.l.b16 %v100
    %v802 = vunpack.c.h.b16 %v100
    %v803 = vunpack.c.l.b16 %v101
    %v804 = vunpack.c.h.b16 %v101
    %v805 = vunpack.c.l.b16 %v102
    %v806 = vunpack.c.h.b16 %v102
    %v807 = vunpack.c.l.b16 %v103
    %v808 = vunpack.c.h.b16 %v103
    %v809 = vunpack.c.l.b16 %v104
    %v810 = vunpack.c.h.b16 %v104
    %v811 = vunpack.c.l.b16 %v105
    %v812 = vunpack.c.h.b16 %v105
    %v813 = vunpack.c.l.b16 %v106
    %v814 = vunpack.c.h.b16 %v106
    %v815 = vunpack.c.l.b16 %v107
    %v816 = vunpack.c.h.b16 %v107
    %v817 = vunpack.c.l.b16 %v108
    %v818 = vunpack.c.h.b16 %v108
    %v819 = vunpack.c.l.b16 %v109
    %v820 = vunpack.c.h.b16 %v109
    %v821 = vunpack.c.l.b16 %v110
    %v822 = vunpack.c.h.b16 %v110
    %v823 = vunpack.c.l.b16 %v111
    %v824 = vunpack.c.h.b16 %v111
    %v825 = vunpack.c.l.b16 %v112
    %v826 = vunpack.c.h.b16 %v112
    %v827 = vunpack.c.l.b16 %v113
    %v828 = vunpack.c.h.b16 %v113
    %v829 = vunpack.c.l.b16 %v114
    %v830 = vunpack.c.h.b16 %v114
    %v831 = vunpack.c.l.b16 %v115
    %v832 = vunpack.c.h.b16 %v115
    %v833 = vunpack.c.l.b16 %v116
    %v834 = vunpack.c.h.b16 %v116
    %v835 = vunpack.c.l.b16 %v117
    %v836 = vunpack.c.h.b16 %v117
    %v837 = vunpack.c.l.b16 %v118
    %v838 = vunpack.c.h.b16 %v118
    %v839 = vunpack.c.l.b16 %v119
    %v840 = vunpack.c.h.b16 %v119
    %v841 = vunpack.c.l.b16 %v120
    %v842 = vunpack.c.h.b16 %v120
    %v843 = vunpack.c.l.b16 %v121
    %v844 = vunpack.c.h.b16 %v121
    %v845 = vunpack.c.l.b16 %v122
    %v846 = vunpack.c.h.b16 %v122
    %v847 = vunpack.c.l.b16 %v123
    %v848 = vunpack.c.h.b16 %v123
    %v849 = vunpack.c.l.b16 %v124
    %v850 = vunpack.c.h.b16 %v124
    %v851 = vunpack.c.l.b16 %v125
    %v852 = vunpack.c.h.b16 %v125
    %v853 = vunpack.c.l.b16 %v126
    %v854 = vunpack.c.h.b16 %v126
    %v855 = vunpack.c.l.b16 %v127
    %v856 = vunpack.c.h.b16 %v127
    %v857 = vunpack.c.l.b16 %v128
    %v858 = vunpack.c.h.b16 %v128
    %v859 = vunpack.c.l.b16 %v129
    %v860 = vunpack.c.h.b16 %v129
    %v861 = vunpack.c.l.b16 %v130
    %v862 = vunpack.c.h.b16 %v130
    %v863 = vunpack.c.l.b16 %v131
    %v864 = vunpack.c.h.b16 %v131
    %v865 = vunpack.c.l.b16 %v132
    %v866 = vunpack.c.h.b16 %v132
    %v867 = vunpack.c.l.b16 %v133
    %v868 = vunpack.c.h.b16 %v133
    %v869 = vunpack.c.l.b16 %v134
    %v870 = vunpack.c.h.b16 %v134
    %v871 = vunpack.c.l.b16 %v135
    %v872 = vunpack.c.h.b16 %v135
    %v873 = vunpack.c.l.b16 %v136
    %v874 = vunpack.c.h.b16 %v136
    %v875 = vunpack.c.l.b16 %v137
    %v876 = vunpack.c.h.b16 %v137
    %v877 = vunpack.c.l.b16 %v138
    %v878 = vunpack.c.h.b16 %v138
    %v879 = vunpack.c.l.b16 %v139
    %v880 = vunpack.c.h.b16 %v139
    %v881 = vunpack.c.l.b16 %v140
    %v882 = vunpack.c.h.b16 %v140
    %v883 = vunpack.c.l.b16 %v141
    %v884 = vunpack.c.h.b16 %v141
    %v885 = vunpack.c.l.b16 %v142
    %v886 = vunpack.c.h.b16 %v142
    %v887 = vunpack.c.l.b16 %v143
    %v888 = vunpack.c.h.b16 %v143
    %v889 = vunpack.c.l.b16 %v144
    %v890 = vunpack.c.h.b16 %v144
    %v891 = vunpack.c.l.b16 %v145
    %v892 = vunpack.c.h.b16 %v145
    %v893 = vunpack.c.l.b16 %v146
    %v894 = vunpack.c.h.b16 %v146
    %v895 = vunpack.c.l.b16 %v147
    %v896 = vunpack.c.h.b16 %v147
    %v897 = vunpack.c.l.b16 %v148
    %v898 = vunpack.c.h.b16 %v148
    %v899 = vunpack.c.l.b16 %v149
    %v900 = vunpack.c.h.b16 %v149
    %v901 = vunpack.c.l.b16 %v150
    %v902 = vunpack.c.h.b16 %v150
    %v903 = vunpack.c.l.b16 %v151
    %v904 = vunpack.c.h.b16 %v151
    %v905 = vunpack.c.l.b16 %v152
    %v906 = vunpack.c.h.b16 %v152
    %v907 = vunpack.c.l.b16 %v153
    %v908 = vunpack.c.h.b16 %v153
    %v909 = vunpack.c.l.b16 %v154
    %v910 = vunpack.c.h.b16 %v154
    %v911 = vunpack.c.l.b16 %v155
    %v912 = vunpack.c.h.b16 %v155
    %v913 = vunpack.c.l.b16 %v156
    %v914 = vunpack.c.h.b16 %v156
    %v915 = vunpack.c.l.b16 %v157
    %v916 = vunpack.c.h.b16 %v157
    %v917 = vunpack.c.l.b16 %v158
    %v918 = vunpack.c.h.b16 %v158
    %v919 = vunpack.c.l.b16 %v159
    %v920 = vunpack.c.h.b16 %v159
    %v921 = vunpack.c.l.b16 %v160
    %v922 = vunpack.c.h.b16 %v160
    %v923 = vunpack.c.l.b16 %v161
    %v924 = vunpack.c.h.b16 %v161
    %v925 = vunpack.c.l.b16 %v162
    %v926 = vunpack.c.h.b16 %v162
    %v927 = vunpack.c.l.b16 %v163
    %v928 = vunpack.c.h.b16 %v163
    %v929 = vunpack.c.l.b16 %v164
    %v930 = vunpack.c.h.b16 %v164
    %v931 = vunpack.c.l.b16 %v165
    %v932 = vunpack.c.h.b16 %v165
    %v933 = vunpack.c.l.b16 %v166
    %v934 = vunpack.c.h.b16 %v166
    %v935 = vunpack.c.l.b16 %v167
    %v936 = vunpack.c.h.b16 %v167
    %v937 = vunpack.c.l.b16 %v168
    %v938 = vunpack.c.h.b16 %v168
    %v939 = vunpack.c.l.b16 %v169
    %v940 = vunpack.c.h.b16 %v169
    %v941 = vunpack.c.l.b16 %v170
    %v942 = vunpack.c.h.b16 %v170
    %v943 = vunpack.c.l.b16 %v171
    %v944 = vunpack.c.h.b16 %v171
    %v945 = vunpack.c.l.b16 %v172
    %v946 = vunpack.c.h.b16 %v172
    %v947 = vunpack.c.l.b16 %v173
    %v948 = vunpack.c.h.b16 %v173
    %v949 = vunpack.c.l.b16 %v174
    %v950 = vunpack.c.h.b16 %v174
    %v951 = vunpack.c.l.b16 %v175
    %v952 = vunpack.c.h.b16 %v175
    %v953 = vunpack.c.l.b16 %v176
    %v954 = vunpack.c.h.b16 %v176
    %v955 = vunpack.c.l.b16 %v177
    %v956 = vunpack.c.h.b16 %v177
    %v957 = vunpack.c.l.b16 %v178
    %v958 = vunpack.c.h.b16 %v178
    %v959 = vunpack.c.l.b16 %v179
    %v960 = vunpack.c.h.b16 %v179
    %v961 = vunpack.c.l.b16 %v180
    %v962 = vunpack.c.h.b16 %v180
    %v963 = vunpack.c.l.b16 %v181
    %v964 = vunpack.c.h.b16 %v181
    %v965 = vunpack.c.l.b16 %v182
    %v966 = vunpack.c.h.b16 %v182
    %v967 = vunpack.c.l.b16 %v183
    %v968 = vunpack.c.h.b16 %v183
    %v969 = vunpack.c.l.b16 %v184
    %v970 = vunpack.c.h.b16 %v184
    %v971 = vunpack.c.l.b16 %v185
    %v972 = vunpack.c.h.b16 %v185
    %v973 = vunpack.c.l.b16 %v186
    %v974 = vunpack.c.h.b16 %v186
    %v975 = vunpack.c.l.b16 %v187
    %v976 = vunpack.c.h.b16 %v187
    %v977 = vunpack.c.l.b16 %v188
    %v978 = vunpack.c.h.b16 %v188
    %v979 = vunpack.c.l.b16 %v189
    %v980 = vunpack.c.h.b16 %v189
    %v981 = vunpack.c.l.b16 %v190
    %v982 = vunpack.c.h.b16 %v190
    %v983 = vunpack.c.l.b16 %v191
    %v984 = vunpack.c.h.b16 %v191
    %v985 = vunpack.c.l.b16 %v192
    %v986 = vunpack.c.h.b16 %v192
    %v987 = vunpack.c.l.b16 %v193
    %v988 = vunpack.c.h.b16 %v193
    %v989 = vunpack.c.l.b16 %v194
    %v990 = vunpack.c.h.b16 %v194
    %v991 = vunpack.c.l.b16 %v195
    %v992 = vunpack.c.h.b16 %v195
    %v993 = vunpack.c.l.b16 %v196
    %v994 = vunpack.c.h.b16 %v196
    %v995 = vunpack.c.l.b16 %v197
    %v996 = vunpack.c.h.b16 %v197
    %v997 = vunpack.c.l.b16 %v198
    %v998 = vunpack.c.h.b16 %v198
    %v999 = vunpack.c.l.b16 %v199
    %v1000 = vunpack.c.h.b16 %v199
    %v1001 = vunpack.c.l.b16 %v200
    %v1002 = vunpack.c.h.b16 %v200
    %v1003 = vunpack.c.l.b16 %v201
    %v1004 = vunpack.c.h.b16 %v201
    %v1005 = vunpack.c.l.b16 %v202
    %v1006 = vunpack.c.h.b16 %v202
    %v1007 = vunpack.c.l.b16 %v203
    %v1008 = vunpack.c.h.b16 %v203
    %v1009 = vunpack.c.l.b16 %v204
    %v1010 = vunpack.c.h.b16 %v204
    %v1011 = vunpack.c.l.b16 %v205
    %v1012 = vunpack.c.h.b16 %v205
    %v1013 = vunpack.c.l.b16 %v206
    %v1014 = vunpack.c.h.b16 %v206
    %v1015 = vunpack.c.l.b16 %v207
    %v1016 = vunpack.c.h.b16 %v207
    %v1017 = vunpack.c.l.b16 %v208
    %v1018 = vunpack.c.h.b16 %v208
    %v1019 = vunpack.c.l.b16 %v209
    %v1020 = vunpack.c.h.b16 %v209
    %v1021 = vunpack.c.l.b16 %v210
    %v1022 = vunpack.c.h.b16 %v210
    %v1023 = vunpack.c.l.b16 %v211
    %v1024 = vunpack.c.h.b16 %v211
    %v1025 = vunpack.c.l.b16 %v212
    %v1026 = vunpack.c.h.b16 %v212
    %v1027 = vunpack.c.l.b16 %v213
    %v1028 = vunpack.c.h.b16 %v213
    %v1029 = vunpack.c.l.b16 %v214
    %v1030 = vunpack.c.h.b16 %v214
    %v1031 = vunpack.c.l.b16 %v215
    %v1032 = vunpack.c.h.b16 %v215
    %v1033 = vunpack.c.l.b16 %v216
    %v1034 = vunpack.c.h.b16 %v216
    %v1035 = vunpack.c.l.b16 %v217
    %v1036 = vunpack.c.h.b16 %v217
    %v1037 = vunpack.c.l.b16 %v218
    %v1038 = vunpack.c.h.b16 %v218
    %v1039 = vunpack.c.l.b16 %v219
    %v1040 = vunpack.c.h.b16 %v219
    %v1041 = vunpack.c.l.b16 %v220
    %v1042 = vunpack.c.h.b16 %v220
    %v1043 = vunpack.c.l.b16 %v221
    %v1044 = vunpack.c.h.b16 %v221
    %v1045 = vunpack.c.l.b16 %v222
    %v1046 = vunpack.c.h.b16 %v222
    %v1047 = vunpack.c.l.b16 %v223
    %v1048 = vunpack.c.h.b16 %v223
    %v1049 = vunpack.c.l.b16 %v224
    %v1050 = vunpack.c.h.b16 %v224
    %v1051 = vunpack.c.l.b16 %v225
    %v1052 = vunpack.c.h.b16 %v225
    %v1053 = vunpack.c.l.b16 %v226
    %v1054 = vunpack.c.h.b16 %v226
    %v1055 = vunpack.c.l.b16 %v227
    %v1056 = vunpack.c.h.b16 %v227
    %v1057 = vunpack.c.l.b16 %v228
    %v1058 = vunpack.c.h.b16 %v228
    %v1059 = vunpack.c.l.b16 %v229
    %v1060 = vunpack.c.h.b16 %v229
    %v1061 = vunpack.c.l.b16 %v230
    %v1062 = vunpack.c.h.b16 %v230
    %v1063 = vunpack.c.l.b16 %v231
    %v1064 = vunpack.c.h.b16 %v231
    %v1065 = vunpack.c.l.b16 %v232
    %v1066 = vunpack.c.h.b16 %v232
    %v1067 = vunpack.c.l.b16 %v233
    %v1068 = vunpack.c.h.b16 %v233
    %v1069 = vunpack.c.l.b16 %v234
    %v1070 = vunpack.c.h.b16 %v234
    %v1071 = vunpack.c.l.b16 %v235
    %v1072 = vunpack.c.h.b16 %v235
    %v1073 = vunpack.c.l.b16 %v236
    %v1074 = vunpack.c.h.b16 %v236
    %v1075 = vunpack.c.l.b16 %v237
    %v1076 = vunpack.c.h.b16 %v237
    %v1077 = vunpack.c.l.b16 %v238
    %v1078 = vunpack.c.h.b16 %v238
    %v1079 = vunpack.c.l.b16 %v239
    %v1080 = vunpack.c.h.b16 %v239
    %v1081 = vunpack.c.l.b16 %v240
    %v1082 = vunpack.c.h.b16 %v240
    %v1083 = vunpack.c.l.b16 %v241
    %v1084 = vunpack.c.h.b16 %v241
    %v1085 = vunpack.c.l.b16 %v242
    %v1086 = vunpack.c.h.b16 %v242
    %v1087 = vunpack.c.l.b16 %v243
    %v1088 = vunpack.c.h.b16 %v243
    %v1089 = vunpack.c.l.b16 %v244
    %v1090 = vunpack.c.h.b16 %v244
    %v1091 = vunpack.c.l.b16 %v245
    %v1092 = vunpack.c.h.b16 %v245
    %v1093 = vunpack.c.l.b16 %v246
    %v1094 = vunpack.c.h.b16 %v246
    %v1095 = vunpack.c.l.b16 %v247
    %v1096 = vunpack.c.h.b16 %v247
    %v1097 = vunpack.c.l.b16 %v248
    %v1098 = vunpack.c.h.b16 %v248
    %v1099 = vunpack.c.l.b16 %v249
    %v1100 = vunpack.c.h.b16 %v249
    %v1101 = vunpack.c.l.b16 %v250
    %v1102 = vunpack.c.h.b16 %v250
    %v1103 = vunpack.c.l.b16 %v251
    %v1104 = vunpack.c.h.b16 %v251
    %v1105 = vunpack.c.l.b16 %v252
    %v1106 = vunpack.c.h.b16 %v252
    %v1107 = vunpack.c.l.b16 %v253
    %v1108 = vunpack.c.h.b16 %v253
    %v1109 = vunpack.c.l.b16 %v254
    %v1110 = vunpack.c.h.b16 %v254
    %v1111 = vunpack.c.l.b16 %v255
    %v1112 = vunpack.c.h.b16 %v255
    %v1113 = vunpack.c.l.b16 %v256
    %v1114 = vunpack.c.h.b16 %v256
    %v1115 = vunpack.c.l.b16 %v257
    %v1116 = vunpack.c.h.b16 %v257
    %v1117 = vunpack.c.l.b16 %v258
    %v1118 = vunpack.c.h.b16 %v258
    %v1119 = vunpack.c.l.b16 %v259
    %v1120 = vunpack.c.h.b16 %v259
    %v1121 = vunpack.c.l.b16 %v260
    %v1122 = vunpack.c.h.b16 %v260
    %v1123 = vunpack.c.l.b16 %v261
    %v1124 = vunpack.c.h.b16 %v261
    %v1125 = vunpack.c.l.b16 %v262
    %v1126 = vunpack.c.h.b16 %v262
    %v1127 = vunpack.c.l.b16 %v263
    %v1128 = vunpack.c.h.b16 %v263
    %v1129 = vunpack.c.l.b16 %v264
    %v1130 = vunpack.c.h.b16 %v264
    %v1131 = vunpack.c.l.b16 %v265
    %v1132 = vunpack.c.h.b16 %v265
    %v1133 = vunpack.c.l.b16 %v266
    %v1134 = vunpack.c.h.b16 %v266
    %v1135 = vunpack.c.l.b16 %v267
    %v1136 = vunpack.c.h.b16 %v267
    %v1137 = vunpack.c.l.b16 %v268
    %v1138 = vunpack.c.h.b16 %v268
    %v1139 = vunpack.c.l.b16 %v269
    %v1140 = vunpack.c.h.b16 %v269
    %v1141 = vunpack.c.l.b16 %v270
    %v1142 = vunpack.c.h.b16 %v270
    %v1143 = vunpack.c.l.b16 %v271
    %v1144 = vunpack.c.h.b16 %v271
    %v1145 = vunpack.c.l.b16 %v272
    %v1146 = vunpack.c.h.b16 %v272
    %v1147 = vunpack.c.l.b16 %v273
    %v1148 = vunpack.c.h.b16 %v273
    %v1149 = vunpack.c.l.b16 %v274
    %v1150 = vunpack.c.h.b16 %v274
    %v1151 = vunpack.c.l.b16 %v275
    %v1152 = vunpack.c.h.b16 %v275
    %v1153 = vunpack.c.l.b16 %v276
    %v1154 = vunpack.c.h.b16 %v276
    %v1155 = vunpack.c.l.b16 %v277
    %v1156 = vunpack.c.h.b16 %v277
    %v1157 = vunpack.c.l.b16 %v278
    %v1158 = vunpack.c.h.b16 %v278
    %v1159 = vunpack.c.l.b16 %v279
    %v1160 = vunpack.c.h.b16 %v279
    %v1161 = vunpack.c.l.b16 %v280
    %v1162 = vunpack.c.h.b16 %v280
    %v1163 = vunpack.c.l.b16 %v281
    %v1164 = vunpack.c.h.b16 %v281
    %v1165 = vunpack.c.l.b16 %v282
    %v1166 = vunpack.c.h.b16 %v282
    %v1167 = vunpack.c.l.b16 %v283
    %v1168 = vunpack.c.h.b16 %v283
    %v1169 = vunpack.c.l.b16 %v284
    %v1170 = vunpack.c.h.b16 %v284
    %v1171 = vunpack.c.l.b16 %v285
    %v1172 = vunpack.c.h.b16 %v285
    %v1173 = vunpack.c.l.b16 %v286
    %v1174 = vunpack.c.h.b16 %v286
    %v1175 = vunpack.c.l.b16 %v287
    %v1176 = vunpack.c.h.b16 %v287
    %v1177 = vunpack.c.l.b16 %v288
    %v1178 = vunpack.c.h.b16 %v288
    %v1179 = vunpack.c.l.b16 %v289
    %v1180 = vunpack.c.h.b16 %v289
    %v1181 = vunpack.c.l.b16 %v290
    %v1182 = vunpack.c.h.b16 %v290
    %v1183 = vunpack.c.l.b16 %v291
    %v1184 = vunpack.c.h.b16 %v291
    %v1185 = vunpack.c.l.b16 %v292
    %v1186 = vunpack.c.h.b16 %v292
    %v1187 = vunpack.c.l.b16 %v293
    %v1188 = vunpack.c.h.b16 %v293
    %v1189 = vunpack.c.l.b16 %v294
    %v1190 = vunpack.c.h.b16 %v294
    %v1191 = vunpack.c.l.b16 %v295
    %v1192 = vunpack.c.h.b16 %v295
    %v1193 = vunpack.c.l.b16 %v296
    %v1194 = vunpack.c.h.b16 %v296
    %v1195 = vunpack.c.l.b16 %v297
    %v1196 = vunpack.c.h.b16 %v297
    %v1197 = vunpack.c.l.b16 %v298
    %v1198 = vunpack.c.h.b16 %v298
    %v1199 = vunpack.c.l.b16 %v299
    %v1200 = vunpack.c.h.b16 %v299
    %v1201 = vunpack.c.l.b16 %v300
    %v1202 = vunpack.c.h.b16 %v300
    %v1203 = vunpack.c.l.b16 %v301
    %v1204 = vunpack.c.h.b16 %v301
    %v1205 = vunpack.c.l.b16 %v302
    %v1206 = vunpack.c.h.b16 %v302
    %v1207 = vunpack.c.l.b16 %v303
    %v1208 = vunpack.c.h.b16 %v303
    %v1209 = vunpack.c.l.b16 %v304
    %v1210 = vunpack.c.h.b16 %v304
    %v1211 = vunpack.c.l.b16 %v305
    %v1212 = vunpack.c.h.b16 %v305
    %v1213 = vunpack.c.l.b16 %v306
    %v1214 = vunpack.c.h.b16 %v306
    %v1215 = vunpack.c.l.b16 %v307
    %v1216 = vunpack.c.h.b16 %v307
    %v1217 = vunpack.c.l.b16 %v308
    %v1218 = vunpack.c.h.b16 %v308
    %v1219 = vunpack.c.l.b16 %v309
    %v1220 = vunpack.c.h.b16 %v309
    %v1221 = vunpack.c.l.b16 %v310
    %v1222 = vunpack.c.h.b16 %v310
    %v1223 = vunpack.c.l.b16 %v311
    %v1224 = vunpack.c.h.b16 %v311
    %v1225 = vunpack.c.l.b16 %v312
    %v1226 = vunpack.c.h.b16 %v312
    %v1227 = vunpack.c.l.b16 %v313
    %v1228 = vunpack.c.h.b16 %v313
    %v1229 = vunpack.c.l.b16 %v314
    %v1230 = vunpack.c.h.b16 %v314
    %v1231 = vunpack.c.l.b16 %v315
    %v1232 = vunpack.c.h.b16 %v315
    %v1233 = vunpack.c.l.b16 %v316
    %v1234 = vunpack.c.h.b16 %v316
    %v1235 = vunpack.c.l.b16 %v317
    %v1236 = vunpack.c.h.b16 %v317
    %v1237 = vunpack.c.l.b16 %v318
    %v1238 = vunpack.c.h.b16 %v318
    %v1239 = vunpack.c.l.b16 %v319
    %v1240 = vunpack.c.h.b16 %v319
    %v1241 = vunpack.c.l.b16 %v320
    %v1242 = vunpack.c.h.b16 %v320
    %v1243 = vunpack.c.l.b16 %v321
    %v1244 = vunpack.c.h.b16 %v321
    %v1245 = vunpack.c.l.b16 %v322
    %v1246 = vunpack.c.h.b16 %v322
    %v1247 = vunpack.c.l.b16 %v323
    %v1248 = vunpack.c.h.b16 %v323
    %v1249 = vunpack.c.l.b16 %v324
    %v1250 = vunpack.c.h.b16 %v324
    %v1251 = vunpack.c.l.b16 %v325
    %v1252 = vunpack.c.h.b16 %v325
    %v1253 = vunpack.c.l.b16 %v326
    %v1254 = vunpack.c.h.b16 %v326
    %v1255 = vunpack.c.l.b16 %v327
    %v1256 = vunpack.c.h.b16 %v327
    %v1257 = vunpack.c.l.b16 %v328
    %v1258 = vunpack.c.h.b16 %v328
    %v1259 = vunpack.c.l.b16 %v329
    %v1260 = vunpack.c.h.b16 %v329
    %v1261 = vunpack.c.l.b16 %v330
    %v1262 = vunpack.c.h.b16 %v330
    %v1263 = vunpack.c.l.b16 %v331
    %v1264 = vunpack.c.h.b16 %v331
    %v1265 = vunpack.c.l.b16 %v332
    %v1266 = vunpack.c.h.b16 %v332
    %v1267 = vunpack.c.l.b16 %v333
    %v1268 = vunpack.c.h.b16 %v333
    %v1269 = vunpack.c.l.b16 %v334
    %v1270 = vunpack.c.h.b16 %v334
    %v1271 = vunpack.c.l.b16 %v335
    %v1272 = vunpack.c.h.b16 %v335
    %v1273 = vunpack.c.l.b16 %v336
    %v1274 = vunpack.c.h.b16 %v336
    %v1275 = vunpack.c.l.b16 %v337
    %v1276 = vunpack.c.h.b16 %v337
    %v1277 = vunpack.c.l.b16 %v338
    %v1278 = vunpack.c.h.b16 %v338
    %v1279 = vpack.c.b16 %v769, %v767
    %v1280 = vpack.c.b16 %v770, %v768
    %v1281 = vpack.c.b16 %v773, %v771
    %v1282 = vpack.c.b16 %v774, %v772
    %v1283 = vpack.c.b16 %v777, %v775
    %v1284 = vpack.c.b16 %v778, %v776
    %v1285 = vpack.c.b16 %v781, %v779
    %v1286 = vpack.c.b16 %v782, %v780
    %v1287 = vpack.c.b16 %v785, %v783
    %v1288 = vpack.c.b16 %v786, %v784
    %v1289 = vpack.c.b16 %v789, %v787
    %v1290 = vpack.c.b16 %v790, %v788
    %v1291 = vpack.c.b16 %v793, %v791
    %v1292 = vpack.c.b16 %v794, %v792
    %v1293 = vpack.c.b16 %v797, %v795
    %v1294 = vpack.c.b16 %v798, %v796
    %v1295 = vpack.c.b16 %v801, %v799
    %v1296 = vpack.c.b16 %v802, %v800
    %v1297 = vpack.c.b16 %v805, %v803
    %v1298 = vpack.c.b16 %v806, %v804
    %v1299 = vpack.c.b16 %v809, %v807
    %v1300 = vpack.c.b16 %v810, %v808
    %v1301 = vpack.c.b16 %v813, %v811
    %v1302 = vpack.c.b16 %v814, %v812
    %v1303 = vpack.c.b16 %v817, %v815
    %v1304 = vpack.c.b16 %v818, %v816
    %v1305 = vpack.c.b16 %v821, %v819
    %v1306 = vpack.c.b16 %v822, %v820
    %v1307 = vpack.c.b16 %v825, %v823
    %v1308 = vpack.c.b16 %v826, %v824
    %v1309 = vpack.c.b16 %v829, %v827
    %v1310 = vpack.c.b16 %v830, %v828
    %v1311 = vpack.c.b16 %v833, %v831
    %v1312 = vpack.c.b16 %v834, %v832
    %v1313 = vpack.c.b16 %v837, %v835
    %v1314 = vpack.c.b16 %v838, %v836
    %v1315 = vpack.c.b16 %v841, %v839
    %v1316 = vpack.c.b16 %v842, %v840
    %v1317 = vpack.c.b16 %v845, %v843
    %v1318 = vpack.c.b16 %v846, %v844
    %v1319 = vpack.c.b16 %v849, %v847
    %v1320 = vpack.c.b16 %v850, %v848
    %v1321 = vpack.c.b16 %v853, %v851
    %v1322 = vpack.c.b16 %v854, %v852
    %v1323 = vpack.c.b16 %v857, %v855
    %v1324 = vpack.c.b16 %v858, %v856
    %v1325 = vpack.c.b16 %v861, %v859
    %v1326 = vpack.c.b16 %v862, %v860
    %v1327 = vpack.c.b16 %v865, %v863
    %v1328 = vpack.c.b16 %v866, %v864
    %v1329 = vpack.c.b16 %v869, %v867
    %v1330 = vpack.c.b16 %v870, %v868
    %v1331 = vpack.c.b16 %v873, %v871
    %v1332 = vpack.c.b16 %v874, %v872
    %v1333 = vpack.c.b16 %v877, %v875
    %v1334 = vpack.c.b16 %v878, %v876
    %v1335 = vpack.c.b16 %v881, %v879
    %v1336 = vpack.c.b16 %v882, %v880
    %v1337 = vpack.c.b16 %v885, %v883
    %v1338 = vpack.c.b16 %v886, %v884
    %v1339 = vpack.c.b16 %v889, %v887
    %v1340 = vpack.c.b16 %v890, %v888
    %v1341 = vpack.c.b16 %v893, %v891
    %v1342 = vpack.c.b16 %v894, %v892
    %v1343 = vpack.c.b16 %v897, %v895
    %v1344 = vpack.c.b16 %v898, %v896
    %v1345 = vpack.c.b16 %v901, %v899
    %v1346 = vpack.c.b16 %v902, %v900
    %v1347 = vpack.c.b16 %v905, %v903
    %v1348 = vpack.c.b16 %v906, %v904
    %v1349 = vpack.c.b16 %v909, %v907
    %v1350 = vpack.c.b16 %v910, %v908
    %v1351 = vpack.c.b16 %v913, %v911
    %v1352 = vpack.c.b16 %v914, %v912
    %v1353 = vpack.c.b16 %v917, %v915
    %v1354 = vpack.c.b16 %v918, %v916
    %v1355 = vpack.c.b16 %v921, %v919
    %v1356 = vpack.c.b16 %v922, %v920
    %v1357 = vpack.c.b16 %v925, %v923
    %v1358 = vpack.c.b16 %v926, %v924
    %v1359 = vpack.c.b16 %v929, %v927
    %v1360 = vpack.c.b16 %v930, %v928
    %v1361 = vpack.c.b16 %v933, %v931
    %v1362 = vpack.c.b16 %v934, %v932
    %v1363 = vpack.c.b16 %v937, %v935
    %v1364 = vpack.c.b16 %v938, %v936
    %v1365 = vpack.c.b16 %v941, %v939
    %v1366 = vpack.c.b16 %v942, %v940
    %v1367 = vpack.c.b16 %v945, %v943
    %v1368 = vpack.c.b16 %v946, %v944
    %v1369 = vpack.c.b16 %v949, %v947
    %v1370 = vpack.c.b16 %v950, %v948
    %v1371 = vpack.c.b16 %v953, %v951
    %v1372 = vpack.c.b16 %v954, %v952
    %v1373 = vpack.c.b16 %v957, %v955
    %v1374 = vpack.c.b16 %v958, %v956
    %v1375 = vpack.c.b16 %v961, %v959
    %v1376 = vpack.c.b16 %v962, %v960
    %v1377 = vpack.c.b16 %v965, %v963
    %v1378 = vpack.c.b16 %v966, %v964
    %v1379 = vpack.c.b16 %v969, %v967
    %v1380 = vpack.c.b16 %v970, %v968
    %v1381 = vpack.c.b16 %v973, %v971
    %v1382 = vpack.c.b16 %v974, %v972
    %v1383 = vpack.c.b16 %v977, %v975
    %v1384 = vpack.c.b16 %v978, %v976
    %v1385 = vpack.c.b16 %v981, %v979
    %v1386 = vpack.c.b16 %v982, %v980
    %v1387 = vpack.c.b16 %v985, %v983
    %v1388 = vpack.c.b16 %v986, %v984
    %v1389 = vpack.c.b16 %v989, %v987
    %v1390 = vpack.c.b16 %v990, %v988
    %v1391 = vpack.c.b16 %v993, %v991
    %v1392 = vpack.c.b16 %v994, %v992
    %v1393 = vpack.c.b16 %v997, %v995
    %v1394 = vpack.c.b16 %v998, %v996
    %v1395 = vpack.c.b16 %v1001, %v999
    %v1396 = vpack.c.b16 %v1002, %v1000
    %v1397 = vpack.c.b16 %v1005, %v1003
    %v1398 = vpack.c.b16 %v1006, %v1004
    %v1399 = vpack.c.b16 %v1009, %v1007
    %v1400 = vpack.c.b16 %v1010, %v1008
    %v1401 = vpack.c.b16 %v1013, %v1011
    %v1402 = vpack.c.b16 %v1014, %v1012
    %v1403 = vpack.c.b16 %v1017, %v1015
    %v1404 = vpack.c.b16 %v1018, %v1016
    %v1405 = vpack.c.b16 %v1021, %v1019
    %v1406 = vpack.c.b16 %v1022, %v1020
    %v1407 = vpack.c.b16 %v1025, %v1023
    %v1408 = vpack.c.b16 %v1026, %v1024
    %v1409 = vpack.c.b16 %v1029, %v1027
    %v1410 = vpack.c.b16 %v1030, %v1028
    %v1411 = vpack.c.b16 %v1033, %v1031
    %v1412 = vpack.c.b16 %v1034, %v1032
    %v1413 = vpack.c.b16 %v1037, %v1035
    %v1414 = vpack.c.b16 %v1038, %v1036
    %v1415 = vpack.c.b16 %v1041, %v1039
    %v1416 = vpack.c.b16 %v1042, %v1040
    %v1417 = vpack.c.b16 %v1045, %v1043
    %v1418 = vpack.c.b16 %v1046, %v1044
    %v1419 = vpack.c.b16 %v1049, %v1047
    %v1420 = vpack.c.b16 %v1050, %v1048
    %v1421 = vpack.c.b16 %v1053, %v1051
    %v1422 = vpack.c.b16 %v1054, %v1052
    %v1423 = vpack.c.b16 %v1057, %v1055
    %v1424 = vpack.c.b16 %v1058, %v1056
    %v1425 = vpack.c.b16 %v1061, %v1059
    %v1426 = vpack.c.b16 %v1062, %v1060
    %v1427 = vpack.c.b16 %v1065, %v1063
    %v1428 = vpack.c.b16 %v1066, %v1064
    %v1429 = vpack.c.b16 %v1069, %v1067
    %v1430 = vpack.c.b16 %v1070, %v1068
    %v1431 = vpack.c.b16 %v1073, %v1071
    %v1432 = vpack.c.b16 %v1074, %v1072
    %v1433 = vpack.c.b16 %v1077, %v1075
    %v1434 = vpack.c.b16 %v1078, %v1076
    %v1435 = vpack.c.b16 %v1081, %v1079
    %v1436 = vpack.c.b16 %v1082, %v1080
    %v1437 = vpack.c.b16 %v1085, %v1083
    %v1438 = vpack.c.b16 %v1086, %v1084
    %v1439 = vpack.c.b16 %v1089, %v1087
    %v1440 = vpack.c.b16 %v1090, %v1088
    %v1441 = vpack.c.b16 %v1093, %v1091
    %v1442 = vpack.c.b16 %v1094, %v1092
    %v1443 = vpack.c.b16 %v1097, %v1095
    %v1444 = vpack.c.b16 %v1098, %v1096
    %v1445 = vpack.c.b16 %v1101, %v1099
    %v1446 = vpack.c.b16 %v1102, %v1100
    %v1447 = vpack.c.b16 %v1105, %v1103
    %v1448 = vpack.c.b16 %v1106, %v1104
    %v1449 = vpack.c.b16 %v1109, %v1107
    %v1450 = vpack.c.b16 %v1110, %v1108
    %v1451 = vpack.c.b16 %v1113, %v1111
    %v1452 = vpack.c.b16 %v1114, %v1112
    %v1453 = vpack.c.b16 %v1117, %v1115
    %v1454 = vpack.c.b16 %v1118, %v1116
    %v1455 = vpack.c.b16 %v1121, %v1119
    %v1456 = vpack.c.b16 %v1122, %v1120
    %v1457 = vpack.c.b16 %v1125, %v1123
    %v1458 = vpack.c.b16 %v1126, %v1124
    %v1459 = vpack.c.b16 %v1129, %v1127
    %v1460 = vpack.c.b16 %v1130, %v1128
    %v1461 = vpack.c.b16 %v1133, %v1131
    %v1462 = vpack.c.b16 %v1134, %v1132
    %v1463 = vpack.c.b16 %v1137, %v1135
    %v1464 = vpack.c.b16 %v1138, %v1136
    %v1465 = vpack.c.b16 %v1141, %v1139
    %v1466 = vpack.c.b16 %v1142, %v1140
    %v1467 = vpack.c.b16 %v1145, %v1143
    %v1468 = vpack.c.b16 %v1146, %v1144
    %v1469 = vpack.c.b16 %v1149, %v1147
    %v1470 = vpack.c.b16 %v1150, %v1148
    %v1471 = vpack.c.b16 %v1153, %v1151
    %v1472 = vpack.c.b16 %v1154, %v1152
    %v1473 = vpack.c.b16 %v1157, %v1155
    %v1474 = vpack.c.b16 %v1158, %v1156
    %v1475 = vpack.c.b16 %v1161, %v1159
    %v1476 = vpack.c.b16 %v1162, %v1160
    %v1477 = vpack.c.b16 %v1165, %v1163
    %v1478 = vpack.c.b16 %v1166, %v1164
    %v1479 = vpack.c.b16 %v1169, %v1167
    %v1480 = vpack.c.b16 %v1170, %v1168
    %v1481 = vpack.c.b16 %v1173, %v1171
    %v1482 = vpack.c.b16 %v1174, %v1172
    %v1483 = vpack.c.b16 %v1177, %v1175
    %v1484 = vpack.c.b16 %v1178, %v1176
    %v1485 = vpack.c.b16 %v1181, %v1179
    %v1486 = vpack.c.b16 %v1182, %v1180
    %v1487 = vpack.c.b16 %v1185, %v1183
    %v1488 = vpack.c.b16 %v1186, %v1184
    %v1489 = vpack.c.b16 %v1189, %v1187
    %v1490 = vpack.c.b16 %v1190, %v1188
    %v1491 = vpack.c.b16 %v1193, %v1191
    %v1492 = vpack.c.b16 %v1194, %v1192
    %v1493 = vpack.c.b16 %v1197, %v1195
    %v1494 = vpack.c.b16 %v1198, %v1196
    %v1495 = vpack.c.b16 %v1201, %v1199
    %v1496 = vpack.c.b16 %v1202, %v1200
    %v1497 = vpack.c.b16 %v1205, %v1203
    %v1498 = vpack.c.b16 %v1206, %v1204
    %v1499 = vpack.c.b16 %v1209, %v1207
    %v1500 = vpack.c.b16 %v1210, %v1208
    %v1501 = vpack.c.b16 %v1213, %v1211
    %v1502 = vpack.c.b16 %v1214, %v1212
    %v1503 = vpack.c.b16 %v1217, %v1215
    %v1504 = vpack.c.b16 %v1218, %v1216
    %v1505 = vpack.c.b16 %v1221, %v1219
    %v1506 = vpack.c.b16 %v1222, %v1220
    %v1507 = vpack.c.b16 %v1225, %v1223
    %v1508 = vpack.c.b16 %v1226, %v1224
    %v1509 = vpack.c.b16 %v1229, %v1227
    %v1510 = vpack.c.b16 %v1230, %v1228
    %v1511 = vpack.c.b16 %v1233, %v1231
    %v1512 = vpack.c.b16 %v1234, %v1232
    %v1513 = vpack.c.b16 %v1237, %v1235
    %v1514 = vpack.c.b16 %v1238, %v1236
    %v1515 = vpack.c.b16 %v1241, %v1239
    %v1516 = vpack.c.b16 %v1242, %v1240
    %v1517 = vpack.c.b16 %v1245, %v1243
    %v1518 = vpack.c.b16 %v1246, %v1244
    %v1519 = vpack.c.b16 %v1249, %v1247
    %v1520 = vpack.c.b16 %v1250, %v1248
    %v1521 = vpack.c.b16 %v1253, %v1251
    %v1522 = vpack.c.b16 %v1254, %v1252
    %v1523 = vpack.c.b16 %v1257, %v1255
    %v1524 = vpack.c.b16 %v1258, %v1256
    %v1525 = vpack.c.b16 %v1261, %v1259
    %v1526 = vpack.c.b16 %v1262, %v1260
    %v1527 = vpack.c.b16 %v1265, %v1263
    %v1528 = vpack.c.b16 %v1266, %v1264
    %v1529 = vpack.c.b16 %v1269, %v1267
    %v1530 = vpack.c.b16 %v1270, %v1268
    %v1531 = vpack.c.b16 %v1273, %v1271
    %v1532 = vpack.c.b16 %v1274, %v1272
    %v1533 = vpack.c.b16 %v1277, %v1275
    %v1534 = vpack.c.b16 %v1278, %v1276
    %1791 = vmatprep.subr.bf16.mxu0 %v1280
    %1792 = vmatpush1.bf16.msra.mxu0 %v1279
    %1793 = vmatprep.subr.bf16.mxu0 %v1282
    %1794 = vmatpush1.bf16.msra.mxu0 %v1281
    %1795 = vmatprep.subr.bf16.mxu0 %v1284
    %1796 = vmatpush1.bf16.msra.mxu0 %v1283
    %1797 = vmatprep.subr.bf16.mxu0 %v1286
    %1798 = vmatpush1.bf16.msra.mxu0 %v1285
    %1799 = vmatprep.subr.bf16.mxu0 %v1288
    %1800 = vmatpush1.bf16.msra.mxu0 %v1287
    %1801 = vmatprep.subr.bf16.mxu0 %v1290
    %1802 = vmatpush1.bf16.msra.mxu0 %v1289
    %1803 = vmatprep.subr.bf16.mxu0 %v1292
    %1804 = vmatpush1.bf16.msra.mxu0 %v1291
    %1805 = vmatprep.subr.bf16.mxu0 %v1294
    %1806 = vmatpush1.bf16.msra.mxu0 %v1293
    %1807 = vmatprep.subr.bf16.mxu0 %v1296
    %1808 = vmatpush1.bf16.msra.mxu0 %v1295
    %1809 = vmatprep.subr.bf16.mxu0 %v1298
    %1810 = vmatpush1.bf16.msra.mxu0 %v1297
    %1811 = vmatprep.subr.bf16.mxu0 %v1300
    %1812 = vmatpush1.bf16.msra.mxu0 %v1299
    %1813 = vmatprep.subr.bf16.mxu0 %v1302
    %1814 = vmatpush1.bf16.msra.mxu0 %v1301
    %1815 = vmatprep.subr.bf16.mxu0 %v1304
    %1816 = vmatpush1.bf16.msra.mxu0 %v1303
    %1817 = vmatprep.subr.bf16.mxu0 %v1306
    %1818 = vmatpush1.bf16.msra.mxu0 %v1305
    %1819 = vmatprep.subr.bf16.mxu0 %v1308
    %1820 = vmatpush1.bf16.msra.mxu0 %v1307
    %1821 = vmatprep.subr.bf16.mxu0 %v1310
    %1822 = vmatpush1.bf16.msra.mxu0 %v1309
    %1823 = vmatprep.mubr.bf16.mxu0 %v448
    %1824 = vmatmul.mubr.bf16.gmra.mrb[0].mxu0 %v447
    %v1825 = vpop.f32.mrb[0].mxu0
    %v1826 = vadd.f32 %v344, %v1825
    %v1827 = vpop.f32.mrb[0].mxu0
    %v1828 = vadd.f32 %v348, %v1827
    %v1829 = vpop.f32.mrb[0].mxu0
    %v1830 = vadd.f32 %v344, %v1829
    %v1831 = vpop.f32.mrb[0].mxu0
    %v1832 = vadd.f32 %v348, %v1831
    %1833 = vmatprep.mubr.bf16.mxu0 %v464
    %1834 = vmatmul.mubr.bf16.gmra.mrb[0].mxu0 %v463
    %v1835 = vpop.f32.mrb[0].mxu0
    %v1836 = vadd.f32 %v344, %v1835
    %v1837 = vpop.f32.mrb[0].mxu0
    %v1838 = vadd.f32 %v348, %v1837
    %v1839 = vpop.f32.mrb[0].mxu0
    %v1840 = vadd.f32 %v344, %v1839
    %v1841 = vpop.f32.mrb[0].mxu0
    %v1842 = vadd.f32 %v348, %v1841
    %1843 = vdwg.mxu0
    %1844 = vmatprep.subr.bf16.mxu0 %v1312
    %1845 = vmatpush1.bf16.msra.mxu0 %v1311
    %1846 = vmatprep.subr.bf16.mxu0 %v1314
    %1847 = vmatpush1.bf16.msra.mxu0 %v1313
    %1848 = vmatprep.subr.bf16.mxu0 %v1316
    %1849 = vmatpush1.bf16.msra.mxu0 %v1315
    %1850 = vmatprep.subr.bf16.mxu0 %v1318
    %1851 = vmatpush1.bf16.msra.mxu0 %v1317
    %1852 = vmatprep.subr.bf16.mxu0 %v1320
    %1853 = vmatpush1.bf16.msra.mxu0 %v1319
    %1854 = vmatprep.subr.bf16.mxu0 %v1322
    %1855 = vmatpush1.bf16.msra.mxu0 %v1321
    %1856 = vmatprep.subr.bf16.mxu0 %v1324
    %1857 = vmatpush1.bf16.msra.mxu0 %v1323
    %1858 = vmatprep.subr.bf16.mxu0 %v1326
    %1859 = vmatpush1.bf16.msra.mxu0 %v1325
    %1860 = vmatprep.subr.bf16.mxu0 %v1328
    %1861 = vmatpush1.bf16.msra.mxu0 %v1327
    %1862 = vmatprep.subr.bf16.mxu0 %v1330
    %1863 = vmatpush1.bf16.msra.mxu0 %v1329
    %1864 = vmatprep.subr.bf16.mxu0 %v1332
    %1865 = vmatpush1.bf16.msra.mxu0 %v1331
    %1866 = vmatprep.subr.bf16.mxu0 %v1334
    %1867 = vmatpush1.bf16.msra.mxu0 %v1333
    %1868 = vmatprep.subr.bf16.mxu0 %v1336
    %1869 = vmatpush1.bf16.msra.mxu0 %v1335
    %1870 = vmatprep.subr.bf16.mxu0 %v1338
    %1871 = vmatpush1.bf16.msra.mxu0 %v1337
    %1872 = vmatprep.subr.bf16.mxu0 %v1340
    %1873 = vmatpush1.bf16.msra.mxu0 %v1339
    %1874 = vmatprep.subr.bf16.mxu0 %v1342
    %1875 = vmatpush1.bf16.msra.mxu0 %v1341
    %1876 = vmatprep.mubr.bf16.mxu0 %v450
    %1877 = vmatmul.mubr.bf16.gmra.mrb[0].mxu0 %v449
    %v1878 = vpop.f32.mrb[0].mxu0
    %v1879 = vadd.f32 %v1826, %v1878
    %v1880 = vpop.f32.mrb[0].mxu0
    %v1881 = vadd.f32 %v1828, %v1880
    %v1882 = vpop.f32.mrb[0].mxu0
    %v1883 = vadd.f32 %v1830, %v1882
    %v1884 = vpop.f32.mrb[0].mxu0
    %v1885 = vadd.f32 %v1832, %v1884
    %1886 = vmatprep.mubr.bf16.mxu0 %v466
    %1887 = vmatmul.mubr.bf16.gmra.mrb[0].mxu0 %v465
    %v1888 = vpop.f32.mrb[0].mxu0
    %v1889 = vadd.f32 %v1836, %v1888
    %v1890 = vpop.f32.mrb[0].mxu0
    %v1891 = vadd.f32 %v1838, %v1890
    %v1892 = vpop.f32.mrb[0].mxu0
    %v1893 = vadd.f32 %v1840, %v1892
    %v1894 = vpop.f32.mrb[0].mxu0
    %v1895 = vadd.f32 %v1842, %v1894
    %1896 = vdwg.mxu0
    %1897 = vmatprep.subr.bf16.mxu0 %v1344
    %1898 = vmatpush1.bf16.msra.mxu0 %v1343
    %1899 = vmatprep.subr.bf16.mxu0 %v1346
    %1900 = vmatpush1.bf16.msra.mxu0 %v1345
    %1901 = vmatprep.subr.bf16.mxu0 %v1348
    %1902 = vmatpush1.bf16.msra.mxu0 %v1347
    %1903 = vmatprep.subr.bf16.mxu0 %v1350
    %1904 = vmatpush1.bf16.msra.mxu0 %v1349
    %1905 = vmatprep.subr.bf16.mxu0 %v1352
    %1906 = vmatpush1.bf16.msra.mxu0 %v1351
    %1907 = vmatprep.subr.bf16.mxu0 %v1354
    %1908 = vmatpush1.bf16.msra.mxu0 %v1353
    %1909 = vmatprep.subr.bf16.mxu0 %v1356
    %1910 = vmatpush1.bf16.msra.mxu0 %v1355
    %1911 = vmatprep.subr.bf16.mxu0 %v1358
    %1912 = vmatpush1.bf16.msra.mxu0 %v1357
    %1913 = vmatprep.subr.bf16.mxu0 %v1360
    %1914 = vmatpush1.bf16.msra.mxu0 %v1359
    %1915 = vmatprep.subr.bf16.mxu0 %v1362
    %1916 = vmatpush1.bf16.msra.mxu0 %v1361
    %1917 = vmatprep.subr.bf16.mxu0 %v1364
    %1918 = vmatpush1.bf16.msra.mxu0 %v1363
    %1919 = vmatprep.subr.bf16.mxu0 %v1366
    %1920 = vmatpush1.bf16.msra.mxu0 %v1365
    %1921 = vmatprep.subr.bf16.mxu0 %v1368
    %1922 = vmatpush1.bf16.msra.mxu0 %v1367
    %1923 = vmatprep.subr.bf16.mxu0 %v1370
    %1924 = vmatpush1.bf16.msra.mxu0 %v1369
    %1925 = vmatprep.subr.bf16.mxu0 %v1372
    %1926 = vmatpush1.bf16.msra.mxu0 %v1371
    %1927 = vmatprep.subr.bf16.mxu0 %v1374
    %1928 = vmatpush1.bf16.msra.mxu0 %v1373
    %1929 = vmatprep.mubr.bf16.mxu0 %v452
    %1930 = vmatmul.mubr.bf16.gmra.mrb[0].mxu0 %v451
    %v1931 = vpop.f32.mrb[0].mxu0
    %v1932 = vadd.f32 %v1879, %v1931
    %v1933 = vpop.f32.mrb[0].mxu0
    %v1934 = vadd.f32 %v1881, %v1933
    %v1935 = vpop.f32.mrb[0].mxu0
    %v1936 = vadd.f32 %v1883, %v1935
    %v1937 = vpop.f32.mrb[0].mxu0
    %v1938 = vadd.f32 %v1885, %v1937
    %1939 = vmatprep.mubr.bf16.mxu0 %v468
    %1940 = vmatmul.mubr.bf16.gmra.mrb[0].mxu0 %v467
    %v1941 = vpop.f32.mrb[0].mxu0
    %v1942 = vadd.f32 %v1889, %v1941
    %v1943 = vpop.f32.mrb[0].mxu0
    %v1944 = vadd.f32 %v1891, %v1943
    %v1945 = vpop.f32.mrb[0].mxu0
    %v1946 = vadd.f32 %v1893, %v1945
    %v1947 = vpop.f32.mrb[0].mxu0
    %v1948 = vadd.f32 %v1895, %v1947
    %1949 = vdwg.mxu0
    %1950 = vmatprep.subr.bf16.mxu0 %v1376
    %1951 = vmatpush1.bf16.msra.mxu0 %v1375
    %1952 = vmatprep.subr.bf16.mxu0 %v1378
    %1953 = vmatpush1.bf16.msra.mxu0 %v1377
    %1954 = vmatprep.subr.bf16.mxu0 %v1380
    %1955 = vmatpush1.bf16.msra.mxu0 %v1379
    %1956 = vmatprep.subr.bf16.mxu0 %v1382
    %1957 = vmatpush1.bf16.msra.mxu0 %v1381
    %1958 = vmatprep.subr.bf16.mxu0 %v1384
    %1959 = vmatpush1.bf16.msra.mxu0 %v1383
    %1960 = vmatprep.subr.bf16.mxu0 %v1386
    %1961 = vmatpush1.bf16.msra.mxu0 %v1385
    %1962 = vmatprep.subr.bf16.mxu0 %v1388
    %1963 = vmatpush1.bf16.msra.mxu0 %v1387
    %1964 = vmatprep.subr.bf16.mxu0 %v1390
    %1965 = vmatpush1.bf16.msra.mxu0 %v1389
    %1966 = vmatprep.subr.bf16.mxu0 %v1392
    %1967 = vmatpush1.bf16.msra.mxu0 %v1391
    %1968 = vmatprep.subr.bf16.mxu0 %v1394
    %1969 = vmatpush1.bf16.msra.mxu0 %v1393
    %1970 = vmatprep.subr.bf16.mxu0 %v1396
    %1971 = vmatpush1.bf16.msra.mxu0 %v1395
    %1972 = vmatprep.subr.bf16.mxu0 %v1398
    %1973 = vmatpush1.bf16.msra.mxu0 %v1397
    %1974 = vmatprep.subr.bf16.mxu0 %v1400
    %1975 = vmatpush1.bf16.msra.mxu0 %v1399
    %1976 = vmatprep.subr.bf16.mxu0 %v1402
    %1977 = vmatpush1.bf16.msra.mxu0 %v1401
    %1978 = vmatprep.subr.bf16.mxu0 %v1404
    %1979 = vmatpush1.bf16.msra.mxu0 %v1403
    %1980 = vmatprep.subr.bf16.mxu0 %v1406
    %1981 = vmatpush1.bf16.msra.mxu0 %v1405
    %1982 = vmatprep.mubr.bf16.mxu0 %v454
    %1983 = vmatmul.mubr.bf16.gmra.mrb[0].mxu0 %v453
    %v1984 = vpop.f32.mrb[0].mxu0
    %v1985 = vadd.f32 %v1932, %v1984
    %v1986 = vpop.f32.mrb[0].mxu0
    %v1987 = vadd.f32 %v1934, %v1986
    %v1988 = vpop.f32.mrb[0].mxu0
    %v1989 = vadd.f32 %v1936, %v1988
    %v1990 = vpop.f32.mrb[0].mxu0
    %v1991 = vadd.f32 %v1938, %v1990
    %1992 = vmatprep.mubr.bf16.mxu0 %v470
    %1993 = vmatmul.mubr.bf16.gmra.mrb[0].mxu0 %v469
    %v1994 = vpop.f32.mrb[0].mxu0
    %v1995 = vadd.f32 %v1942, %v1994
    %v1996 = vpop.f32.mrb[0].mxu0
    %v1997 = vadd.f32 %v1944, %v1996
    %v1998 = vpop.f32.mrb[0].mxu0
    %v1999 = vadd.f32 %v1946, %v1998
    %v2000 = vpop.f32.mrb[0].mxu0
    %v2001 = vadd.f32 %v1948, %v2000
    %2002 = vdwg.mxu0
    %2003 = vmatprep.subr.bf16.mxu0 %v1408
    %2004 = vmatpush1.bf16.msra.mxu0 %v1407
    %2005 = vmatprep.subr.bf16.mxu0 %v1410
    %2006 = vmatpush1.bf16.msra.mxu0 %v1409
    %2007 = vmatprep.subr.bf16.mxu0 %v1412
    %2008 = vmatpush1.bf16.msra.mxu0 %v1411
    %2009 = vmatprep.subr.bf16.mxu0 %v1414
    %2010 = vmatpush1.bf16.msra.mxu0 %v1413
    %2011 = vmatprep.subr.bf16.mxu0 %v1416
    %2012 = vmatpush1.bf16.msra.mxu0 %v1415
    %2013 = vmatprep.subr.bf16.mxu0 %v1418
    %2014 = vmatpush1.bf16.msra.mxu0 %v1417
    %2015 = vmatprep.subr.bf16.mxu0 %v1420
    %2016 = vmatpush1.bf16.msra.mxu0 %v1419
    %2017 = vmatprep.subr.bf16.mxu0 %v1422
    %2018 = vmatpush1.bf16.msra.mxu0 %v1421
    %2019 = vmatprep.subr.bf16.mxu0 %v1424
    %2020 = vmatpush1.bf16.msra.mxu0 %v1423
    %2021 = vmatprep.subr.bf16.mxu0 %v1426
    %2022 = vmatpush1.bf16.msra.mxu0 %v1425
    %2023 = vmatprep.subr.bf16.mxu0 %v1428
    %2024 = vmatpush1.bf16.msra.mxu0 %v1427
    %2025 = vmatprep.subr.bf16.mxu0 %v1430
    %2026 = vmatpush1.bf16.msra.mxu0 %v1429
    %2027 = vmatprep.subr.bf16.mxu0 %v1432
    %2028 = vmatpush1.bf16.msra.mxu0 %v1431
    %2029 = vmatprep.subr.bf16.mxu0 %v1434
    %2030 = vmatpush1.bf16.msra.mxu0 %v1433
    %2031 = vmatprep.subr.bf16.mxu0 %v1436
    %2032 = vmatpush1.bf16.msra.mxu0 %v1435
    %2033 = vmatprep.subr.bf16.mxu0 %v1438
    %2034 = vmatpush1.bf16.msra.mxu0 %v1437
    %2035 = vmatprep.mubr.bf16.mxu0 %v456
    %2036 = vmatmul.mubr.bf16.gmra.mrb[0].mxu0 %v455
    %v2037 = vpop.f32.mrb[0].mxu0
    %v2038 = vadd.f32 %v1985, %v2037
    %v2039 = vpop.f32.mrb[0].mxu0
    %v2040 = vadd.f32 %v1987, %v2039
    %v2041 = vpop.f32.mrb[0].mxu0
    %v2042 = vadd.f32 %v1989, %v2041
    %v2043 = vpop.f32.mrb[0].mxu0
    %v2044 = vadd.f32 %v1991, %v2043
    %2045 = vmatprep.mubr.bf16.mxu0 %v472
    %2046 = vmatmul.mubr.bf16.gmra.mrb[0].mxu0 %v471
    %v2047 = vpop.f32.mrb[0].mxu0
    %v2048 = vadd.f32 %v1995, %v2047
    %v2049 = vpop.f32.mrb[0].mxu0
    %v2050 = vadd.f32 %v1997, %v2049
    %v2051 = vpop.f32.mrb[0].mxu0
    %v2052 = vadd.f32 %v1999, %v2051
    %v2053 = vpop.f32.mrb[0].mxu0
    %v2054 = vadd.f32 %v2001, %v2053
    %2055 = vdwg.mxu0
    %2056 = vmatprep.subr.bf16.mxu0 %v1440
    %2057 = vmatpush1.bf16.msra.mxu0 %v1439
    %2058 = vmatprep.subr.bf16.mxu0 %v1442
    %2059 = vmatpush1.bf16.msra.mxu0 %v1441
    %2060 = vmatprep.subr.bf16.mxu0 %v1444
    %2061 = vmatpush1.bf16.msra.mxu0 %v1443
    %2062 = vmatprep.subr.bf16.mxu0 %v1446
    %2063 = vmatpush1.bf16.msra.mxu0 %v1445
    %2064 = vmatprep.subr.bf16.mxu0 %v1448
    %2065 = vmatpush1.bf16.msra.mxu0 %v1447
    %2066 = vmatprep.subr.bf16.mxu0 %v1450
    %2067 = vmatpush1.bf16.msra.mxu0 %v1449
    %2068 = vmatprep.subr.bf16.mxu0 %v1452
    %2069 = vmatpush1.bf16.msra.mxu0 %v1451
    %2070 = vmatprep.subr.bf16.mxu0 %v1454
    %2071 = vmatpush1.bf16.msra.mxu0 %v1453
    %2072 = vmatprep.subr.bf16.mxu0 %v1456
    %2073 = vmatpush1.bf16.msra.mxu0 %v1455
    %2074 = vmatprep.subr.bf16.mxu0 %v1458
    %2075 = vmatpush1.bf16.msra.mxu0 %v1457
    %2076 = vmatprep.subr.bf16.mxu0 %v1460
    %2077 = vmatpush1.bf16.msra.mxu0 %v1459
    %2078 = vmatprep.subr.bf16.mxu0 %v1462
    %2079 = vmatpush1.bf16.msra.mxu0 %v1461
    %2080 = vmatprep.subr.bf16.mxu0 %v1464
    %2081 = vmatpush1.bf16.msra.mxu0 %v1463
    %2082 = vmatprep.subr.bf16.mxu0 %v1466
    %2083 = vmatpush1.bf16.msra.mxu0 %v1465
    %2084 = vmatprep.subr.bf16.mxu0 %v1468
    %2085 = vmatpush1.bf16.msra.mxu0 %v1467
    %2086 = vmatprep.subr.bf16.mxu0 %v1470
    %2087 = vmatpush1.bf16.msra.mxu0 %v1469
    %2088 = vmatprep.mubr.bf16.mxu0 %v458
    %2089 = vmatmul.mubr.bf16.gmra.mrb[0].mxu0 %v457
    %v2090 = vpop.f32.mrb[0].mxu0
    %v2091 = vadd.f32 %v2038, %v2090
    %v2092 = vpop.f32.mrb[0].mxu0
    %v2093 = vadd.f32 %v2040, %v2092
    %v2094 = vpop.f32.mrb[0].mxu0
    %v2095 = vadd.f32 %v2042, %v2094
    %v2096 = vpop.f32.mrb[0].mxu0
    %v2097 = vadd.f32 %v2044, %v2096
    %2098 = vmatprep.mubr.bf16.mxu0 %v474
    %2099 = vmatmul.mubr.bf16.gmra.mrb[0].mxu0 %v473
    %v2100 = vpop.f32.mrb[0].mxu0
    %v2101 = vadd.f32 %v2048, %v2100
    %v2102 = vpop.f32.mrb[0].mxu0
    %v2103 = vadd.f32 %v2050, %v2102
    %v2104 = vpop.f32.mrb[0].mxu0
    %v2105 = vadd.f32 %v2052, %v2104
    %v2106 = vpop.f32.mrb[0].mxu0
    %v2107 = vadd.f32 %v2054, %v2106
    %2108 = vdwg.mxu0
    %2109 = vmatprep.subr.bf16.mxu0 %v1472
    %2110 = vmatpush1.bf16.msra.mxu0 %v1471
    %2111 = vmatprep.subr.bf16.mxu0 %v1474
    %2112 = vmatpush1.bf16.msra.mxu0 %v1473
    %2113 = vmatprep.subr.bf16.mxu0 %v1476
    %2114 = vmatpush1.bf16.msra.mxu0 %v1475
    %2115 = vmatprep.subr.bf16.mxu0 %v1478
    %2116 = vmatpush1.bf16.msra.mxu0 %v1477
    %2117 = vmatprep.subr.bf16.mxu0 %v1480
    %2118 = vmatpush1.bf16.msra.mxu0 %v1479
    %2119 = vmatprep.subr.bf16.mxu0 %v1482
    %2120 = vmatpush1.bf16.msra.mxu0 %v1481
    %2121 = vmatprep.subr.bf16.mxu0 %v1484
    %2122 = vmatpush1.bf16.msra.mxu0 %v1483
    %2123 = vmatprep.subr.bf16.mxu0 %v1486
    %2124 = vmatpush1.bf16.msra.mxu0 %v1485
    %2125 = vmatprep.subr.bf16.mxu0 %v1488
    %2126 = vmatpush1.bf16.msra.mxu0 %v1487
    %2127 = vmatprep.subr.bf16.mxu0 %v1490
    %2128 = vmatpush1.bf16.msra.mxu0 %v1489
    %2129 = vmatprep.subr.bf16.mxu0 %v1492
    %2130 = vmatpush1.bf16.msra.mxu0 %v1491
    %2131 = vmatprep.subr.bf16.mxu0 %v1494
    %2132 = vmatpush1.bf16.msra.mxu0 %v1493
    %2133 = vmatprep.subr.bf16.mxu0 %v1496
    %2134 = vmatpush1.bf16.msra.mxu0 %v1495
    %2135 = vmatprep.subr.bf16.mxu0 %v1498
    %2136 = vmatpush1.bf16.msra.mxu0 %v1497
    %2137 = vmatprep.subr.bf16.mxu0 %v1500
    %2138 = vmatpush1.bf16.msra.mxu0 %v1499
    %2139 = vmatprep.subr.bf16.mxu0 %v1502
    %2140 = vmatpush1.bf16.msra.mxu0 %v1501
    %2141 = vmatprep.mubr.bf16.mxu0 %v460
    %2142 = vmatmul.mubr.bf16.gmra.mrb[0].mxu0 %v459
    %v2143 = vpop.f32.mrb[0].mxu0
    %v2144 = vadd.f32 %v2091, %v2143
    %v2145 = vpop.f32.mrb[0].mxu0
    %v2146 = vadd.f32 %v2093, %v2145
    %v2147 = vpop.f32.mrb[0].mxu0
    %v2148 = vadd.f32 %v2095, %v2147
    %v2149 = vpop.f32.mrb[0].mxu0
    %v2150 = vadd.f32 %v2097, %v2149
    %2151 = vmatprep.mubr.bf16.mxu0 %v476
    %2152 = vmatmul.mubr.bf16.gmra.mrb[0].mxu0 %v475
    %v2153 = vpop.f32.mrb[0].mxu0
    %v2154 = vadd.f32 %v2101, %v2153
    %v2155 = vpop.f32.mrb[0].mxu0
    %v2156 = vadd.f32 %v2103, %v2155
    %v2157 = vpop.f32.mrb[0].mxu0
    %v2158 = vadd.f32 %v2105, %v2157
    %v2159 = vpop.f32.mrb[0].mxu0
    %v2160 = vadd.f32 %v2107, %v2159
    %2161 = vdwg.mxu0
    %2162 = vmatprep.subr.bf16.mxu0 %v1504
    %2163 = vmatpush1.bf16.msra.mxu0 %v1503
    %2164 = vmatprep.subr.bf16.mxu0 %v1506
    %2165 = vmatpush1.bf16.msra.mxu0 %v1505
    %2166 = vmatprep.subr.bf16.mxu0 %v1508
    %2167 = vmatpush1.bf16.msra.mxu0 %v1507
    %2168 = vmatprep.subr.bf16.mxu0 %v1510
    %2169 = vmatpush1.bf16.msra.mxu0 %v1509
    %2170 = vmatprep.subr.bf16.mxu0 %v1512
    %2171 = vmatpush1.bf16.msra.mxu0 %v1511
    %2172 = vmatprep.subr.bf16.mxu0 %v1514
    %2173 = vmatpush1.bf16.msra.mxu0 %v1513
    %2174 = vmatprep.subr.bf16.mxu0 %v1516
    %2175 = vmatpush1.bf16.msra.mxu0 %v1515
    %2176 = vmatprep.subr.bf16.mxu0 %v1518
    %2177 = vmatpush1.bf16.msra.mxu0 %v1517
    %2178 = vmatprep.subr.bf16.mxu0 %v1520
    %2179 = vmatpush1.bf16.msra.mxu0 %v1519
    %2180 = vmatprep.subr.bf16.mxu0 %v1522
    %2181 = vmatpush1.bf16.msra.mxu0 %v1521
    %2182 = vmatprep.subr.bf16.mxu0 %v1524
    %2183 = vmatpush1.bf16.msra.mxu0 %v1523
    %2184 = vmatprep.subr.bf16.mxu0 %v1526
    %2185 = vmatpush1.bf16.msra.mxu0 %v1525
    %2186 = vmatprep.subr.bf16.mxu0 %v1528
    %2187 = vmatpush1.bf16.msra.mxu0 %v1527
    %2188 = vmatprep.subr.bf16.mxu0 %v1530
    %2189 = vmatpush1.bf16.msra.mxu0 %v1529
    %2190 = vmatprep.subr.bf16.mxu0 %v1532
    %2191 = vmatpush1.bf16.msra.mxu0 %v1531
    %2192 = vmatprep.subr.bf16.mxu0 %v1534
    %2193 = vmatpush1.bf16.msra.mxu0 %v1533
    %2194 = vmatprep.mubr.bf16.mxu0 %v462
    %2195 = vmatmul.mubr.bf16.gmra.mrb[0].mxu0 %v461
    %v2196 = vpop.f32.mrb[0].mxu0
    %v2197 = vadd.f32 %v2144, %v2196
    %v2198 = vpop.f32.mrb[0].mxu0
    %v2199 = vadd.f32 %v2146, %v2198
    %v2200 = vpop.f32.mrb[0].mxu0
    %v2201 = vadd.f32 %v2148, %v2200
    %v2202 = vpop.f32.mrb[0].mxu0
    %v2203 = vadd.f32 %v2150, %v2202
    %2204 = vmatprep.mubr.bf16.mxu0 %v478
    %2205 = vmatmul.mubr.bf16.gmra.mrb[0].mxu0 %v477
    %v2206 = vpop.f32.mrb[0].mxu0
    %v2207 = vadd.f32 %v2154, %v2206
    %v2208 = vpop.f32.mrb[0].mxu0
    %v2209 = vadd.f32 %v2156, %v2208
    %v2210 = vpop.f32.mrb[0].mxu0
    %v2211 = vadd.f32 %v2158, %v2210
    %v2212 = vpop.f32.mrb[0].mxu0
    %v2213 = vadd.f32 %v2160, %v2212
    %2214 = vdwg.mxu0
    %2215 = vst [vmem:[#allocation2] sm:$0xff] %v2197
    %2216 = vst [vmem:[#allocation2 + $0x8] sm:$0xff] %v2199
    %2217 = vst [vmem:[#allocation2 + $0x10] sm:$0xff] %v2201
    %2218 = vst [vmem:[#allocation2 + $0x18] sm:$0xff] %v2203
    %2219 = vst [vmem:[#allocation2 + $0x20] sm:$0xff] %v2207
    %2220 = vst [vmem:[#allocation2 + $0x28] sm:$0xff] %v2209
    %2221 = vst [vmem:[#allocation2 + $0x30] sm:$0xff] %v2211
    %2222 = vst [vmem:[#allocation2 + $0x38] sm:$0xff] %v2213
    %v2223 = vld [vmem:[%s5] sm:$0xf]
    %v2224 = vld [vmem:[%s5 + $0x4] sm:$0xf]
    %v2225 = vld [vmem:[%s5 + $0x8] sm:$0xf]
    %v2226 = vld [vmem:[%s5 + $0xc] sm:$0xf]
    %v2227 = vld [vmem:[%s5 + $0x10] sm:$0xf]
    %v2228 = vld [vmem:[%s5 + $0x14] sm:$0xf]
    %v2229 = vld [vmem:[%s5 + $0x18] sm:$0xf]
    %v2230 = vld [vmem:[%s5 + $0x1c] sm:$0xf]
    %v2231 = vld [vmem:[%s5 + $0x20] sm:$0xf]
    %v2232 = vld [vmem:[%s5 + $0x24] sm:$0xf]
    %v2233 = vld [vmem:[%s5 + $0x28] sm:$0xf]
    %v2234 = vld [vmem:[%s5 + $0x2c] sm:$0xf]
    %v2235 = vld [vmem:[%s5 + $0x30] sm:$0xf]
    %v2236 = vld [vmem:[%s5 + $0x34] sm:$0xf]
    %v2237 = vld [vmem:[%s5 + $0x38] sm:$0xf]
    %v2238 = vld [vmem:[%s5 + $0x3c] sm:$0xf]
    %v2239 = vld [vmem:[%s5 + $0x40] sm:$0xf]
    %v2240 = vld [vmem:[%s5 + $0x44] sm:$0xf]
    %v2241 = vld [vmem:[%s5 + $0x48] sm:$0xf]
    %v2242 = vld [vmem:[%s5 + $0x4c] sm:$0xf]
    %v2243 = vld [vmem:[%s5 + $0x50] sm:$0xf]
    %v2244 = vld [vmem:[%s5 + $0x54] sm:$0xf]
    %v2245 = vld [vmem:[%s5 + $0x58] sm:$0xf]
    %v2246 = vld [vmem:[%s5 + $0x5c] sm:$0xf]
    %v2247 = vld [vmem:[%s5 + $0x60] sm:$0xf]
    %v2248 = vld [vmem:[%s5 + $0x64] sm:$0xf]
    %v2249 = vld [vmem:[%s5 + $0x68] sm:$0xf]
    %v2250 = vld [vmem:[%s5 + $0x6c] sm:$0xf]
    %v2251 = vld [vmem:[%s5 + $0x70] sm:$0xf]
    %v2252 = vld [vmem:[%s5 + $0x74] sm:$0xf]
    %v2253 = vld [vmem:[%s5 + $0x78] sm:$0xf]
    %v2254 = vld [vmem:[%s5 + $0x7c] sm:$0xf]
    %v2255 = vld [vmem:[%s5 + $0x80] sm:$0xf]
    %v2256 = vld [vmem:[%s5 + $0x84] sm:$0xf]
    %v2257 = vld [vmem:[%s5 + $0x88] sm:$0xf]
    %v2258 = vld [vmem:[%s5 + $0x8c] sm:$0xf]
    %v2259 = vld [vmem:[%s5 + $0x90] sm:$0xf]
    %v2260 = vld [vmem:[%s5 + $0x94] sm:$0xf]
    %v2261 = vld [vmem:[%s5 + $0x98] sm:$0xf]
    %v2262 = vld [vmem:[%s5 + $0x9c] sm:$0xf]
    %v2263 = vld [vmem:[%s5 + $0xa0] sm:$0xf]
    %v2264 = vld [vmem:[%s5 + $0xa4] sm:$0xf]
    %v2265 = vld [vmem:[%s5 + $0xa8] sm:$0xf]
    %v2266 = vld [vmem:[%s5 + $0xac] sm:$0xf]
    %v2267 = vld [vmem:[%s5 + $0xb0] sm:$0xf]
    %v2268 = vld [vmem:[%s5 + $0xb4] sm:$0xf]
    %v2269 = vld [vmem:[%s5 + $0xb8] sm:$0xf]
    %v2270 = vld [vmem:[%s5 + $0xbc] sm:$0xf]
    %v2271 = vld [vmem:[%s5 + $0xc0] sm:$0xf]
    %v2272 = vld [vmem:[%s5 + $0xc4] sm:$0xf]
    %v2273 = vld [vmem:[%s5 + $0xc8] sm:$0xf]
    %v2274 = vld [vmem:[%s5 + $0xcc] sm:$0xf]
    %v2275 = vld [vmem:[%s5 + $0xd0] sm:$0xf]
    %v2276 = vld [vmem:[%s5 + $0xd4] sm:$0xf]
    %v2277 = vld [vmem:[%s5 + $0xd8] sm:$0xf]
    %v2278 = vld [vmem:[%s5 + $0xdc] sm:$0xf]
    %v2279 = vld [vmem:[%s5 + $0xe0] sm:$0xf]
    %v2280 = vld [vmem:[%s5 + $0xe4] sm:$0xf]
    %v2281 = vld [vmem:[%s5 + $0xe8] sm:$0xf]
    %v2282 = vld [vmem:[%s5 + $0xec] sm:$0xf]
    %v2283 = vld [vmem:[%s5 + $0xf0] sm:$0xf]
    %v2284 = vld [vmem:[%s5 + $0xf4] sm:$0xf]
    %v2285 = vld [vmem:[%s5 + $0xf8] sm:$0xf]
    %v2286 = vld [vmem:[%s5 + $0xfc] sm:$0xf]
    %v2287 = vld [vmem:[%s5 + $0x100] sm:$0xf]
    %v2288 = vld [vmem:[%s5 + $0x104] sm:$0xf]
    %v2289 = vld [vmem:[%s5 + $0x108] sm:$0xf]
    %v2290 = vld [vmem:[%s5 + $0x10c] sm:$0xf]
    %v2291 = vld [vmem:[%s5 + $0x110] sm:$0xf]
    %v2292 = vld [vmem:[%s5 + $0x114] sm:$0xf]
    %v2293 = vld [vmem:[%s5 + $0x118] sm:$0xf]
    %v2294 = vld [vmem:[%s5 + $0x11c] sm:$0xf]
    %v2295 = vld [vmem:[%s5 + $0x120] sm:$0xf]
    %v2296 = vld [vmem:[%s5 + $0x124] sm:$0xf]
    %v2297 = vld [vmem:[%s5 + $0x128] sm:$0xf]
    %v2298 = vld [vmem:[%s5 + $0x12c] sm:$0xf]
    %v2299 = vld [vmem:[%s5 + $0x130] sm:$0xf]
    %v2300 = vld [vmem:[%s5 + $0x134] sm:$0xf]
    %v2301 = vld [vmem:[%s5 + $0x138] sm:$0xf]
    %v2302 = vld [vmem:[%s5 + $0x13c] sm:$0xf]
    %v2303 = vld [vmem:[%s5 + $0x140] sm:$0xf]
    %v2304 = vld [vmem:[%s5 + $0x144] sm:$0xf]
    %v2305 = vld [vmem:[%s5 + $0x148] sm:$0xf]
    %v2306 = vld [vmem:[%s5 + $0x14c] sm:$0xf]
    %v2307 = vld [vmem:[%s5 + $0x150] sm:$0xf]
    %v2308 = vld [vmem:[%s5 + $0x154] sm:$0xf]
    %v2309 = vld [vmem:[%s5 + $0x158] sm:$0xf]
    %v2310 = vld [vmem:[%s5 + $0x15c] sm:$0xf]
    %v2311 = vld [vmem:[%s5 + $0x160] sm:$0xf]
    %v2312 = vld [vmem:[%s5 + $0x164] sm:$0xf]
    %v2313 = vld [vmem:[%s5 + $0x168] sm:$0xf]
    %v2314 = vld [vmem:[%s5 + $0x16c] sm:$0xf]
    %v2315 = vld [vmem:[%s5 + $0x170] sm:$0xf]
    %v2316 = vld [vmem:[%s5 + $0x174] sm:$0xf]
    %v2317 = vld [vmem:[%s5 + $0x178] sm:$0xf]
    %v2318 = vld [vmem:[%s5 + $0x17c] sm:$0xf]
    %v2319 = vld [vmem:[%s5 + $0x180] sm:$0xf]
    %v2320 = vld [vmem:[%s5 + $0x184] sm:$0xf]
    %v2321 = vld [vmem:[%s5 + $0x188] sm:$0xf]
    %v2322 = vld [vmem:[%s5 + $0x18c] sm:$0xf]
    %v2323 = vld [vmem:[%s5 + $0x190] sm:$0xf]
    %v2324 = vld [vmem:[%s5 + $0x194] sm:$0xf]
    %v2325 = vld [vmem:[%s5 + $0x198] sm:$0xf]
    %v2326 = vld [vmem:[%s5 + $0x19c] sm:$0xf]
    %v2327 = vld [vmem:[%s5 + $0x1a0] sm:$0xf]
    %v2328 = vld [vmem:[%s5 + $0x1a4] sm:$0xf]
    %v2329 = vld [vmem:[%s5 + $0x1a8] sm:$0xf]
    %v2330 = vld [vmem:[%s5 + $0x1ac] sm:$0xf]
    %v2331 = vld [vmem:[%s5 + $0x1b0] sm:$0xf]
    %v2332 = vld [vmem:[%s5 + $0x1b4] sm:$0xf]
    %v2333 = vld [vmem:[%s5 + $0x1b8] sm:$0xf]
    %v2334 = vld [vmem:[%s5 + $0x1bc] sm:$0xf]
    %v2335 = vld [vmem:[%s5 + $0x1c0] sm:$0xf]
    %v2336 = vld [vmem:[%s5 + $0x1c4] sm:$0xf]
    %v2337 = vld [vmem:[%s5 + $0x1c8] sm:$0xf]
    %v2338 = vld [vmem:[%s5 + $0x1cc] sm:$0xf]
    %v2339 = vld [vmem:[%s5 + $0x1d0] sm:$0xf]
    %v2340 = vld [vmem:[%s5 + $0x1d4] sm:$0xf]
    %v2341 = vld [vmem:[%s5 + $0x1d8] sm:$0xf]
    %v2342 = vld [vmem:[%s5 + $0x1dc] sm:$0xf]
    %v2343 = vld [vmem:[%s5 + $0x1e0] sm:$0xf]
    %v2344 = vld [vmem:[%s5 + $0x1e4] sm:$0xf]
    %v2345 = vld [vmem:[%s5 + $0x1e8] sm:$0xf]
    %v2346 = vld [vmem:[%s5 + $0x1ec] sm:$0xf]
    %v2347 = vld [vmem:[%s5 + $0x1f0] sm:$0xf]
    %v2348 = vld [vmem:[%s5 + $0x1f4] sm:$0xf]
    %v2349 = vld [vmem:[%s5 + $0x1f8] sm:$0xf]
    %v2350 = vld [vmem:[%s5 + $0x1fc] sm:$0xf]
    %v2351 = vld [vmem:[%s5 + $0x200] sm:$0xf]
    %v2352 = vld [vmem:[%s5 + $0x204] sm:$0xf]
    %v2353 = vld [vmem:[%s5 + $0x208] sm:$0xf]
    %v2354 = vld [vmem:[%s5 + $0x20c] sm:$0xf]
    %v2355 = vld [vmem:[%s5 + $0x210] sm:$0xf]
    %v2356 = vld [vmem:[%s5 + $0x214] sm:$0xf]
    %v2357 = vld [vmem:[%s5 + $0x218] sm:$0xf]
    %v2358 = vld [vmem:[%s5 + $0x21c] sm:$0xf]
    %v2359 = vld [vmem:[%s5 + $0x220] sm:$0xf]
    %v2360 = vld [vmem:[%s5 + $0x224] sm:$0xf]
    %v2361 = vld [vmem:[%s5 + $0x228] sm:$0xf]
    %v2362 = vld [vmem:[%s5 + $0x22c] sm:$0xf]
    %v2363 = vld [vmem:[%s5 + $0x230] sm:$0xf]
    %v2364 = vld [vmem:[%s5 + $0x234] sm:$0xf]
    %v2365 = vld [vmem:[%s5 + $0x238] sm:$0xf]
    %v2366 = vld [vmem:[%s5 + $0x23c] sm:$0xf]
    %v2367 = vld [vmem:[%s5 + $0x240] sm:$0xf]
    %v2368 = vld [vmem:[%s5 + $0x244] sm:$0xf]
    %v2369 = vld [vmem:[%s5 + $0x248] sm:$0xf]
    %v2370 = vld [vmem:[%s5 + $0x24c] sm:$0xf]
    %v2371 = vld [vmem:[%s5 + $0x250] sm:$0xf]
    %v2372 = vld [vmem:[%s5 + $0x254] sm:$0xf]
    %v2373 = vld [vmem:[%s5 + $0x258] sm:$0xf]
    %v2374 = vld [vmem:[%s5 + $0x25c] sm:$0xf]
    %v2375 = vld [vmem:[%s5 + $0x260] sm:$0xf]
    %v2376 = vld [vmem:[%s5 + $0x264] sm:$0xf]
    %v2377 = vld [vmem:[%s5 + $0x268] sm:$0xf]
    %v2378 = vld [vmem:[%s5 + $0x26c] sm:$0xf]
    %v2379 = vld [vmem:[%s5 + $0x270] sm:$0xf]
    %v2380 = vld [vmem:[%s5 + $0x274] sm:$0xf]
    %v2381 = vld [vmem:[%s5 + $0x278] sm:$0xf]
    %v2382 = vld [vmem:[%s5 + $0x27c] sm:$0xf]
    %v2383 = vld [vmem:[%s5 + $0x280] sm:$0xf]
    %v2384 = vld [vmem:[%s5 + $0x284] sm:$0xf]
    %v2385 = vld [vmem:[%s5 + $0x288] sm:$0xf]
    %v2386 = vld [vmem:[%s5 + $0x28c] sm:$0xf]
    %v2387 = vld [vmem:[%s5 + $0x290] sm:$0xf]
    %v2388 = vld [vmem:[%s5 + $0x294] sm:$0xf]
    %v2389 = vld [vmem:[%s5 + $0x298] sm:$0xf]
    %v2390 = vld [vmem:[%s5 + $0x29c] sm:$0xf]
    %v2391 = vld [vmem:[%s5 + $0x2a0] sm:$0xf]
    %v2392 = vld [vmem:[%s5 + $0x2a4] sm:$0xf]
    %v2393 = vld [vmem:[%s5 + $0x2a8] sm:$0xf]
    %v2394 = vld [vmem:[%s5 + $0x2ac] sm:$0xf]
    %v2395 = vld [vmem:[%s5 + $0x2b0] sm:$0xf]
    %v2396 = vld [vmem:[%s5 + $0x2b4] sm:$0xf]
    %v2397 = vld [vmem:[%s5 + $0x2b8] sm:$0xf]
    %v2398 = vld [vmem:[%s5 + $0x2bc] sm:$0xf]
    %v2399 = vld [vmem:[%s5 + $0x2c0] sm:$0xf]
    %v2400 = vld [vmem:[%s5 + $0x2c4] sm:$0xf]
    %v2401 = vld [vmem:[%s5 + $0x2c8] sm:$0xf]
    %v2402 = vld [vmem:[%s5 + $0x2cc] sm:$0xf]
    %v2403 = vld [vmem:[%s5 + $0x2d0] sm:$0xf]
    %v2404 = vld [vmem:[%s5 + $0x2d4] sm:$0xf]
    %v2405 = vld [vmem:[%s5 + $0x2d8] sm:$0xf]
    %v2406 = vld [vmem:[%s5 + $0x2dc] sm:$0xf]
    %v2407 = vld [vmem:[%s5 + $0x2e0] sm:$0xf]
    %v2408 = vld [vmem:[%s5 + $0x2e4] sm:$0xf]
    %v2409 = vld [vmem:[%s5 + $0x2e8] sm:$0xf]
    %v2410 = vld [vmem:[%s5 + $0x2ec] sm:$0xf]
    %v2411 = vld [vmem:[%s5 + $0x2f0] sm:$0xf]
    %v2412 = vld [vmem:[%s5 + $0x2f4] sm:$0xf]
    %v2413 = vld [vmem:[%s5 + $0x2f8] sm:$0xf]
    %v2414 = vld [vmem:[%s5 + $0x2fc] sm:$0xf]
    %v2415 = vld [vmem:[%s5 + $0x300] sm:$0xf]
    %v2416 = vld [vmem:[%s5 + $0x304] sm:$0xf]
    %v2417 = vld [vmem:[%s5 + $0x308] sm:$0xf]
    %v2418 = vld [vmem:[%s5 + $0x30c] sm:$0xf]
    %v2419 = vld [vmem:[%s5 + $0x310] sm:$0xf]
    %v2420 = vld [vmem:[%s5 + $0x314] sm:$0xf]
    %v2421 = vld [vmem:[%s5 + $0x318] sm:$0xf]
    %v2422 = vld [vmem:[%s5 + $0x31c] sm:$0xf]
    %v2423 = vld [vmem:[%s5 + $0x320] sm:$0xf]
    %v2424 = vld [vmem:[%s5 + $0x324] sm:$0xf]
    %v2425 = vld [vmem:[%s5 + $0x328] sm:$0xf]
    %v2426 = vld [vmem:[%s5 + $0x32c] sm:$0xf]
    %v2427 = vld [vmem:[%s5 + $0x330] sm:$0xf]
    %v2428 = vld [vmem:[%s5 + $0x334] sm:$0xf]
    %v2429 = vld [vmem:[%s5 + $0x338] sm:$0xf]
    %v2430 = vld [vmem:[%s5 + $0x33c] sm:$0xf]
    %v2431 = vld [vmem:[%s5 + $0x340] sm:$0xf]
    %v2432 = vld [vmem:[%s5 + $0x344] sm:$0xf]
    %v2433 = vld [vmem:[%s5 + $0x348] sm:$0xf]
    %v2434 = vld [vmem:[%s5 + $0x34c] sm:$0xf]
    %v2435 = vld [vmem:[%s5 + $0x350] sm:$0xf]
    %v2436 = vld [vmem:[%s5 + $0x354] sm:$0xf]
    %v2437 = vld [vmem:[%s5 + $0x358] sm:$0xf]
    %v2438 = vld [vmem:[%s5 + $0x35c] sm:$0xf]
    %v2439 = vld [vmem:[%s5 + $0x360] sm:$0xf]
    %v2440 = vld [vmem:[%s5 + $0x364] sm:$0xf]
    %v2441 = vld [vmem:[%s5 + $0x368] sm:$0xf]
    %v2442 = vld [vmem:[%s5 + $0x36c] sm:$0xf]
    %v2443 = vld [vmem:[%s5 + $0x370] sm:$0xf]
    %v2444 = vld [vmem:[%s5 + $0x374] sm:$0xf]
    %v2445 = vld [vmem:[%s5 + $0x378] sm:$0xf]
    %v2446 = vld [vmem:[%s5 + $0x37c] sm:$0xf]
    %v2447 = vld [vmem:[%s5 + $0x380] sm:$0xf]
    %v2448 = vld [vmem:[%s5 + $0x384] sm:$0xf]
    %v2449 = vld [vmem:[%s5 + $0x388] sm:$0xf]
    %v2450 = vld [vmem:[%s5 + $0x38c] sm:$0xf]
    %v2451 = vld [vmem:[%s5 + $0x390] sm:$0xf]
    %v2452 = vld [vmem:[%s5 + $0x394] sm:$0xf]
    %v2453 = vld [vmem:[%s5 + $0x398] sm:$0xf]
    %v2454 = vld [vmem:[%s5 + $0x39c] sm:$0xf]
    %v2455 = vld [vmem:[%s5 + $0x3a0] sm:$0xf]
    %v2456 = vld [vmem:[%s5 + $0x3a4] sm:$0xf]
    %v2457 = vld [vmem:[%s5 + $0x3a8] sm:$0xf]
    %v2458 = vld [vmem:[%s5 + $0x3ac] sm:$0xf]
    %v2459 = vld [vmem:[%s5 + $0x3b0] sm:$0xf]
    %v2460 = vld [vmem:[%s5 + $0x3b4] sm:$0xf]
    %v2461 = vld [vmem:[%s5 + $0x3b8] sm:$0xf]
    %v2462 = vld [vmem:[%s5 + $0x3bc] sm:$0xf]
    %v2463 = vld [vmem:[%s5 + $0x3c0] sm:$0xf]
    %v2464 = vld [vmem:[%s5 + $0x3c4] sm:$0xf]
    %v2465 = vld [vmem:[%s5 + $0x3c8] sm:$0xf]
    %v2466 = vld [vmem:[%s5 + $0x3cc] sm:$0xf]
    %v2467 = vld [vmem:[%s5 + $0x3d0] sm:$0xf]
    %v2468 = vld [vmem:[%s5 + $0x3d4] sm:$0xf]
    %v2469 = vld [vmem:[%s5 + $0x3d8] sm:$0xf]
    %v2470 = vld [vmem:[%s5 + $0x3dc] sm:$0xf]
    %v2471 = vld [vmem:[%s5 + $0x3e0] sm:$0xf]
    %v2472 = vld [vmem:[%s5 + $0x3e4] sm:$0xf]
    %v2473 = vld [vmem:[%s5 + $0x3e8] sm:$0xf]
    %v2474 = vld [vmem:[%s5 + $0x3ec] sm:$0xf]
    %v2475 = vld [vmem:[%s5 + $0x3f0] sm:$0xf]
    %v2476 = vld [vmem:[%s5 + $0x3f4] sm:$0xf]
    %v2477 = vld [vmem:[%s5 + $0x3f8] sm:$0xf]
    %v2478 = vld [vmem:[%s5 + $0x3fc] sm:$0xf]
    %v2479 = vld [vmem:[%s6] sm:$0x1]
    %v2481 = vlaneseq
    %v2482 = vshrl.u32 %v2481, 7
    %v2483 = vsub.s32 0, %v2482
    %v2484 = vrot.slane %v2479, %v2483
    %v2742 = vunpack.c.l.b16 %v2223
    %v2743 = vunpack.c.l.b16 %v2224
    %v2744 = vunpack.c.l.b16 %v2225
    %v2745 = vunpack.c.l.b16 %v2226
    %v2746 = vunpack.c.l.b16 %v2227
    %v2747 = vunpack.c.l.b16 %v2228
    %v2748 = vunpack.c.l.b16 %v2229
    %v2749 = vunpack.c.l.b16 %v2230
    %v2750 = vunpack.c.l.b16 %v2231
    %v2751 = vunpack.c.l.b16 %v2232
    %v2752 = vunpack.c.l.b16 %v2233
    %v2753 = vunpack.c.l.b16 %v2234
    %v2754 = vunpack.c.l.b16 %v2235
    %v2755 = vunpack.c.l.b16 %v2236
    %v2756 = vunpack.c.l.b16 %v2237
    %v2757 = vunpack.c.l.b16 %v2238
    %v2758 = vunpack.c.l.b16 %v2239
    %v2759 = vunpack.c.l.b16 %v2240
    %v2760 = vunpack.c.l.b16 %v2241
    %v2761 = vunpack.c.l.b16 %v2242
    %v2762 = vunpack.c.l.b16 %v2243
    %v2763 = vunpack.c.l.b16 %v2244
    %v2764 = vunpack.c.l.b16 %v2245
    %v2765 = vunpack.c.l.b16 %v2246
    %v2766 = vunpack.c.l.b16 %v2247
    %v2767 = vunpack.c.l.b16 %v2248
    %v2768 = vunpack.c.l.b16 %v2249
    %v2769 = vunpack.c.l.b16 %v2250
    %v2770 = vunpack.c.l.b16 %v2251
    %v2771 = vunpack.c.l.b16 %v2252
    %v2772 = vunpack.c.l.b16 %v2253
    %v2773 = vunpack.c.l.b16 %v2254
    %v2774 = vunpack.c.l.b16 %v2255
    %v2775 = vunpack.c.l.b16 %v2256
    %v2776 = vunpack.c.l.b16 %v2257
    %v2777 = vunpack.c.l.b16 %v2258
    %v2778 = vunpack.c.l.b16 %v2259
    %v2779 = vunpack.c.l.b16 %v2260
    %v2780 = vunpack.c.l.b16 %v2261
    %v2781 = vunpack.c.l.b16 %v2262
    %v2782 = vunpack.c.l.b16 %v2263
    %v2783 = vunpack.c.l.b16 %v2264
    %v2784 = vunpack.c.l.b16 %v2265
    %v2785 = vunpack.c.l.b16 %v2266
    %v2786 = vunpack.c.l.b16 %v2267
    %v2787 = vunpack.c.l.b16 %v2268
    %v2788 = vunpack.c.l.b16 %v2269
    %v2789 = vunpack.c.l.b16 %v2270
    %v2790 = vunpack.c.l.b16 %v2271
    %v2791 = vunpack.c.l.b16 %v2272
    %v2792 = vunpack.c.l.b16 %v2273
    %v2793 = vunpack.c.l.b16 %v2274
    %v2794 = vunpack.c.l.b16 %v2275
    %v2795 = vunpack.c.l.b16 %v2276
    %v2796 = vunpack.c.l.b16 %v2277
    %v2797 = vunpack.c.l.b16 %v2278
    %v2798 = vunpack.c.l.b16 %v2279
    %v2799 = vunpack.c.l.b16 %v2280
    %v2800 = vunpack.c.l.b16 %v2281
    %v2801 = vunpack.c.l.b16 %v2282
    %v2802 = vunpack.c.l.b16 %v2283
    %v2803 = vunpack.c.l.b16 %v2284
    %v2804 = vunpack.c.l.b16 %v2285
    %v2805 = vunpack.c.l.b16 %v2286
    %v2806 = vunpack.c.l.b16 %v2287
    %v2807 = vunpack.c.l.b16 %v2288
    %v2808 = vunpack.c.l.b16 %v2289
    %v2809 = vunpack.c.l.b16 %v2290
    %v2810 = vunpack.c.l.b16 %v2291
    %v2811 = vunpack.c.l.b16 %v2292
    %v2812 = vunpack.c.l.b16 %v2293
    %v2813 = vunpack.c.l.b16 %v2294
    %v2814 = vunpack.c.l.b16 %v2295
    %v2815 = vunpack.c.l.b16 %v2296
    %v2816 = vunpack.c.l.b16 %v2297
    %v2817 = vunpack.c.l.b16 %v2298
    %v2818 = vunpack.c.l.b16 %v2299
    %v2819 = vunpack.c.l.b16 %v2300
    %v2820 = vunpack.c.l.b16 %v2301
    %v2821 = vunpack.c.l.b16 %v2302
    %v2822 = vunpack.c.l.b16 %v2303
    %v2823 = vunpack.c.l.b16 %v2304
    %v2824 = vunpack.c.l.b16 %v2305
    %v2825 = vunpack.c.l.b16 %v2306
    %v2826 = vunpack.c.l.b16 %v2307
    %v2827 = vunpack.c.l.b16 %v2308
    %v2828 = vunpack.c.l.b16 %v2309
    %v2829 = vunpack.c.l.b16 %v2310
    %v2830 = vunpack.c.l.b16 %v2311
    %v2831 = vunpack.c.l.b16 %v2312
    %v2832 = vunpack.c.l.b16 %v2313
    %v2833 = vunpack.c.l.b16 %v2314
    %v2834 = vunpack.c.l.b16 %v2315
    %v2835 = vunpack.c.l.b16 %v2316
    %v2836 = vunpack.c.l.b16 %v2317
    %v2837 = vunpack.c.l.b16 %v2318
    %v2838 = vunpack.c.l.b16 %v2319
    %v2839 = vunpack.c.l.b16 %v2320
    %v2840 = vunpack.c.l.b16 %v2321
    %v2841 = vunpack.c.l.b16 %v2322
    %v2842 = vunpack.c.l.b16 %v2323
    %v2843 = vunpack.c.l.b16 %v2324
    %v2844 = vunpack.c.l.b16 %v2325
    %v2845 = vunpack.c.l.b16 %v2326
    %v2846 = vunpack.c.l.b16 %v2327
    %v2847 = vunpack.c.l.b16 %v2328
    %v2848 = vunpack.c.l.b16 %v2329
    %v2849 = vunpack.c.l.b16 %v2330
    %v2850 = vunpack.c.l.b16 %v2331
    %v2851 = vunpack.c.l.b16 %v2332
    %v2852 = vunpack.c.l.b16 %v2333
    %v2853 = vunpack.c.l.b16 %v2334
    %v2854 = vunpack.c.l.b16 %v2335
    %v2855 = vunpack.c.l.b16 %v2336
    %v2856 = vunpack.c.l.b16 %v2337
    %v2857 = vunpack.c.l.b16 %v2338
    %v2858 = vunpack.c.l.b16 %v2339
    %v2859 = vunpack.c.l.b16 %v2340
    %v2860 = vunpack.c.l.b16 %v2341
    %v2861 = vunpack.c.l.b16 %v2342
    %v2862 = vunpack.c.l.b16 %v2343
    %v2863 = vunpack.c.l.b16 %v2344
    %v2864 = vunpack.c.l.b16 %v2345
    %v2865 = vunpack.c.l.b16 %v2346
    %v2866 = vunpack.c.l.b16 %v2347
    %v2867 = vunpack.c.l.b16 %v2348
    %v2868 = vunpack.c.l.b16 %v2349
    %v2869 = vunpack.c.l.b16 %v2350
    %v2870 = vunpack.c.l.b16 %v2351
    %v2871 = vunpack.c.l.b16 %v2352
    %v2872 = vunpack.c.l.b16 %v2353
    %v2873 = vunpack.c.l.b16 %v2354
    %v2874 = vunpack.c.l.b16 %v2355
    %v2875 = vunpack.c.l.b16 %v2356
    %v2876 = vunpack.c.l.b16 %v2357
    %v2877 = vunpack.c.l.b16 %v2358
    %v2878 = vunpack.c.l.b16 %v2359
    %v2879 = vunpack.c.l.b16 %v2360
    %v2880 = vunpack.c.l.b16 %v2361
    %v2881 = vunpack.c.l.b16 %v2362
    %v2882 = vunpack.c.l.b16 %v2363
    %v2883 = vunpack.c.l.b16 %v2364
    %v2884 = vunpack.c.l.b16 %v2365
    %v2885 = vunpack.c.l.b16 %v2366
    %v2886 = vunpack.c.l.b16 %v2367
    %v2887 = vunpack.c.l.b16 %v2368
    %v2888 = vunpack.c.l.b16 %v2369
    %v2889 = vunpack.c.l.b16 %v2370
    %v2890 = vunpack.c.l.b16 %v2371
    %v2891 = vunpack.c.l.b16 %v2372
    %v2892 = vunpack.c.l.b16 %v2373
    %v2893 = vunpack.c.l.b16 %v2374
    %v2894 = vunpack.c.l.b16 %v2375
    %v2895 = vunpack.c.l.b16 %v2376
    %v2896 = vunpack.c.l.b16 %v2377
    %v2897 = vunpack.c.l.b16 %v2378
    %v2898 = vunpack.c.l.b16 %v2379
    %v2899 = vunpack.c.l.b16 %v2380
    %v2900 = vunpack.c.l.b16 %v2381
    %v2901 = vunpack.c.l.b16 %v2382
    %v2902 = vunpack.c.l.b16 %v2383
    %v2903 = vunpack.c.l.b16 %v2384
    %v2904 = vunpack.c.l.b16 %v2385
    %v2905 = vunpack.c.l.b16 %v2386
    %v2906 = vunpack.c.l.b16 %v2387
    %v2907 = vunpack.c.l.b16 %v2388
    %v2908 = vunpack.c.l.b16 %v2389
    %v2909 = vunpack.c.l.b16 %v2390
    %v2910 = vunpack.c.l.b16 %v2391
    %v2911 = vunpack.c.l.b16 %v2392
    %v2912 = vunpack.c.l.b16 %v2393
    %v2913 = vunpack.c.l.b16 %v2394
    %v2914 = vunpack.c.l.b16 %v2395
    %v2915 = vunpack.c.l.b16 %v2396
    %v2916 = vunpack.c.l.b16 %v2397
    %v2917 = vunpack.c.l.b16 %v2398
    %v2918 = vunpack.c.l.b16 %v2399
    %v2919 = vunpack.c.l.b16 %v2400
    %v2920 = vunpack.c.l.b16 %v2401
    %v2921 = vunpack.c.l.b16 %v2402
    %v2922 = vunpack.c.l.b16 %v2403
    %v2923 = vunpack.c.l.b16 %v2404
    %v2924 = vunpack.c.l.b16 %v2405
    %v2925 = vunpack.c.l.b16 %v2406
    %v2926 = vunpack.c.l.b16 %v2407
    %v2927 = vunpack.c.l.b16 %v2408
    %v2928 = vunpack.c.l.b16 %v2409
    %v2929 = vunpack.c.l.b16 %v2410
    %v2930 = vunpack.c.l.b16 %v2411
    %v2931 = vunpack.c.l.b16 %v2412
    %v2932 = vunpack.c.l.b16 %v2413
    %v2933 = vunpack.c.l.b16 %v2414
    %v2934 = vunpack.c.l.b16 %v2415
    %v2935 = vunpack.c.l.b16 %v2416
    %v2936 = vunpack.c.l.b16 %v2417
    %v2937 = vunpack.c.l.b16 %v2418
    %v2938 = vunpack.c.l.b16 %v2419
    %v2939 = vunpack.c.l.b16 %v2420
    %v2940 = vunpack.c.l.b16 %v2421
    %v2941 = vunpack.c.l.b16 %v2422
    %v2942 = vunpack.c.l.b16 %v2423
    %v2943 = vunpack.c.l.b16 %v2424
    %v2944 = vunpack.c.l.b16 %v2425
    %v2945 = vunpack.c.l.b16 %v2426
    %v2946 = vunpack.c.l.b16 %v2427
    %v2947 = vunpack.c.l.b16 %v2428
    %v2948 = vunpack.c.l.b16 %v2429
    %v2949 = vunpack.c.l.b16 %v2430
    %v2950 = vunpack.c.l.b16 %v2431
    %v2951 = vunpack.c.l.b16 %v2432
    %v2952 = vunpack.c.l.b16 %v2433
    %v2953 = vunpack.c.l.b16 %v2434
    %v2954 = vunpack.c.l.b16 %v2435
    %v2955 = vunpack.c.l.b16 %v2436
    %v2956 = vunpack.c.l.b16 %v2437
    %v2957 = vunpack.c.l.b16 %v2438
    %v2958 = vunpack.c.l.b16 %v2439
    %v2959 = vunpack.c.l.b16 %v2440
    %v2960 = vunpack.c.l.b16 %v2441
    %v2961 = vunpack.c.l.b16 %v2442
    %v2962 = vunpack.c.l.b16 %v2443
    %v2963 = vunpack.c.l.b16 %v2444
    %v2964 = vunpack.c.l.b16 %v2445
    %v2965 = vunpack.c.l.b16 %v2446
    %v2966 = vunpack.c.l.b16 %v2447
    %v2967 = vunpack.c.l.b16 %v2448
    %v2968 = vunpack.c.l.b16 %v2449
    %v2969 = vunpack.c.l.b16 %v2450
    %v2970 = vunpack.c.l.b16 %v2451
    %v2971 = vunpack.c.l.b16 %v2452
    %v2972 = vunpack.c.l.b16 %v2453
    %v2973 = vunpack.c.l.b16 %v2454
    %v2974 = vunpack.c.l.b16 %v2455
    %v2975 = vunpack.c.l.b16 %v2456
    %v2976 = vunpack.c.l.b16 %v2457
    %v2977 = vunpack.c.l.b16 %v2458
    %v2978 = vunpack.c.l.b16 %v2459
    %v2979 = vunpack.c.l.b16 %v2460
    %v2980 = vunpack.c.l.b16 %v2461
    %v2981 = vunpack.c.l.b16 %v2462
    %v2982 = vunpack.c.l.b16 %v2463
    %v2983 = vunpack.c.l.b16 %v2464
    %v2984 = vunpack.c.l.b16 %v2465
    %v2985 = vunpack.c.l.b16 %v2466
    %v2986 = vunpack.c.l.b16 %v2467
    %v2987 = vunpack.c.l.b16 %v2468
    %v2988 = vunpack.c.l.b16 %v2469
    %v2989 = vunpack.c.l.b16 %v2470
    %v2990 = vunpack.c.l.b16 %v2471
    %v2991 = vunpack.c.l.b16 %v2472
    %v2992 = vunpack.c.l.b16 %v2473
    %v2993 = vunpack.c.l.b16 %v2474
    %v2994 = vunpack.c.l.b16 %v2475
    %v2995 = vunpack.c.l.b16 %v2476
    %v2996 = vunpack.c.l.b16 %v2477
    %v2997 = vunpack.c.l.b16 %v2478
    %v2998 = vpack.c.b16 %v2743, %v2742
    %v2999 = vpack.c.b16 %v2745, %v2744
    %v3000 = vpack.c.b16 %v2747, %v2746
    %v3001 = vpack.c.b16 %v2749, %v2748
    %v3002 = vpack.c.b16 %v2751, %v2750
    %v3003 = vpack.c.b16 %v2753, %v2752
    %v3004 = vpack.c.b16 %v2755, %v2754
    %v3005 = vpack.c.b16 %v2757, %v2756
    %v3006 = vpack.c.b16 %v2759, %v2758
    %v3007 = vpack.c.b16 %v2761, %v2760
    %v3008 = vpack.c.b16 %v2763, %v2762
    %v3009 = vpack.c.b16 %v2765, %v2764
    %v3010 = vpack.c.b16 %v2767, %v2766
    %v3011 = vpack.c.b16 %v2769, %v2768
    %v3012 = vpack.c.b16 %v2771, %v2770
    %v3013 = vpack.c.b16 %v2773, %v2772
    %v3014 = vpack.c.b16 %v2775, %v2774
    %v3015 = vpack.c.b16 %v2777, %v2776
    %v3016 = vpack.c.b16 %v2779, %v2778
    %v3017 = vpack.c.b16 %v2781, %v2780
    %v3018 = vpack.c.b16 %v2783, %v2782
    %v3019 = vpack.c.b16 %v2785, %v2784
    %v3020 = vpack.c.b16 %v2787, %v2786
    %v3021 = vpack.c.b16 %v2789, %v2788
    %v3022 = vpack.c.b16 %v2791, %v2790
    %v3023 = vpack.c.b16 %v2793, %v2792
    %v3024 = vpack.c.b16 %v2795, %v2794
    %v3025 = vpack.c.b16 %v2797, %v2796
    %v3026 = vpack.c.b16 %v2799, %v2798
    %v3027 = vpack.c.b16 %v2801, %v2800
    %v3028 = vpack.c.b16 %v2803, %v2802
    %v3029 = vpack.c.b16 %v2805, %v2804
    %v3030 = vpack.c.b16 %v2807, %v2806
    %v3031 = vpack.c.b16 %v2809, %v2808
    %v3032 = vpack.c.b16 %v2811, %v2810
    %v3033 = vpack.c.b16 %v2813, %v2812
    %v3034 = vpack.c.b16 %v2815, %v2814
    %v3035 = vpack.c.b16 %v2817, %v2816
    %v3036 = vpack.c.b16 %v2819, %v2818
    %v3037 = vpack.c.b16 %v2821, %v2820
    %v3038 = vpack.c.b16 %v2823, %v2822
    %v3039 = vpack.c.b16 %v2825, %v2824
    %v3040 = vpack.c.b16 %v2827, %v2826
    %v3041 = vpack.c.b16 %v2829, %v2828
    %v3042 = vpack.c.b16 %v2831, %v2830
    %v3043 = vpack.c.b16 %v2833, %v2832
    %v3044 = vpack.c.b16 %v2835, %v2834
    %v3045 = vpack.c.b16 %v2837, %v2836
    %v3046 = vpack.c.b16 %v2839, %v2838
    %v3047 = vpack.c.b16 %v2841, %v2840
    %v3048 = vpack.c.b16 %v2843, %v2842
    %v3049 = vpack.c.b16 %v2845, %v2844
    %v3050 = vpack.c.b16 %v2847, %v2846
    %v3051 = vpack.c.b16 %v2849, %v2848
    %v3052 = vpack.c.b16 %v2851, %v2850
    %v3053 = vpack.c.b16 %v2853, %v2852
    %v3054 = vpack.c.b16 %v2855, %v2854
    %v3055 = vpack.c.b16 %v2857, %v2856
    %v3056 = vpack.c.b16 %v2859, %v2858
    %v3057 = vpack.c.b16 %v2861, %v2860
    %v3058 = vpack.c.b16 %v2863, %v2862
    %v3059 = vpack.c.b16 %v2865, %v2864
    %v3060 = vpack.c.b16 %v2867, %v2866
    %v3061 = vpack.c.b16 %v2869, %v2868
    %v3062 = vpack.c.b16 %v2871, %v2870
    %v3063 = vpack.c.b16 %v2873, %v2872
    %v3064 = vpack.c.b16 %v2875, %v2874
    %v3065 = vpack.c.b16 %v2877, %v2876
    %v3066 = vpack.c.b16 %v2879, %v2878
    %v3067 = vpack.c.b16 %v2881, %v2880
    %v3068 = vpack.c.b16 %v2883, %v2882
    %v3069 = vpack.c.b16 %v2885, %v2884
    %v3070 = vpack.c.b16 %v2887, %v2886
    %v3071 = vpack.c.b16 %v2889, %v2888
    %v3072 = vpack.c.b16 %v2891, %v2890
    %v3073 = vpack.c.b16 %v2893, %v2892
    %v3074 = vpack.c.b16 %v2895, %v2894
    %v3075 = vpack.c.b16 %v2897, %v2896
    %v3076 = vpack.c.b16 %v2899, %v2898
    %v3077 = vpack.c.b16 %v2901, %v2900
    %v3078 = vpack.c.b16 %v2903, %v2902
    %v3079 = vpack.c.b16 %v2905, %v2904
    %v3080 = vpack.c.b16 %v2907, %v2906
    %v3081 = vpack.c.b16 %v2909, %v2908
    %v3082 = vpack.c.b16 %v2911, %v2910
    %v3083 = vpack.c.b16 %v2913, %v2912
    %v3084 = vpack.c.b16 %v2915, %v2914
    %v3085 = vpack.c.b16 %v2917, %v2916
    %v3086 = vpack.c.b16 %v2919, %v2918
    %v3087 = vpack.c.b16 %v2921, %v2920
    %v3088 = vpack.c.b16 %v2923, %v2922
    %v3089 = vpack.c.b16 %v2925, %v2924
    %v3090 = vpack.c.b16 %v2927, %v2926
    %v3091 = vpack.c.b16 %v2929, %v2928
    %v3092 = vpack.c.b16 %v2931, %v2930
    %v3093 = vpack.c.b16 %v2933, %v2932
    %v3094 = vpack.c.b16 %v2935, %v2934
    %v3095 = vpack.c.b16 %v2937, %v2936
    %v3096 = vpack.c.b16 %v2939, %v2938
    %v3097 = vpack.c.b16 %v2941, %v2940
    %v3098 = vpack.c.b16 %v2943, %v2942
    %v3099 = vpack.c.b16 %v2945, %v2944
    %v3100 = vpack.c.b16 %v2947, %v2946
    %v3101 = vpack.c.b16 %v2949, %v2948
    %v3102 = vpack.c.b16 %v2951, %v2950
    %v3103 = vpack.c.b16 %v2953, %v2952
    %v3104 = vpack.c.b16 %v2955, %v2954
    %v3105 = vpack.c.b16 %v2957, %v2956
    %v3106 = vpack.c.b16 %v2959, %v2958
    %v3107 = vpack.c.b16 %v2961, %v2960
    %v3108 = vpack.c.b16 %v2963, %v2962
    %v3109 = vpack.c.b16 %v2965, %v2964
    %v3110 = vpack.c.b16 %v2967, %v2966
    %v3111 = vpack.c.b16 %v2969, %v2968
    %v3112 = vpack.c.b16 %v2971, %v2970
    %v3113 = vpack.c.b16 %v2973, %v2972
    %v3114 = vpack.c.b16 %v2975, %v2974
    %v3115 = vpack.c.b16 %v2977, %v2976
    %v3116 = vpack.c.b16 %v2979, %v2978
    %v3117 = vpack.c.b16 %v2981, %v2980
    %v3118 = vpack.c.b16 %v2983, %v2982
    %v3119 = vpack.c.b16 %v2985, %v2984
    %v3120 = vpack.c.b16 %v2987, %v2986
    %v3121 = vpack.c.b16 %v2989, %v2988
    %v3122 = vpack.c.b16 %v2991, %v2990
    %v3123 = vpack.c.b16 %v2993, %v2992
    %v3124 = vpack.c.b16 %v2995, %v2994
    %v3125 = vpack.c.b16 %v2997, %v2996
    %3254 = vmatprep.subr.bf16.mxu0 0
    %3255 = vmatpush1.bf16.msra.mxu0 %v2998
    %3256 = vmatprep.subr.bf16.mxu0 0
    %3257 = vmatpush1.bf16.msra.mxu0 %v2999
    %3258 = vmatprep.subr.bf16.mxu0 0
    %3259 = vmatpush1.bf16.msra.mxu0 %v3000
    %3260 = vmatprep.subr.bf16.mxu0 0
    %3261 = vmatpush1.bf16.msra.mxu0 %v3001
    %3262 = vmatprep.subr.bf16.mxu0 0
    %3263 = vmatpush1.bf16.msra.mxu0 %v3002
    %3264 = vmatprep.subr.bf16.mxu0 0
    %3265 = vmatpush1.bf16.msra.mxu0 %v3003
    %3266 = vmatprep.subr.bf16.mxu0 0
    %3267 = vmatpush1.bf16.msra.mxu0 %v3004
    %3268 = vmatprep.subr.bf16.mxu0 0
    %3269 = vmatpush1.bf16.msra.mxu0 %v3005
    %3270 = vmatprep.subr.bf16.mxu0 0
    %3271 = vmatpush1.bf16.msra.mxu0 %v3006
    %3272 = vmatprep.subr.bf16.mxu0 0
    %3273 = vmatpush1.bf16.msra.mxu0 %v3007
    %3274 = vmatprep.subr.bf16.mxu0 0
    %3275 = vmatpush1.bf16.msra.mxu0 %v3008
    %3276 = vmatprep.subr.bf16.mxu0 0
    %3277 = vmatpush1.bf16.msra.mxu0 %v3009
    %3278 = vmatprep.subr.bf16.mxu0 0
    %3279 = vmatpush1.bf16.msra.mxu0 %v3010
    %3280 = vmatprep.subr.bf16.mxu0 0
    %3281 = vmatpush1.bf16.msra.mxu0 %v3011
    %3282 = vmatprep.subr.bf16.mxu0 0
    %3283 = vmatpush1.bf16.msra.mxu0 %v3012
    %3284 = vmatprep.subr.bf16.mxu0 0
    %3285 = vmatpush1.bf16.msra.mxu0 %v3013
    %3286 = vmatprep.mubr.bf16.mxu0 %v448
    %3287 = vmatmul.mubr.bf16.gmra.mrb[0].mxu0 %v447
    %v3288 = vpop.f32.mrb[0].mxu0
    %v3289 = vadd.f32 %v2484, %v3288
    %v3290 = vpop.f32.mrb[0].mxu0
    %v3291 = vpop.f32.mrb[0].mxu0
    %v3292 = vadd.f32 %v2484, %v3291
    %v3293 = vpop.f32.mrb[0].mxu0
    %3294 = vmatprep.mubr.bf16.mxu0 %v464
    %3295 = vmatmul.mubr.bf16.gmra.mrb[0].mxu0 %v463
    %v3296 = vpop.f32.mrb[0].mxu0
    %v3297 = vadd.f32 %v2484, %v3296
    %v3298 = vpop.f32.mrb[0].mxu0
    %v3299 = vpop.f32.mrb[0].mxu0
    %v3300 = vadd.f32 %v2484, %v3299
    %v3301 = vpop.f32.mrb[0].mxu0
    %3302 = vdwg.mxu0
    %3303 = vmatprep.subr.bf16.mxu0 0
    %3304 = vmatpush1.bf16.msra.mxu0 %v3014
    %3305 = vmatprep.subr.bf16.mxu0 0
    %3306 = vmatpush1.bf16.msra.mxu0 %v3015
    %3307 = vmatprep.subr.bf16.mxu0 0
    %3308 = vmatpush1.bf16.msra.mxu0 %v3016
    %3309 = vmatprep.subr.bf16.mxu0 0
    %3310 = vmatpush1.bf16.msra.mxu0 %v3017
    %3311 = vmatprep.subr.bf16.mxu0 0
    %3312 = vmatpush1.bf16.msra.mxu0 %v3018
    %3313 = vmatprep.subr.bf16.mxu0 0
    %3314 = vmatpush1.bf16.msra.mxu0 %v3019
    %3315 = vmatprep.subr.bf16.mxu0 0
    %3316 = vmatpush1.bf16.msra.mxu0 %v3020
    %3317 = vmatprep.subr.bf16.mxu0 0
    %3318 = vmatpush1.bf16.msra.mxu0 %v3021
    %3319 = vmatprep.subr.bf16.mxu0 0
    %3320 = vmatpush1.bf16.msra.mxu0 %v3022
    %3321 = vmatprep.subr.bf16.mxu0 0
    %3322 = vmatpush1.bf16.msra.mxu0 %v3023
    %3323 = vmatprep.subr.bf16.mxu0 0
    %3324 = vmatpush1.bf16.msra.mxu0 %v3024
    %3325 = vmatprep.subr.bf16.mxu0 0
    %3326 = vmatpush1.bf16.msra.mxu0 %v3025
    %3327 = vmatprep.subr.bf16.mxu0 0
    %3328 = vmatpush1.bf16.msra.mxu0 %v3026
    %3329 = vmatprep.subr.bf16.mxu0 0
    %3330 = vmatpush1.bf16.msra.mxu0 %v3027
    %3331 = vmatprep.subr.bf16.mxu0 0
    %3332 = vmatpush1.bf16.msra.mxu0 %v3028
    %3333 = vmatprep.subr.bf16.mxu0 0
    %3334 = vmatpush1.bf16.msra.mxu0 %v3029
    %3335 = vmatprep.mubr.bf16.mxu0 %v450
    %3336 = vmatmul.mubr.bf16.gmra.mrb[0].mxu0 %v449
    %v3337 = vpop.f32.mrb[0].mxu0
    %v3338 = vadd.f32 %v3289, %v3337
    %v3339 = vpop.f32.mrb[0].mxu0
    %v3340 = vpop.f32.mrb[0].mxu0
    %v3341 = vadd.f32 %v3292, %v3340
    %v3342 = vpop.f32.mrb[0].mxu0
    %3343 = vmatprep.mubr.bf16.mxu0 %v466
    %3344 = vmatmul.mubr.bf16.gmra.mrb[0].mxu0 %v465
    %v3345 = vpop.f32.mrb[0].mxu0
    %v3346 = vadd.f32 %v3297, %v3345
    %v3347 = vpop.f32.mrb[0].mxu0
    %v3348 = vpop.f32.mrb[0].mxu0
    %v3349 = vadd.f32 %v3300, %v3348
    %v3350 = vpop.f32.mrb[0].mxu0
    %3351 = vdwg.mxu0
    %3352 = vmatprep.subr.bf16.mxu0 0
    %3353 = vmatpush1.bf16.msra.mxu0 %v3030
    %3354 = vmatprep.subr.bf16.mxu0 0
    %3355 = vmatpush1.bf16.msra.mxu0 %v3031
    %3356 = vmatprep.subr.bf16.mxu0 0
    %3357 = vmatpush1.bf16.msra.mxu0 %v3032
    %3358 = vmatprep.subr.bf16.mxu0 0
    %3359 = vmatpush1.bf16.msra.mxu0 %v3033
    %3360 = vmatprep.subr.bf16.mxu0 0
    %3361 = vmatpush1.bf16.msra.mxu0 %v3034
    %3362 = vmatprep.subr.bf16.mxu0 0
    %3363 = vmatpush1.bf16.msra.mxu0 %v3035
    %3364 = vmatprep.subr.bf16.mxu0 0
    %3365 = vmatpush1.bf16.msra.mxu0 %v3036
    %3366 = vmatprep.subr.bf16.mxu0 0
    %3367 = vmatpush1.bf16.msra.mxu0 %v3037
    %3368 = vmatprep.subr.bf16.mxu0 0
    %3369 = vmatpush1.bf16.msra.mxu0 %v3038
    %3370 = vmatprep.subr.bf16.mxu0 0
    %3371 = vmatpush1.bf16.msra.mxu0 %v3039
    %3372 = vmatprep.subr.bf16.mxu0 0
    %3373 = vmatpush1.bf16.msra.mxu0 %v3040
    %3374 = vmatprep.subr.bf16.mxu0 0
    %3375 = vmatpush1.bf16.msra.mxu0 %v3041
    %3376 = vmatprep.subr.bf16.mxu0 0
    %3377 = vmatpush1.bf16.msra.mxu0 %v3042
    %3378 = vmatprep.subr.bf16.mxu0 0
    %3379 = vmatpush1.bf16.msra.mxu0 %v3043
    %3380 = vmatprep.subr.bf16.mxu0 0
    %3381 = vmatpush1.bf16.msra.mxu0 %v3044
    %3382 = vmatprep.subr.bf16.mxu0 0
    %3383 = vmatpush1.bf16.msra.mxu0 %v3045
    %3384 = vmatprep.mubr.bf16.mxu0 %v452
    %3385 = vmatmul.mubr.bf16.gmra.mrb[0].mxu0 %v451
    %v3386 = vpop.f32.mrb[0].mxu0
    %v3387 = vadd.f32 %v3338, %v3386
    %v3388 = vpop.f32.mrb[0].mxu0
    %v3389 = vpop.f32.mrb[0].mxu0
    %v3390 = vadd.f32 %v3341, %v3389
    %v3391 = vpop.f32.mrb[0].mxu0
    %3392 = vmatprep.mubr.bf16.mxu0 %v468
    %3393 = vmatmul.mubr.bf16.gmra.mrb[0].mxu0 %v467
    %v3394 = vpop.f32.mrb[0].mxu0
    %v3395 = vadd.f32 %v3346, %v3394
    %v3396 = vpop.f32.mrb[0].mxu0
    %v3397 = vpop.f32.mrb[0].mxu0
    %v3398 = vadd.f32 %v3349, %v3397
    %v3399 = vpop.f32.mrb[0].mxu0
    %3400 = vdwg.mxu0
    %3401 = vmatprep.subr.bf16.mxu0 0
    %3402 = vmatpush1.bf16.msra.mxu0 %v3046
    %3403 = vmatprep.subr.bf16.mxu0 0
    %3404 = vmatpush1.bf16.msra.mxu0 %v3047
    %3405 = vmatprep.subr.bf16.mxu0 0
    %3406 = vmatpush1.bf16.msra.mxu0 %v3048
    %3407 = vmatprep.subr.bf16.mxu0 0
    %3408 = vmatpush1.bf16.msra.mxu0 %v3049
    %3409 = vmatprep.subr.bf16.mxu0 0
    %3410 = vmatpush1.bf16.msra.mxu0 %v3050
    %3411 = vmatprep.subr.bf16.mxu0 0
    %3412 = vmatpush1.bf16.msra.mxu0 %v3051
    %3413 = vmatprep.subr.bf16.mxu0 0
    %3414 = vmatpush1.bf16.msra.mxu0 %v3052
    %3415 = vmatprep.subr.bf16.mxu0 0
    %3416 = vmatpush1.bf16.msra.mxu0 %v3053
    %3417 = vmatprep.subr.bf16.mxu0 0
    %3418 = vmatpush1.bf16.msra.mxu0 %v3054
    %3419 = vmatprep.subr.bf16.mxu0 0
    %3420 = vmatpush1.bf16.msra.mxu0 %v3055
    %3421 = vmatprep.subr.bf16.mxu0 0
    %3422 = vmatpush1.bf16.msra.mxu0 %v3056
    %3423 = vmatprep.subr.bf16.mxu0 0
    %3424 = vmatpush1.bf16.msra.mxu0 %v3057
    %3425 = vmatprep.subr.bf16.mxu0 0
    %3426 = vmatpush1.bf16.msra.mxu0 %v3058
    %3427 = vmatprep.subr.bf16.mxu0 0
    %3428 = vmatpush1.bf16.msra.mxu0 %v3059
    %3429 = vmatprep.subr.bf16.mxu0 0
    %3430 = vmatpush1.bf16.msra.mxu0 %v3060
    %3431 = vmatprep.subr.bf16.mxu0 0
    %3432 = vmatpush1.bf16.msra.mxu0 %v3061
    %3433 = vmatprep.mubr.bf16.mxu0 %v454
    %3434 = vmatmul.mubr.bf16.gmra.mrb[0].mxu0 %v453
    %v3435 = vpop.f32.mrb[0].mxu0
    %v3436 = vadd.f32 %v3387, %v3435
    %v3437 = vpop.f32.mrb[0].mxu0
    %v3438 = vpop.f32.mrb[0].mxu0
    %v3439 = vadd.f32 %v3390, %v3438
    %v3440 = vpop.f32.mrb[0].mxu0
    %3441 = vmatprep.mubr.bf16.mxu0 %v470
    %3442 = vmatmul.mubr.bf16.gmra.mrb[0].mxu0 %v469
    %v3443 = vpop.f32.mrb[0].mxu0
    %v3444 = vadd.f32 %v3395, %v3443
    %v3445 = vpop.f32.mrb[0].mxu0
    %v3446 = vpop.f32.mrb[0].mxu0
    %v3447 = vadd.f32 %v3398, %v3446
    %v3448 = vpop.f32.mrb[0].mxu0
    %3449 = vdwg.mxu0
    %3450 = vmatprep.subr.bf16.mxu0 0
    %3451 = vmatpush1.bf16.msra.mxu0 %v3062
    %3452 = vmatprep.subr.bf16.mxu0 0
    %3453 = vmatpush1.bf16.msra.mxu0 %v3063
    %3454 = vmatprep.subr.bf16.mxu0 0
    %3455 = vmatpush1.bf16.msra.mxu0 %v3064
    %3456 = vmatprep.subr.bf16.mxu0 0
    %3457 = vmatpush1.bf16.msra.mxu0 %v3065
    %3458 = vmatprep.subr.bf16.mxu0 0
    %3459 = vmatpush1.bf16.msra.mxu0 %v3066
    %3460 = vmatprep.subr.bf16.mxu0 0
    %3461 = vmatpush1.bf16.msra.mxu0 %v3067
    %3462 = vmatprep.subr.bf16.mxu0 0
    %3463 = vmatpush1.bf16.msra.mxu0 %v3068
    %3464 = vmatprep.subr.bf16.mxu0 0
    %3465 = vmatpush1.bf16.msra.mxu0 %v3069
    %3466 = vmatprep.subr.bf16.mxu0 0
    %3467 = vmatpush1.bf16.msra.mxu0 %v3070
    %3468 = vmatprep.subr.bf16.mxu0 0
    %3469 = vmatpush1.bf16.msra.mxu0 %v3071
    %3470 = vmatprep.subr.bf16.mxu0 0
    %3471 = vmatpush1.bf16.msra.mxu0 %v3072
    %3472 = vmatprep.subr.bf16.mxu0 0
    %3473 = vmatpush1.bf16.msra.mxu0 %v3073
    %3474 = vmatprep.subr.bf16.mxu0 0
    %3475 = vmatpush1.bf16.msra.mxu0 %v3074
    %3476 = vmatprep.subr.bf16.mxu0 0
    %3477 = vmatpush1.bf16.msra.mxu0 %v3075
    %3478 = vmatprep.subr.bf16.mxu0 0
    %3479 = vmatpush1.bf16.msra.mxu0 %v3076
    %3480 = vmatprep.subr.bf16.mxu0 0
    %3481 = vmatpush1.bf16.msra.mxu0 %v3077
    %3482 = vmatprep.mubr.bf16.mxu0 %v456
    %3483 = vmatmul.mubr.bf16.gmra.mrb[0].mxu0 %v455
    %v3484 = vpop.f32.mrb[0].mxu0
    %v3485 = vadd.f32 %v3436, %v3484
    %v3486 = vpop.f32.mrb[0].mxu0
    %v3487 = vpop.f32.mrb[0].mxu0
    %v3488 = vadd.f32 %v3439, %v3487
    %v3489 = vpop.f32.mrb[0].mxu0
    %3490 = vmatprep.mubr.bf16.mxu0 %v472
    %3491 = vmatmul.mubr.bf16.gmra.mrb[0].mxu0 %v471
    %v3492 = vpop.f32.mrb[0].mxu0
    %v3493 = vadd.f32 %v3444, %v3492
    %v3494 = vpop.f32.mrb[0].mxu0
    %v3495 = vpop.f32.mrb[0].mxu0
    %v3496 = vadd.f32 %v3447, %v3495
    %v3497 = vpop.f32.mrb[0].mxu0
    %3498 = vdwg.mxu0
    %3499 = vmatprep.subr.bf16.mxu0 0
    %3500 = vmatpush1.bf16.msra.mxu0 %v3078
    %3501 = vmatprep.subr.bf16.mxu0 0
    %3502 = vmatpush1.bf16.msra.mxu0 %v3079
    %3503 = vmatprep.subr.bf16.mxu0 0
    %3504 = vmatpush1.bf16.msra.mxu0 %v3080
    %3505 = vmatprep.subr.bf16.mxu0 0
    %3506 = vmatpush1.bf16.msra.mxu0 %v3081
    %3507 = vmatprep.subr.bf16.mxu0 0
    %3508 = vmatpush1.bf16.msra.mxu0 %v3082
    %3509 = vmatprep.subr.bf16.mxu0 0
    %3510 = vmatpush1.bf16.msra.mxu0 %v3083
    %3511 = vmatprep.subr.bf16.mxu0 0
    %3512 = vmatpush1.bf16.msra.mxu0 %v3084
    %3513 = vmatprep.subr.bf16.mxu0 0
    %3514 = vmatpush1.bf16.msra.mxu0 %v3085
    %3515 = vmatprep.subr.bf16.mxu0 0
    %3516 = vmatpush1.bf16.msra.mxu0 %v3086
    %3517 = vmatprep.subr.bf16.mxu0 0
    %3518 = vmatpush1.bf16.msra.mxu0 %v3087
    %3519 = vmatprep.subr.bf16.mxu0 0
    %3520 = vmatpush1.bf16.msra.mxu0 %v3088
    %3521 = vmatprep.subr.bf16.mxu0 0
    %3522 = vmatpush1.bf16.msra.mxu0 %v3089
    %3523 = vmatprep.subr.bf16.mxu0 0
    %3524 = vmatpush1.bf16.msra.mxu0 %v3090
    %3525 = vmatprep.subr.bf16.mxu0 0
    %3526 = vmatpush1.bf16.msra.mxu0 %v3091
    %3527 = vmatprep.subr.bf16.mxu0 0
    %3528 = vmatpush1.bf16.msra.mxu0 %v3092
    %3529 = vmatprep.subr.bf16.mxu0 0
    %3530 = vmatpush1.bf16.msra.mxu0 %v3093
    %3531 = vmatprep.mubr.bf16.mxu0 %v458
    %3532 = vmatmul.mubr.bf16.gmra.mrb[0].mxu0 %v457
    %v3533 = vpop.f32.mrb[0].mxu0
    %v3534 = vadd.f32 %v3485, %v3533
    %v3535 = vpop.f32.mrb[0].mxu0
    %v3536 = vpop.f32.mrb[0].mxu0
    %v3537 = vadd.f32 %v3488, %v3536
    %v3538 = vpop.f32.mrb[0].mxu0
    %3539 = vmatprep.mubr.bf16.mxu0 %v474
    %3540 = vmatmul.mubr.bf16.gmra.mrb[0].mxu0 %v473
    %v3541 = vpop.f32.mrb[0].mxu0
    %v3542 = vadd.f32 %v3493, %v3541
    %v3543 = vpop.f32.mrb[0].mxu0
    %v3544 = vpop.f32.mrb[0].mxu0
    %v3545 = vadd.f32 %v3496, %v3544
    %v3546 = vpop.f32.mrb[0].mxu0
    %3547 = vdwg.mxu0
    %3548 = vmatprep.subr.bf16.mxu0 0
    %3549 = vmatpush1.bf16.msra.mxu0 %v3094
    %3550 = vmatprep.subr.bf16.mxu0 0
    %3551 = vmatpush1.bf16.msra.mxu0 %v3095
    %3552 = vmatprep.subr.bf16.mxu0 0
    %3553 = vmatpush1.bf16.msra.mxu0 %v3096
    %3554 = vmatprep.subr.bf16.mxu0 0
    %3555 = vmatpush1.bf16.msra.mxu0 %v3097
    %3556 = vmatprep.subr.bf16.mxu0 0
    %3557 = vmatpush1.bf16.msra.mxu0 %v3098
    %3558 = vmatprep.subr.bf16.mxu0 0
    %3559 = vmatpush1.bf16.msra.mxu0 %v3099
    %3560 = vmatprep.subr.bf16.mxu0 0
    %3561 = vmatpush1.bf16.msra.mxu0 %v3100
    %3562 = vmatprep.subr.bf16.mxu0 0
    %3563 = vmatpush1.bf16.msra.mxu0 %v3101
    %3564 = vmatprep.subr.bf16.mxu0 0
    %3565 = vmatpush1.bf16.msra.mxu0 %v3102
    %3566 = vmatprep.subr.bf16.mxu0 0
    %3567 = vmatpush1.bf16.msra.mxu0 %v3103
    %3568 = vmatprep.subr.bf16.mxu0 0
    %3569 = vmatpush1.bf16.msra.mxu0 %v3104
    %3570 = vmatprep.subr.bf16.mxu0 0
    %3571 = vmatpush1.bf16.msra.mxu0 %v3105
    %3572 = vmatprep.subr.bf16.mxu0 0
    %3573 = vmatpush1.bf16.msra.mxu0 %v3106
    %3574 = vmatprep.subr.bf16.mxu0 0
    %3575 = vmatpush1.bf16.msra.mxu0 %v3107
    %3576 = vmatprep.subr.bf16.mxu0 0
    %3577 = vmatpush1.bf16.msra.mxu0 %v3108
    %3578 = vmatprep.subr.bf16.mxu0 0
    %3579 = vmatpush1.bf16.msra.mxu0 %v3109
    %3580 = vmatprep.mubr.bf16.mxu0 %v460
    %3581 = vmatmul.mubr.bf16.gmra.mrb[0].mxu0 %v459
    %v3582 = vpop.f32.mrb[0].mxu0
    %v3583 = vadd.f32 %v3534, %v3582
    %v3584 = vpop.f32.mrb[0].mxu0
    %v3585 = vpop.f32.mrb[0].mxu0
    %v3586 = vadd.f32 %v3537, %v3585
    %v3587 = vpop.f32.mrb[0].mxu0
    %3588 = vmatprep.mubr.bf16.mxu0 %v476
    %3589 = vmatmul.mubr.bf16.gmra.mrb[0].mxu0 %v475
    %v3590 = vpop.f32.mrb[0].mxu0
    %v3591 = vadd.f32 %v3542, %v3590
    %v3592 = vpop.f32.mrb[0].mxu0
    %v3593 = vpop.f32.mrb[0].mxu0
    %v3594 = vadd.f32 %v3545, %v3593
    %v3595 = vpop.f32.mrb[0].mxu0
    %3596 = vdwg.mxu0
    %3597 = vmatprep.subr.bf16.mxu0 0
    %3598 = vmatpush1.bf16.msra.mxu0 %v3110
    %3599 = vmatprep.subr.bf16.mxu0 0
    %3600 = vmatpush1.bf16.msra.mxu0 %v3111
    %3601 = vmatprep.subr.bf16.mxu0 0
    %3602 = vmatpush1.bf16.msra.mxu0 %v3112
    %3603 = vmatprep.subr.bf16.mxu0 0
    %3604 = vmatpush1.bf16.msra.mxu0 %v3113
    %3605 = vmatprep.subr.bf16.mxu0 0
    %3606 = vmatpush1.bf16.msra.mxu0 %v3114
    %3607 = vmatprep.subr.bf16.mxu0 0
    %3608 = vmatpush1.bf16.msra.mxu0 %v3115
    %3609 = vmatprep.subr.bf16.mxu0 0
    %3610 = vmatpush1.bf16.msra.mxu0 %v3116
    %3611 = vmatprep.subr.bf16.mxu0 0
    %3612 = vmatpush1.bf16.msra.mxu0 %v3117
    %3613 = vmatprep.subr.bf16.mxu0 0
    %3614 = vmatpush1.bf16.msra.mxu0 %v3118
    %3615 = vmatprep.subr.bf16.mxu0 0
    %3616 = vmatpush1.bf16.msra.mxu0 %v3119
    %3617 = vmatprep.subr.bf16.mxu0 0
    %3618 = vmatpush1.bf16.msra.mxu0 %v3120
    %3619 = vmatprep.subr.bf16.mxu0 0
    %3620 = vmatpush1.bf16.msra.mxu0 %v3121
    %3621 = vmatprep.subr.bf16.mxu0 0
    %3622 = vmatpush1.bf16.msra.mxu0 %v3122
    %3623 = vmatprep.subr.bf16.mxu0 0
    %3624 = vmatpush1.bf16.msra.mxu0 %v3123
    %3625 = vmatprep.subr.bf16.mxu0 0
    %3626 = vmatpush1.bf16.msra.mxu0 %v3124
    %3627 = vmatprep.subr.bf16.mxu0 0
    %3628 = vmatpush1.bf16.msra.mxu0 %v3125
    %3629 = vmatprep.mubr.bf16.mxu0 %v462
    %3630 = vmatmul.mubr.bf16.gmra.mrb[0].mxu0 %v461
    %v3631 = vpop.f32.mrb[0].mxu0
    %v3632 = vadd.f32 %v3583, %v3631
    %v3633 = vpop.f32.mrb[0].mxu0
    %v3634 = vpop.f32.mrb[0].mxu0
    %v3635 = vadd.f32 %v3586, %v3634
    %v3636 = vpop.f32.mrb[0].mxu0
    %3637 = vmatprep.mubr.bf16.mxu0 %v478
    %3638 = vmatmul.mubr.bf16.gmra.mrb[0].mxu0 %v477
    %v3639 = vpop.f32.mrb[0].mxu0
    %v3640 = vadd.f32 %v3591, %v3639
    %v3641 = vpop.f32.mrb[0].mxu0
    %v3642 = vpop.f32.mrb[0].mxu0
    %v3643 = vadd.f32 %v3594, %v3642
    %v3644 = vpop.f32.mrb[0].mxu0
    %3645 = vdwg.mxu0
    %v3646 = vmax.f32 %v3632, 0.0
    %v3647 = vmax.f32 %v3635, 0.0
    %v3648 = vmax.f32 %v3640, 0.0
    %v3649 = vmax.f32 %v3643, 0.0
    %v3650 = vpack.c.bf16 %v3647, %v3646
    %v3651 = vpack.c.bf16 %v3649, %v3648
    %v3652 = vld [vmem:[%s7] sm:$0xf]
    %v3653 = vld [vmem:[%s7 + $0x4] sm:$0xf]
    %v3654 = vld [vmem:[%s7 + $0x8] sm:$0xf]
    %v3655 = vld [vmem:[%s7 + $0xc] sm:$0xf]
    %v3656 = vld [vmem:[%s7 + $0x10] sm:$0xf]
    %v3657 = vld [vmem:[%s7 + $0x14] sm:$0xf]
    %v3658 = vld [vmem:[%s7 + $0x18] sm:$0xf]
    %v3659 = vld [vmem:[%s7 + $0x1c] sm:$0xf]
    %v3660 = vld [vmem:[%s8] sm:$0x1]
    %v3662 = vlaneseq
    %v3663 = vshrl.u32 %v3662, 7
    %v3664 = vsub.s32 0, %v3663
    %v3665 = vrot.slane %v3660, %v3664
    %v3675 = vunpack.c.l.b16 %v3652
    %v3676 = vunpack.c.l.b16 %v3653
    %v3677 = vunpack.c.l.b16 %v3654
    %v3678 = vunpack.c.l.b16 %v3655
    %v3679 = vunpack.c.l.b16 %v3656
    %v3680 = vunpack.c.l.b16 %v3657
    %v3681 = vunpack.c.l.b16 %v3658
    %v3682 = vunpack.c.l.b16 %v3659
    %v3683 = vpack.c.b16 %v3676, %v3675
    %v3684 = vpack.c.b16 %v3678, %v3677
    %v3685 = vpack.c.b16 %v3680, %v3679
    %v3686 = vpack.c.b16 %v3682, %v3681
    %vm3691 = vcmask 523264
    %v3693 = vsel %vm3691, %v3650, 0
    %v3696 = vsel %vm3691, %v3651, 0
    %3698 = vmatprep.subr.bf16.mxu0 0
    %3699 = vmatpush1.bf16.msra.mxu0 %v3683
    %3700 = vmatprep.subr.bf16.mxu0 0
    %3701 = vmatpush1.bf16.msra.mxu0 %v3684
    %3702 = vmatprep.subr.bf16.mxu0 0
    %3703 = vmatpush1.bf16.msra.mxu0 %v3685
    %3704 = vmatprep.subr.bf16.mxu0 0
    %3705 = vmatpush1.bf16.msra.mxu0 %v3686
    %3706 = vmatprep.subr.bf16.mxu0 0
    %3707 = vmatpush1.bf16.msra.mxu0 0
    %3708 = vmatprep.subr.bf16.mxu0 0
    %3709 = vmatpush1.bf16.msra.mxu0 0
    %3710 = vmatprep.subr.bf16.mxu0 0
    %3711 = vmatpush1.bf16.msra.mxu0 0
    %3712 = vmatprep.subr.bf16.mxu0 0
    %3713 = vmatpush1.bf16.msra.mxu0 0
    %3714 = vmatprep.subr.bf16.mxu0 0
    %3715 = vmatpush1.bf16.msra.mxu0 0
    %3716 = vmatprep.subr.bf16.mxu0 0
    %3717 = vmatpush1.bf16.msra.mxu0 0
    %3718 = vmatprep.subr.bf16.mxu0 0
    %3719 = vmatpush1.bf16.msra.mxu0 0
    %3720 = vmatprep.subr.bf16.mxu0 0
    %3721 = vmatpush1.bf16.msra.mxu0 0
    %3722 = vmatprep.subr.bf16.mxu0 0
    %3723 = vmatpush1.bf16.msra.mxu0 0
    %3724 = vmatprep.subr.bf16.mxu0 0
    %3725 = vmatpush1.bf16.msra.mxu0 0
    %3726 = vmatprep.subr.bf16.mxu0 0
    %3727 = vmatpush1.bf16.msra.mxu0 0
    %3728 = vmatprep.subr.bf16.mxu0 0
    %3729 = vmatpush1.bf16.msra.mxu0 0
    %3730 = vmatprep.mubr.bf16.mxu0 0
    %3731 = vmatmul.mubr.bf16.gmra.mrb[0].mxu0 %v3693
    %v3732 = vpop.f32.mrb[0].mxu0
    %v3733 = vadd.f32 %v3665, %v3732
    %v3734 = vpop.f32.mrb[0].mxu0
    %v3735 = vpop.f32.mrb[0].mxu0
    %v3736 = vadd.f32 %v3665, %v3735
    %v3737 = vpop.f32.mrb[0].mxu0
    %3738 = vmatprep.mubr.bf16.mxu0 0
    %3739 = vmatmul.mubr.bf16.gmra.mrb[0].mxu0 %v3696
    %v3740 = vpop.f32.mrb[0].mxu0
    %v3741 = vadd.f32 %v3665, %v3740
    %v3742 = vpop.f32.mrb[0].mxu0
    %v3743 = vpop.f32.mrb[0].mxu0
    %v3744 = vadd.f32 %v3665, %v3743
    %v3745 = vpop.f32.mrb[0].mxu0
    %3746 = vdwg.mxu0
    %v3747 = vsel %vm3691, %v3733, -inf
    %3748 = vmax.xlane.f32.xlu0 %v3747
    %v3749 = vpop.xlane.xlu0 %3748
    %v3750 = vsel %vm3691, %v3736, -inf
    %3751 = vmax.xlane.f32.xlu0 %v3750
    %v3752 = vpop.xlane.xlu0 %3751
    %v3753 = vsel %vm3691, %v3741, -inf
    %3754 = vmax.xlane.f32.xlu0 %v3753
    %v3755 = vpop.xlane.xlu0 %3754
    %v3756 = vsel %vm3691, %v3744, -inf
    %3757 = vmax.xlane.f32.xlu0 %v3756
    %v3758 = vpop.xlane.xlu0 %3757
    %v3759 = vsub.f32 %v3733, %v3749
    %v3760 = vsub.f32 %v3736, %v3752
    %v3761 = vsub.f32 %v3741, %v3755
    %v3762 = vsub.f32 %v3744, %v3758
    %v3763 = vmul.f32 %v3759, 1.442695
    %v3764 = vpow.pop %v3763
    %v3765 = vmul.f32 %v3760, 1.442695
    %v3766 = vpow.pop %v3765
    %v3767 = vmul.f32 %v3761, 1.442695
    %v3768 = vpow.pop %v3767
    %v3769 = vmul.f32 %v3762, 1.442695
    %v3770 = vpow.pop %v3769
    %v3771 = vsel %vm3691, %v3764, 0.0
    %3772 = vadd.xlane.f32.xlu0 %v3771
    %v3773 = vpop.xlane.xlu0 %3772
    %v3774 = vsel %vm3691, %v3766, 0.0
    %3775 = vadd.xlane.f32.xlu0 %v3774
    %v3776 = vpop.xlane.xlu0 %3775
    %v3777 = vsel %vm3691, %v3768, 0.0
    %3778 = vadd.xlane.f32.xlu0 %v3777
    %v3779 = vpop.xlane.xlu0 %3778
    %v3780 = vsel %vm3691, %v3770, 0.0
    %3781 = vadd.xlane.f32.xlu0 %v3780
    %v3782 = vpop.xlane.xlu0 %3781
    %v3783 = vrcp.pop %v3773
    %v3784 = vrcp.pop %v3776
    %v3785 = vrcp.pop %v3779
    %v3786 = vrcp.pop %v3782
    %v3787 = vmul.f32 %v3764, %v3783
    %v3788 = vmul.f32 %v3766, %v3784
    %v3789 = vmul.f32 %v3768, %v3785
    %v3790 = vmul.f32 %v3770, %v3786
    %v3791 = vmul.f32 %v3787, %v3632
    %v3792 = vmul.f32 %v3788, %v3635
    %v3793 = vmul.f32 %v3789, %v3640
    %v3794 = vmul.f32 %v3790, %v3643
    %v3795 = vpack.c.bf16 %v3792, %v3791
    %v3796 = vpack.c.bf16 %v3794, %v3793
    %v3797 = vld [vmem:[%s9] sm:$0xff]
    %v3798 = vld [vmem:[%s9 + $0x8] sm:$0xff]
    %v3799 = vld [vmem:[%s9 + $0x10] sm:$0xff]
    %v3800 = vld [vmem:[%s9 + $0x18] sm:$0xff]
    %v3801 = vld [vmem:[%s9 + $0x20] sm:$0xff]
    %v3802 = vld [vmem:[%s9 + $0x28] sm:$0xff]
    %v3803 = vld [vmem:[%s9 + $0x30] sm:$0xff]
    %v3804 = vld [vmem:[%s9 + $0x38] sm:$0xff]
    %v3805 = vld [vmem:[%s11] sm:$0x3]
    %v3807 = vlaneseq
    %v3808 = vshrl.u32 %v3807, 7
    %v3809 = vsub.s32 0, %v3808
    %v3810 = vrot.slane %v3805, %v3809
    %v3811 = vlaneseq
    %v3812 = vshrl.u32 %v3811, 7
    %v3813 = vsub.s32 1, %v3812
    %v3814 = vrot.slane %v3805, %v3813
    %v3825 = vunpack.c.l.b16 %v3797
    %v3826 = vunpack.c.h.b16 %v3797
    %v3827 = vunpack.c.l.b16 %v3798
    %v3828 = vunpack.c.h.b16 %v3798
    %v3829 = vunpack.c.l.b16 %v3799
    %v3830 = vunpack.c.h.b16 %v3799
    %v3831 = vunpack.c.l.b16 %v3800
    %v3832 = vunpack.c.h.b16 %v3800
    %v3833 = vunpack.c.l.b16 %v3801
    %v3834 = vunpack.c.h.b16 %v3801
    %v3835 = vunpack.c.l.b16 %v3802
    %v3836 = vunpack.c.h.b16 %v3802
    %v3837 = vunpack.c.l.b16 %v3803
    %v3838 = vunpack.c.h.b16 %v3803
    %v3839 = vunpack.c.l.b16 %v3804
    %v3840 = vunpack.c.h.b16 %v3804
    %v3841 = vpack.c.b16 %v3827, %v3825
    %v3842 = vpack.c.b16 %v3828, %v3826
    %v3843 = vpack.c.b16 %v3831, %v3829
    %v3844 = vpack.c.b16 %v3832, %v3830
    %v3845 = vpack.c.b16 %v3835, %v3833
    %v3846 = vpack.c.b16 %v3836, %v3834
    %v3847 = vpack.c.b16 %v3839, %v3837
    %v3848 = vpack.c.b16 %v3840, %v3838
    %v3858 = vsel %vm3691, %v3795, 0
    %v3861 = vsel %vm3691, %v3796, 0
    %3863 = vmatprep.subr.bf16.mxu0 %v3842
    %3864 = vmatpush1.bf16.msra.mxu0 %v3841
    %3865 = vmatprep.subr.bf16.mxu0 %v3844
    %3866 = vmatpush1.bf16.msra.mxu0 %v3843
    %3867 = vmatprep.subr.bf16.mxu0 %v3846
    %3868 = vmatpush1.bf16.msra.mxu0 %v3845
    %3869 = vmatprep.subr.bf16.mxu0 %v3848
    %3870 = vmatpush1.bf16.msra.mxu0 %v3847
    %3871 = vmatprep.subr.bf16.mxu0 0
    %3872 = vmatpush1.bf16.msra.mxu0 0
    %3873 = vmatprep.subr.bf16.mxu0 0
    %3874 = vmatpush1.bf16.msra.mxu0 0
    %3875 = vmatprep.subr.bf16.mxu0 0
    %3876 = vmatpush1.bf16.msra.mxu0 0
    %3877 = vmatprep.subr.bf16.mxu0 0
    %3878 = vmatpush1.bf16.msra.mxu0 0
    %3879 = vmatprep.subr.bf16.mxu0 0
    %3880 = vmatpush1.bf16.msra.mxu0 0
    %3881 = vmatprep.subr.bf16.mxu0 0
    %3882 = vmatpush1.bf16.msra.mxu0 0
    %3883 = vmatprep.subr.bf16.mxu0 0
    %3884 = vmatpush1.bf16.msra.mxu0 0
    %3885 = vmatprep.subr.bf16.mxu0 0
    %3886 = vmatpush1.bf16.msra.mxu0 0
    %3887 = vmatprep.subr.bf16.mxu0 0
    %3888 = vmatpush1.bf16.msra.mxu0 0
    %3889 = vmatprep.subr.bf16.mxu0 0
    %3890 = vmatpush1.bf16.msra.mxu0 0
    %3891 = vmatprep.subr.bf16.mxu0 0
    %3892 = vmatpush1.bf16.msra.mxu0 0
    %3893 = vmatprep.subr.bf16.mxu0 0
    %3894 = vmatpush1.bf16.msra.mxu0 0
    %3895 = vmatprep.mubr.bf16.mxu0 0
    %3896 = vmatmul.mubr.bf16.gmra.mrb[0].mxu0 %v3858
    %v3897 = vpop.f32.mrb[0].mxu0
    %v3898 = vadd.f32 %v3810, %v3897
    %v3899 = vpop.f32.mrb[0].mxu0
    %v3900 = vadd.f32 %v3814, %v3899
    %v3901 = vpop.f32.mrb[0].mxu0
    %v3902 = vadd.f32 %v3810, %v3901
    %v3903 = vpop.f32.mrb[0].mxu0
    %v3904 = vadd.f32 %v3814, %v3903
    %3905 = vmatprep.mubr.bf16.mxu0 0
    %3906 = vmatmul.mubr.bf16.gmra.mrb[0].mxu0 %v3861
    %v3907 = vpop.f32.mrb[0].mxu0
    %v3908 = vadd.f32 %v3810, %v3907
    %v3909 = vpop.f32.mrb[0].mxu0
    %v3910 = vadd.f32 %v3814, %v3909
    %v3911 = vpop.f32.mrb[0].mxu0
    %v3912 = vadd.f32 %v3810, %v3911
    %v3913 = vpop.f32.mrb[0].mxu0
    %v3914 = vadd.f32 %v3814, %v3913
    %3915 = vdwg.mxu0
    %3916 = vst [vmem:[#allocation3] sm:$0xff] %v3898
    %3917 = vst [vmem:[#allocation3 + $0x8] sm:$0xff] %v3900
    %3918 = vst [vmem:[#allocation3 + $0x10] sm:$0xff] %v3902
    %3919 = vst [vmem:[#allocation3 + $0x18] sm:$0xff] %v3904
    %3920 = vst [vmem:[#allocation3 + $0x20] sm:$0xff] %v3908
    %3921 = vst [vmem:[#allocation3 + $0x28] sm:$0xff] %v3910
    %3922 = vst [vmem:[#allocation3 + $0x30] sm:$0xff] %v3912
    %3923 = vst [vmem:[#allocation3 + $0x38] sm:$0xff] %v3914
    %v3924 = vlaneseq
    %v3925 = vand.u32 %v3924, 127
    %v3926 = vadd.s32 %v3925, 128
    %vm3927 = vcmp.ge.s32.totalorder %v3925, 128
    %vm3928 = vcmp.ge.s32.totalorder %v3926, 128
    %vm3929 = vcmp.lt.s32.totalorder %v3925, 192
    %vm3930 = vcmp.lt.s32.totalorder %v3926, 192
    %vm3931 = vmand %vm3927, %vm3929
    %vm3932 = vmand %vm3928, %vm3930
    %v3933 = vld [vmem:[%s3] sm:$0xff]
    %v3934 = vld [vmem:[%s3 + $0x8] sm:$0xff]
    %v3935 = vld [vmem:[%s3 + $0x10] sm:$0xff]
    %v3936 = vld [vmem:[%s3 + $0x18] sm:$0xff]
    %v3937 = vld [vmem:[%s3 + $0x20] sm:$0xff]
    %v3938 = vld [vmem:[%s3 + $0x28] sm:$0xff]
    %v3939 = vld [vmem:[%s3 + $0x30] sm:$0xff]
    %v3940 = vld [vmem:[%s3 + $0x38] sm:$0xff]
    %v3941 = vld [vmem:[%s10] sm:$0xff]
    %v3942 = vld [vmem:[%s10 + $0x8] sm:$0xff]
    %v3943 = vld [vmem:[%s10 + $0x10] sm:$0xff]
    %v3944 = vld [vmem:[%s10 + $0x18] sm:$0xff]
    %v3945 = vld [vmem:[%s10 + $0x20] sm:$0xff]
    %v3946 = vld [vmem:[%s10 + $0x28] sm:$0xff]
    %v3947 = vld [vmem:[%s10 + $0x30] sm:$0xff]
    %v3948 = vld [vmem:[%s10 + $0x38] sm:$0xff]
    %v3949 = vld [vmem:[#allocation2] sm:$0x3]
    %v3950 = vld [vmem:[#allocation2 + $0x8] sm:$0x3]
    %v3959 = vunpack.c.l.b16 %v3933
    %v3960 = vunpack.c.h.b16 %v3933
    %v3961 = vunpack.c.l.b16 %v3934
    %v3962 = vunpack.c.h.b16 %v3934
    %v3963 = vunpack.c.l.b16 %v3935
    %v3964 = vunpack.c.h.b16 %v3935
    %v3965 = vunpack.c.l.b16 %v3936
    %v3966 = vunpack.c.h.b16 %v3936
    %v3967 = vunpack.c.l.b16 %v3937
    %v3968 = vunpack.c.h.b16 %v3937
    %v3969 = vunpack.c.l.b16 %v3938
    %v3970 = vunpack.c.h.b16 %v3938
    %v3971 = vunpack.c.l.b16 %v3939
    %v3972 = vunpack.c.h.b16 %v3939
    %v3973 = vunpack.c.l.b16 %v3940
    %v3974 = vunpack.c.h.b16 %v3940
    %v3975 = vpack.c.b16 %v3961, %v3959
    %v3976 = vpack.c.b16 %v3962, %v3960
    %v3977 = vpack.c.b16 %v3965, %v3963
    %v3978 = vpack.c.b16 %v3966, %v3964
    %v3979 = vpack.c.b16 %v3969, %v3967
    %v3980 = vpack.c.b16 %v3970, %v3968
    %v3981 = vpack.c.b16 %v3973, %v3971
    %v3982 = vpack.c.b16 %v3974, %v3972
    %v3992 = vsel %vm3691, 0, 0
    %3994 = vmatprep.subr.bf16.mxu0 %v3976
    %3995 = vmatpush1.bf16.msra.mxu0 %v3975
    %3996 = vmatprep.subr.bf16.mxu0 %v3978
    %3997 = vmatpush1.bf16.msra.mxu0 %v3977
    %3998 = vmatprep.subr.bf16.mxu0 %v3980
    %3999 = vmatpush1.bf16.msra.mxu0 %v3979
    %4000 = vmatprep.subr.bf16.mxu0 %v3982
    %4001 = vmatpush1.bf16.msra.mxu0 %v3981
    %4002 = vmatprep.subr.bf16.mxu0 0
    %4003 = vmatpush1.bf16.msra.mxu0 0
    %4004 = vmatprep.subr.bf16.mxu0 0
    %4005 = vmatpush1.bf16.msra.mxu0 0
    %4006 = vmatprep.subr.bf16.mxu0 0
    %4007 = vmatpush1.bf16.msra.mxu0 0
    %4008 = vmatprep.subr.bf16.mxu0 0
    %4009 = vmatpush1.bf16.msra.mxu0 0
    %4010 = vmatprep.subr.bf16.mxu0 0
    %4011 = vmatpush1.bf16.msra.mxu0 0
    %4012 = vmatprep.subr.bf16.mxu0 0
    %4013 = vmatpush1.bf16.msra.mxu0 0
    %4014 = vmatprep.subr.bf16.mxu0 0
    %4015 = vmatpush1.bf16.msra.mxu0 0
    %4016 = vmatprep.subr.bf16.mxu0 0
    %4017 = vmatpush1.bf16.msra.mxu0 0
    %4018 = vmatprep.subr.bf16.mxu0 0
    %4019 = vmatpush1.bf16.msra.mxu0 0
    %4020 = vmatprep.subr.bf16.mxu0 0
    %4021 = vmatpush1.bf16.msra.mxu0 0
    %4022 = vmatprep.subr.bf16.mxu0 0
    %4023 = vmatpush1.bf16.msra.mxu0 0
    %4024 = vmatprep.subr.bf16.mxu0 0
    %4025 = vmatpush1.bf16.msra.mxu0 0
    %4026 = vmatprep.mubr.bf16.mxu0 0
    %4027 = vmatmul.mubr.bf16.gmra.mrb[0].mxu0 %v3992
    %v4028 = vpop.f32.mrb[0].mxu0
    %v4029 = vadd.f32 0.0, %v4028
    %v4030 = vpop.f32.mrb[0].mxu0
    %v4031 = vadd.f32 0.0, %v4030
    %v4032 = vpop.f32.mrb[0].mxu0
    %v4033 = vpop.f32.mrb[0].mxu0
    %4034 = vdwg.mxu0
    %v4035 = vadd.f32 %v3949, %v4029
    %v4036 = vadd.f32 %v3950, %v4031
    %v4037 = vtanh.pop %v4035
    %v4038 = vtanh.pop %v4036
    %v4039 = vxor.u32 %v4035, 2147483648
    %v4040 = vxor.u32 %v4036, 2147483648
    %v4041 = vmul.f32 %v4039, 1.442695
    %v4042 = vpow.pop %v4041
    %v4043 = vmul.f32 %v4040, 1.442695
    %v4044 = vpow.pop %v4043
    %v4045 = vadd.f32 %v4042, 1.0
    %v4046 = vadd.f32 %v4044, 1.0
    %v4047 = vrcp.pop %v4045
    %v4048 = vmul.f32 1.0, %v4047
    %v4049 = vrcp.pop %v4046
    %v4050 = vmul.f32 1.0, %v4049
    %v4051 = vsel %vm3931, %v4037, %v4048
    %v4052 = vsel %vm3932, %v4038, %v4050
    %v4053 = vmul.f32 %v4051, 0.0
    %v4054 = vmul.f32 %v4051, %v4052
    %4056 = vrot.lane.b32.xlu0 %v4054, 64
    %v4057 = vpop.permute.xlu0 %4056
    %v4059 = vadd.f32 %v4053, %v4057
    %v4060 = vtanh.pop %v4059
    %v4061 = vmul.f32 %v4052, %v4060
    %vm4062 = vcmp.eq.s32.totalorder %v50, 0
    %v4063 = vsel %vm4062, 1, 0
    %4064 = vset.pattern.permute.xlu0 0
    %4065 = vperm.xlu0 %4064, %v4063
    %v4066 = vpop.permute.xlu0 %4065
    %vm4067 = vcmp.eq.s32.totalorder %v4066, 1
    %v4068 = vsel %vm4067, %v4061, 0.0
    %v4069 = vld [vmem:[#allocation2] sm:$0xc]
    %v4070 = vld [vmem:[#allocation2 + $0x8] sm:$0xc]
    %v4071 = vpack.c.bf16 %v4061, %v4061
    %4073 = vrot.lane.b32.xlu0 %v4071, 64
    %v4074 = vpop.permute.xlu0 %4073
    %v4076 = vsel %vm3691, %v4074, 0
    %4078 = vmatprep.subr.bf16.mxu0 %v3976
    %4079 = vmatpush1.bf16.msra.mxu0 %v3975
    %4080 = vmatprep.subr.bf16.mxu0 %v3978
    %4081 = vmatpush1.bf16.msra.mxu0 %v3977
    %4082 = vmatprep.subr.bf16.mxu0 %v3980
    %4083 = vmatpush1.bf16.msra.mxu0 %v3979
    %4084 = vmatprep.subr.bf16.mxu0 %v3982
    %4085 = vmatpush1.bf16.msra.mxu0 %v3981
    %4086 = vmatprep.subr.bf16.mxu0 0
    %4087 = vmatpush1.bf16.msra.mxu0 0
    %4088 = vmatprep.subr.bf16.mxu0 0
    %4089 = vmatpush1.bf16.msra.mxu0 0
    %4090 = vmatprep.subr.bf16.mxu0 0
    %4091 = vmatpush1.bf16.msra.mxu0 0
    %4092 = vmatprep.subr.bf16.mxu0 0
    %4093 = vmatpush1.bf16.msra.mxu0 0
    %4094 = vmatprep.subr.bf16.mxu0 0
    %4095 = vmatpush1.bf16.msra.mxu0 0
    %4096 = vmatprep.subr.bf16.mxu0 0
    %4097 = vmatpush1.bf16.msra.mxu0 0
    %4098 = vmatprep.subr.bf16.mxu0 0
    %4099 = vmatpush1.bf16.msra.mxu0 0
    %4100 = vmatprep.subr.bf16.mxu0 0
    %4101 = vmatpush1.bf16.msra.mxu0 0
    %4102 = vmatprep.subr.bf16.mxu0 0
    %4103 = vmatpush1.bf16.msra.mxu0 0
    %4104 = vmatprep.subr.bf16.mxu0 0
    %4105 = vmatpush1.bf16.msra.mxu0 0
    %4106 = vmatprep.subr.bf16.mxu0 0
    %4107 = vmatpush1.bf16.msra.mxu0 0
    %4108 = vmatprep.subr.bf16.mxu0 0
    %4109 = vmatpush1.bf16.msra.mxu0 0
    %4110 = vmatprep.mubr.bf16.mxu0 0
    %4111 = vmatmul.mubr.bf16.gmra.mrb[0].mxu0 %v4076
    %v4112 = vpop.f32.mrb[0].mxu0
    %v4113 = vadd.f32 0.0, %v4112
    %v4114 = vpop.f32.mrb[0].mxu0
    %v4115 = vadd.f32 0.0, %v4114
    %v4116 = vpop.f32.mrb[0].mxu0
    %v4117 = vpop.f32.mrb[0].mxu0
    %4118 = vdwg.mxu0
    %v4121 = vrot.slane %v4113, 6
    %v4122 = vrot.slane %v4115, 6
    %v4125 = vadd.f32 %v4069, %v4121
    %v4126 = vadd.f32 %v4070, %v4122
    %v4127 = vtanh.pop %v4125
    %v4128 = vtanh.pop %v4126
    %v4129 = vxor.u32 %v4125, 2147483648
    %v4130 = vxor.u32 %v4126, 2147483648
    %v4131 = vmul.f32 %v4129, 1.442695
    %v4132 = vpow.pop %v4131
    %v4133 = vmul.f32 %v4130, 1.442695
    %v4134 = vpow.pop %v4133
    %v4135 = vadd.f32 %v4132, 1.0
    %v4136 = vadd.f32 %v4134, 1.0
    %v4137 = vrcp.pop %v4135
    %v4138 = vmul.f32 1.0, %v4137
    %v4139 = vrcp.pop %v4136
    %v4140 = vmul.f32 1.0, %v4139
    %v4141 = vsel %vm3931, %v4127, %v4138
    %v4142 = vsel %vm3932, %v4128, %v4140
    %v4144 = vrot.slane %v4059, 6
    %v4146 = vmul.f32 %v4141, %v4144
    %v4147 = vmul.f32 %v4141, %v4142
    %4149 = vrot.lane.b32.xlu0 %v4147, 64
    %v4150 = vpop.permute.xlu0 %4149
    %v4152 = vadd.f32 %v4146, %v4150
    %v4153 = vtanh.pop %v4152
    %v4154 = vmul.f32 %v4142, %v4153
    %vm4155 = vcmp.eq.s32.totalorder %v50, 1
    %v4156 = vsel %vm4155, 1, 0
    %4157 = vset.pattern.permute.xlu0 0
    %4158 = vperm.xlu0 %4157, %v4156
    %v4159 = vpop.permute.xlu0 %4158
    %vm4160 = vcmp.eq.s32.totalorder %v4159, 1
    %v4162 = vrot.slane %v4154, 2
    %4163 = vrot.lane.b32.xlu0 %v4162, 64
    %v4164 = vpop.permute.xlu0 %4163
    %4167 = vrot.lane.b32.xlu0 %v4068, 64
    %v4168 = vpop.permute.xlu0 %4167
    %v4170 = vsel %vm4160, %v4164, %v4168
    %v4171 = vld [vmem:[#allocation2] sm:$0x30]
    %v4172 = vld [vmem:[#allocation2 + $0x8] sm:$0x30]
    %v4173 = vpack.c.bf16 %v4154, %v4154
    %v4175 = vrot.slane %v4173, 1
    %4176 = vrot.lane.b32.xlu0 %v4175, 64
    %v4177 = vpop.permute.xlu0 %4176
    %v4179 = vsel %vm3691, %v4177, 0
    %4181 = vmatprep.subr.bf16.mxu0 %v3976
    %4182 = vmatpush1.bf16.msra.mxu0 %v3975
    %4183 = vmatprep.subr.bf16.mxu0 %v3978
    %4184 = vmatpush1.bf16.msra.mxu0 %v3977
    %4185 = vmatprep.subr.bf16.mxu0 %v3980
    %4186 = vmatpush1.bf16.msra.mxu0 %v3979
    %4187 = vmatprep.subr.bf16.mxu0 %v3982
    %4188 = vmatpush1.bf16.msra.mxu0 %v3981
    %4189 = vmatprep.subr.bf16.mxu0 0
    %4190 = vmatpush1.bf16.msra.mxu0 0
    %4191 = vmatprep.subr.bf16.mxu0 0
    %4192 = vmatpush1.bf16.msra.mxu0 0
    %4193 = vmatprep.subr.bf16.mxu0 0
    %4194 = vmatpush1.bf16.msra.mxu0 0
    %4195 = vmatprep.subr.bf16.mxu0 0
    %4196 = vmatpush1.bf16.msra.mxu0 0
    %4197 = vmatprep.subr.bf16.mxu0 0
    %4198 = vmatpush1.bf16.msra.mxu0 0
    %4199 = vmatprep.subr.bf16.mxu0 0
    %4200 = vmatpush1.bf16.msra.mxu0 0
    %4201 = vmatprep.subr.bf16.mxu0 0
    %4202 = vmatpush1.bf16.msra.mxu0 0
    %4203 = vmatprep.subr.bf16.mxu0 0
    %4204 = vmatpush1.bf16.msra.mxu0 0
    %4205 = vmatprep.subr.bf16.mxu0 0
    %4206 = vmatpush1.bf16.msra.mxu0 0
    %4207 = vmatprep.subr.bf16.mxu0 0
    %4208 = vmatpush1.bf16.msra.mxu0 0
    %4209 = vmatprep.subr.bf16.mxu0 0
    %4210 = vmatpush1.bf16.msra.mxu0 0
    %4211 = vmatprep.subr.bf16.mxu0 0
    %4212 = vmatpush1.bf16.msra.mxu0 0
    %4213 = vmatprep.mubr.bf16.mxu0 0
    %4214 = vmatmul.mubr.bf16.gmra.mrb[0].mxu0 %v4179
    %v4215 = vpop.f32.mrb[0].mxu0
    %v4216 = vadd.f32 0.0, %v4215
    %v4217 = vpop.f32.mrb[0].mxu0
    %v4218 = vadd.f32 0.0, %v4217
    %v4219 = vpop.f32.mrb[0].mxu0
    %v4220 = vpop.f32.mrb[0].mxu0
    %4221 = vdwg.mxu0
    %v4224 = vrot.slane %v4216, 4
    %v4225 = vrot.slane %v4218, 4
    %v4228 = vadd.f32 %v4171, %v4224
    %v4229 = vadd.f32 %v4172, %v4225
    %v4230 = vtanh.pop %v4228
    %v4231 = vtanh.pop %v4229
    %v4232 = vxor.u32 %v4228, 2147483648
    %v4233 = vxor.u32 %v4229, 2147483648
    %v4234 = vmul.f32 %v4232, 1.442695
    %v4235 = vpow.pop %v4234
    %v4236 = vmul.f32 %v4233, 1.442695
    %v4237 = vpow.pop %v4236
    %v4238 = vadd.f32 %v4235, 1.0
    %v4239 = vadd.f32 %v4237, 1.0
    %v4240 = vrcp.pop %v4238
    %v4241 = vmul.f32 1.0, %v4240
    %v4242 = vrcp.pop %v4239
    %v4243 = vmul.f32 1.0, %v4242
    %v4244 = vsel %vm3931, %v4230, %v4241
    %v4245 = vsel %vm3932, %v4231, %v4243
    %v4247 = vrot.slane %v4152, 6
    %v4249 = vmul.f32 %v4244, %v4247
    %v4250 = vmul.f32 %v4244, %v4245
    %4252 = vrot.lane.b32.xlu0 %v4250, 64
    %v4253 = vpop.permute.xlu0 %4252
    %v4255 = vadd.f32 %v4249, %v4253
    %v4256 = vtanh.pop %v4255
    %v4257 = vmul.f32 %v4245, %v4256
    %vm4258 = vcmp.eq.s32.totalorder %v50, 2
    %v4259 = vsel %vm4258, 1, 0
    %4260 = vset.pattern.permute.xlu0 0
    %4261 = vperm.xlu0 %4260, %v4259
    %v4262 = vpop.permute.xlu0 %4261
    %vm4263 = vcmp.eq.s32.totalorder %v4262, 1
    %v4265 = vrot.slane %v4257, 4
    %4266 = vrot.lane.b32.xlu0 %v4265, 64
    %v4267 = vpop.permute.xlu0 %4266
    %v4269 = vsel %vm4263, %v4267, %v4170
    %v4270 = vld [vmem:[#allocation2] sm:$0xc0]
    %v4271 = vld [vmem:[#allocation2 + $0x8] sm:$0xc0]
    %v4272 = vpack.c.bf16 %v4257, %v4257
    %v4274 = vrot.slane %v4272, 2
    %4275 = vrot.lane.b32.xlu0 %v4274, 64
    %v4276 = vpop.permute.xlu0 %4275
    %v4278 = vsel %vm3691, %v4276, 0
    %4280 = vmatprep.subr.bf16.mxu0 %v3976
    %4281 = vmatpush1.bf16.msra.mxu0 %v3975
    %4282 = vmatprep.subr.bf16.mxu0 %v3978
    %4283 = vmatpush1.bf16.msra.mxu0 %v3977
    %4284 = vmatprep.subr.bf16.mxu0 %v3980
    %4285 = vmatpush1.bf16.msra.mxu0 %v3979
    %4286 = vmatprep.subr.bf16.mxu0 %v3982
    %4287 = vmatpush1.bf16.msra.mxu0 %v3981
    %4288 = vmatprep.subr.bf16.mxu0 0
    %4289 = vmatpush1.bf16.msra.mxu0 0
    %4290 = vmatprep.subr.bf16.mxu0 0
    %4291 = vmatpush1.bf16.msra.mxu0 0
    %4292 = vmatprep.subr.bf16.mxu0 0
    %4293 = vmatpush1.bf16.msra.mxu0 0
    %4294 = vmatprep.subr.bf16.mxu0 0
    %4295 = vmatpush1.bf16.msra.mxu0 0
    %4296 = vmatprep.subr.bf16.mxu0 0
    %4297 = vmatpush1.bf16.msra.mxu0 0
    %4298 = vmatprep.subr.bf16.mxu0 0
    %4299 = vmatpush1.bf16.msra.mxu0 0
    %4300 = vmatprep.subr.bf16.mxu0 0
    %4301 = vmatpush1.bf16.msra.mxu0 0
    %4302 = vmatprep.subr.bf16.mxu0 0
    %4303 = vmatpush1.bf16.msra.mxu0 0
    %4304 = vmatprep.subr.bf16.mxu0 0
    %4305 = vmatpush1.bf16.msra.mxu0 0
    %4306 = vmatprep.subr.bf16.mxu0 0
    %4307 = vmatpush1.bf16.msra.mxu0 0
    %4308 = vmatprep.subr.bf16.mxu0 0
    %4309 = vmatpush1.bf16.msra.mxu0 0
    %4310 = vmatprep.subr.bf16.mxu0 0
    %4311 = vmatpush1.bf16.msra.mxu0 0
    %4312 = vmatprep.mubr.bf16.mxu0 0
    %4313 = vmatmul.mubr.bf16.gmra.mrb[0].mxu0 %v4278
    %v4314 = vpop.f32.mrb[0].mxu0
    %v4315 = vadd.f32 0.0, %v4314
    %v4316 = vpop.f32.mrb[0].mxu0
    %v4317 = vadd.f32 0.0, %v4316
    %v4318 = vpop.f32.mrb[0].mxu0
    %v4319 = vpop.f32.mrb[0].mxu0
    %4320 = vdwg.mxu0
    %v4323 = vrot.slane %v4315, 2
    %v4324 = vrot.slane %v4317, 2
    %v4327 = vadd.f32 %v4270, %v4323
    %v4328 = vadd.f32 %v4271, %v4324
    %v4329 = vtanh.pop %v4327
    %v4330 = vtanh.pop %v4328
    %v4331 = vxor.u32 %v4327, 2147483648
    %v4332 = vxor.u32 %v4328, 2147483648
    %v4333 = vmul.f32 %v4331, 1.442695
    %v4334 = vpow.pop %v4333
    %v4335 = vmul.f32 %v4332, 1.442695
    %v4336 = vpow.pop %v4335
    %v4337 = vadd.f32 %v4334, 1.0
    %v4338 = vadd.f32 %v4336, 1.0
    %v4339 = vrcp.pop %v4337
    %v4340 = vmul.f32 1.0, %v4339
    %v4341 = vrcp.pop %v4338
    %v4342 = vmul.f32 1.0, %v4341
    %v4343 = vsel %vm3931, %v4329, %v4340
    %v4344 = vsel %vm3932, %v4330, %v4342
    %v4346 = vrot.slane %v4255, 6
    %v4348 = vmul.f32 %v4343, %v4346
    %v4349 = vmul.f32 %v4343, %v4344
    %4351 = vrot.lane.b32.xlu0 %v4349, 64
    %v4352 = vpop.permute.xlu0 %4351
    %v4354 = vadd.f32 %v4348, %v4352
    %v4355 = vtanh.pop %v4354
    %v4356 = vmul.f32 %v4344, %v4355
    %vm4357 = vcmp.eq.s32.totalorder %v50, 3
    %v4358 = vsel %vm4357, 1, 0
    %4359 = vset.pattern.permute.xlu0 0
    %4360 = vperm.xlu0 %4359, %v4358
    %v4361 = vpop.permute.xlu0 %4360
    %vm4362 = vcmp.eq.s32.totalorder %v4361, 1
    %v4364 = vrot.slane %v4356, 6
    %4365 = vrot.lane.b32.xlu0 %v4364, 64
    %v4366 = vpop.permute.xlu0 %4365
    %v4368 = vsel %vm4362, %v4366, %v4269
    %v4369 = vld [vmem:[#allocation2 + $0x10] sm:$0x3]
    %v4370 = vld [vmem:[#allocation2 + $0x18] sm:$0x3]
    %v4371 = vpack.c.bf16 %v4356, %v4356
    %v4373 = vrot.slane %v4371, 3
    %4374 = vrot.lane.b32.xlu0 %v4373, 64
    %v4375 = vpop.permute.xlu0 %4374
    %v4377 = vsel %vm3691, %v4375, 0
    %4379 = vmatprep.subr.bf16.mxu0 %v3976
    %4380 = vmatpush1.bf16.msra.mxu0 %v3975
    %4381 = vmatprep.subr.bf16.mxu0 %v3978
    %4382 = vmatpush1.bf16.msra.mxu0 %v3977
    %4383 = vmatprep.subr.bf16.mxu0 %v3980
    %4384 = vmatpush1.bf16.msra.mxu0 %v3979
    %4385 = vmatprep.subr.bf16.mxu0 %v3982
    %4386 = vmatpush1.bf16.msra.mxu0 %v3981
    %4387 = vmatprep.subr.bf16.mxu0 0
    %4388 = vmatpush1.bf16.msra.mxu0 0
    %4389 = vmatprep.subr.bf16.mxu0 0
    %4390 = vmatpush1.bf16.msra.mxu0 0
    %4391 = vmatprep.subr.bf16.mxu0 0
    %4392 = vmatpush1.bf16.msra.mxu0 0
    %4393 = vmatprep.subr.bf16.mxu0 0
    %4394 = vmatpush1.bf16.msra.mxu0 0
    %4395 = vmatprep.subr.bf16.mxu0 0
    %4396 = vmatpush1.bf16.msra.mxu0 0
    %4397 = vmatprep.subr.bf16.mxu0 0
    %4398 = vmatpush1.bf16.msra.mxu0 0
    %4399 = vmatprep.subr.bf16.mxu0 0
    %4400 = vmatpush1.bf16.msra.mxu0 0
    %4401 = vmatprep.subr.bf16.mxu0 0
    %4402 = vmatpush1.bf16.msra.mxu0 0
    %4403 = vmatprep.subr.bf16.mxu0 0
    %4404 = vmatpush1.bf16.msra.mxu0 0
    %4405 = vmatprep.subr.bf16.mxu0 0
    %4406 = vmatpush1.bf16.msra.mxu0 0
    %4407 = vmatprep.subr.bf16.mxu0 0
    %4408 = vmatpush1.bf16.msra.mxu0 0
    %4409 = vmatprep.subr.bf16.mxu0 0
    %4410 = vmatpush1.bf16.msra.mxu0 0
    %4411 = vmatprep.mubr.bf16.mxu0 0
    %4412 = vmatmul.mubr.bf16.gmra.mrb[0].mxu0 %v4377
    %v4413 = vpop.f32.mrb[0].mxu0
    %v4414 = vadd.f32 0.0, %v4413
    %v4415 = vpop.f32.mrb[0].mxu0
    %v4416 = vadd.f32 0.0, %v4415
    %v4417 = vpop.f32.mrb[0].mxu0
    %v4418 = vpop.f32.mrb[0].mxu0
    %4419 = vdwg.mxu0
    %v4420 = vadd.f32 %v4369, %v4414
    %v4421 = vadd.f32 %v4370, %v4416
    %v4422 = vtanh.pop %v4420
    %v4423 = vtanh.pop %v4421
    %v4424 = vxor.u32 %v4420, 2147483648
    %v4425 = vxor.u32 %v4421, 2147483648
    %v4426 = vmul.f32 %v4424, 1.442695
    %v4427 = vpow.pop %v4426
    %v4428 = vmul.f32 %v4425, 1.442695
    %v4429 = vpow.pop %v4428
    %v4430 = vadd.f32 %v4427, 1.0
    %v4431 = vadd.f32 %v4429, 1.0
    %v4432 = vrcp.pop %v4430
    %v4433 = vmul.f32 1.0, %v4432
    %v4434 = vrcp.pop %v4431
    %v4435 = vmul.f32 1.0, %v4434
    %v4436 = vsel %vm3931, %v4422, %v4433
    %v4437 = vsel %vm3932, %v4423, %v4435
    %v4439 = vrot.slane %v4354, 6
    %v4441 = vmul.f32 %v4436, %v4439
    %v4442 = vmul.f32 %v4436, %v4437
    %4444 = vrot.lane.b32.xlu0 %v4442, 64
    %v4445 = vpop.permute.xlu0 %4444
    %v4447 = vadd.f32 %v4441, %v4445
    %v4448 = vtanh.pop %v4447
    %v4449 = vmul.f32 %v4437, %v4448
    %vm4450 = vcmp.eq.s32.totalorder %v50, 4
    %v4451 = vsel %vm4450, 1, 0
    %4452 = vset.pattern.permute.xlu0 0
    %4453 = vperm.xlu0 %4452, %v4451
    %v4454 = vpop.permute.xlu0 %4453
    %vm4455 = vcmp.eq.s32.totalorder %v4454, 1
    %4457 = vrot.lane.b32.xlu0 %v4368, 64
    %v4458 = vpop.permute.xlu0 %4457
    %v4460 = vsel %vm4455, %v4449, %v4458
    %v4461 = vld [vmem:[#allocation2 + $0x10] sm:$0xc]
    %v4462 = vld [vmem:[#allocation2 + $0x18] sm:$0xc]
    %v4463 = vpack.c.bf16 %v4449, %v4449
    %4465 = vrot.lane.b32.xlu0 %v4463, 64
    %v4466 = vpop.permute.xlu0 %4465
    %v4468 = vsel %vm3691, %v4466, 0
    %4470 = vmatprep.subr.bf16.mxu0 %v3976
    %4471 = vmatpush1.bf16.msra.mxu0 %v3975
    %4472 = vmatprep.subr.bf16.mxu0 %v3978
    %4473 = vmatpush1.bf16.msra.mxu0 %v3977
    %4474 = vmatprep.subr.bf16.mxu0 %v3980
    %4475 = vmatpush1.bf16.msra.mxu0 %v3979
    %4476 = vmatprep.subr.bf16.mxu0 %v3982
    %4477 = vmatpush1.bf16.msra.mxu0 %v3981
    %4478 = vmatprep.subr.bf16.mxu0 0
    %4479 = vmatpush1.bf16.msra.mxu0 0
    %4480 = vmatprep.subr.bf16.mxu0 0
    %4481 = vmatpush1.bf16.msra.mxu0 0
    %4482 = vmatprep.subr.bf16.mxu0 0
    %4483 = vmatpush1.bf16.msra.mxu0 0
    %4484 = vmatprep.subr.bf16.mxu0 0
    %4485 = vmatpush1.bf16.msra.mxu0 0
    %4486 = vmatprep.subr.bf16.mxu0 0
    %4487 = vmatpush1.bf16.msra.mxu0 0
    %4488 = vmatprep.subr.bf16.mxu0 0
    %4489 = vmatpush1.bf16.msra.mxu0 0
    %4490 = vmatprep.subr.bf16.mxu0 0
    %4491 = vmatpush1.bf16.msra.mxu0 0
    %4492 = vmatprep.subr.bf16.mxu0 0
    %4493 = vmatpush1.bf16.msra.mxu0 0
    %4494 = vmatprep.subr.bf16.mxu0 0
    %4495 = vmatpush1.bf16.msra.mxu0 0
    %4496 = vmatprep.subr.bf16.mxu0 0
    %4497 = vmatpush1.bf16.msra.mxu0 0
    %4498 = vmatprep.subr.bf16.mxu0 0
    %4499 = vmatpush1.bf16.msra.mxu0 0
    %4500 = vmatprep.subr.bf16.mxu0 0
    %4501 = vmatpush1.bf16.msra.mxu0 0
    %4502 = vmatprep.mubr.bf16.mxu0 0
    %4503 = vmatmul.mubr.bf16.gmra.mrb[0].mxu0 %v4468
    %v4504 = vpop.f32.mrb[0].mxu0
    %v4505 = vadd.f32 0.0, %v4504
    %v4506 = vpop.f32.mrb[0].mxu0
    %v4507 = vadd.f32 0.0, %v4506
    %v4508 = vpop.f32.mrb[0].mxu0
    %v4509 = vpop.f32.mrb[0].mxu0
    %4510 = vdwg.mxu0
    %v4513 = vrot.slane %v4505, 6
    %v4514 = vrot.slane %v4507, 6
    %v4517 = vadd.f32 %v4461, %v4513
    %v4518 = vadd.f32 %v4462, %v4514
    %v4519 = vtanh.pop %v4517
    %v4520 = vtanh.pop %v4518
    %v4521 = vxor.u32 %v4517, 2147483648
    %v4522 = vxor.u32 %v4518, 2147483648
    %v4523 = vmul.f32 %v4521, 1.442695
    %v4524 = vpow.pop %v4523
    %v4525 = vmul.f32 %v4522, 1.442695
    %v4526 = vpow.pop %v4525
    %v4527 = vadd.f32 %v4524, 1.0
    %v4528 = vadd.f32 %v4526, 1.0
    %v4529 = vrcp.pop %v4527
    %v4530 = vmul.f32 1.0, %v4529
    %v4531 = vrcp.pop %v4528
    %v4532 = vmul.f32 1.0, %v4531
    %v4533 = vsel %vm3931, %v4519, %v4530
    %v4534 = vsel %vm3932, %v4520, %v4532
    %v4536 = vrot.slane %v4447, 6
    %v4538 = vmul.f32 %v4533, %v4536
    %v4539 = vmul.f32 %v4533, %v4534
    %4541 = vrot.lane.b32.xlu0 %v4539, 64
    %v4542 = vpop.permute.xlu0 %4541
    %v4544 = vadd.f32 %v4538, %v4542
    %v4545 = vtanh.pop %v4544
    %v4546 = vmul.f32 %v4534, %v4545
    %vm4547 = vcmp.eq.s32.totalorder %v50, 5
    %v4548 = vsel %vm4547, 1, 0
    %4549 = vset.pattern.permute.xlu0 0
    %4550 = vperm.xlu0 %4549, %v4548
    %v4551 = vpop.permute.xlu0 %4550
    %vm4552 = vcmp.eq.s32.totalorder %v4551, 1
    %v4554 = vrot.slane %v4546, 2
    %4555 = vrot.lane.b32.xlu0 %v4554, 64
    %v4556 = vpop.permute.xlu0 %4555
    %4559 = vrot.lane.b32.xlu0 %v4460, 64
    %v4560 = vpop.permute.xlu0 %4559
    %v4562 = vsel %vm4552, %v4556, %v4560
    %v4563 = vld [vmem:[#allocation2 + $0x10] sm:$0x30]
    %v4564 = vld [vmem:[#allocation2 + $0x18] sm:$0x30]
    %v4565 = vpack.c.bf16 %v4546, %v4546
    %v4567 = vrot.slane %v4565, 1
    %4568 = vrot.lane.b32.xlu0 %v4567, 64
    %v4569 = vpop.permute.xlu0 %4568
    %v4571 = vsel %vm3691, %v4569, 0
    %4573 = vmatprep.subr.bf16.mxu0 %v3976
    %4574 = vmatpush1.bf16.msra.mxu0 %v3975
    %4575 = vmatprep.subr.bf16.mxu0 %v3978
    %4576 = vmatpush1.bf16.msra.mxu0 %v3977
    %4577 = vmatprep.subr.bf16.mxu0 %v3980
    %4578 = vmatpush1.bf16.msra.mxu0 %v3979
    %4579 = vmatprep.subr.bf16.mxu0 %v3982
    %4580 = vmatpush1.bf16.msra.mxu0 %v3981
    %4581 = vmatprep.subr.bf16.mxu0 0
    %4582 = vmatpush1.bf16.msra.mxu0 0
    %4583 = vmatprep.subr.bf16.mxu0 0
    %4584 = vmatpush1.bf16.msra.mxu0 0
    %4585 = vmatprep.subr.bf16.mxu0 0
    %4586 = vmatpush1.bf16.msra.mxu0 0
    %4587 = vmatprep.subr.bf16.mxu0 0
    %4588 = vmatpush1.bf16.msra.mxu0 0
    %4589 = vmatprep.subr.bf16.mxu0 0
    %4590 = vmatpush1.bf16.msra.mxu0 0
    %4591 = vmatprep.subr.bf16.mxu0 0
    %4592 = vmatpush1.bf16.msra.mxu0 0
    %4593 = vmatprep.subr.bf16.mxu0 0
    %4594 = vmatpush1.bf16.msra.mxu0 0
    %4595 = vmatprep.subr.bf16.mxu0 0
    %4596 = vmatpush1.bf16.msra.mxu0 0
    %4597 = vmatprep.subr.bf16.mxu0 0
    %4598 = vmatpush1.bf16.msra.mxu0 0
    %4599 = vmatprep.subr.bf16.mxu0 0
    %4600 = vmatpush1.bf16.msra.mxu0 0
    %4601 = vmatprep.subr.bf16.mxu0 0
    %4602 = vmatpush1.bf16.msra.mxu0 0
    %4603 = vmatprep.subr.bf16.mxu0 0
    %4604 = vmatpush1.bf16.msra.mxu0 0
    %4605 = vmatprep.mubr.bf16.mxu0 0
    %4606 = vmatmul.mubr.bf16.gmra.mrb[0].mxu0 %v4571
    %v4607 = vpop.f32.mrb[0].mxu0
    %v4608 = vadd.f32 0.0, %v4607
    %v4609 = vpop.f32.mrb[0].mxu0
    %v4610 = vadd.f32 0.0, %v4609
    %v4611 = vpop.f32.mrb[0].mxu0
    %v4612 = vpop.f32.mrb[0].mxu0
    %4613 = vdwg.mxu0
    %v4616 = vrot.slane %v4608, 4
    %v4617 = vrot.slane %v4610, 4
    %v4620 = vadd.f32 %v4563, %v4616
    %v4621 = vadd.f32 %v4564, %v4617
    %v4622 = vtanh.pop %v4620
    %v4623 = vtanh.pop %v4621
    %v4624 = vxor.u32 %v4620, 2147483648
    %v4625 = vxor.u32 %v4621, 2147483648
    %v4626 = vmul.f32 %v4624, 1.442695
    %v4627 = vpow.pop %v4626
    %v4628 = vmul.f32 %v4625, 1.442695
    %v4629 = vpow.pop %v4628
    %v4630 = vadd.f32 %v4627, 1.0
    %v4631 = vadd.f32 %v4629, 1.0
    %v4632 = vrcp.pop %v4630
    %v4633 = vmul.f32 1.0, %v4632
    %v4634 = vrcp.pop %v4631
    %v4635 = vmul.f32 1.0, %v4634
    %v4636 = vsel %vm3931, %v4622, %v4633
    %v4637 = vsel %vm3932, %v4623, %v4635
    %v4639 = vrot.slane %v4544, 6
    %v4641 = vmul.f32 %v4636, %v4639
    %v4642 = vmul.f32 %v4636, %v4637
    %4644 = vrot.lane.b32.xlu0 %v4642, 64
    %v4645 = vpop.permute.xlu0 %4644
    %v4647 = vadd.f32 %v4641, %v4645
    %v4648 = vtanh.pop %v4647
    %v4649 = vmul.f32 %v4637, %v4648
    %vm4650 = vcmp.eq.s32.totalorder %v50, 6
    %v4651 = vsel %vm4650, 1, 0
    %4652 = vset.pattern.permute.xlu0 0
    %4653 = vperm.xlu0 %4652, %v4651
    %v4654 = vpop.permute.xlu0 %4653
    %vm4655 = vcmp.eq.s32.totalorder %v4654, 1
    %v4657 = vrot.slane %v4649, 4
    %4658 = vrot.lane.b32.xlu0 %v4657, 64
    %v4659 = vpop.permute.xlu0 %4658
    %v4661 = vsel %vm4655, %v4659, %v4562
    %v4662 = vld [vmem:[#allocation2 + $0x10] sm:$0xc0]
    %v4663 = vld [vmem:[#allocation2 + $0x18] sm:$0xc0]
    %v4664 = vpack.c.bf16 %v4649, %v4649
    %v4666 = vrot.slane %v4664, 2
    %4667 = vrot.lane.b32.xlu0 %v4666, 64
    %v4668 = vpop.permute.xlu0 %4667
    %v4670 = vsel %vm3691, %v4668, 0
    %4672 = vmatprep.subr.bf16.mxu0 %v3976
    %4673 = vmatpush1.bf16.msra.mxu0 %v3975
    %4674 = vmatprep.subr.bf16.mxu0 %v3978
    %4675 = vmatpush1.bf16.msra.mxu0 %v3977
    %4676 = vmatprep.subr.bf16.mxu0 %v3980
    %4677 = vmatpush1.bf16.msra.mxu0 %v3979
    %4678 = vmatprep.subr.bf16.mxu0 %v3982
    %4679 = vmatpush1.bf16.msra.mxu0 %v3981
    %4680 = vmatprep.subr.bf16.mxu0 0
    %4681 = vmatpush1.bf16.msra.mxu0 0
    %4682 = vmatprep.subr.bf16.mxu0 0
    %4683 = vmatpush1.bf16.msra.mxu0 0
    %4684 = vmatprep.subr.bf16.mxu0 0
    %4685 = vmatpush1.bf16.msra.mxu0 0
    %4686 = vmatprep.subr.bf16.mxu0 0
    %4687 = vmatpush1.bf16.msra.mxu0 0
    %4688 = vmatprep.subr.bf16.mxu0 0
    %4689 = vmatpush1.bf16.msra.mxu0 0
    %4690 = vmatprep.subr.bf16.mxu0 0
    %4691 = vmatpush1.bf16.msra.mxu0 0
    %4692 = vmatprep.subr.bf16.mxu0 0
    %4693 = vmatpush1.bf16.msra.mxu0 0
    %4694 = vmatprep.subr.bf16.mxu0 0
    %4695 = vmatpush1.bf16.msra.mxu0 0
    %4696 = vmatprep.subr.bf16.mxu0 0
    %4697 = vmatpush1.bf16.msra.mxu0 0
    %4698 = vmatprep.subr.bf16.mxu0 0
    %4699 = vmatpush1.bf16.msra.mxu0 0
    %4700 = vmatprep.subr.bf16.mxu0 0
    %4701 = vmatpush1.bf16.msra.mxu0 0
    %4702 = vmatprep.subr.bf16.mxu0 0
    %4703 = vmatpush1.bf16.msra.mxu0 0
    %4704 = vmatprep.mubr.bf16.mxu0 0
    %4705 = vmatmul.mubr.bf16.gmra.mrb[0].mxu0 %v4670
    %v4706 = vpop.f32.mrb[0].mxu0
    %v4707 = vadd.f32 0.0, %v4706
    %v4708 = vpop.f32.mrb[0].mxu0
    %v4709 = vadd.f32 0.0, %v4708
    %v4710 = vpop.f32.mrb[0].mxu0
    %v4711 = vpop.f32.mrb[0].mxu0
    %4712 = vdwg.mxu0
    %v4715 = vrot.slane %v4707, 2
    %v4716 = vrot.slane %v4709, 2
    %v4719 = vadd.f32 %v4662, %v4715
    %v4720 = vadd.f32 %v4663, %v4716
    %v4721 = vtanh.pop %v4719
    %v4722 = vtanh.pop %v4720
    %v4723 = vxor.u32 %v4719, 2147483648
    %v4724 = vxor.u32 %v4720, 2147483648
    %v4725 = vmul.f32 %v4723, 1.442695
    %v4726 = vpow.pop %v4725
    %v4727 = vmul.f32 %v4724, 1.442695
    %v4728 = vpow.pop %v4727
    %v4729 = vadd.f32 %v4726, 1.0
    %v4730 = vadd.f32 %v4728, 1.0
    %v4731 = vrcp.pop %v4729
    %v4732 = vmul.f32 1.0, %v4731
    %v4733 = vrcp.pop %v4730
    %v4734 = vmul.f32 1.0, %v4733
    %v4735 = vsel %vm3931, %v4721, %v4732
    %v4736 = vsel %vm3932, %v4722, %v4734
    %v4738 = vrot.slane %v4647, 6
    %v4740 = vmul.f32 %v4735, %v4738
    %v4741 = vmul.f32 %v4735, %v4736
    %4743 = vrot.lane.b32.xlu0 %v4741, 64
    %v4744 = vpop.permute.xlu0 %4743
    %v4746 = vadd.f32 %v4740, %v4744
    %v4747 = vtanh.pop %v4746
    %v4748 = vmul.f32 %v4736, %v4747
    %vm4749 = vcmp.eq.s32.totalorder %v50, 7
    %v4750 = vsel %vm4749, 1, 0
    %4751 = vset.pattern.permute.xlu0 0
    %4752 = vperm.xlu0 %4751, %v4750
    %v4753 = vpop.permute.xlu0 %4752
    %vm4754 = vcmp.eq.s32.totalorder %v4753, 1
    %v4756 = vrot.slane %v4748, 6
    %4757 = vrot.lane.b32.xlu0 %v4756, 64
    %v4758 = vpop.permute.xlu0 %4757
    %v4760 = vsel %vm4754, %v4758, %v4661
    %v4761 = vld [vmem:[#allocation2 + $0x20] sm:$0x3]
    %v4762 = vld [vmem:[#allocation2 + $0x28] sm:$0x3]
    %v4763 = vpack.c.bf16 %v4748, %v4748
    %v4765 = vrot.slane %v4763, 3
    %4766 = vrot.lane.b32.xlu0 %v4765, 64
    %v4767 = vpop.permute.xlu0 %4766
    %v4769 = vsel %vm3691, %v4767, 0
    %4771 = vmatprep.subr.bf16.mxu0 %v3976
    %4772 = vmatpush1.bf16.msra.mxu0 %v3975
    %4773 = vmatprep.subr.bf16.mxu0 %v3978
    %4774 = vmatpush1.bf16.msra.mxu0 %v3977
    %4775 = vmatprep.subr.bf16.mxu0 %v3980
    %4776 = vmatpush1.bf16.msra.mxu0 %v3979
    %4777 = vmatprep.subr.bf16.mxu0 %v3982
    %4778 = vmatpush1.bf16.msra.mxu0 %v3981
    %4779 = vmatprep.subr.bf16.mxu0 0
    %4780 = vmatpush1.bf16.msra.mxu0 0
    %4781 = vmatprep.subr.bf16.mxu0 0
    %4782 = vmatpush1.bf16.msra.mxu0 0
    %4783 = vmatprep.subr.bf16.mxu0 0
    %4784 = vmatpush1.bf16.msra.mxu0 0
    %4785 = vmatprep.subr.bf16.mxu0 0
    %4786 = vmatpush1.bf16.msra.mxu0 0
    %4787 = vmatprep.subr.bf16.mxu0 0
    %4788 = vmatpush1.bf16.msra.mxu0 0
    %4789 = vmatprep.subr.bf16.mxu0 0
    %4790 = vmatpush1.bf16.msra.mxu0 0
    %4791 = vmatprep.subr.bf16.mxu0 0
    %4792 = vmatpush1.bf16.msra.mxu0 0
    %4793 = vmatprep.subr.bf16.mxu0 0
    %4794 = vmatpush1.bf16.msra.mxu0 0
    %4795 = vmatprep.subr.bf16.mxu0 0
    %4796 = vmatpush1.bf16.msra.mxu0 0
    %4797 = vmatprep.subr.bf16.mxu0 0
    %4798 = vmatpush1.bf16.msra.mxu0 0
    %4799 = vmatprep.subr.bf16.mxu0 0
    %4800 = vmatpush1.bf16.msra.mxu0 0
    %4801 = vmatprep.subr.bf16.mxu0 0
    %4802 = vmatpush1.bf16.msra.mxu0 0
    %4803 = vmatprep.mubr.bf16.mxu0 0
    %4804 = vmatmul.mubr.bf16.gmra.mrb[0].mxu0 %v4769
    %v4805 = vpop.f32.mrb[0].mxu0
    %v4806 = vadd.f32 0.0, %v4805
    %v4807 = vpop.f32.mrb[0].mxu0
    %v4808 = vadd.f32 0.0, %v4807
    %v4809 = vpop.f32.mrb[0].mxu0
    %v4810 = vpop.f32.mrb[0].mxu0
    %4811 = vdwg.mxu0
    %v4812 = vadd.f32 %v4761, %v4806
    %v4813 = vadd.f32 %v4762, %v4808
    %v4814 = vtanh.pop %v4812
    %v4815 = vtanh.pop %v4813
    %v4816 = vxor.u32 %v4812, 2147483648
    %v4817 = vxor.u32 %v4813, 2147483648
    %v4818 = vmul.f32 %v4816, 1.442695
    %v4819 = vpow.pop %v4818
    %v4820 = vmul.f32 %v4817, 1.442695
    %v4821 = vpow.pop %v4820
    %v4822 = vadd.f32 %v4819, 1.0
    %v4823 = vadd.f32 %v4821, 1.0
    %v4824 = vrcp.pop %v4822
    %v4825 = vmul.f32 1.0, %v4824
    %v4826 = vrcp.pop %v4823
    %v4827 = vmul.f32 1.0, %v4826
    %v4828 = vsel %vm3931, %v4814, %v4825
    %v4829 = vsel %vm3932, %v4815, %v4827
    %v4831 = vrot.slane %v4746, 6
    %v4833 = vmul.f32 %v4828, %v4831
    %v4834 = vmul.f32 %v4828, %v4829
    %4836 = vrot.lane.b32.xlu0 %v4834, 64
    %v4837 = vpop.permute.xlu0 %4836
    %v4839 = vadd.f32 %v4833, %v4837
    %v4840 = vtanh.pop %v4839
    %v4841 = vmul.f32 %v4829, %v4840
    %vm4842 = vcmp.eq.s32.totalorder %v50, 8
    %v4843 = vsel %vm4842, 1, 0
    %4844 = vset.pattern.permute.xlu0 0
    %4845 = vperm.xlu0 %4844, %v4843
    %v4846 = vpop.permute.xlu0 %4845
    %vm4847 = vcmp.eq.s32.totalorder %v4846, 1
    %4849 = vrot.lane.b32.xlu0 %v4760, 64
    %v4850 = vpop.permute.xlu0 %4849
    %v4852 = vsel %vm4847, %v4841, %v4850
    %v4853 = vld [vmem:[#allocation2 + $0x20] sm:$0xc]
    %v4854 = vld [vmem:[#allocation2 + $0x28] sm:$0xc]
    %v4855 = vpack.c.bf16 %v4841, %v4841
    %4857 = vrot.lane.b32.xlu0 %v4855, 64
    %v4858 = vpop.permute.xlu0 %4857
    %v4860 = vsel %vm3691, %v4858, 0
    %4862 = vmatprep.subr.bf16.mxu0 %v3976
    %4863 = vmatpush1.bf16.msra.mxu0 %v3975
    %4864 = vmatprep.subr.bf16.mxu0 %v3978
    %4865 = vmatpush1.bf16.msra.mxu0 %v3977
    %4866 = vmatprep.subr.bf16.mxu0 %v3980
    %4867 = vmatpush1.bf16.msra.mxu0 %v3979
    %4868 = vmatprep.subr.bf16.mxu0 %v3982
    %4869 = vmatpush1.bf16.msra.mxu0 %v3981
    %4870 = vmatprep.subr.bf16.mxu0 0
    %4871 = vmatpush1.bf16.msra.mxu0 0
    %4872 = vmatprep.subr.bf16.mxu0 0
    %4873 = vmatpush1.bf16.msra.mxu0 0
    %4874 = vmatprep.subr.bf16.mxu0 0
    %4875 = vmatpush1.bf16.msra.mxu0 0
    %4876 = vmatprep.subr.bf16.mxu0 0
    %4877 = vmatpush1.bf16.msra.mxu0 0
    %4878 = vmatprep.subr.bf16.mxu0 0
    %4879 = vmatpush1.bf16.msra.mxu0 0
    %4880 = vmatprep.subr.bf16.mxu0 0
    %4881 = vmatpush1.bf16.msra.mxu0 0
    %4882 = vmatprep.subr.bf16.mxu0 0
    %4883 = vmatpush1.bf16.msra.mxu0 0
    %4884 = vmatprep.subr.bf16.mxu0 0
    %4885 = vmatpush1.bf16.msra.mxu0 0
    %4886 = vmatprep.subr.bf16.mxu0 0
    %4887 = vmatpush1.bf16.msra.mxu0 0
    %4888 = vmatprep.subr.bf16.mxu0 0
    %4889 = vmatpush1.bf16.msra.mxu0 0
    %4890 = vmatprep.subr.bf16.mxu0 0
    %4891 = vmatpush1.bf16.msra.mxu0 0
    %4892 = vmatprep.subr.bf16.mxu0 0
    %4893 = vmatpush1.bf16.msra.mxu0 0
    %4894 = vmatprep.mubr.bf16.mxu0 0
    %4895 = vmatmul.mubr.bf16.gmra.mrb[0].mxu0 %v4860
    %v4896 = vpop.f32.mrb[0].mxu0
    %v4897 = vadd.f32 0.0, %v4896
    %v4898 = vpop.f32.mrb[0].mxu0
    %v4899 = vadd.f32 0.0, %v4898
    %v4900 = vpop.f32.mrb[0].mxu0
    %v4901 = vpop.f32.mrb[0].mxu0
    %4902 = vdwg.mxu0
    %v4905 = vrot.slane %v4897, 6
    %v4906 = vrot.slane %v4899, 6
    %v4909 = vadd.f32 %v4853, %v4905
    %v4910 = vadd.f32 %v4854, %v4906
    %v4911 = vtanh.pop %v4909
    %v4912 = vtanh.pop %v4910
    %v4913 = vxor.u32 %v4909, 2147483648
    %v4914 = vxor.u32 %v4910, 2147483648
    %v4915 = vmul.f32 %v4913, 1.442695
    %v4916 = vpow.pop %v4915
    %v4917 = vmul.f32 %v4914, 1.442695
    %v4918 = vpow.pop %v4917
    %v4919 = vadd.f32 %v4916, 1.0
    %v4920 = vadd.f32 %v4918, 1.0
    %v4921 = vrcp.pop %v4919
    %v4922 = vmul.f32 1.0, %v4921
    %v4923 = vrcp.pop %v4920
    %v4924 = vmul.f32 1.0, %v4923
    %v4925 = vsel %vm3931, %v4911, %v4922
    %v4926 = vsel %vm3932, %v4912, %v4924
    %v4928 = vrot.slane %v4839, 6
    %v4930 = vmul.f32 %v4925, %v4928
    %v4931 = vmul.f32 %v4925, %v4926
    %4933 = vrot.lane.b32.xlu0 %v4931, 64
    %v4934 = vpop.permute.xlu0 %4933
    %v4936 = vadd.f32 %v4930, %v4934
    %v4937 = vtanh.pop %v4936
    %v4938 = vmul.f32 %v4926, %v4937
    %vm4939 = vcmp.eq.s32.totalorder %v50, 9
    %v4940 = vsel %vm4939, 1, 0
    %4941 = vset.pattern.permute.xlu0 0
    %4942 = vperm.xlu0 %4941, %v4940
    %v4943 = vpop.permute.xlu0 %4942
    %vm4944 = vcmp.eq.s32.totalorder %v4943, 1
    %v4946 = vrot.slane %v4938, 2
    %4947 = vrot.lane.b32.xlu0 %v4946, 64
    %v4948 = vpop.permute.xlu0 %4947
    %4951 = vrot.lane.b32.xlu0 %v4852, 64
    %v4952 = vpop.permute.xlu0 %4951
    %v4954 = vsel %vm4944, %v4948, %v4952
    %v4955 = vld [vmem:[#allocation2 + $0x20] sm:$0x30]
    %v4956 = vld [vmem:[#allocation2 + $0x28] sm:$0x30]
    %v4957 = vpack.c.bf16 %v4938, %v4938
    %v4959 = vrot.slane %v4957, 1
    %4960 = vrot.lane.b32.xlu0 %v4959, 64
    %v4961 = vpop.permute.xlu0 %4960
    %v4963 = vsel %vm3691, %v4961, 0
    %4965 = vmatprep.subr.bf16.mxu0 %v3976
    %4966 = vmatpush1.bf16.msra.mxu0 %v3975
    %4967 = vmatprep.subr.bf16.mxu0 %v3978
    %4968 = vmatpush1.bf16.msra.mxu0 %v3977
    %4969 = vmatprep.subr.bf16.mxu0 %v3980
    %4970 = vmatpush1.bf16.msra.mxu0 %v3979
    %4971 = vmatprep.subr.bf16.mxu0 %v3982
    %4972 = vmatpush1.bf16.msra.mxu0 %v3981
    %4973 = vmatprep.subr.bf16.mxu0 0
    %4974 = vmatpush1.bf16.msra.mxu0 0
    %4975 = vmatprep.subr.bf16.mxu0 0
    %4976 = vmatpush1.bf16.msra.mxu0 0
    %4977 = vmatprep.subr.bf16.mxu0 0
    %4978 = vmatpush1.bf16.msra.mxu0 0
    %4979 = vmatprep.subr.bf16.mxu0 0
    %4980 = vmatpush1.bf16.msra.mxu0 0
    %4981 = vmatprep.subr.bf16.mxu0 0
    %4982 = vmatpush1.bf16.msra.mxu0 0
    %4983 = vmatprep.subr.bf16.mxu0 0
    %4984 = vmatpush1.bf16.msra.mxu0 0
    %4985 = vmatprep.subr.bf16.mxu0 0
    %4986 = vmatpush1.bf16.msra.mxu0 0
    %4987 = vmatprep.subr.bf16.mxu0 0
    %4988 = vmatpush1.bf16.msra.mxu0 0
    %4989 = vmatprep.subr.bf16.mxu0 0
    %4990 = vmatpush1.bf16.msra.mxu0 0
    %4991 = vmatprep.subr.bf16.mxu0 0
    %4992 = vmatpush1.bf16.msra.mxu0 0
    %4993 = vmatprep.subr.bf16.mxu0 0
    %4994 = vmatpush1.bf16.msra.mxu0 0
    %4995 = vmatprep.subr.bf16.mxu0 0
    %4996 = vmatpush1.bf16.msra.mxu0 0
    %4997 = vmatprep.mubr.bf16.mxu0 0
    %4998 = vmatmul.mubr.bf16.gmra.mrb[0].mxu0 %v4963
    %v4999 = vpop.f32.mrb[0].mxu0
    %v5000 = vadd.f32 0.0, %v4999
    %v5001 = vpop.f32.mrb[0].mxu0
    %v5002 = vadd.f32 0.0, %v5001
    %v5003 = vpop.f32.mrb[0].mxu0
    %v5004 = vpop.f32.mrb[0].mxu0
    %5005 = vdwg.mxu0
    %v5008 = vrot.slane %v5000, 4
    %v5009 = vrot.slane %v5002, 4
    %v5012 = vadd.f32 %v4955, %v5008
    %v5013 = vadd.f32 %v4956, %v5009
    %v5014 = vtanh.pop %v5012
    %v5015 = vtanh.pop %v5013
    %v5016 = vxor.u32 %v5012, 2147483648
    %v5017 = vxor.u32 %v5013, 2147483648
    %v5018 = vmul.f32 %v5016, 1.442695
    %v5019 = vpow.pop %v5018
    %v5020 = vmul.f32 %v5017, 1.442695
    %v5021 = vpow.pop %v5020
    %v5022 = vadd.f32 %v5019, 1.0
    %v5023 = vadd.f32 %v5021, 1.0
    %v5024 = vrcp.pop %v5022
    %v5025 = vmul.f32 1.0, %v5024
    %v5026 = vrcp.pop %v5023
    %v5027 = vmul.f32 1.0, %v5026
    %v5028 = vsel %vm3931, %v5014, %v5025
    %v5029 = vsel %vm3932, %v5015, %v5027
    %v5031 = vrot.slane %v4936, 6
    %v5033 = vmul.f32 %v5028, %v5031
    %v5034 = vmul.f32 %v5028, %v5029
    %5036 = vrot.lane.b32.xlu0 %v5034, 64
    %v5037 = vpop.permute.xlu0 %5036
    %v5039 = vadd.f32 %v5033, %v5037
    %v5040 = vtanh.pop %v5039
    %v5041 = vmul.f32 %v5029, %v5040
    %vm5042 = vcmp.eq.s32.totalorder %v50, 10
    %v5043 = vsel %vm5042, 1, 0
    %5044 = vset.pattern.permute.xlu0 0
    %5045 = vperm.xlu0 %5044, %v5043
    %v5046 = vpop.permute.xlu0 %5045
    %vm5047 = vcmp.eq.s32.totalorder %v5046, 1
    %v5049 = vrot.slane %v5041, 4
    %5050 = vrot.lane.b32.xlu0 %v5049, 64
    %v5051 = vpop.permute.xlu0 %5050
    %v5053 = vsel %vm5047, %v5051, %v4954
    %v5054 = vld [vmem:[#allocation2 + $0x20] sm:$0xc0]
    %v5055 = vld [vmem:[#allocation2 + $0x28] sm:$0xc0]
    %v5056 = vpack.c.bf16 %v5041, %v5041
    %v5058 = vrot.slane %v5056, 2
    %5059 = vrot.lane.b32.xlu0 %v5058, 64
    %v5060 = vpop.permute.xlu0 %5059
    %v5062 = vsel %vm3691, %v5060, 0
    %5064 = vmatprep.subr.bf16.mxu0 %v3976
    %5065 = vmatpush1.bf16.msra.mxu0 %v3975
    %5066 = vmatprep.subr.bf16.mxu0 %v3978
    %5067 = vmatpush1.bf16.msra.mxu0 %v3977
    %5068 = vmatprep.subr.bf16.mxu0 %v3980
    %5069 = vmatpush1.bf16.msra.mxu0 %v3979
    %5070 = vmatprep.subr.bf16.mxu0 %v3982
    %5071 = vmatpush1.bf16.msra.mxu0 %v3981
    %5072 = vmatprep.subr.bf16.mxu0 0
    %5073 = vmatpush1.bf16.msra.mxu0 0
    %5074 = vmatprep.subr.bf16.mxu0 0
    %5075 = vmatpush1.bf16.msra.mxu0 0
    %5076 = vmatprep.subr.bf16.mxu0 0
    %5077 = vmatpush1.bf16.msra.mxu0 0
    %5078 = vmatprep.subr.bf16.mxu0 0
    %5079 = vmatpush1.bf16.msra.mxu0 0
    %5080 = vmatprep.subr.bf16.mxu0 0
    %5081 = vmatpush1.bf16.msra.mxu0 0
    %5082 = vmatprep.subr.bf16.mxu0 0
    %5083 = vmatpush1.bf16.msra.mxu0 0
    %5084 = vmatprep.subr.bf16.mxu0 0
    %5085 = vmatpush1.bf16.msra.mxu0 0
    %5086 = vmatprep.subr.bf16.mxu0 0
    %5087 = vmatpush1.bf16.msra.mxu0 0
    %5088 = vmatprep.subr.bf16.mxu0 0
    %5089 = vmatpush1.bf16.msra.mxu0 0
    %5090 = vmatprep.subr.bf16.mxu0 0
    %5091 = vmatpush1.bf16.msra.mxu0 0
    %5092 = vmatprep.subr.bf16.mxu0 0
    %5093 = vmatpush1.bf16.msra.mxu0 0
    %5094 = vmatprep.subr.bf16.mxu0 0
    %5095 = vmatpush1.bf16.msra.mxu0 0
    %5096 = vmatprep.mubr.bf16.mxu0 0
    %5097 = vmatmul.mubr.bf16.gmra.mrb[0].mxu0 %v5062
    %v5098 = vpop.f32.mrb[0].mxu0
    %v5099 = vadd.f32 0.0, %v5098
    %v5100 = vpop.f32.mrb[0].mxu0
    %v5101 = vadd.f32 0.0, %v5100
    %v5102 = vpop.f32.mrb[0].mxu0
    %v5103 = vpop.f32.mrb[0].mxu0
    %5104 = vdwg.mxu0
    %v5107 = vrot.slane %v5099, 2
    %v5108 = vrot.slane %v5101, 2
    %v5111 = vadd.f32 %v5054, %v5107
    %v5112 = vadd.f32 %v5055, %v5108
    %v5113 = vtanh.pop %v5111
    %v5114 = vtanh.pop %v5112
    %v5115 = vxor.u32 %v5111, 2147483648
    %v5116 = vxor.u32 %v5112, 2147483648
    %v5117 = vmul.f32 %v5115, 1.442695
    %v5118 = vpow.pop %v5117
    %v5119 = vmul.f32 %v5116, 1.442695
    %v5120 = vpow.pop %v5119
    %v5121 = vadd.f32 %v5118, 1.0
    %v5122 = vadd.f32 %v5120, 1.0
    %v5123 = vrcp.pop %v5121
    %v5124 = vmul.f32 1.0, %v5123
    %v5125 = vrcp.pop %v5122
    %v5126 = vmul.f32 1.0, %v5125
    %v5127 = vsel %vm3931, %v5113, %v5124
    %v5128 = vsel %vm3932, %v5114, %v5126
    %v5130 = vrot.slane %v5039, 6
    %v5132 = vmul.f32 %v5127, %v5130
    %v5133 = vmul.f32 %v5127, %v5128
    %5135 = vrot.lane.b32.xlu0 %v5133, 64
    %v5136 = vpop.permute.xlu0 %5135
    %v5138 = vadd.f32 %v5132, %v5136
    %v5139 = vtanh.pop %v5138
    %v5140 = vmul.f32 %v5128, %v5139
    %vm5141 = vcmp.eq.s32.totalorder %v50, 11
    %v5142 = vsel %vm5141, 1, 0
    %5143 = vset.pattern.permute.xlu0 0
    %5144 = vperm.xlu0 %5143, %v5142
    %v5145 = vpop.permute.xlu0 %5144
    %vm5146 = vcmp.eq.s32.totalorder %v5145, 1
    %v5148 = vrot.slane %v5140, 6
    %5149 = vrot.lane.b32.xlu0 %v5148, 64
    %v5150 = vpop.permute.xlu0 %5149
    %v5152 = vsel %vm5146, %v5150, %v5053
    %v5153 = vld [vmem:[#allocation2 + $0x30] sm:$0x3]
    %v5154 = vld [vmem:[#allocation2 + $0x38] sm:$0x3]
    %v5155 = vpack.c.bf16 %v5140, %v5140
    %v5157 = vrot.slane %v5155, 3
    %5158 = vrot.lane.b32.xlu0 %v5157, 64
    %v5159 = vpop.permute.xlu0 %5158
    %v5161 = vsel %vm3691, %v5159, 0
    %5163 = vmatprep.subr.bf16.mxu0 %v3976
    %5164 = vmatpush1.bf16.msra.mxu0 %v3975
    %5165 = vmatprep.subr.bf16.mxu0 %v3978
    %5166 = vmatpush1.bf16.msra.mxu0 %v3977
    %5167 = vmatprep.subr.bf16.mxu0 %v3980
    %5168 = vmatpush1.bf16.msra.mxu0 %v3979
    %5169 = vmatprep.subr.bf16.mxu0 %v3982
    %5170 = vmatpush1.bf16.msra.mxu0 %v3981
    %5171 = vmatprep.subr.bf16.mxu0 0
    %5172 = vmatpush1.bf16.msra.mxu0 0
    %5173 = vmatprep.subr.bf16.mxu0 0
    %5174 = vmatpush1.bf16.msra.mxu0 0
    %5175 = vmatprep.subr.bf16.mxu0 0
    %5176 = vmatpush1.bf16.msra.mxu0 0
    %5177 = vmatprep.subr.bf16.mxu0 0
    %5178 = vmatpush1.bf16.msra.mxu0 0
    %5179 = vmatprep.subr.bf16.mxu0 0
    %5180 = vmatpush1.bf16.msra.mxu0 0
    %5181 = vmatprep.subr.bf16.mxu0 0
    %5182 = vmatpush1.bf16.msra.mxu0 0
    %5183 = vmatprep.subr.bf16.mxu0 0
    %5184 = vmatpush1.bf16.msra.mxu0 0
    %5185 = vmatprep.subr.bf16.mxu0 0
    %5186 = vmatpush1.bf16.msra.mxu0 0
    %5187 = vmatprep.subr.bf16.mxu0 0
    %5188 = vmatpush1.bf16.msra.mxu0 0
    %5189 = vmatprep.subr.bf16.mxu0 0
    %5190 = vmatpush1.bf16.msra.mxu0 0
    %5191 = vmatprep.subr.bf16.mxu0 0
    %5192 = vmatpush1.bf16.msra.mxu0 0
    %5193 = vmatprep.subr.bf16.mxu0 0
    %5194 = vmatpush1.bf16.msra.mxu0 0
    %5195 = vmatprep.mubr.bf16.mxu0 0
    %5196 = vmatmul.mubr.bf16.gmra.mrb[0].mxu0 %v5161
    %v5197 = vpop.f32.mrb[0].mxu0
    %v5198 = vadd.f32 0.0, %v5197
    %v5199 = vpop.f32.mrb[0].mxu0
    %v5200 = vadd.f32 0.0, %v5199
    %v5201 = vpop.f32.mrb[0].mxu0
    %v5202 = vpop.f32.mrb[0].mxu0
    %5203 = vdwg.mxu0
    %v5204 = vadd.f32 %v5153, %v5198
    %v5205 = vadd.f32 %v5154, %v5200
    %v5206 = vtanh.pop %v5204
    %v5207 = vtanh.pop %v5205
    %v5208 = vxor.u32 %v5204, 2147483648
    %v5209 = vxor.u32 %v5205, 2147483648
    %v5210 = vmul.f32 %v5208, 1.442695
    %v5211 = vpow.pop %v5210
    %v5212 = vmul.f32 %v5209, 1.442695
    %v5213 = vpow.pop %v5212
    %v5214 = vadd.f32 %v5211, 1.0
    %v5215 = vadd.f32 %v5213, 1.0
    %v5216 = vrcp.pop %v5214
    %v5217 = vmul.f32 1.0, %v5216
    %v5218 = vrcp.pop %v5215
    %v5219 = vmul.f32 1.0, %v5218
    %v5220 = vsel %vm3931, %v5206, %v5217
    %v5221 = vsel %vm3932, %v5207, %v5219
    %v5223 = vrot.slane %v5138, 6
    %v5225 = vmul.f32 %v5220, %v5223
    %v5226 = vmul.f32 %v5220, %v5221
    %5228 = vrot.lane.b32.xlu0 %v5226, 64
    %v5229 = vpop.permute.xlu0 %5228
    %v5231 = vadd.f32 %v5225, %v5229
    %v5232 = vtanh.pop %v5231
    %v5233 = vmul.f32 %v5221, %v5232
    %vm5234 = vcmp.eq.s32.totalorder %v50, 12
    %v5235 = vsel %vm5234, 1, 0
    %5236 = vset.pattern.permute.xlu0 0
    %5237 = vperm.xlu0 %5236, %v5235
    %v5238 = vpop.permute.xlu0 %5237
    %vm5239 = vcmp.eq.s32.totalorder %v5238, 1
    %5241 = vrot.lane.b32.xlu0 %v5152, 64
    %v5242 = vpop.permute.xlu0 %5241
    %v5244 = vsel %vm5239, %v5233, %v5242
    %v5245 = vld [vmem:[#allocation2 + $0x30] sm:$0xc]
    %v5246 = vld [vmem:[#allocation2 + $0x38] sm:$0xc]
    %v5247 = vpack.c.bf16 %v5233, %v5233
    %5249 = vrot.lane.b32.xlu0 %v5247, 64
    %v5250 = vpop.permute.xlu0 %5249
    %v5252 = vsel %vm3691, %v5250, 0
    %5254 = vmatprep.subr.bf16.mxu0 %v3976
    %5255 = vmatpush1.bf16.msra.mxu0 %v3975
    %5256 = vmatprep.subr.bf16.mxu0 %v3978
    %5257 = vmatpush1.bf16.msra.mxu0 %v3977
    %5258 = vmatprep.subr.bf16.mxu0 %v3980
    %5259 = vmatpush1.bf16.msra.mxu0 %v3979
    %5260 = vmatprep.subr.bf16.mxu0 %v3982
    %5261 = vmatpush1.bf16.msra.mxu0 %v3981
    %5262 = vmatprep.subr.bf16.mxu0 0
    %5263 = vmatpush1.bf16.msra.mxu0 0
    %5264 = vmatprep.subr.bf16.mxu0 0
    %5265 = vmatpush1.bf16.msra.mxu0 0
    %5266 = vmatprep.subr.bf16.mxu0 0
    %5267 = vmatpush1.bf16.msra.mxu0 0
    %5268 = vmatprep.subr.bf16.mxu0 0
    %5269 = vmatpush1.bf16.msra.mxu0 0
    %5270 = vmatprep.subr.bf16.mxu0 0
    %5271 = vmatpush1.bf16.msra.mxu0 0
    %5272 = vmatprep.subr.bf16.mxu0 0
    %5273 = vmatpush1.bf16.msra.mxu0 0
    %5274 = vmatprep.subr.bf16.mxu0 0
    %5275 = vmatpush1.bf16.msra.mxu0 0
    %5276 = vmatprep.subr.bf16.mxu0 0
    %5277 = vmatpush1.bf16.msra.mxu0 0
    %5278 = vmatprep.subr.bf16.mxu0 0
    %5279 = vmatpush1.bf16.msra.mxu0 0
    %5280 = vmatprep.subr.bf16.mxu0 0
    %5281 = vmatpush1.bf16.msra.mxu0 0
    %5282 = vmatprep.subr.bf16.mxu0 0
    %5283 = vmatpush1.bf16.msra.mxu0 0
    %5284 = vmatprep.subr.bf16.mxu0 0
    %5285 = vmatpush1.bf16.msra.mxu0 0
    %5286 = vmatprep.mubr.bf16.mxu0 0
    %5287 = vmatmul.mubr.bf16.gmra.mrb[0].mxu0 %v5252
    %v5288 = vpop.f32.mrb[0].mxu0
    %v5289 = vadd.f32 0.0, %v5288
    %v5290 = vpop.f32.mrb[0].mxu0
    %v5291 = vadd.f32 0.0, %v5290
    %v5292 = vpop.f32.mrb[0].mxu0
    %v5293 = vpop.f32.mrb[0].mxu0
    %5294 = vdwg.mxu0
    %v5297 = vrot.slane %v5289, 6
    %v5298 = vrot.slane %v5291, 6
    %v5301 = vadd.f32 %v5245, %v5297
    %v5302 = vadd.f32 %v5246, %v5298
    %v5303 = vtanh.pop %v5301
    %v5304 = vtanh.pop %v5302
    %v5305 = vxor.u32 %v5301, 2147483648
    %v5306 = vxor.u32 %v5302, 2147483648
    %v5307 = vmul.f32 %v5305, 1.442695
    %v5308 = vpow.pop %v5307
    %v5309 = vmul.f32 %v5306, 1.442695
    %v5310 = vpow.pop %v5309
    %v5311 = vadd.f32 %v5308, 1.0
    %v5312 = vadd.f32 %v5310, 1.0
    %v5313 = vrcp.pop %v5311
    %v5314 = vmul.f32 1.0, %v5313
    %v5315 = vrcp.pop %v5312
    %v5316 = vmul.f32 1.0, %v5315
    %v5317 = vsel %vm3931, %v5303, %v5314
    %v5318 = vsel %vm3932, %v5304, %v5316
    %v5320 = vrot.slane %v5231, 6
    %v5322 = vmul.f32 %v5317, %v5320
    %v5323 = vmul.f32 %v5317, %v5318
    %5325 = vrot.lane.b32.xlu0 %v5323, 64
    %v5326 = vpop.permute.xlu0 %5325
    %v5328 = vadd.f32 %v5322, %v5326
    %v5329 = vtanh.pop %v5328
    %v5330 = vmul.f32 %v5318, %v5329
    %vm5331 = vcmp.eq.s32.totalorder %v50, 13
    %v5332 = vsel %vm5331, 1, 0
    %5333 = vset.pattern.permute.xlu0 0
    %5334 = vperm.xlu0 %5333, %v5332
    %v5335 = vpop.permute.xlu0 %5334
    %vm5336 = vcmp.eq.s32.totalorder %v5335, 1
    %v5338 = vrot.slane %v5330, 2
    %5339 = vrot.lane.b32.xlu0 %v5338, 64
    %v5340 = vpop.permute.xlu0 %5339
    %5343 = vrot.lane.b32.xlu0 %v5244, 64
    %v5344 = vpop.permute.xlu0 %5343
    %v5346 = vsel %vm5336, %v5340, %v5344
    %v5347 = vld [vmem:[#allocation2 + $0x30] sm:$0x30]
    %v5348 = vld [vmem:[#allocation2 + $0x38] sm:$0x30]
    %v5349 = vpack.c.bf16 %v5330, %v5330
    %v5351 = vrot.slane %v5349, 1
    %5352 = vrot.lane.b32.xlu0 %v5351, 64
    %v5353 = vpop.permute.xlu0 %5352
    %v5355 = vsel %vm3691, %v5353, 0
    %5357 = vmatprep.subr.bf16.mxu0 %v3976
    %5358 = vmatpush1.bf16.msra.mxu0 %v3975
    %5359 = vmatprep.subr.bf16.mxu0 %v3978
    %5360 = vmatpush1.bf16.msra.mxu0 %v3977
    %5361 = vmatprep.subr.bf16.mxu0 %v3980
    %5362 = vmatpush1.bf16.msra.mxu0 %v3979
    %5363 = vmatprep.subr.bf16.mxu0 %v3982
    %5364 = vmatpush1.bf16.msra.mxu0 %v3981
    %5365 = vmatprep.subr.bf16.mxu0 0
    %5366 = vmatpush1.bf16.msra.mxu0 0
    %5367 = vmatprep.subr.bf16.mxu0 0
    %5368 = vmatpush1.bf16.msra.mxu0 0
    %5369 = vmatprep.subr.bf16.mxu0 0
    %5370 = vmatpush1.bf16.msra.mxu0 0
    %5371 = vmatprep.subr.bf16.mxu0 0
    %5372 = vmatpush1.bf16.msra.mxu0 0
    %5373 = vmatprep.subr.bf16.mxu0 0
    %5374 = vmatpush1.bf16.msra.mxu0 0
    %5375 = vmatprep.subr.bf16.mxu0 0
    %5376 = vmatpush1.bf16.msra.mxu0 0
    %5377 = vmatprep.subr.bf16.mxu0 0
    %5378 = vmatpush1.bf16.msra.mxu0 0
    %5379 = vmatprep.subr.bf16.mxu0 0
    %5380 = vmatpush1.bf16.msra.mxu0 0
    %5381 = vmatprep.subr.bf16.mxu0 0
    %5382 = vmatpush1.bf16.msra.mxu0 0
    %5383 = vmatprep.subr.bf16.mxu0 0
    %5384 = vmatpush1.bf16.msra.mxu0 0
    %5385 = vmatprep.subr.bf16.mxu0 0
    %5386 = vmatpush1.bf16.msra.mxu0 0
    %5387 = vmatprep.subr.bf16.mxu0 0
    %5388 = vmatpush1.bf16.msra.mxu0 0
    %5389 = vmatprep.mubr.bf16.mxu0 0
    %5390 = vmatmul.mubr.bf16.gmra.mrb[0].mxu0 %v5355
    %v5391 = vpop.f32.mrb[0].mxu0
    %v5392 = vadd.f32 0.0, %v5391
    %v5393 = vpop.f32.mrb[0].mxu0
    %v5394 = vadd.f32 0.0, %v5393
    %v5395 = vpop.f32.mrb[0].mxu0
    %v5396 = vpop.f32.mrb[0].mxu0
    %5397 = vdwg.mxu0
    %v5400 = vrot.slane %v5392, 4
    %v5401 = vrot.slane %v5394, 4
    %v5404 = vadd.f32 %v5347, %v5400
    %v5405 = vadd.f32 %v5348, %v5401
    %v5406 = vtanh.pop %v5404
    %v5407 = vtanh.pop %v5405
    %v5408 = vxor.u32 %v5404, 2147483648
    %v5409 = vxor.u32 %v5405, 2147483648
    %v5410 = vmul.f32 %v5408, 1.442695
    %v5411 = vpow.pop %v5410
    %v5412 = vmul.f32 %v5409, 1.442695
    %v5413 = vpow.pop %v5412
    %v5414 = vadd.f32 %v5411, 1.0
    %v5415 = vadd.f32 %v5413, 1.0
    %v5416 = vrcp.pop %v5414
    %v5417 = vmul.f32 1.0, %v5416
    %v5418 = vrcp.pop %v5415
    %v5419 = vmul.f32 1.0, %v5418
    %v5420 = vsel %vm3931, %v5406, %v5417
    %v5421 = vsel %vm3932, %v5407, %v5419
    %v5423 = vrot.slane %v5328, 6
    %v5425 = vmul.f32 %v5420, %v5423
    %v5426 = vmul.f32 %v5420, %v5421
    %5428 = vrot.lane.b32.xlu0 %v5426, 64
    %v5429 = vpop.permute.xlu0 %5428
    %v5431 = vadd.f32 %v5425, %v5429
    %v5432 = vtanh.pop %v5431
    %v5433 = vmul.f32 %v5421, %v5432
    %vm5434 = vcmp.eq.s32.totalorder %v50, 14
    %v5435 = vsel %vm5434, 1, 0
    %5436 = vset.pattern.permute.xlu0 0
    %5437 = vperm.xlu0 %5436, %v5435
    %v5438 = vpop.permute.xlu0 %5437
    %vm5439 = vcmp.eq.s32.totalorder %v5438, 1
    %v5441 = vrot.slane %v5433, 4
    %5442 = vrot.lane.b32.xlu0 %v5441, 64
    %v5443 = vpop.permute.xlu0 %5442
    %v5445 = vsel %vm5439, %v5443, %v5346
    %v5446 = vld [vmem:[#allocation2 + $0x30] sm:$0xc0]
    %v5447 = vld [vmem:[#allocation2 + $0x38] sm:$0xc0]
    %v5448 = vpack.c.bf16 %v5433, %v5433
    %v5450 = vrot.slane %v5448, 2
    %5451 = vrot.lane.b32.xlu0 %v5450, 64
    %v5452 = vpop.permute.xlu0 %5451
    %v5454 = vsel %vm3691, %v5452, 0
    %5456 = vmatprep.subr.bf16.mxu0 %v3976
    %5457 = vmatpush1.bf16.msra.mxu0 %v3975
    %5458 = vmatprep.subr.bf16.mxu0 %v3978
    %5459 = vmatpush1.bf16.msra.mxu0 %v3977
    %5460 = vmatprep.subr.bf16.mxu0 %v3980
    %5461 = vmatpush1.bf16.msra.mxu0 %v3979
    %5462 = vmatprep.subr.bf16.mxu0 %v3982
    %5463 = vmatpush1.bf16.msra.mxu0 %v3981
    %5464 = vmatprep.subr.bf16.mxu0 0
    %5465 = vmatpush1.bf16.msra.mxu0 0
    %5466 = vmatprep.subr.bf16.mxu0 0
    %5467 = vmatpush1.bf16.msra.mxu0 0
    %5468 = vmatprep.subr.bf16.mxu0 0
    %5469 = vmatpush1.bf16.msra.mxu0 0
    %5470 = vmatprep.subr.bf16.mxu0 0
    %5471 = vmatpush1.bf16.msra.mxu0 0
    %5472 = vmatprep.subr.bf16.mxu0 0
    %5473 = vmatpush1.bf16.msra.mxu0 0
    %5474 = vmatprep.subr.bf16.mxu0 0
    %5475 = vmatpush1.bf16.msra.mxu0 0
    %5476 = vmatprep.subr.bf16.mxu0 0
    %5477 = vmatpush1.bf16.msra.mxu0 0
    %5478 = vmatprep.subr.bf16.mxu0 0
    %5479 = vmatpush1.bf16.msra.mxu0 0
    %5480 = vmatprep.subr.bf16.mxu0 0
    %5481 = vmatpush1.bf16.msra.mxu0 0
    %5482 = vmatprep.subr.bf16.mxu0 0
    %5483 = vmatpush1.bf16.msra.mxu0 0
    %5484 = vmatprep.subr.bf16.mxu0 0
    %5485 = vmatpush1.bf16.msra.mxu0 0
    %5486 = vmatprep.subr.bf16.mxu0 0
    %5487 = vmatpush1.bf16.msra.mxu0 0
    %5488 = vmatprep.mubr.bf16.mxu0 0
    %5489 = vmatmul.mubr.bf16.gmra.mrb[0].mxu0 %v5454
    %v5490 = vpop.f32.mrb[0].mxu0
    %v5491 = vadd.f32 0.0, %v5490
    %v5492 = vpop.f32.mrb[0].mxu0
    %v5493 = vadd.f32 0.0, %v5492
    %v5494 = vpop.f32.mrb[0].mxu0
    %v5495 = vpop.f32.mrb[0].mxu0
    %5496 = vdwg.mxu0
    %v5499 = vrot.slane %v5491, 2
    %v5500 = vrot.slane %v5493, 2
    %v5503 = vadd.f32 %v5446, %v5499
    %v5504 = vadd.f32 %v5447, %v5500
    %v5505 = vtanh.pop %v5503
    %v5506 = vtanh.pop %v5504
    %v5507 = vxor.u32 %v5503, 2147483648
    %v5508 = vxor.u32 %v5504, 2147483648
    %v5509 = vmul.f32 %v5507, 1.442695
    %v5510 = vpow.pop %v5509
    %v5511 = vmul.f32 %v5508, 1.442695
    %v5512 = vpow.pop %v5511
    %v5513 = vadd.f32 %v5510, 1.0
    %v5514 = vadd.f32 %v5512, 1.0
    %v5515 = vrcp.pop %v5513
    %v5516 = vmul.f32 1.0, %v5515
    %v5517 = vrcp.pop %v5514
    %v5518 = vmul.f32 1.0, %v5517
    %v5519 = vsel %vm3931, %v5505, %v5516
    %v5520 = vsel %vm3932, %v5506, %v5518
    %v5522 = vrot.slane %v5431, 6
    %v5524 = vmul.f32 %v5519, %v5522
    %v5525 = vmul.f32 %v5519, %v5520
    %5527 = vrot.lane.b32.xlu0 %v5525, 64
    %v5528 = vpop.permute.xlu0 %5527
    %v5530 = vadd.f32 %v5524, %v5528
    %v5531 = vtanh.pop %v5530
    %v5532 = vmul.f32 %v5520, %v5531
    %vm5533 = vcmp.eq.s32.totalorder %v50, 15
    %v5534 = vsel %vm5533, 1, 0
    %5535 = vset.pattern.permute.xlu0 0
    %5536 = vperm.xlu0 %5535, %v5534
    %v5537 = vpop.permute.xlu0 %5536
    %vm5538 = vcmp.eq.s32.totalorder %v5537, 1
    %v5540 = vrot.slane %v5532, 6
    %5541 = vrot.lane.b32.xlu0 %v5540, 64
    %v5542 = vpop.permute.xlu0 %5541
    %v5544 = vsel %vm5538, %v5542, %v5445
    %v5545 = vpack.c.bf16 %v5544, %v5544
    %v5546 = vld [vmem:[%s9] sm:$0xff]
    %v5547 = vld [vmem:[%s9 + $0x8] sm:$0xff]
    %v5548 = vld [vmem:[%s9 + $0x10] sm:$0xff]
    %v5549 = vld [vmem:[%s9 + $0x18] sm:$0xff]
    %v5550 = vld [vmem:[%s9 + $0x20] sm:$0xff]
    %v5551 = vld [vmem:[%s9 + $0x28] sm:$0xff]
    %v5552 = vld [vmem:[%s9 + $0x30] sm:$0xff]
    %v5553 = vld [vmem:[%s9 + $0x38] sm:$0xff]
    %v5554 = vld [vmem:[%s11] sm:$0x3]
    %v5556 = vlaneseq
    %v5557 = vshrl.u32 %v5556, 7
    %v5558 = vsub.s32 0, %v5557
    %v5559 = vrot.slane %v5554, %v5558
    %v5560 = vlaneseq
    %v5561 = vshrl.u32 %v5560, 7
    %v5562 = vsub.s32 1, %v5561
    %v5563 = vrot.slane %v5554, %v5562
    %v5574 = vunpack.c.l.b16 %v5546
    %v5575 = vunpack.c.h.b16 %v5546
    %v5576 = vunpack.c.l.b16 %v5547
    %v5577 = vunpack.c.h.b16 %v5547
    %v5578 = vunpack.c.l.b16 %v5548
    %v5579 = vunpack.c.h.b16 %v5548
    %v5580 = vunpack.c.l.b16 %v5549
    %v5581 = vunpack.c.h.b16 %v5549
    %v5582 = vunpack.c.l.b16 %v5550
    %v5583 = vunpack.c.h.b16 %v5550
    %v5584 = vunpack.c.l.b16 %v5551
    %v5585 = vunpack.c.h.b16 %v5551
    %v5586 = vunpack.c.l.b16 %v5552
    %v5587 = vunpack.c.h.b16 %v5552
    %v5588 = vunpack.c.l.b16 %v5553
    %v5589 = vunpack.c.h.b16 %v5553
    %v5590 = vpack.c.b16 %v5576, %v5574
    %v5591 = vpack.c.b16 %v5577, %v5575
    %v5592 = vpack.c.b16 %v5580, %v5578
    %v5593 = vpack.c.b16 %v5581, %v5579
    %v5594 = vpack.c.b16 %v5584, %v5582
    %v5595 = vpack.c.b16 %v5585, %v5583
    %v5596 = vpack.c.b16 %v5588, %v5586
    %v5597 = vpack.c.b16 %v5589, %v5587
    %v5607 = vsel %vm3691, %v5545, 0
    %5609 = vmatprep.subr.bf16.mxu0 %v5591
    %5610 = vmatpush1.bf16.msra.mxu0 %v5590
    %5611 = vmatprep.subr.bf16.mxu0 %v5593
    %5612 = vmatpush1.bf16.msra.mxu0 %v5592
    %5613 = vmatprep.subr.bf16.mxu0 %v5595
    %5614 = vmatpush1.bf16.msra.mxu0 %v5594
    %5615 = vmatprep.subr.bf16.mxu0 %v5597
    %5616 = vmatpush1.bf16.msra.mxu0 %v5596
    %5617 = vmatprep.subr.bf16.mxu0 0
    %5618 = vmatpush1.bf16.msra.mxu0 0
    %5619 = vmatprep.subr.bf16.mxu0 0
    %5620 = vmatpush1.bf16.msra.mxu0 0
    %5621 = vmatprep.subr.bf16.mxu0 0
    %5622 = vmatpush1.bf16.msra.mxu0 0
    %5623 = vmatprep.subr.bf16.mxu0 0
    %5624 = vmatpush1.bf16.msra.mxu0 0
    %5625 = vmatprep.subr.bf16.mxu0 0
    %5626 = vmatpush1.bf16.msra.mxu0 0
    %5627 = vmatprep.subr.bf16.mxu0 0
    %5628 = vmatpush1.bf16.msra.mxu0 0
    %5629 = vmatprep.subr.bf16.mxu0 0
    %5630 = vmatpush1.bf16.msra.mxu0 0
    %5631 = vmatprep.subr.bf16.mxu0 0
    %5632 = vmatpush1.bf16.msra.mxu0 0
    %5633 = vmatprep.subr.bf16.mxu0 0
    %5634 = vmatpush1.bf16.msra.mxu0 0
    %5635 = vmatprep.subr.bf16.mxu0 0
    %5636 = vmatpush1.bf16.msra.mxu0 0
    %5637 = vmatprep.subr.bf16.mxu0 0
    %5638 = vmatpush1.bf16.msra.mxu0 0
    %5639 = vmatprep.subr.bf16.mxu0 0
    %5640 = vmatpush1.bf16.msra.mxu0 0
    %5641 = vmatprep.mubr.bf16.mxu0 0
    %5642 = vmatmul.mubr.bf16.gmra.mrb[0].mxu0 %v5607
    %v5643 = vpop.f32.mrb[0].mxu0
    %v5644 = vadd.f32 %v5559, %v5643
    %v5645 = vpop.f32.mrb[0].mxu0
    %v5646 = vadd.f32 %v5563, %v5645
    %v5647 = vpop.f32.mrb[0].mxu0
    %v5648 = vpop.f32.mrb[0].mxu0
    %5649 = vdwg.mxu0
    %v5650 = vtanh.pop %v5644
    %v5651 = vtanh.pop %v5646
    %v5652 = vxor.u32 %v5644, 2147483648
    %v5653 = vxor.u32 %v5646, 2147483648
    %v5654 = vmul.f32 %v5652, 1.442695
    %v5655 = vpow.pop %v5654
    %v5656 = vmul.f32 %v5653, 1.442695
    %v5657 = vpow.pop %v5656
    %v5658 = vadd.f32 %v5655, 1.0
    %v5659 = vadd.f32 %v5657, 1.0
    %v5660 = vrcp.pop %v5658
    %v5661 = vmul.f32 1.0, %v5660
    %v5662 = vrcp.pop %v5659
    %v5663 = vmul.f32 1.0, %v5662
    %v5664 = vsel %vm3931, %v5650, %v5661
    %v5665 = vsel %vm3932, %v5651, %v5663
    %v5666 = vmul.f32 %v5664, 0.0
    %v5667 = vmul.f32 %v5664, %v5665
    %5669 = vrot.lane.b32.xlu0 %v5667, 64
    %v5670 = vpop.permute.xlu0 %5669
    %v5672 = vadd.f32 %v5666, %v5670
    %v5673 = vtanh.pop %v5672
    %v5674 = vmul.f32 %v5665, %v5673
    %vm5675 = vcmp.eq.s32.totalorder %v49, 0
    %v5676 = vsel %vm5675, 1, 0
    %5677 = vset.pattern.permute.xlu0 0
    %5678 = vperm.xlu0 %5677, %v5676
    %v5679 = vpop.permute.xlu0 %5678
    %vm5680 = vcmp.eq.s32.totalorder %v5679, 1
    %v5681 = vsel %vm5680, %v5674, 0.0
    %v5682 = vld [vmem:[#allocation3] sm:$0x3]
    %v5683 = vld [vmem:[#allocation3 + $0x8] sm:$0x3]
    %v5684 = vpack.c.bf16 %v5674, %v5674
    %5686 = vrot.lane.b32.xlu0 %v5684, 64
    %v5687 = vpop.permute.xlu0 %5686
    %v5696 = vunpack.c.l.b16 %v3941
    %v5697 = vunpack.c.h.b16 %v3941
    %v5698 = vunpack.c.l.b16 %v3942
    %v5699 = vunpack.c.h.b16 %v3942
    %v5700 = vunpack.c.l.b16 %v3943
    %v5701 = vunpack.c.h.b16 %v3943
    %v5702 = vunpack.c.l.b16 %v3944
    %v5703 = vunpack.c.h.b16 %v3944
    %v5704 = vunpack.c.l.b16 %v3945
    %v5705 = vunpack.c.h.b16 %v3945
    %v5706 = vunpack.c.l.b16 %v3946
    %v5707 = vunpack.c.h.b16 %v3946
    %v5708 = vunpack.c.l.b16 %v3947
    %v5709 = vunpack.c.h.b16 %v3947
    %v5710 = vunpack.c.l.b16 %v3948
    %v5711 = vunpack.c.h.b16 %v3948
    %v5712 = vpack.c.b16 %v5698, %v5696
    %v5713 = vpack.c.b16 %v5699, %v5697
    %v5714 = vpack.c.b16 %v5702, %v5700
    %v5715 = vpack.c.b16 %v5703, %v5701
    %v5716 = vpack.c.b16 %v5706, %v5704
    %v5717 = vpack.c.b16 %v5707, %v5705
    %v5718 = vpack.c.b16 %v5710, %v5708
    %v5719 = vpack.c.b16 %v5711, %v5709
    %v5729 = vsel %vm3691, %v5687, 0
    %5731 = vmatprep.subr.bf16.mxu0 %v5713
    %5732 = vmatpush1.bf16.msra.mxu0 %v5712
    %5733 = vmatprep.subr.bf16.mxu0 %v5715
    %5734 = vmatpush1.bf16.msra.mxu0 %v5714
    %5735 = vmatprep.subr.bf16.mxu0 %v5717
    %5736 = vmatpush1.bf16.msra.mxu0 %v5716
    %5737 = vmatprep.subr.bf16.mxu0 %v5719
    %5738 = vmatpush1.bf16.msra.mxu0 %v5718
    %5739 = vmatprep.subr.bf16.mxu0 0
    %5740 = vmatpush1.bf16.msra.mxu0 0
    %5741 = vmatprep.subr.bf16.mxu0 0
    %5742 = vmatpush1.bf16.msra.mxu0 0
    %5743 = vmatprep.subr.bf16.mxu0 0
    %5744 = vmatpush1.bf16.msra.mxu0 0
    %5745 = vmatprep.subr.bf16.mxu0 0
    %5746 = vmatpush1.bf16.msra.mxu0 0
    %5747 = vmatprep.subr.bf16.mxu0 0
    %5748 = vmatpush1.bf16.msra.mxu0 0
    %5749 = vmatprep.subr.bf16.mxu0 0
    %5750 = vmatpush1.bf16.msra.mxu0 0
    %5751 = vmatprep.subr.bf16.mxu0 0
    %5752 = vmatpush1.bf16.msra.mxu0 0
    %5753 = vmatprep.subr.bf16.mxu0 0
    %5754 = vmatpush1.bf16.msra.mxu0 0
    %5755 = vmatprep.subr.bf16.mxu0 0
    %5756 = vmatpush1.bf16.msra.mxu0 0
    %5757 = vmatprep.subr.bf16.mxu0 0
    %5758 = vmatpush1.bf16.msra.mxu0 0
    %5759 = vmatprep.subr.bf16.mxu0 0
    %5760 = vmatpush1.bf16.msra.mxu0 0
    %5761 = vmatprep.subr.bf16.mxu0 0
    %5762 = vmatpush1.bf16.msra.mxu0 0
    %5763 = vmatprep.mubr.bf16.mxu0 0
    %5764 = vmatmul.mubr.bf16.gmra.mrb[0].mxu0 %v5729
    %v5765 = vpop.f32.mrb[0].mxu0
    %v5766 = vadd.f32 0.0, %v5765
    %v5767 = vpop.f32.mrb[0].mxu0
    %v5768 = vadd.f32 0.0, %v5767
    %v5769 = vpop.f32.mrb[0].mxu0
    %v5770 = vpop.f32.mrb[0].mxu0
    %5771 = vdwg.mxu0
    %v5772 = vadd.f32 %v5682, %v5766
    %v5773 = vadd.f32 %v5683, %v5768
    %v5774 = vtanh.pop %v5772
    %v5775 = vtanh.pop %v5773
    %v5776 = vxor.u32 %v5772, 2147483648
    %v5777 = vxor.u32 %v5773, 2147483648
    %v5778 = vmul.f32 %v5776, 1.442695
    %v5779 = vpow.pop %v5778
    %v5780 = vmul.f32 %v5777, 1.442695
    %v5781 = vpow.pop %v5780
    %v5782 = vadd.f32 %v5779, 1.0
    %v5783 = vadd.f32 %v5781, 1.0
    %v5784 = vrcp.pop %v5782
    %v5785 = vmul.f32 1.0, %v5784
    %v5786 = vrcp.pop %v5783
    %v5787 = vmul.f32 1.0, %v5786
    %v5788 = vsel %vm3931, %v5774, %v5785
    %v5789 = vsel %vm3932, %v5775, %v5787
    %v5790 = vmul.f32 %v5788, %v5672
    %v5791 = vmul.f32 %v5788, %v5789
    %5793 = vrot.lane.b32.xlu0 %v5791, 64
    %v5794 = vpop.permute.xlu0 %5793
    %v5796 = vadd.f32 %v5790, %v5794
    %v5797 = vtanh.pop %v5796
    %v5798 = vmul.f32 %v5789, %v5797
    %vm5799 = vcmp.eq.s32.totalorder %v49, 1
    %v5800 = vsel %vm5799, 1, 0
    %5801 = vset.pattern.permute.xlu0 0
    %5802 = vperm.xlu0 %5801, %v5800
    %v5803 = vpop.permute.xlu0 %5802
    %vm5804 = vcmp.eq.s32.totalorder %v5803, 1
    %v5805 = vsel %vm5804, %v5798, %v5681
    %v5806 = vld [vmem:[#allocation3] sm:$0xc]
    %v5807 = vld [vmem:[#allocation3 + $0x8] sm:$0xc]
    %v5808 = vpack.c.bf16 %v5798, %v5798
    %5810 = vrot.lane.b32.xlu0 %v5808, 64
    %v5811 = vpop.permute.xlu0 %5810
    %v5813 = vsel %vm3691, %v5811, 0
    %5815 = vmatprep.subr.bf16.mxu0 %v5713
    %5816 = vmatpush1.bf16.msra.mxu0 %v5712
    %5817 = vmatprep.subr.bf16.mxu0 %v5715
    %5818 = vmatpush1.bf16.msra.mxu0 %v5714
    %5819 = vmatprep.subr.bf16.mxu0 %v5717
    %5820 = vmatpush1.bf16.msra.mxu0 %v5716
    %5821 = vmatprep.subr.bf16.mxu0 %v5719
    %5822 = vmatpush1.bf16.msra.mxu0 %v5718
    %5823 = vmatprep.subr.bf16.mxu0 0
    %5824 = vmatpush1.bf16.msra.mxu0 0
    %5825 = vmatprep.subr.bf16.mxu0 0
    %5826 = vmatpush1.bf16.msra.mxu0 0
    %5827 = vmatprep.subr.bf16.mxu0 0
    %5828 = vmatpush1.bf16.msra.mxu0 0
    %5829 = vmatprep.subr.bf16.mxu0 0
    %5830 = vmatpush1.bf16.msra.mxu0 0
    %5831 = vmatprep.subr.bf16.mxu0 0
    %5832 = vmatpush1.bf16.msra.mxu0 0
    %5833 = vmatprep.subr.bf16.mxu0 0
    %5834 = vmatpush1.bf16.msra.mxu0 0
    %5835 = vmatprep.subr.bf16.mxu0 0
    %5836 = vmatpush1.bf16.msra.mxu0 0
    %5837 = vmatprep.subr.bf16.mxu0 0
    %5838 = vmatpush1.bf16.msra.mxu0 0
    %5839 = vmatprep.subr.bf16.mxu0 0
    %5840 = vmatpush1.bf16.msra.mxu0 0
    %5841 = vmatprep.subr.bf16.mxu0 0
    %5842 = vmatpush1.bf16.msra.mxu0 0
    %5843 = vmatprep.subr.bf16.mxu0 0
    %5844 = vmatpush1.bf16.msra.mxu0 0
    %5845 = vmatprep.subr.bf16.mxu0 0
    %5846 = vmatpush1.bf16.msra.mxu0 0
    %5847 = vmatprep.mubr.bf16.mxu0 0
    %5848 = vmatmul.mubr.bf16.gmra.mrb[0].mxu0 %v5813
    %v5849 = vpop.f32.mrb[0].mxu0
    %v5850 = vadd.f32 0.0, %v5849
    %v5851 = vpop.f32.mrb[0].mxu0
    %v5852 = vadd.f32 0.0, %v5851
    %v5853 = vpop.f32.mrb[0].mxu0
    %v5854 = vpop.f32.mrb[0].mxu0
    %5855 = vdwg.mxu0
    %v5858 = vrot.slane %v5850, 6
    %v5859 = vrot.slane %v5852, 6
    %v5862 = vadd.f32 %v5806, %v5858
    %v5863 = vadd.f32 %v5807, %v5859
    %v5864 = vtanh.pop %v5862
    %v5865 = vtanh.pop %v5863
    %v5866 = vxor.u32 %v5862, 2147483648
    %v5867 = vxor.u32 %v5863, 2147483648
    %v5868 = vmul.f32 %v5866, 1.442695
    %v5869 = vpow.pop %v5868
    %v5870 = vmul.f32 %v5867, 1.442695
    %v5871 = vpow.pop %v5870
    %v5872 = vadd.f32 %v5869, 1.0
    %v5873 = vadd.f32 %v5871, 1.0
    %v5874 = vrcp.pop %v5872
    %v5875 = vmul.f32 1.0, %v5874
    %v5876 = vrcp.pop %v5873
    %v5877 = vmul.f32 1.0, %v5876
    %v5878 = vsel %vm3931, %v5864, %v5875
    %v5879 = vsel %vm3932, %v5865, %v5877
    %v5881 = vrot.slane %v5796, 6
    %v5883 = vmul.f32 %v5878, %v5881
    %v5884 = vmul.f32 %v5878, %v5879
    %5886 = vrot.lane.b32.xlu0 %v5884, 64
    %v5887 = vpop.permute.xlu0 %5886
    %v5889 = vadd.f32 %v5883, %v5887
    %v5890 = vtanh.pop %v5889
    %v5891 = vmul.f32 %v5879, %v5890
    %vm5892 = vcmp.eq.s32.totalorder %v49, 2
    %v5893 = vsel %vm5892, 1, 0
    %5894 = vset.pattern.permute.xlu0 0
    %5895 = vperm.xlu0 %5894, %v5893
    %v5896 = vpop.permute.xlu0 %5895
    %vm5897 = vcmp.eq.s32.totalorder %v5896, 1
    %v5899 = vrot.slane %v5891, 2
    %5900 = vrot.lane.b32.xlu0 %v5899, 64
    %v5901 = vpop.permute.xlu0 %5900
    %5904 = vrot.lane.b32.xlu0 %v5805, 64
    %v5905 = vpop.permute.xlu0 %5904
    %v5907 = vsel %vm5897, %v5901, %v5905
    %v5908 = vld [vmem:[#allocation3] sm:$0x30]
    %v5909 = vld [vmem:[#allocation3 + $0x8] sm:$0x30]
    %v5910 = vpack.c.bf16 %v5891, %v5891
    %v5912 = vrot.slane %v5910, 1
    %5913 = vrot.lane.b32.xlu0 %v5912, 64
    %v5914 = vpop.permute.xlu0 %5913
    %v5916 = vsel %vm3691, %v5914, 0
    %5918 = vmatprep.subr.bf16.mxu0 %v5713
    %5919 = vmatpush1.bf16.msra.mxu0 %v5712
    %5920 = vmatprep.subr.bf16.mxu0 %v5715
    %5921 = vmatpush1.bf16.msra.mxu0 %v5714
    %5922 = vmatprep.subr.bf16.mxu0 %v5717
    %5923 = vmatpush1.bf16.msra.mxu0 %v5716
    %5924 = vmatprep.subr.bf16.mxu0 %v5719
    %5925 = vmatpush1.bf16.msra.mxu0 %v5718
    %5926 = vmatprep.subr.bf16.mxu0 0
    %5927 = vmatpush1.bf16.msra.mxu0 0
    %5928 = vmatprep.subr.bf16.mxu0 0
    %5929 = vmatpush1.bf16.msra.mxu0 0
    %5930 = vmatprep.subr.bf16.mxu0 0
    %5931 = vmatpush1.bf16.msra.mxu0 0
    %5932 = vmatprep.subr.bf16.mxu0 0
    %5933 = vmatpush1.bf16.msra.mxu0 0
    %5934 = vmatprep.subr.bf16.mxu0 0
    %5935 = vmatpush1.bf16.msra.mxu0 0
    %5936 = vmatprep.subr.bf16.mxu0 0
    %5937 = vmatpush1.bf16.msra.mxu0 0
    %5938 = vmatprep.subr.bf16.mxu0 0
    %5939 = vmatpush1.bf16.msra.mxu0 0
    %5940 = vmatprep.subr.bf16.mxu0 0
    %5941 = vmatpush1.bf16.msra.mxu0 0
    %5942 = vmatprep.subr.bf16.mxu0 0
    %5943 = vmatpush1.bf16.msra.mxu0 0
    %5944 = vmatprep.subr.bf16.mxu0 0
    %5945 = vmatpush1.bf16.msra.mxu0 0
    %5946 = vmatprep.subr.bf16.mxu0 0
    %5947 = vmatpush1.bf16.msra.mxu0 0
    %5948 = vmatprep.subr.bf16.mxu0 0
    %5949 = vmatpush1.bf16.msra.mxu0 0
    %5950 = vmatprep.mubr.bf16.mxu0 0
    %5951 = vmatmul.mubr.bf16.gmra.mrb[0].mxu0 %v5916
    %v5952 = vpop.f32.mrb[0].mxu0
    %v5953 = vadd.f32 0.0, %v5952
    %v5954 = vpop.f32.mrb[0].mxu0
    %v5955 = vadd.f32 0.0, %v5954
    %v5956 = vpop.f32.mrb[0].mxu0
    %v5957 = vpop.f32.mrb[0].mxu0
    %5958 = vdwg.mxu0
    %v5961 = vrot.slane %v5953, 4
    %v5962 = vrot.slane %v5955, 4
    %v5965 = vadd.f32 %v5908, %v5961
    %v5966 = vadd.f32 %v5909, %v5962
    %v5967 = vtanh.pop %v5965
    %v5968 = vtanh.pop %v5966
    %v5969 = vxor.u32 %v5965, 2147483648
    %v5970 = vxor.u32 %v5966, 2147483648
    %v5971 = vmul.f32 %v5969, 1.442695
    %v5972 = vpow.pop %v5971
    %v5973 = vmul.f32 %v5970, 1.442695
    %v5974 = vpow.pop %v5973
    %v5975 = vadd.f32 %v5972, 1.0
    %v5976 = vadd.f32 %v5974, 1.0
    %v5977 = vrcp.pop %v5975
    %v5978 = vmul.f32 1.0, %v5977
    %v5979 = vrcp.pop %v5976
    %v5980 = vmul.f32 1.0, %v5979
    %v5981 = vsel %vm3931, %v5967, %v5978
    %v5982 = vsel %vm3932, %v5968, %v5980
    %v5984 = vrot.slane %v5889, 6
    %v5986 = vmul.f32 %v5981, %v5984
    %v5987 = vmul.f32 %v5981, %v5982
    %5989 = vrot.lane.b32.xlu0 %v5987, 64
    %v5990 = vpop.permute.xlu0 %5989
    %v5992 = vadd.f32 %v5986, %v5990
    %v5993 = vtanh.pop %v5992
    %v5994 = vmul.f32 %v5982, %v5993
    %vm5995 = vcmp.eq.s32.totalorder %v49, 3
    %v5996 = vsel %vm5995, 1, 0
    %5997 = vset.pattern.permute.xlu0 0
    %5998 = vperm.xlu0 %5997, %v5996
    %v5999 = vpop.permute.xlu0 %5998
    %vm6000 = vcmp.eq.s32.totalorder %v5999, 1
    %v6002 = vrot.slane %v5994, 4
    %6003 = vrot.lane.b32.xlu0 %v6002, 64
    %v6004 = vpop.permute.xlu0 %6003
    %v6006 = vsel %vm6000, %v6004, %v5907
    %v6007 = vld [vmem:[#allocation3] sm:$0xc0]
    %v6008 = vld [vmem:[#allocation3 + $0x8] sm:$0xc0]
    %v6009 = vpack.c.bf16 %v5994, %v5994
    %v6011 = vrot.slane %v6009, 2
    %6012 = vrot.lane.b32.xlu0 %v6011, 64
    %v6013 = vpop.permute.xlu0 %6012
    %v6015 = vsel %vm3691, %v6013, 0
    %6017 = vmatprep.subr.bf16.mxu0 %v5713
    %6018 = vmatpush1.bf16.msra.mxu0 %v5712
    %6019 = vmatprep.subr.bf16.mxu0 %v5715
    %6020 = vmatpush1.bf16.msra.mxu0 %v5714
    %6021 = vmatprep.subr.bf16.mxu0 %v5717
    %6022 = vmatpush1.bf16.msra.mxu0 %v5716
    %6023 = vmatprep.subr.bf16.mxu0 %v5719
    %6024 = vmatpush1.bf16.msra.mxu0 %v5718
    %6025 = vmatprep.subr.bf16.mxu0 0
    %6026 = vmatpush1.bf16.msra.mxu0 0
    %6027 = vmatprep.subr.bf16.mxu0 0
    %6028 = vmatpush1.bf16.msra.mxu0 0
    %6029 = vmatprep.subr.bf16.mxu0 0
    %6030 = vmatpush1.bf16.msra.mxu0 0
    %6031 = vmatprep.subr.bf16.mxu0 0
    %6032 = vmatpush1.bf16.msra.mxu0 0
    %6033 = vmatprep.subr.bf16.mxu0 0
    %6034 = vmatpush1.bf16.msra.mxu0 0
    %6035 = vmatprep.subr.bf16.mxu0 0
    %6036 = vmatpush1.bf16.msra.mxu0 0
    %6037 = vmatprep.subr.bf16.mxu0 0
    %6038 = vmatpush1.bf16.msra.mxu0 0
    %6039 = vmatprep.subr.bf16.mxu0 0
    %6040 = vmatpush1.bf16.msra.mxu0 0
    %6041 = vmatprep.subr.bf16.mxu0 0
    %6042 = vmatpush1.bf16.msra.mxu0 0
    %6043 = vmatprep.subr.bf16.mxu0 0
    %6044 = vmatpush1.bf16.msra.mxu0 0
    %6045 = vmatprep.subr.bf16.mxu0 0
    %6046 = vmatpush1.bf16.msra.mxu0 0
    %6047 = vmatprep.subr.bf16.mxu0 0
    %6048 = vmatpush1.bf16.msra.mxu0 0
    %6049 = vmatprep.mubr.bf16.mxu0 0
    %6050 = vmatmul.mubr.bf16.gmra.mrb[0].mxu0 %v6015
    %v6051 = vpop.f32.mrb[0].mxu0
    %v6052 = vadd.f32 0.0, %v6051
    %v6053 = vpop.f32.mrb[0].mxu0
    %v6054 = vadd.f32 0.0, %v6053
    %v6055 = vpop.f32.mrb[0].mxu0
    %v6056 = vpop.f32.mrb[0].mxu0
    %6057 = vdwg.mxu0
    %v6060 = vrot.slane %v6052, 2
    %v6061 = vrot.slane %v6054, 2
    %v6064 = vadd.f32 %v6007, %v6060
    %v6065 = vadd.f32 %v6008, %v6061
    %v6066 = vtanh.pop %v6064
    %v6067 = vtanh.pop %v6065
    %v6068 = vxor.u32 %v6064, 2147483648
    %v6069 = vxor.u32 %v6065, 2147483648
    %v6070 = vmul.f32 %v6068, 1.442695
    %v6071 = vpow.pop %v6070
    %v6072 = vmul.f32 %v6069, 1.442695
    %v6073 = vpow.pop %v6072
    %v6074 = vadd.f32 %v6071, 1.0
    %v6075 = vadd.f32 %v6073, 1.0
    %v6076 = vrcp.pop %v6074
    %v6077 = vmul.f32 1.0, %v6076
    %v6078 = vrcp.pop %v6075
    %v6079 = vmul.f32 1.0, %v6078
    %v6080 = vsel %vm3931, %v6066, %v6077
    %v6081 = vsel %vm3932, %v6067, %v6079
    %v6083 = vrot.slane %v5992, 6
    %v6085 = vmul.f32 %v6080, %v6083
    %v6086 = vmul.f32 %v6080, %v6081
    %6088 = vrot.lane.b32.xlu0 %v6086, 64
    %v6089 = vpop.permute.xlu0 %6088
    %v6091 = vadd.f32 %v6085, %v6089
    %v6092 = vtanh.pop %v6091
    %v6093 = vmul.f32 %v6081, %v6092
    %vm6094 = vcmp.eq.s32.totalorder %v49, 4
    %v6095 = vsel %vm6094, 1, 0
    %6096 = vset.pattern.permute.xlu0 0
    %6097 = vperm.xlu0 %6096, %v6095
    %v6098 = vpop.permute.xlu0 %6097
    %vm6099 = vcmp.eq.s32.totalorder %v6098, 1
    %v6101 = vrot.slane %v6093, 6
    %6102 = vrot.lane.b32.xlu0 %v6101, 64
    %v6103 = vpop.permute.xlu0 %6102
    %v6105 = vsel %vm6099, %v6103, %v6006
    %v6106 = vld [vmem:[#allocation3 + $0x10] sm:$0x3]
    %v6107 = vld [vmem:[#allocation3 + $0x18] sm:$0x3]
    %v6108 = vpack.c.bf16 %v6093, %v6093
    %v6110 = vrot.slane %v6108, 3
    %6111 = vrot.lane.b32.xlu0 %v6110, 64
    %v6112 = vpop.permute.xlu0 %6111
    %v6114 = vsel %vm3691, %v6112, 0
    %6116 = vmatprep.subr.bf16.mxu0 %v5713
    %6117 = vmatpush1.bf16.msra.mxu0 %v5712
    %6118 = vmatprep.subr.bf16.mxu0 %v5715
    %6119 = vmatpush1.bf16.msra.mxu0 %v5714
    %6120 = vmatprep.subr.bf16.mxu0 %v5717
    %6121 = vmatpush1.bf16.msra.mxu0 %v5716
    %6122 = vmatprep.subr.bf16.mxu0 %v5719
    %6123 = vmatpush1.bf16.msra.mxu0 %v5718
    %6124 = vmatprep.subr.bf16.mxu0 0
    %6125 = vmatpush1.bf16.msra.mxu0 0
    %6126 = vmatprep.subr.bf16.mxu0 0
    %6127 = vmatpush1.bf16.msra.mxu0 0
    %6128 = vmatprep.subr.bf16.mxu0 0
    %6129 = vmatpush1.bf16.msra.mxu0 0
    %6130 = vmatprep.subr.bf16.mxu0 0
    %6131 = vmatpush1.bf16.msra.mxu0 0
    %6132 = vmatprep.subr.bf16.mxu0 0
    %6133 = vmatpush1.bf16.msra.mxu0 0
    %6134 = vmatprep.subr.bf16.mxu0 0
    %6135 = vmatpush1.bf16.msra.mxu0 0
    %6136 = vmatprep.subr.bf16.mxu0 0
    %6137 = vmatpush1.bf16.msra.mxu0 0
    %6138 = vmatprep.subr.bf16.mxu0 0
    %6139 = vmatpush1.bf16.msra.mxu0 0
    %6140 = vmatprep.subr.bf16.mxu0 0
    %6141 = vmatpush1.bf16.msra.mxu0 0
    %6142 = vmatprep.subr.bf16.mxu0 0
    %6143 = vmatpush1.bf16.msra.mxu0 0
    %6144 = vmatprep.subr.bf16.mxu0 0
    %6145 = vmatpush1.bf16.msra.mxu0 0
    %6146 = vmatprep.subr.bf16.mxu0 0
    %6147 = vmatpush1.bf16.msra.mxu0 0
    %6148 = vmatprep.mubr.bf16.mxu0 0
    %6149 = vmatmul.mubr.bf16.gmra.mrb[0].mxu0 %v6114
    %v6150 = vpop.f32.mrb[0].mxu0
    %v6151 = vadd.f32 0.0, %v6150
    %v6152 = vpop.f32.mrb[0].mxu0
    %v6153 = vadd.f32 0.0, %v6152
    %v6154 = vpop.f32.mrb[0].mxu0
    %v6155 = vpop.f32.mrb[0].mxu0
    %6156 = vdwg.mxu0
    %v6157 = vadd.f32 %v6106, %v6151
    %v6158 = vadd.f32 %v6107, %v6153
    %v6159 = vtanh.pop %v6157
    %v6160 = vtanh.pop %v6158
    %v6161 = vxor.u32 %v6157, 2147483648
    %v6162 = vxor.u32 %v6158, 2147483648
    %v6163 = vmul.f32 %v6161, 1.442695
    %v6164 = vpow.pop %v6163
    %v6165 = vmul.f32 %v6162, 1.442695
    %v6166 = vpow.pop %v6165
    %v6167 = vadd.f32 %v6164, 1.0
    %v6168 = vadd.f32 %v6166, 1.0
    %v6169 = vrcp.pop %v6167
    %v6170 = vmul.f32 1.0, %v6169
    %v6171 = vrcp.pop %v6168
    %v6172 = vmul.f32 1.0, %v6171
    %v6173 = vsel %vm3931, %v6159, %v6170
    %v6174 = vsel %vm3932, %v6160, %v6172
    %v6176 = vrot.slane %v6091, 6
    %v6178 = vmul.f32 %v6173, %v6176
    %v6179 = vmul.f32 %v6173, %v6174
    %6181 = vrot.lane.b32.xlu0 %v6179, 64
    %v6182 = vpop.permute.xlu0 %6181
    %v6184 = vadd.f32 %v6178, %v6182
    %v6185 = vtanh.pop %v6184
    %v6186 = vmul.f32 %v6174, %v6185
    %vm6187 = vcmp.eq.s32.totalorder %v49, 5
    %v6188 = vsel %vm6187, 1, 0
    %6189 = vset.pattern.permute.xlu0 0
    %6190 = vperm.xlu0 %6189, %v6188
    %v6191 = vpop.permute.xlu0 %6190
    %vm6192 = vcmp.eq.s32.totalorder %v6191, 1
    %6194 = vrot.lane.b32.xlu0 %v6105, 64
    %v6195 = vpop.permute.xlu0 %6194
    %v6197 = vsel %vm6192, %v6186, %v6195
    %v6198 = vld [vmem:[#allocation3 + $0x10] sm:$0xc]
    %v6199 = vld [vmem:[#allocation3 + $0x18] sm:$0xc]
    %v6200 = vpack.c.bf16 %v6186, %v6186
    %6202 = vrot.lane.b32.xlu0 %v6200, 64
    %v6203 = vpop.permute.xlu0 %6202
    %v6205 = vsel %vm3691, %v6203, 0
    %6207 = vmatprep.subr.bf16.mxu0 %v5713
    %6208 = vmatpush1.bf16.msra.mxu0 %v5712
    %6209 = vmatprep.subr.bf16.mxu0 %v5715
    %6210 = vmatpush1.bf16.msra.mxu0 %v5714
    %6211 = vmatprep.subr.bf16.mxu0 %v5717
    %6212 = vmatpush1.bf16.msra.mxu0 %v5716
    %6213 = vmatprep.subr.bf16.mxu0 %v5719
    %6214 = vmatpush1.bf16.msra.mxu0 %v5718
    %6215 = vmatprep.subr.bf16.mxu0 0
    %6216 = vmatpush1.bf16.msra.mxu0 0
    %6217 = vmatprep.subr.bf16.mxu0 0
    %6218 = vmatpush1.bf16.msra.mxu0 0
    %6219 = vmatprep.subr.bf16.mxu0 0
    %6220 = vmatpush1.bf16.msra.mxu0 0
    %6221 = vmatprep.subr.bf16.mxu0 0
    %6222 = vmatpush1.bf16.msra.mxu0 0
    %6223 = vmatprep.subr.bf16.mxu0 0
    %6224 = vmatpush1.bf16.msra.mxu0 0
    %6225 = vmatprep.subr.bf16.mxu0 0
    %6226 = vmatpush1.bf16.msra.mxu0 0
    %6227 = vmatprep.subr.bf16.mxu0 0
    %6228 = vmatpush1.bf16.msra.mxu0 0
    %6229 = vmatprep.subr.bf16.mxu0 0
    %6230 = vmatpush1.bf16.msra.mxu0 0
    %6231 = vmatprep.subr.bf16.mxu0 0
    %6232 = vmatpush1.bf16.msra.mxu0 0
    %6233 = vmatprep.subr.bf16.mxu0 0
    %6234 = vmatpush1.bf16.msra.mxu0 0
    %6235 = vmatprep.subr.bf16.mxu0 0
    %6236 = vmatpush1.bf16.msra.mxu0 0
    %6237 = vmatprep.subr.bf16.mxu0 0
    %6238 = vmatpush1.bf16.msra.mxu0 0
    %6239 = vmatprep.mubr.bf16.mxu0 0
    %6240 = vmatmul.mubr.bf16.gmra.mrb[0].mxu0 %v6205
    %v6241 = vpop.f32.mrb[0].mxu0
    %v6242 = vadd.f32 0.0, %v6241
    %v6243 = vpop.f32.mrb[0].mxu0
    %v6244 = vadd.f32 0.0, %v6243
    %v6245 = vpop.f32.mrb[0].mxu0
    %v6246 = vpop.f32.mrb[0].mxu0
    %6247 = vdwg.mxu0
    %v6250 = vrot.slane %v6242, 6
    %v6251 = vrot.slane %v6244, 6
    %v6254 = vadd.f32 %v6198, %v6250
    %v6255 = vadd.f32 %v6199, %v6251
    %v6256 = vtanh.pop %v6254
    %v6257 = vtanh.pop %v6255
    %v6258 = vxor.u32 %v6254, 2147483648
    %v6259 = vxor.u32 %v6255, 2147483648
    %v6260 = vmul.f32 %v6258, 1.442695
    %v6261 = vpow.pop %v6260
    %v6262 = vmul.f32 %v6259, 1.442695
    %v6263 = vpow.pop %v6262
    %v6264 = vadd.f32 %v6261, 1.0
    %v6265 = vadd.f32 %v6263, 1.0
    %v6266 = vrcp.pop %v6264
    %v6267 = vmul.f32 1.0, %v6266
    %v6268 = vrcp.pop %v6265
    %v6269 = vmul.f32 1.0, %v6268
    %v6270 = vsel %vm3931, %v6256, %v6267
    %v6271 = vsel %vm3932, %v6257, %v6269
    %v6273 = vrot.slane %v6184, 6
    %v6275 = vmul.f32 %v6270, %v6273
    %v6276 = vmul.f32 %v6270, %v6271
    %6278 = vrot.lane.b32.xlu0 %v6276, 64
    %v6279 = vpop.permute.xlu0 %6278
    %v6281 = vadd.f32 %v6275, %v6279
    %v6282 = vtanh.pop %v6281
    %v6283 = vmul.f32 %v6271, %v6282
    %vm6284 = vcmp.eq.s32.totalorder %v49, 6
    %v6285 = vsel %vm6284, 1, 0
    %6286 = vset.pattern.permute.xlu0 0
    %6287 = vperm.xlu0 %6286, %v6285
    %v6288 = vpop.permute.xlu0 %6287
    %vm6289 = vcmp.eq.s32.totalorder %v6288, 1
    %v6291 = vrot.slane %v6283, 2
    %6292 = vrot.lane.b32.xlu0 %v6291, 64
    %v6293 = vpop.permute.xlu0 %6292
    %6296 = vrot.lane.b32.xlu0 %v6197, 64
    %v6297 = vpop.permute.xlu0 %6296
    %v6299 = vsel %vm6289, %v6293, %v6297
    %v6300 = vld [vmem:[#allocation3 + $0x10] sm:$0x30]
    %v6301 = vld [vmem:[#allocation3 + $0x18] sm:$0x30]
    %v6302 = vpack.c.bf16 %v6283, %v6283
    %v6304 = vrot.slane %v6302, 1
    %6305 = vrot.lane.b32.xlu0 %v6304, 64
    %v6306 = vpop.permute.xlu0 %6305
    %v6308 = vsel %vm3691, %v6306, 0
    %6310 = vmatprep.subr.bf16.mxu0 %v5713
    %6311 = vmatpush1.bf16.msra.mxu0 %v5712
    %6312 = vmatprep.subr.bf16.mxu0 %v5715
    %6313 = vmatpush1.bf16.msra.mxu0 %v5714
    %6314 = vmatprep.subr.bf16.mxu0 %v5717
    %6315 = vmatpush1.bf16.msra.mxu0 %v5716
    %6316 = vmatprep.subr.bf16.mxu0 %v5719
    %6317 = vmatpush1.bf16.msra.mxu0 %v5718
    %6318 = vmatprep.subr.bf16.mxu0 0
    %6319 = vmatpush1.bf16.msra.mxu0 0
    %6320 = vmatprep.subr.bf16.mxu0 0
    %6321 = vmatpush1.bf16.msra.mxu0 0
    %6322 = vmatprep.subr.bf16.mxu0 0
    %6323 = vmatpush1.bf16.msra.mxu0 0
    %6324 = vmatprep.subr.bf16.mxu0 0
    %6325 = vmatpush1.bf16.msra.mxu0 0
    %6326 = vmatprep.subr.bf16.mxu0 0
    %6327 = vmatpush1.bf16.msra.mxu0 0
    %6328 = vmatprep.subr.bf16.mxu0 0
    %6329 = vmatpush1.bf16.msra.mxu0 0
    %6330 = vmatprep.subr.bf16.mxu0 0
    %6331 = vmatpush1.bf16.msra.mxu0 0
    %6332 = vmatprep.subr.bf16.mxu0 0
    %6333 = vmatpush1.bf16.msra.mxu0 0
    %6334 = vmatprep.subr.bf16.mxu0 0
    %6335 = vmatpush1.bf16.msra.mxu0 0
    %6336 = vmatprep.subr.bf16.mxu0 0
    %6337 = vmatpush1.bf16.msra.mxu0 0
    %6338 = vmatprep.subr.bf16.mxu0 0
    %6339 = vmatpush1.bf16.msra.mxu0 0
    %6340 = vmatprep.subr.bf16.mxu0 0
    %6341 = vmatpush1.bf16.msra.mxu0 0
    %6342 = vmatprep.mubr.bf16.mxu0 0
    %6343 = vmatmul.mubr.bf16.gmra.mrb[0].mxu0 %v6308
    %v6344 = vpop.f32.mrb[0].mxu0
    %v6345 = vadd.f32 0.0, %v6344
    %v6346 = vpop.f32.mrb[0].mxu0
    %v6347 = vadd.f32 0.0, %v6346
    %v6348 = vpop.f32.mrb[0].mxu0
    %v6349 = vpop.f32.mrb[0].mxu0
    %6350 = vdwg.mxu0
    %v6353 = vrot.slane %v6345, 4
    %v6354 = vrot.slane %v6347, 4
    %v6357 = vadd.f32 %v6300, %v6353
    %v6358 = vadd.f32 %v6301, %v6354
    %v6359 = vtanh.pop %v6357
    %v6360 = vtanh.pop %v6358
    %v6361 = vxor.u32 %v6357, 2147483648
    %v6362 = vxor.u32 %v6358, 2147483648
    %v6363 = vmul.f32 %v6361, 1.442695
    %v6364 = vpow.pop %v6363
    %v6365 = vmul.f32 %v6362, 1.442695
    %v6366 = vpow.pop %v6365
    %v6367 = vadd.f32 %v6364, 1.0
    %v6368 = vadd.f32 %v6366, 1.0
    %v6369 = vrcp.pop %v6367
    %v6370 = vmul.f32 1.0, %v6369
    %v6371 = vrcp.pop %v6368
    %v6372 = vmul.f32 1.0, %v6371
    %v6373 = vsel %vm3931, %v6359, %v6370
    %v6374 = vsel %vm3932, %v6360, %v6372
    %v6376 = vrot.slane %v6281, 6
    %v6378 = vmul.f32 %v6373, %v6376
    %v6379 = vmul.f32 %v6373, %v6374
    %6381 = vrot.lane.b32.xlu0 %v6379, 64
    %v6382 = vpop.permute.xlu0 %6381
    %v6384 = vadd.f32 %v6378, %v6382
    %v6385 = vtanh.pop %v6384
    %v6386 = vmul.f32 %v6374, %v6385
    %vm6387 = vcmp.eq.s32.totalorder %v49, 7
    %v6388 = vsel %vm6387, 1, 0
    %6389 = vset.pattern.permute.xlu0 0
    %6390 = vperm.xlu0 %6389, %v6388
    %v6391 = vpop.permute.xlu0 %6390
    %vm6392 = vcmp.eq.s32.totalorder %v6391, 1
    %v6394 = vrot.slane %v6386, 4
    %6395 = vrot.lane.b32.xlu0 %v6394, 64
    %v6396 = vpop.permute.xlu0 %6395
    %v6398 = vsel %vm6392, %v6396, %v6299
    %v6399 = vld [vmem:[#allocation3 + $0x10] sm:$0xc0]
    %v6400 = vld [vmem:[#allocation3 + $0x18] sm:$0xc0]
    %v6401 = vpack.c.bf16 %v6386, %v6386
    %v6403 = vrot.slane %v6401, 2
    %6404 = vrot.lane.b32.xlu0 %v6403, 64
    %v6405 = vpop.permute.xlu0 %6404
    %v6407 = vsel %vm3691, %v6405, 0
    %6409 = vmatprep.subr.bf16.mxu0 %v5713
    %6410 = vmatpush1.bf16.msra.mxu0 %v5712
    %6411 = vmatprep.subr.bf16.mxu0 %v5715
    %6412 = vmatpush1.bf16.msra.mxu0 %v5714
    %6413 = vmatprep.subr.bf16.mxu0 %v5717
    %6414 = vmatpush1.bf16.msra.mxu0 %v5716
    %6415 = vmatprep.subr.bf16.mxu0 %v5719
    %6416 = vmatpush1.bf16.msra.mxu0 %v5718
    %6417 = vmatprep.subr.bf16.mxu0 0
    %6418 = vmatpush1.bf16.msra.mxu0 0
    %6419 = vmatprep.subr.bf16.mxu0 0
    %6420 = vmatpush1.bf16.msra.mxu0 0
    %6421 = vmatprep.subr.bf16.mxu0 0
    %6422 = vmatpush1.bf16.msra.mxu0 0
    %6423 = vmatprep.subr.bf16.mxu0 0
    %6424 = vmatpush1.bf16.msra.mxu0 0
    %6425 = vmatprep.subr.bf16.mxu0 0
    %6426 = vmatpush1.bf16.msra.mxu0 0
    %6427 = vmatprep.subr.bf16.mxu0 0
    %6428 = vmatpush1.bf16.msra.mxu0 0
    %6429 = vmatprep.subr.bf16.mxu0 0
    %6430 = vmatpush1.bf16.msra.mxu0 0
    %6431 = vmatprep.subr.bf16.mxu0 0
    %6432 = vmatpush1.bf16.msra.mxu0 0
    %6433 = vmatprep.subr.bf16.mxu0 0
    %6434 = vmatpush1.bf16.msra.mxu0 0
    %6435 = vmatprep.subr.bf16.mxu0 0
    %6436 = vmatpush1.bf16.msra.mxu0 0
    %6437 = vmatprep.subr.bf16.mxu0 0
    %6438 = vmatpush1.bf16.msra.mxu0 0
    %6439 = vmatprep.subr.bf16.mxu0 0
    %6440 = vmatpush1.bf16.msra.mxu0 0
    %6441 = vmatprep.mubr.bf16.mxu0 0
    %6442 = vmatmul.mubr.bf16.gmra.mrb[0].mxu0 %v6407
    %v6443 = vpop.f32.mrb[0].mxu0
    %v6444 = vadd.f32 0.0, %v6443
    %v6445 = vpop.f32.mrb[0].mxu0
    %v6446 = vadd.f32 0.0, %v6445
    %v6447 = vpop.f32.mrb[0].mxu0
    %v6448 = vpop.f32.mrb[0].mxu0
    %6449 = vdwg.mxu0
    %v6452 = vrot.slane %v6444, 2
    %v6453 = vrot.slane %v6446, 2
    %v6456 = vadd.f32 %v6399, %v6452
    %v6457 = vadd.f32 %v6400, %v6453
    %v6458 = vtanh.pop %v6456
    %v6459 = vtanh.pop %v6457
    %v6460 = vxor.u32 %v6456, 2147483648
    %v6461 = vxor.u32 %v6457, 2147483648
    %v6462 = vmul.f32 %v6460, 1.442695
    %v6463 = vpow.pop %v6462
    %v6464 = vmul.f32 %v6461, 1.442695
    %v6465 = vpow.pop %v6464
    %v6466 = vadd.f32 %v6463, 1.0
    %v6467 = vadd.f32 %v6465, 1.0
    %v6468 = vrcp.pop %v6466
    %v6469 = vmul.f32 1.0, %v6468
    %v6470 = vrcp.pop %v6467
    %v6471 = vmul.f32 1.0, %v6470
    %v6472 = vsel %vm3931, %v6458, %v6469
    %v6473 = vsel %vm3932, %v6459, %v6471
    %v6475 = vrot.slane %v6384, 6
    %v6477 = vmul.f32 %v6472, %v6475
    %v6478 = vmul.f32 %v6472, %v6473
    %6480 = vrot.lane.b32.xlu0 %v6478, 64
    %v6481 = vpop.permute.xlu0 %6480
    %v6483 = vadd.f32 %v6477, %v6481
    %v6484 = vtanh.pop %v6483
    %v6485 = vmul.f32 %v6473, %v6484
    %vm6486 = vcmp.eq.s32.totalorder %v49, 8
    %v6487 = vsel %vm6486, 1, 0
    %6488 = vset.pattern.permute.xlu0 0
    %6489 = vperm.xlu0 %6488, %v6487
    %v6490 = vpop.permute.xlu0 %6489
    %vm6491 = vcmp.eq.s32.totalorder %v6490, 1
    %v6493 = vrot.slane %v6485, 6
    %6494 = vrot.lane.b32.xlu0 %v6493, 64
    %v6495 = vpop.permute.xlu0 %6494
    %v6497 = vsel %vm6491, %v6495, %v6398
    %v6498 = vld [vmem:[#allocation3 + $0x20] sm:$0x3]
    %v6499 = vld [vmem:[#allocation3 + $0x28] sm:$0x3]
    %v6500 = vpack.c.bf16 %v6485, %v6485
    %v6502 = vrot.slane %v6500, 3
    %6503 = vrot.lane.b32.xlu0 %v6502, 64
    %v6504 = vpop.permute.xlu0 %6503
    %v6506 = vsel %vm3691, %v6504, 0
    %6508 = vmatprep.subr.bf16.mxu0 %v5713
    %6509 = vmatpush1.bf16.msra.mxu0 %v5712
    %6510 = vmatprep.subr.bf16.mxu0 %v5715
    %6511 = vmatpush1.bf16.msra.mxu0 %v5714
    %6512 = vmatprep.subr.bf16.mxu0 %v5717
    %6513 = vmatpush1.bf16.msra.mxu0 %v5716
    %6514 = vmatprep.subr.bf16.mxu0 %v5719
    %6515 = vmatpush1.bf16.msra.mxu0 %v5718
    %6516 = vmatprep.subr.bf16.mxu0 0
    %6517 = vmatpush1.bf16.msra.mxu0 0
    %6518 = vmatprep.subr.bf16.mxu0 0
    %6519 = vmatpush1.bf16.msra.mxu0 0
    %6520 = vmatprep.subr.bf16.mxu0 0
    %6521 = vmatpush1.bf16.msra.mxu0 0
    %6522 = vmatprep.subr.bf16.mxu0 0
    %6523 = vmatpush1.bf16.msra.mxu0 0
    %6524 = vmatprep.subr.bf16.mxu0 0
    %6525 = vmatpush1.bf16.msra.mxu0 0
    %6526 = vmatprep.subr.bf16.mxu0 0
    %6527 = vmatpush1.bf16.msra.mxu0 0
    %6528 = vmatprep.subr.bf16.mxu0 0
    %6529 = vmatpush1.bf16.msra.mxu0 0
    %6530 = vmatprep.subr.bf16.mxu0 0
    %6531 = vmatpush1.bf16.msra.mxu0 0
    %6532 = vmatprep.subr.bf16.mxu0 0
    %6533 = vmatpush1.bf16.msra.mxu0 0
    %6534 = vmatprep.subr.bf16.mxu0 0
    %6535 = vmatpush1.bf16.msra.mxu0 0
    %6536 = vmatprep.subr.bf16.mxu0 0
    %6537 = vmatpush1.bf16.msra.mxu0 0
    %6538 = vmatprep.subr.bf16.mxu0 0
    %6539 = vmatpush1.bf16.msra.mxu0 0
    %6540 = vmatprep.mubr.bf16.mxu0 0
    %6541 = vmatmul.mubr.bf16.gmra.mrb[0].mxu0 %v6506
    %v6542 = vpop.f32.mrb[0].mxu0
    %v6543 = vadd.f32 0.0, %v6542
    %v6544 = vpop.f32.mrb[0].mxu0
    %v6545 = vadd.f32 0.0, %v6544
    %v6546 = vpop.f32.mrb[0].mxu0
    %v6547 = vpop.f32.mrb[0].mxu0
    %6548 = vdwg.mxu0
    %v6549 = vadd.f32 %v6498, %v6543
    %v6550 = vadd.f32 %v6499, %v6545
    %v6551 = vtanh.pop %v6549
    %v6552 = vtanh.pop %v6550
    %v6553 = vxor.u32 %v6549, 2147483648
    %v6554 = vxor.u32 %v6550, 2147483648
    %v6555 = vmul.f32 %v6553, 1.442695
    %v6556 = vpow.pop %v6555
    %v6557 = vmul.f32 %v6554, 1.442695
    %v6558 = vpow.pop %v6557
    %v6559 = vadd.f32 %v6556, 1.0
    %v6560 = vadd.f32 %v6558, 1.0
    %v6561 = vrcp.pop %v6559
    %v6562 = vmul.f32 1.0, %v6561
    %v6563 = vrcp.pop %v6560
    %v6564 = vmul.f32 1.0, %v6563
    %v6565 = vsel %vm3931, %v6551, %v6562
    %v6566 = vsel %vm3932, %v6552, %v6564
    %v6568 = vrot.slane %v6483, 6
    %v6570 = vmul.f32 %v6565, %v6568
    %v6571 = vmul.f32 %v6565, %v6566
    %6573 = vrot.lane.b32.xlu0 %v6571, 64
    %v6574 = vpop.permute.xlu0 %6573
    %v6576 = vadd.f32 %v6570, %v6574
    %v6577 = vtanh.pop %v6576
    %v6578 = vmul.f32 %v6566, %v6577
    %vm6579 = vcmp.eq.s32.totalorder %v49, 9
    %v6580 = vsel %vm6579, 1, 0
    %6581 = vset.pattern.permute.xlu0 0
    %6582 = vperm.xlu0 %6581, %v6580
    %v6583 = vpop.permute.xlu0 %6582
    %vm6584 = vcmp.eq.s32.totalorder %v6583, 1
    %6586 = vrot.lane.b32.xlu0 %v6497, 64
    %v6587 = vpop.permute.xlu0 %6586
    %v6589 = vsel %vm6584, %v6578, %v6587
    %v6590 = vld [vmem:[#allocation3 + $0x20] sm:$0xc]
    %v6591 = vld [vmem:[#allocation3 + $0x28] sm:$0xc]
    %v6592 = vpack.c.bf16 %v6578, %v6578
    %6594 = vrot.lane.b32.xlu0 %v6592, 64
    %v6595 = vpop.permute.xlu0 %6594
    %v6597 = vsel %vm3691, %v6595, 0
    %6599 = vmatprep.subr.bf16.mxu0 %v5713
    %6600 = vmatpush1.bf16.msra.mxu0 %v5712
    %6601 = vmatprep.subr.bf16.mxu0 %v5715
    %6602 = vmatpush1.bf16.msra.mxu0 %v5714
    %6603 = vmatprep.subr.bf16.mxu0 %v5717
    %6604 = vmatpush1.bf16.msra.mxu0 %v5716
    %6605 = vmatprep.subr.bf16.mxu0 %v5719
    %6606 = vmatpush1.bf16.msra.mxu0 %v5718
    %6607 = vmatprep.subr.bf16.mxu0 0
    %6608 = vmatpush1.bf16.msra.mxu0 0
    %6609 = vmatprep.subr.bf16.mxu0 0
    %6610 = vmatpush1.bf16.msra.mxu0 0
    %6611 = vmatprep.subr.bf16.mxu0 0
    %6612 = vmatpush1.bf16.msra.mxu0 0
    %6613 = vmatprep.subr.bf16.mxu0 0
    %6614 = vmatpush1.bf16.msra.mxu0 0
    %6615 = vmatprep.subr.bf16.mxu0 0
    %6616 = vmatpush1.bf16.msra.mxu0 0
    %6617 = vmatprep.subr.bf16.mxu0 0
    %6618 = vmatpush1.bf16.msra.mxu0 0
    %6619 = vmatprep.subr.bf16.mxu0 0
    %6620 = vmatpush1.bf16.msra.mxu0 0
    %6621 = vmatprep.subr.bf16.mxu0 0
    %6622 = vmatpush1.bf16.msra.mxu0 0
    %6623 = vmatprep.subr.bf16.mxu0 0
    %6624 = vmatpush1.bf16.msra.mxu0 0
    %6625 = vmatprep.subr.bf16.mxu0 0
    %6626 = vmatpush1.bf16.msra.mxu0 0
    %6627 = vmatprep.subr.bf16.mxu0 0
    %6628 = vmatpush1.bf16.msra.mxu0 0
    %6629 = vmatprep.subr.bf16.mxu0 0
    %6630 = vmatpush1.bf16.msra.mxu0 0
    %6631 = vmatprep.mubr.bf16.mxu0 0
    %6632 = vmatmul.mubr.bf16.gmra.mrb[0].mxu0 %v6597
    %v6633 = vpop.f32.mrb[0].mxu0
    %v6634 = vadd.f32 0.0, %v6633
    %v6635 = vpop.f32.mrb[0].mxu0
    %v6636 = vadd.f32 0.0, %v6635
    %v6637 = vpop.f32.mrb[0].mxu0
    %v6638 = vpop.f32.mrb[0].mxu0
    %6639 = vdwg.mxu0
    %v6642 = vrot.slane %v6634, 6
    %v6643 = vrot.slane %v6636, 6
    %v6646 = vadd.f32 %v6590, %v6642
    %v6647 = vadd.f32 %v6591, %v6643
    %v6648 = vtanh.pop %v6646
    %v6649 = vtanh.pop %v6647
    %v6650 = vxor.u32 %v6646, 2147483648
    %v6651 = vxor.u32 %v6647, 2147483648
    %v6652 = vmul.f32 %v6650, 1.442695
    %v6653 = vpow.pop %v6652
    %v6654 = vmul.f32 %v6651, 1.442695
    %v6655 = vpow.pop %v6654
    %v6656 = vadd.f32 %v6653, 1.0
    %v6657 = vadd.f32 %v6655, 1.0
    %v6658 = vrcp.pop %v6656
    %v6659 = vmul.f32 1.0, %v6658
    %v6660 = vrcp.pop %v6657
    %v6661 = vmul.f32 1.0, %v6660
    %v6662 = vsel %vm3931, %v6648, %v6659
    %v6663 = vsel %vm3932, %v6649, %v6661
    %v6665 = vrot.slane %v6576, 6
    %v6667 = vmul.f32 %v6662, %v6665
    %v6668 = vmul.f32 %v6662, %v6663
    %6670 = vrot.lane.b32.xlu0 %v6668, 64
    %v6671 = vpop.permute.xlu0 %6670
    %v6673 = vadd.f32 %v6667, %v6671
    %v6674 = vtanh.pop %v6673
    %v6675 = vmul.f32 %v6663, %v6674
    %vm6676 = vcmp.eq.s32.totalorder %v49, 10
    %v6677 = vsel %vm6676, 1, 0
    %6678 = vset.pattern.permute.xlu0 0
    %6679 = vperm.xlu0 %6678, %v6677
    %v6680 = vpop.permute.xlu0 %6679
    %vm6681 = vcmp.eq.s32.totalorder %v6680, 1
    %v6683 = vrot.slane %v6675, 2
    %6684 = vrot.lane.b32.xlu0 %v6683, 64
    %v6685 = vpop.permute.xlu0 %6684
    %6688 = vrot.lane.b32.xlu0 %v6589, 64
    %v6689 = vpop.permute.xlu0 %6688
    %v6691 = vsel %vm6681, %v6685, %v6689
    %v6692 = vld [vmem:[#allocation3 + $0x20] sm:$0x30]
    %v6693 = vld [vmem:[#allocation3 + $0x28] sm:$0x30]
    %v6694 = vpack.c.bf16 %v6675, %v6675
    %v6696 = vrot.slane %v6694, 1
    %6697 = vrot.lane.b32.xlu0 %v6696, 64
    %v6698 = vpop.permute.xlu0 %6697
    %v6700 = vsel %vm3691, %v6698, 0
    %6702 = vmatprep.subr.bf16.mxu0 %v5713
    %6703 = vmatpush1.bf16.msra.mxu0 %v5712
    %6704 = vmatprep.subr.bf16.mxu0 %v5715
    %6705 = vmatpush1.bf16.msra.mxu0 %v5714
    %6706 = vmatprep.subr.bf16.mxu0 %v5717
    %6707 = vmatpush1.bf16.msra.mxu0 %v5716
    %6708 = vmatprep.subr.bf16.mxu0 %v5719
    %6709 = vmatpush1.bf16.msra.mxu0 %v5718
    %6710 = vmatprep.subr.bf16.mxu0 0
    %6711 = vmatpush1.bf16.msra.mxu0 0
    %6712 = vmatprep.subr.bf16.mxu0 0
    %6713 = vmatpush1.bf16.msra.mxu0 0
    %6714 = vmatprep.subr.bf16.mxu0 0
    %6715 = vmatpush1.bf16.msra.mxu0 0
    %6716 = vmatprep.subr.bf16.mxu0 0
    %6717 = vmatpush1.bf16.msra.mxu0 0
    %6718 = vmatprep.subr.bf16.mxu0 0
    %6719 = vmatpush1.bf16.msra.mxu0 0
    %6720 = vmatprep.subr.bf16.mxu0 0
    %6721 = vmatpush1.bf16.msra.mxu0 0
    %6722 = vmatprep.subr.bf16.mxu0 0
    %6723 = vmatpush1.bf16.msra.mxu0 0
    %6724 = vmatprep.subr.bf16.mxu0 0
    %6725 = vmatpush1.bf16.msra.mxu0 0
    %6726 = vmatprep.subr.bf16.mxu0 0
    %6727 = vmatpush1.bf16.msra.mxu0 0
    %6728 = vmatprep.subr.bf16.mxu0 0
    %6729 = vmatpush1.bf16.msra.mxu0 0
    %6730 = vmatprep.subr.bf16.mxu0 0
    %6731 = vmatpush1.bf16.msra.mxu0 0
    %6732 = vmatprep.subr.bf16.mxu0 0
    %6733 = vmatpush1.bf16.msra.mxu0 0
    %6734 = vmatprep.mubr.bf16.mxu0 0
    %6735 = vmatmul.mubr.bf16.gmra.mrb[0].mxu0 %v6700
    %v6736 = vpop.f32.mrb[0].mxu0
    %v6737 = vadd.f32 0.0, %v6736
    %v6738 = vpop.f32.mrb[0].mxu0
    %v6739 = vadd.f32 0.0, %v6738
    %v6740 = vpop.f32.mrb[0].mxu0
    %v6741 = vpop.f32.mrb[0].mxu0
    %6742 = vdwg.mxu0
    %v6745 = vrot.slane %v6737, 4
    %v6746 = vrot.slane %v6739, 4
    %v6749 = vadd.f32 %v6692, %v6745
    %v6750 = vadd.f32 %v6693, %v6746
    %v6751 = vtanh.pop %v6749
    %v6752 = vtanh.pop %v6750
    %v6753 = vxor.u32 %v6749, 2147483648
    %v6754 = vxor.u32 %v6750, 2147483648
    %v6755 = vmul.f32 %v6753, 1.442695
    %v6756 = vpow.pop %v6755
    %v6757 = vmul.f32 %v6754, 1.442695
    %v6758 = vpow.pop %v6757
    %v6759 = vadd.f32 %v6756, 1.0
    %v6760 = vadd.f32 %v6758, 1.0
    %v6761 = vrcp.pop %v6759
    %v6762 = vmul.f32 1.0, %v6761
    %v6763 = vrcp.pop %v6760
    %v6764 = vmul.f32 1.0, %v6763
    %v6765 = vsel %vm3931, %v6751, %v6762
    %v6766 = vsel %vm3932, %v6752, %v6764
    %v6768 = vrot.slane %v6673, 6
    %v6770 = vmul.f32 %v6765, %v6768
    %v6771 = vmul.f32 %v6765, %v6766
    %6773 = vrot.lane.b32.xlu0 %v6771, 64
    %v6774 = vpop.permute.xlu0 %6773
    %v6776 = vadd.f32 %v6770, %v6774
    %v6777 = vtanh.pop %v6776
    %v6778 = vmul.f32 %v6766, %v6777
    %vm6779 = vcmp.eq.s32.totalorder %v49, 11
    %v6780 = vsel %vm6779, 1, 0
    %6781 = vset.pattern.permute.xlu0 0
    %6782 = vperm.xlu0 %6781, %v6780
    %v6783 = vpop.permute.xlu0 %6782
    %vm6784 = vcmp.eq.s32.totalorder %v6783, 1
    %v6786 = vrot.slane %v6778, 4
    %6787 = vrot.lane.b32.xlu0 %v6786, 64
    %v6788 = vpop.permute.xlu0 %6787
    %v6790 = vsel %vm6784, %v6788, %v6691
    %v6791 = vld [vmem:[#allocation3 + $0x20] sm:$0xc0]
    %v6792 = vld [vmem:[#allocation3 + $0x28] sm:$0xc0]
    %v6793 = vpack.c.bf16 %v6778, %v6778
    %v6795 = vrot.slane %v6793, 2
    %6796 = vrot.lane.b32.xlu0 %v6795, 64
    %v6797 = vpop.permute.xlu0 %6796
    %v6799 = vsel %vm3691, %v6797, 0
    %6801 = vmatprep.subr.bf16.mxu0 %v5713
    %6802 = vmatpush1.bf16.msra.mxu0 %v5712
    %6803 = vmatprep.subr.bf16.mxu0 %v5715
    %6804 = vmatpush1.bf16.msra.mxu0 %v5714
    %6805 = vmatprep.subr.bf16.mxu0 %v5717
    %6806 = vmatpush1.bf16.msra.mxu0 %v5716
    %6807 = vmatprep.subr.bf16.mxu0 %v5719
    %6808 = vmatpush1.bf16.msra.mxu0 %v5718
    %6809 = vmatprep.subr.bf16.mxu0 0
    %6810 = vmatpush1.bf16.msra.mxu0 0
    %6811 = vmatprep.subr.bf16.mxu0 0
    %6812 = vmatpush1.bf16.msra.mxu0 0
    %6813 = vmatprep.subr.bf16.mxu0 0
    %6814 = vmatpush1.bf16.msra.mxu0 0
    %6815 = vmatprep.subr.bf16.mxu0 0
    %6816 = vmatpush1.bf16.msra.mxu0 0
    %6817 = vmatprep.subr.bf16.mxu0 0
    %6818 = vmatpush1.bf16.msra.mxu0 0
    %6819 = vmatprep.subr.bf16.mxu0 0
    %6820 = vmatpush1.bf16.msra.mxu0 0
    %6821 = vmatprep.subr.bf16.mxu0 0
    %6822 = vmatpush1.bf16.msra.mxu0 0
    %6823 = vmatprep.subr.bf16.mxu0 0
    %6824 = vmatpush1.bf16.msra.mxu0 0
    %6825 = vmatprep.subr.bf16.mxu0 0
    %6826 = vmatpush1.bf16.msra.mxu0 0
    %6827 = vmatprep.subr.bf16.mxu0 0
    %6828 = vmatpush1.bf16.msra.mxu0 0
    %6829 = vmatprep.subr.bf16.mxu0 0
    %6830 = vmatpush1.bf16.msra.mxu0 0
    %6831 = vmatprep.subr.bf16.mxu0 0
    %6832 = vmatpush1.bf16.msra.mxu0 0
    %6833 = vmatprep.mubr.bf16.mxu0 0
    %6834 = vmatmul.mubr.bf16.gmra.mrb[0].mxu0 %v6799
    %v6835 = vpop.f32.mrb[0].mxu0
    %v6836 = vadd.f32 0.0, %v6835
    %v6837 = vpop.f32.mrb[0].mxu0
    %v6838 = vadd.f32 0.0, %v6837
    %v6839 = vpop.f32.mrb[0].mxu0
    %v6840 = vpop.f32.mrb[0].mxu0
    %6841 = vdwg.mxu0
    %v6844 = vrot.slane %v6836, 2
    %v6845 = vrot.slane %v6838, 2
    %v6848 = vadd.f32 %v6791, %v6844
    %v6849 = vadd.f32 %v6792, %v6845
    %v6850 = vtanh.pop %v6848
    %v6851 = vtanh.pop %v6849
    %v6852 = vxor.u32 %v6848, 2147483648
    %v6853 = vxor.u32 %v6849, 2147483648
    %v6854 = vmul.f32 %v6852, 1.442695
    %v6855 = vpow.pop %v6854
    %v6856 = vmul.f32 %v6853, 1.442695
    %v6857 = vpow.pop %v6856
    %v6858 = vadd.f32 %v6855, 1.0
    %v6859 = vadd.f32 %v6857, 1.0
    %v6860 = vrcp.pop %v6858
    %v6861 = vmul.f32 1.0, %v6860
    %v6862 = vrcp.pop %v6859
    %v6863 = vmul.f32 1.0, %v6862
    %v6864 = vsel %vm3931, %v6850, %v6861
    %v6865 = vsel %vm3932, %v6851, %v6863
    %v6867 = vrot.slane %v6776, 6
    %v6869 = vmul.f32 %v6864, %v6867
    %v6870 = vmul.f32 %v6864, %v6865
    %6872 = vrot.lane.b32.xlu0 %v6870, 64
    %v6873 = vpop.permute.xlu0 %6872
    %v6875 = vadd.f32 %v6869, %v6873
    %v6876 = vtanh.pop %v6875
    %v6877 = vmul.f32 %v6865, %v6876
    %vm6878 = vcmp.eq.s32.totalorder %v49, 12
    %v6879 = vsel %vm6878, 1, 0
    %6880 = vset.pattern.permute.xlu0 0
    %6881 = vperm.xlu0 %6880, %v6879
    %v6882 = vpop.permute.xlu0 %6881
    %vm6883 = vcmp.eq.s32.totalorder %v6882, 1
    %v6885 = vrot.slane %v6877, 6
    %6886 = vrot.lane.b32.xlu0 %v6885, 64
    %v6887 = vpop.permute.xlu0 %6886
    %v6889 = vsel %vm6883, %v6887, %v6790
    %v6890 = vld [vmem:[#allocation3 + $0x30] sm:$0x3]
    %v6891 = vld [vmem:[#allocation3 + $0x38] sm:$0x3]
    %v6892 = vpack.c.bf16 %v6877, %v6877
    %v6894 = vrot.slane %v6892, 3
    %6895 = vrot.lane.b32.xlu0 %v6894, 64
    %v6896 = vpop.permute.xlu0 %6895
    %v6898 = vsel %vm3691, %v6896, 0
    %6900 = vmatprep.subr.bf16.mxu0 %v5713
    %6901 = vmatpush1.bf16.msra.mxu0 %v5712
    %6902 = vmatprep.subr.bf16.mxu0 %v5715
    %6903 = vmatpush1.bf16.msra.mxu0 %v5714
    %6904 = vmatprep.subr.bf16.mxu0 %v5717
    %6905 = vmatpush1.bf16.msra.mxu0 %v5716
    %6906 = vmatprep.subr.bf16.mxu0 %v5719
    %6907 = vmatpush1.bf16.msra.mxu0 %v5718
    %6908 = vmatprep.subr.bf16.mxu0 0
    %6909 = vmatpush1.bf16.msra.mxu0 0
    %6910 = vmatprep.subr.bf16.mxu0 0
    %6911 = vmatpush1.bf16.msra.mxu0 0
    %6912 = vmatprep.subr.bf16.mxu0 0
    %6913 = vmatpush1.bf16.msra.mxu0 0
    %6914 = vmatprep.subr.bf16.mxu0 0
    %6915 = vmatpush1.bf16.msra.mxu0 0
    %6916 = vmatprep.subr.bf16.mxu0 0
    %6917 = vmatpush1.bf16.msra.mxu0 0
    %6918 = vmatprep.subr.bf16.mxu0 0
    %6919 = vmatpush1.bf16.msra.mxu0 0
    %6920 = vmatprep.subr.bf16.mxu0 0
    %6921 = vmatpush1.bf16.msra.mxu0 0
    %6922 = vmatprep.subr.bf16.mxu0 0
    %6923 = vmatpush1.bf16.msra.mxu0 0
    %6924 = vmatprep.subr.bf16.mxu0 0
    %6925 = vmatpush1.bf16.msra.mxu0 0
    %6926 = vmatprep.subr.bf16.mxu0 0
    %6927 = vmatpush1.bf16.msra.mxu0 0
    %6928 = vmatprep.subr.bf16.mxu0 0
    %6929 = vmatpush1.bf16.msra.mxu0 0
    %6930 = vmatprep.subr.bf16.mxu0 0
    %6931 = vmatpush1.bf16.msra.mxu0 0
    %6932 = vmatprep.mubr.bf16.mxu0 0
    %6933 = vmatmul.mubr.bf16.gmra.mrb[0].mxu0 %v6898
    %v6934 = vpop.f32.mrb[0].mxu0
    %v6935 = vadd.f32 0.0, %v6934
    %v6936 = vpop.f32.mrb[0].mxu0
    %v6937 = vadd.f32 0.0, %v6936
    %v6938 = vpop.f32.mrb[0].mxu0
    %v6939 = vpop.f32.mrb[0].mxu0
    %6940 = vdwg.mxu0
    %v6941 = vadd.f32 %v6890, %v6935
    %v6942 = vadd.f32 %v6891, %v6937
    %v6943 = vtanh.pop %v6941
    %v6944 = vtanh.pop %v6942
    %v6945 = vxor.u32 %v6941, 2147483648
    %v6946 = vxor.u32 %v6942, 2147483648
    %v6947 = vmul.f32 %v6945, 1.442695
    %v6948 = vpow.pop %v6947
    %v6949 = vmul.f32 %v6946, 1.442695
    %v6950 = vpow.pop %v6949
    %v6951 = vadd.f32 %v6948, 1.0
    %v6952 = vadd.f32 %v6950, 1.0
    %v6953 = vrcp.pop %v6951
    %v6954 = vmul.f32 1.0, %v6953
    %v6955 = vrcp.pop %v6952
    %v6956 = vmul.f32 1.0, %v6955
    %v6957 = vsel %vm3931, %v6943, %v6954
    %v6958 = vsel %vm3932, %v6944, %v6956
    %v6960 = vrot.slane %v6875, 6
    %v6962 = vmul.f32 %v6957, %v6960
    %v6963 = vmul.f32 %v6957, %v6958
    %6965 = vrot.lane.b32.xlu0 %v6963, 64
    %v6966 = vpop.permute.xlu0 %6965
    %v6968 = vadd.f32 %v6962, %v6966
    %v6969 = vtanh.pop %v6968
    %v6970 = vmul.f32 %v6958, %v6969
    %vm6971 = vcmp.eq.s32.totalorder %v49, 13
    %v6972 = vsel %vm6971, 1, 0
    %6973 = vset.pattern.permute.xlu0 0
    %6974 = vperm.xlu0 %6973, %v6972
    %v6975 = vpop.permute.xlu0 %6974
    %vm6976 = vcmp.eq.s32.totalorder %v6975, 1
    %6978 = vrot.lane.b32.xlu0 %v6889, 64
    %v6979 = vpop.permute.xlu0 %6978
    %v6981 = vsel %vm6976, %v6970, %v6979
    %v6982 = vld [vmem:[#allocation3 + $0x30] sm:$0xc]
    %v6983 = vld [vmem:[#allocation3 + $0x38] sm:$0xc]
    %v6984 = vpack.c.bf16 %v6970, %v6970
    %6986 = vrot.lane.b32.xlu0 %v6984, 64
    %v6987 = vpop.permute.xlu0 %6986
    %v6989 = vsel %vm3691, %v6987, 0
    %6991 = vmatprep.subr.bf16.mxu0 %v5713
    %6992 = vmatpush1.bf16.msra.mxu0 %v5712
    %6993 = vmatprep.subr.bf16.mxu0 %v5715
    %6994 = vmatpush1.bf16.msra.mxu0 %v5714
    %6995 = vmatprep.subr.bf16.mxu0 %v5717
    %6996 = vmatpush1.bf16.msra.mxu0 %v5716
    %6997 = vmatprep.subr.bf16.mxu0 %v5719
    %6998 = vmatpush1.bf16.msra.mxu0 %v5718
    %6999 = vmatprep.subr.bf16.mxu0 0
    %7000 = vmatpush1.bf16.msra.mxu0 0
    %7001 = vmatprep.subr.bf16.mxu0 0
    %7002 = vmatpush1.bf16.msra.mxu0 0
    %7003 = vmatprep.subr.bf16.mxu0 0
    %7004 = vmatpush1.bf16.msra.mxu0 0
    %7005 = vmatprep.subr.bf16.mxu0 0
    %7006 = vmatpush1.bf16.msra.mxu0 0
    %7007 = vmatprep.subr.bf16.mxu0 0
    %7008 = vmatpush1.bf16.msra.mxu0 0
    %7009 = vmatprep.subr.bf16.mxu0 0
    %7010 = vmatpush1.bf16.msra.mxu0 0
    %7011 = vmatprep.subr.bf16.mxu0 0
    %7012 = vmatpush1.bf16.msra.mxu0 0
    %7013 = vmatprep.subr.bf16.mxu0 0
    %7014 = vmatpush1.bf16.msra.mxu0 0
    %7015 = vmatprep.subr.bf16.mxu0 0
    %7016 = vmatpush1.bf16.msra.mxu0 0
    %7017 = vmatprep.subr.bf16.mxu0 0
    %7018 = vmatpush1.bf16.msra.mxu0 0
    %7019 = vmatprep.subr.bf16.mxu0 0
    %7020 = vmatpush1.bf16.msra.mxu0 0
    %7021 = vmatprep.subr.bf16.mxu0 0
    %7022 = vmatpush1.bf16.msra.mxu0 0
    %7023 = vmatprep.mubr.bf16.mxu0 0
    %7024 = vmatmul.mubr.bf16.gmra.mrb[0].mxu0 %v6989
    %v7025 = vpop.f32.mrb[0].mxu0
    %v7026 = vadd.f32 0.0, %v7025
    %v7027 = vpop.f32.mrb[0].mxu0
    %v7028 = vadd.f32 0.0, %v7027
    %v7029 = vpop.f32.mrb[0].mxu0
    %v7030 = vpop.f32.mrb[0].mxu0
    %7031 = vdwg.mxu0
    %v7034 = vrot.slane %v7026, 6
    %v7035 = vrot.slane %v7028, 6
    %v7038 = vadd.f32 %v6982, %v7034
    %v7039 = vadd.f32 %v6983, %v7035
    %v7040 = vtanh.pop %v7038
    %v7041 = vtanh.pop %v7039
    %v7042 = vxor.u32 %v7038, 2147483648
    %v7043 = vxor.u32 %v7039, 2147483648
    %v7044 = vmul.f32 %v7042, 1.442695
    %v7045 = vpow.pop %v7044
    %v7046 = vmul.f32 %v7043, 1.442695
    %v7047 = vpow.pop %v7046
    %v7048 = vadd.f32 %v7045, 1.0
    %v7049 = vadd.f32 %v7047, 1.0
    %v7050 = vrcp.pop %v7048
    %v7051 = vmul.f32 1.0, %v7050
    %v7052 = vrcp.pop %v7049
    %v7053 = vmul.f32 1.0, %v7052
    %v7054 = vsel %vm3931, %v7040, %v7051
    %v7055 = vsel %vm3932, %v7041, %v7053
    %v7057 = vrot.slane %v6968, 6
    %v7059 = vmul.f32 %v7054, %v7057
    %v7060 = vmul.f32 %v7054, %v7055
    %7062 = vrot.lane.b32.xlu0 %v7060, 64
    %v7063 = vpop.permute.xlu0 %7062
    %v7065 = vadd.f32 %v7059, %v7063
    %v7066 = vtanh.pop %v7065
    %v7067 = vmul.f32 %v7055, %v7066
    %vm7068 = vcmp.eq.s32.totalorder %v49, 14
    %v7069 = vsel %vm7068, 1, 0
    %7070 = vset.pattern.permute.xlu0 0
    %7071 = vperm.xlu0 %7070, %v7069
    %v7072 = vpop.permute.xlu0 %7071
    %vm7073 = vcmp.eq.s32.totalorder %v7072, 1
    %v7075 = vrot.slane %v7067, 2
    %7076 = vrot.lane.b32.xlu0 %v7075, 64
    %v7077 = vpop.permute.xlu0 %7076
    %7080 = vrot.lane.b32.xlu0 %v6981, 64
    %v7081 = vpop.permute.xlu0 %7080
    %v7083 = vsel %vm7073, %v7077, %v7081
    %v7084 = vld [vmem:[#allocation3 + $0x30] sm:$0x30]
    %v7085 = vld [vmem:[#allocation3 + $0x38] sm:$0x30]
    %v7086 = vpack.c.bf16 %v7067, %v7067
    %v7088 = vrot.slane %v7086, 1
    %7089 = vrot.lane.b32.xlu0 %v7088, 64
    %v7090 = vpop.permute.xlu0 %7089
    %v7092 = vsel %vm3691, %v7090, 0
    %7094 = vmatprep.subr.bf16.mxu0 %v5713
    %7095 = vmatpush1.bf16.msra.mxu0 %v5712
    %7096 = vmatprep.subr.bf16.mxu0 %v5715
    %7097 = vmatpush1.bf16.msra.mxu0 %v5714
    %7098 = vmatprep.subr.bf16.mxu0 %v5717
    %7099 = vmatpush1.bf16.msra.mxu0 %v5716
    %7100 = vmatprep.subr.bf16.mxu0 %v5719
    %7101 = vmatpush1.bf16.msra.mxu0 %v5718
    %7102 = vmatprep.subr.bf16.mxu0 0
    %7103 = vmatpush1.bf16.msra.mxu0 0
    %7104 = vmatprep.subr.bf16.mxu0 0
    %7105 = vmatpush1.bf16.msra.mxu0 0
    %7106 = vmatprep.subr.bf16.mxu0 0
    %7107 = vmatpush1.bf16.msra.mxu0 0
    %7108 = vmatprep.subr.bf16.mxu0 0
    %7109 = vmatpush1.bf16.msra.mxu0 0
    %7110 = vmatprep.subr.bf16.mxu0 0
    %7111 = vmatpush1.bf16.msra.mxu0 0
    %7112 = vmatprep.subr.bf16.mxu0 0
    %7113 = vmatpush1.bf16.msra.mxu0 0
    %7114 = vmatprep.subr.bf16.mxu0 0
    %7115 = vmatpush1.bf16.msra.mxu0 0
    %7116 = vmatprep.subr.bf16.mxu0 0
    %7117 = vmatpush1.bf16.msra.mxu0 0
    %7118 = vmatprep.subr.bf16.mxu0 0
    %7119 = vmatpush1.bf16.msra.mxu0 0
    %7120 = vmatprep.subr.bf16.mxu0 0
    %7121 = vmatpush1.bf16.msra.mxu0 0
    %7122 = vmatprep.subr.bf16.mxu0 0
    %7123 = vmatpush1.bf16.msra.mxu0 0
    %7124 = vmatprep.subr.bf16.mxu0 0
    %7125 = vmatpush1.bf16.msra.mxu0 0
    %7126 = vmatprep.mubr.bf16.mxu0 0
    %7127 = vmatmul.mubr.bf16.gmra.mrb[0].mxu0 %v7092
    %v7128 = vpop.f32.mrb[0].mxu0
    %v7129 = vadd.f32 0.0, %v7128
    %v7130 = vpop.f32.mrb[0].mxu0
    %v7131 = vadd.f32 0.0, %v7130
    %v7132 = vpop.f32.mrb[0].mxu0
    %v7133 = vpop.f32.mrb[0].mxu0
    %7134 = vdwg.mxu0
    %v7137 = vrot.slane %v7129, 4
    %v7138 = vrot.slane %v7131, 4
    %v7141 = vadd.f32 %v7084, %v7137
    %v7142 = vadd.f32 %v7085, %v7138
    %v7143 = vtanh.pop %v7141
    %v7144 = vtanh.pop %v7142
    %v7145 = vxor.u32 %v7141, 2147483648
    %v7146 = vxor.u32 %v7142, 2147483648
    %v7147 = vmul.f32 %v7145, 1.442695
    %v7148 = vpow.pop %v7147
    %v7149 = vmul.f32 %v7146, 1.442695
    %v7150 = vpow.pop %v7149
    %v7151 = vadd.f32 %v7148, 1.0
    %v7152 = vadd.f32 %v7150, 1.0
    %v7153 = vrcp.pop %v7151
    %v7154 = vmul.f32 1.0, %v7153
    %v7155 = vrcp.pop %v7152
    %v7156 = vmul.f32 1.0, %v7155
    %v7157 = vsel %vm3931, %v7143, %v7154
    %v7158 = vsel %vm3932, %v7144, %v7156
    %v7160 = vrot.slane %v7065, 6
    %v7162 = vmul.f32 %v7157, %v7160
    %v7163 = vmul.f32 %v7157, %v7158
    %7165 = vrot.lane.b32.xlu0 %v7163, 64
    %v7166 = vpop.permute.xlu0 %7165
    %v7168 = vadd.f32 %v7162, %v7166
    %v7169 = vtanh.pop %v7168
    %v7170 = vmul.f32 %v7158, %v7169
    %vm7171 = vcmp.eq.s32.totalorder %v49, 15
    %v7172 = vsel %vm7171, 1, 0
    %7173 = vset.pattern.permute.xlu0 0
    %7174 = vperm.xlu0 %7173, %v7172
    %v7175 = vpop.permute.xlu0 %7174
    %vm7176 = vcmp.eq.s32.totalorder %v7175, 1
    %v7178 = vrot.slane %v7170, 4
    %7179 = vrot.lane.b32.xlu0 %v7178, 64
    %v7180 = vpop.permute.xlu0 %7179
    %v7182 = vsel %vm7176, %v7180, %v7083
    %v7183 = vld [vmem:[#allocation3 + $0x30] sm:$0xc0]
    %v7184 = vld [vmem:[#allocation3 + $0x38] sm:$0xc0]
    %v7185 = vpack.c.bf16 %v7170, %v7170
    %v7187 = vrot.slane %v7185, 2
    %7188 = vrot.lane.b32.xlu0 %v7187, 64
    %v7189 = vpop.permute.xlu0 %7188
    %v7191 = vsel %vm3691, %v7189, 0
    %7193 = vmatprep.subr.bf16.mxu0 %v5713
    %7194 = vmatpush1.bf16.msra.mxu0 %v5712
    %7195 = vmatprep.subr.bf16.mxu0 %v5715
    %7196 = vmatpush1.bf16.msra.mxu0 %v5714
    %7197 = vmatprep.subr.bf16.mxu0 %v5717
    %7198 = vmatpush1.bf16.msra.mxu0 %v5716
    %7199 = vmatprep.subr.bf16.mxu0 %v5719
    %7200 = vmatpush1.bf16.msra.mxu0 %v5718
    %7201 = vmatprep.subr.bf16.mxu0 0
    %7202 = vmatpush1.bf16.msra.mxu0 0
    %7203 = vmatprep.subr.bf16.mxu0 0
    %7204 = vmatpush1.bf16.msra.mxu0 0
    %7205 = vmatprep.subr.bf16.mxu0 0
    %7206 = vmatpush1.bf16.msra.mxu0 0
    %7207 = vmatprep.subr.bf16.mxu0 0
    %7208 = vmatpush1.bf16.msra.mxu0 0
    %7209 = vmatprep.subr.bf16.mxu0 0
    %7210 = vmatpush1.bf16.msra.mxu0 0
    %7211 = vmatprep.subr.bf16.mxu0 0
    %7212 = vmatpush1.bf16.msra.mxu0 0
    %7213 = vmatprep.subr.bf16.mxu0 0
    %7214 = vmatpush1.bf16.msra.mxu0 0
    %7215 = vmatprep.subr.bf16.mxu0 0
    %7216 = vmatpush1.bf16.msra.mxu0 0
    %7217 = vmatprep.subr.bf16.mxu0 0
    %7218 = vmatpush1.bf16.msra.mxu0 0
    %7219 = vmatprep.subr.bf16.mxu0 0
    %7220 = vmatpush1.bf16.msra.mxu0 0
    %7221 = vmatprep.subr.bf16.mxu0 0
    %7222 = vmatpush1.bf16.msra.mxu0 0
    %7223 = vmatprep.subr.bf16.mxu0 0
    %7224 = vmatpush1.bf16.msra.mxu0 0
    %7225 = vmatprep.mubr.bf16.mxu0 0
    %7226 = vmatmul.mubr.bf16.gmra.mrb[0].mxu0 %v7191
    %v7227 = vpop.f32.mrb[0].mxu0
    %v7228 = vadd.f32 0.0, %v7227
    %v7229 = vpop.f32.mrb[0].mxu0
    %v7230 = vadd.f32 0.0, %v7229
    %v7231 = vpop.f32.mrb[0].mxu0
    %v7232 = vpop.f32.mrb[0].mxu0
    %7233 = vdwg.mxu0
    %v7236 = vrot.slane %v7228, 2
    %v7237 = vrot.slane %v7230, 2
    %v7240 = vadd.f32 %v7183, %v7236
    %v7241 = vadd.f32 %v7184, %v7237
    %v7242 = vtanh.pop %v7240
    %v7243 = vtanh.pop %v7241
    %v7244 = vxor.u32 %v7240, 2147483648
    %v7245 = vxor.u32 %v7241, 2147483648
    %v7246 = vmul.f32 %v7244, 1.442695
    %v7247 = vpow.pop %v7246
    %v7248 = vmul.f32 %v7245, 1.442695
    %v7249 = vpow.pop %v7248
    %v7250 = vadd.f32 %v7247, 1.0
    %v7251 = vadd.f32 %v7249, 1.0
    %v7252 = vrcp.pop %v7250
    %v7253 = vmul.f32 1.0, %v7252
    %v7254 = vrcp.pop %v7251
    %v7255 = vmul.f32 1.0, %v7254
    %v7256 = vsel %vm3931, %v7242, %v7253
    %v7257 = vsel %vm3932, %v7243, %v7255
    %v7259 = vrot.slane %v7168, 6
    %v7261 = vmul.f32 %v7256, %v7259
    %v7262 = vmul.f32 %v7256, %v7257
    %7264 = vrot.lane.b32.xlu0 %v7262, 64
    %v7265 = vpop.permute.xlu0 %7264
    %v7267 = vadd.f32 %v7261, %v7265
    %v7268 = vtanh.pop %v7267
    %v7269 = vmul.f32 %v7257, %v7268
    %vm7270 = vcmp.eq.s32.totalorder %v49, 16
    %v7271 = vsel %vm7270, 1, 0
    %7272 = vset.pattern.permute.xlu0 0
    %7273 = vperm.xlu0 %7272, %v7271
    %v7274 = vpop.permute.xlu0 %7273
    %vm7275 = vcmp.eq.s32.totalorder %v7274, 1
    %v7277 = vrot.slane %v7269, 6
    %7278 = vrot.lane.b32.xlu0 %v7277, 64
    %v7279 = vpop.permute.xlu0 %7278
    %v7281 = vsel %vm7275, %v7279, %v7182
    %v7282 = vadd.f32 %v7281, %v5544
    %v7283 = vpack.c.bf16 %v7282, %v7282
    %v7284 = vld [vmem:[%s12] sm:$0xf]
    %v7285 = vld [vmem:[%s12 + $0x4] sm:$0xf]
    %v7286 = vld [vmem:[%s12 + $0x8] sm:$0xf]
    %v7287 = vld [vmem:[%s12 + $0xc] sm:$0xf]
    %v7288 = vld [vmem:[%s12 + $0x10] sm:$0xf]
    %v7289 = vld [vmem:[%s12 + $0x14] sm:$0xf]
    %v7290 = vld [vmem:[%s12 + $0x18] sm:$0xf]
    %v7291 = vld [vmem:[%s12 + $0x1c] sm:$0xf]
    %v7292 = vld [vmem:[%s13] sm:$0x1]
    %v7294 = vlaneseq
    %v7295 = vshrl.u32 %v7294, 7
    %v7296 = vsub.s32 0, %v7295
    %v7297 = vrot.slane %v7292, %v7296
    %v7307 = vunpack.c.l.b16 %v7284
    %v7308 = vunpack.c.l.b16 %v7285
    %v7309 = vunpack.c.l.b16 %v7286
    %v7310 = vunpack.c.l.b16 %v7287
    %v7311 = vunpack.c.l.b16 %v7288
    %v7312 = vunpack.c.l.b16 %v7289
    %v7313 = vunpack.c.l.b16 %v7290
    %v7314 = vunpack.c.l.b16 %v7291
    %v7315 = vpack.c.b16 %v7308, %v7307
    %v7316 = vpack.c.b16 %v7310, %v7309
    %v7317 = vpack.c.b16 %v7312, %v7311
    %v7318 = vpack.c.b16 %v7314, %v7313
    %v7324 = vsel %vm3691, %v7283, 0
    %7326 = vmatprep.subr.bf16.mxu0 0
    %7327 = vmatpush1.bf16.msra.mxu0 %v7315
    %7328 = vmatprep.subr.bf16.mxu0 0
    %7329 = vmatpush1.bf16.msra.mxu0 %v7316
    %7330 = vmatprep.subr.bf16.mxu0 0
    %7331 = vmatpush1.bf16.msra.mxu0 %v7317
    %7332 = vmatprep.subr.bf16.mxu0 0
    %7333 = vmatpush1.bf16.msra.mxu0 %v7318
    %7334 = vmatprep.subr.bf16.mxu0 0
    %7335 = vmatpush1.bf16.msra.mxu0 0
    %7336 = vmatprep.subr.bf16.mxu0 0
    %7337 = vmatpush1.bf16.msra.mxu0 0
    %7338 = vmatprep.subr.bf16.mxu0 0
    %7339 = vmatpush1.bf16.msra.mxu0 0
    %7340 = vmatprep.subr.bf16.mxu0 0
    %7341 = vmatpush1.bf16.msra.mxu0 0
    %7342 = vmatprep.subr.bf16.mxu0 0
    %7343 = vmatpush1.bf16.msra.mxu0 0
    %7344 = vmatprep.subr.bf16.mxu0 0
    %7345 = vmatpush1.bf16.msra.mxu0 0
    %7346 = vmatprep.subr.bf16.mxu0 0
    %7347 = vmatpush1.bf16.msra.mxu0 0
    %7348 = vmatprep.subr.bf16.mxu0 0
    %7349 = vmatpush1.bf16.msra.mxu0 0
    %7350 = vmatprep.subr.bf16.mxu0 0
    %7351 = vmatpush1.bf16.msra.mxu0 0
    %7352 = vmatprep.subr.bf16.mxu0 0
    %7353 = vmatpush1.bf16.msra.mxu0 0
    %7354 = vmatprep.subr.bf16.mxu0 0
    %7355 = vmatpush1.bf16.msra.mxu0 0
    %7356 = vmatprep.subr.bf16.mxu0 0
    %7357 = vmatpush1.bf16.msra.mxu0 0
    %7358 = vmatprep.mubr.bf16.mxu0 0
    %7359 = vmatmul.mubr.bf16.gmra.mrb[0].mxu0 %v7324
    %v7360 = vpop.f32.mrb[0].mxu0
    %v7361 = vadd.f32 %v7297, %v7360
    %v7362 = vpop.f32.mrb[0].mxu0
    %v7363 = vpop.f32.mrb[0].mxu0
    %v7364 = vpop.f32.mrb[0].mxu0
    %7365 = vdwg.mxu0
    %vm7366 = vcmask 254976
    %7367 = vst.msk [vmem:[#allocation4] sm:$0x3] %vm7366, %v7361
    // Predicated region
    $region58: #{video_subnet_forward.1} parent=1 // pred_check
      _
    $region59: #{video_subnet_forward.1} parent=1 // pred_check_branch
      %7369 = sbr.rel (0) target = $region61
    $region60: #{video_subnet_forward.1} parent=1 // pred_region
      %s7371 = ssub.s32 32, 32
      %7372 = vsyncadd [#allocation5], %s7371
      %s7374 = sshll.u32 [#allocation4], 4
      %s7375 = int_to_ptr.vmem [resolvable:$true] %s7374
      %7377 = dma.vmem_to_hbm [thread:$0]  %s7375, 32, %s14, [#allocation5]
    $region61: #{video_subnet_forward.1} parent=1 // pred_fallthru
      _
    // Predicated region
    $region62: #{video_subnet_forward.1} parent=1 // pred_check
      _
    $region63: #{video_subnet_forward.1} parent=1 // pred_check_branch
      %7379 = sbr.rel (0) target = $region65
    $region64: #{video_subnet_forward.1} parent=1 // pred_region
      %7380 = dma.done [#allocation5], 32
    $region65: #{video_subnet_forward.1} parent=1 // pred_fallthru
      _
    %7381 = vsyncpa [#allocation5], 1

</llo_original>
